<compile_context>
chip_gen: v6e
topology: v6e:2x2x1
jax: 0.10.0
libtpu: 0.0.40
codegen_flags: <defaults>
</compile_context>

<pallas_src>
import numpy as np
import jax
import jax.numpy as jnp
from jax import lax
from jax.experimental import pallas as pl
from jax.experimental.pallas import tpu as pltpu


# ----------------------------------------------------------------------------
# Host-side weight packing: (4*Cout, Cin_part, KH, KW) conv weight -> dense
# (KH*W*Cin_part, 4*W*Cout) matrix, so the in-kernel conv is one matmul of
# row-shifted activations against a resident weight matrix producing a
# lane-dense (rows, 4*W*Cout) pre-activation with columns ordered (gate, w, c).
# ----------------------------------------------------------------------------
def _build_gate_weight_matrix(w_part_oikk, W, Cout, padding):
    four_cout, cin_p, KH, KW = w_part_oikk.shape
    assert four_cout == 4 * Cout
    mat = np.zeros((KH * W * cin_p, 4 * W * Cout), np.float32)
    w_np = np.asarray(w_part_oikk, np.float32)
    for kh in range(KH):
        for kw in range(KW):
            # blk[c_in, g*Cout + c_out] = w[g*Cout + c_out, c_in, kh, kw]
            blk = w_np[:, :, kh, kw].T
            for w_out in range(W):
                w_in = w_out + kw - padding
                if 0 <= w_in < W:
                    r0 = kh * W * cin_p + w_in * cin_p
                    for g in range(4):
                        c0 = g * W * Cout + w_out * Cout
                        mat[r0:r0 + cin_p, c0:c0 + Cout] = \
                            blk[:, g * Cout:(g + 1) * Cout]
    return mat


def prepare_params(w_oihw, bias, wci_chw, wcf_chw, wco_chw, padding):
    four_cout, ctot, KH, KW = w_oihw.shape
    Cout = four_cout // 4
    Cin = ctot - Cout
    _, H, W = wci_chw.shape
    assert KH == 2 * padding + 1 and KW == 2 * padding + 1

    w_np = np.asarray(w_oihw, np.float32)
    wx_mat = _build_gate_weight_matrix(w_np[:, :Cin], W, Cout, padding)
    wh_mat = _build_gate_weight_matrix(w_np[:, Cin:], W, Cout, padding)

    b_np = np.asarray(bias, np.float32).reshape(4, 1, Cout)
    b_vec = np.ascontiguousarray(
        np.broadcast_to(b_np, (4, W, Cout))).reshape(1, 4 * W * Cout)

    def peep(p):  # (Cout, H, W) -> lane-dense (H, W*Cout)
        return jnp.asarray(
            np.asarray(p, np.float32).transpose(1, 2, 0).reshape(H, W * Cout))

    return {
        "wx": jnp.asarray(wx_mat),        # (KH*W*Cin,  4*W*Cout)
        "wh": jnp.asarray(wh_mat),        # (KH*W*Cout, 4*W*Cout)
        "b": jnp.asarray(b_vec),          # (1, 4*W*Cout)
        "wci": peep(wci_chw),             # (H, W*Cout)
        "wcf": peep(wcf_chw),
        "wco": peep(wco_chw),
        "KH": KH, "padding": padding, "Cout": Cout, "Cin": Cin,
    }


# ----------------------------------------------------------------------------
# Fused kernel: X-path conv for the whole sequence (one big matmul into VMEM
# scratch) + the T-step recurrence inside a single kernel body.
# ----------------------------------------------------------------------------
def _make_fused_kernel(T, H, KH, padding, WC):
    def sigmoid(x):
        # One EUP tanh instead of exp + reciprocal (exact rewrite).
        return 0.5 * jnp.tanh(0.5 * x) + 0.5

    def shift_rows(x, s):
        """y[r, :] = x[r + s, :], zero-padded at the borders."""
        if s == 0:
            return x
        z = jnp.zeros((abs(s), x.shape[1]), x.dtype)
        if s > 0:
            return jnp.concatenate([x[s:], z], axis=0)
        return jnp.concatenate([z, x[:s]], axis=0)

    def shift_rows_blocked(x, s):
        """Same shift, but independently within each H-row block (per step)."""
        if s == 0:
            return x
        y = shift_rows(x, s)
        r = lax.broadcasted_iota(jnp.int32, x.shape, 0) % H
        valid = (r < H - s) if s > 0 else (r >= -s)
        return jnp.where(valid, y, 0.0)

    def kernel(x_ref, wx_ref, b_ref, wh_ref, wci_ref, wcf_ref, wco_ref,
               hout_ref, convx_sc):
        # --- X path: all T steps at once, one (T*H, KH*WCI)@(KH*WCI, 4*WC)
        #     matmul, bias folded in, result kept in VMEM scratch.
        x = x_ref[...]                                        # (T*H, W*Cin)
        xlhs = jnp.concatenate(
            [shift_rows_blocked(x, kh - padding) for kh in range(KH)], axis=1)
        convx_sc[...] = b_ref[...] + jnp.dot(
            xlhs, wx_ref[...], preferred_element_type=jnp.float32)

        wci = wci_ref[...]
        wcf = wcf_ref[...]
        wco = wco_ref[...]

        # --- Recurrence: H/C carried in vregs across the unrolled T loop.
        def step(t, carry):
            h_prev, c_prev = carry
            r0 = pl.multiple_of(t * H, H)
            lhs = jnp.concatenate(
                [shift_rows(h_prev, kh - padding) for kh in range(KH)], axis=1)
            pre = convx_sc[pl.ds(r0, H), :] + jnp.dot(
                lhs, wh_ref[...], preferred_element_type=jnp.float32)
            i_pre = pre[:, 0 * WC:1 * WC]
            f_pre = pre[:, 1 * WC:2 * WC]
            g_pre = pre[:, 2 * WC:3 * WC]
            o_pre = pre[:, 3 * WC:4 * WC]
            i_g = sigmoid(i_pre + wci * c_prev)
            f_g = sigmoid(f_pre + wcf * c_prev)
            c_new = f_g * c_prev + i_g * jnp.tanh(g_pre)      # activation='tanh'
            o_g = sigmoid(o_pre + wco * c_new)
            h_new = o_g * jnp.tanh(c_new)
            hout_ref[pl.ds(r0, H), :] = h_new
            return (h_new, c_new)

        init = (jnp.zeros((H, WC), jnp.float32),
                jnp.zeros((H, WC), jnp.float32))
        lax.fori_loop(0, T, step, init, unroll=True)

    return kernel


# ----------------------------------------------------------------------------
# Public forward (matches ConvLSTMImage.forward layout-wise).
# ----------------------------------------------------------------------------
def conv_lstm_image_forward(x_ncthw, params):
    """x_ncthw: (B, Cin, T, H, W) -> (B, Cout, T, H, W)."""
    B, Cin, T, H, W = x_ncthw.shape
    KH, padding = params["KH"], params["padding"]
    Cout = params["Cout"]
    WC = W * Cout
    WCI = W * Cin

    # (B, Cin, T, H, W) -> lane-friendly per-batch slab (B, T*H, W*Cin).
    x_b2d = jnp.transpose(x_ncthw, (0, 2, 3, 4, 1)).reshape(B, T * H, WCI)

    h_seq = pl.pallas_call(
        _make_fused_kernel(T, H, KH, padding, WC),
        grid=(B,),
        in_specs=[
            pl.BlockSpec((None, T * H, WCI), lambda b: (b, 0, 0)),   # x slab
            pl.BlockSpec((KH * WCI, 4 * WC), lambda b: (0, 0)),      # wx (resident)
            pl.BlockSpec((1, 4 * WC), lambda b: (0, 0)),             # bias
            pl.BlockSpec((KH * WC, 4 * WC), lambda b: (0, 0)),       # wh (resident)
            pl.BlockSpec((H, WC), lambda b: (0, 0)),                 # W_ci
            pl.BlockSpec((H, WC), lambda b: (0, 0)),                 # W_cf
            pl.BlockSpec((H, WC), lambda b: (0, 0)),                 # W_co
        ],
        out_specs=pl.BlockSpec((None, T * H, WC), lambda b: (b, 0, 0)),
        out_shape=jax.ShapeDtypeStruct((B, T * H, WC), jnp.float32),
        scratch_shapes=[pltpu.VMEM((T * H, 4 * WC), jnp.float32)],   # convx slab
        compiler_params=pltpu.CompilerParams(
            dimension_semantics=("parallel",)),
    )(x_b2d, params["wx"], params["b"], params["wh"],
      params["wci"], params["wcf"], params["wco"])

    # (B, T*H, W*Cout) -> (B, Cout, T, H, W)  (single boundary transpose).
    return jnp.transpose(h_seq.reshape(B, T, H, W, Cout), (0, 4, 1, 2, 3))


# ----------------------------------------------------------------------------
# Pure-JAX NCHW reference (mirrors the PyTorch module exactly).
# ----------------------------------------------------------------------------
def reference_forward(x_ncthw, w_oihw, b, wci_chw, wcf_chw, wco_chw, padding):
    B, _, T, H, W = x_ncthw.shape
    cout = wci_chw.shape[0]
    h = jnp.zeros((B, cout, H, W), jnp.float32)
    c = jnp.zeros((B, cout, H, W), jnp.float32)
    outs = []
    for t in range(T):
        xh = jnp.concatenate([x_ncthw[:, :, t], h], axis=1)
        conv = lax.conv_general_dilated(
            xh, w_oihw, (1, 1), [(padding, padding)] * 2,
            dimension_numbers=("NCHW", "OIHW", "NCHW"))
        conv = conv + b[None, :, None, None]
        i_c, f_c, g_c, o_c = jnp.split(conv, 4, axis=1)
        i = jax.nn.sigmoid(i_c + wci_chw[None] * c)
        f = jax.nn.sigmoid(f_c + wcf_chw[None] * c)
        c = f * c + i * jnp.tanh(g_c)
        o = jax.nn.sigmoid(o_c + wco_chw[None] * c)
        h = o * jnp.tanh(c)
        outs.append(h)
    return jnp.stack(outs, axis=2)                           # (B, Cout, T, H, W)


if __name__ == "__main__":
    # Module config: in_channels=4, out_channels=8, kernel=(3,3), padding=1,
    # activation='tanh', frame_size=(16,16); sequence length 8, batch 2.
    B, Cin, T, H, W = 2, 4, 8, 16, 16
    Cout, K, padding = 8, 3, 1
    Ctot = Cin + Cout

    key = jax.random.PRNGKey(0)
    k1, k2, k3, k4, k5, k6 = jax.random.split(key, 6)
    x = jax.random.normal(k1, (B, Cin, T, H, W), jnp.float32)
    w_oihw = jax.random.normal(k2, (4 * Cout, Ctot, K, K), jnp.float32) * 0.1
    bias = jax.random.normal(k3, (4 * Cout,), jnp.float32) * 0.1
    wci = jax.random.normal(k4, (Cout, H, W), jnp.float32) * 0.1
    wcf = jax.random.normal(k5, (Cout, H, W), jnp.float32) * 0.1
    wco = jax.random.normal(k6, (Cout, H, W), jnp.float32) * 0.1

    params = prepare_params(w_oihw, bias, wci, wcf, wco, padding)

    out = conv_lstm_image_forward(x, params)
    out = jax.block_until_ready(out)
    assert out.shape == (B, Cout, T, H, W)

    ref = reference_forward(x, w_oihw, bias, wci, wcf, wco, padding)
    np.testing.assert_allclose(np.asarray(out), np.asarray(ref),
                               atol=2e-3, rtol=2e-3)
    print("KERNEL_OK")
</pallas_src>

<mosaic_0001>
module attributes {stable_mosaic.version = 11 : i64} {
  func.func @kernel(%arg0: i32, %arg1: memref<1x128x64xf32, #tpu.memory_space<vmem>>, %arg2: memref<192x512xf32, #tpu.memory_space<vmem>>, %arg3: memref<1x512xf32, #tpu.memory_space<vmem>>, %arg4: memref<384x512xf32, #tpu.memory_space<vmem>>, %arg5: memref<16x128xf32, #tpu.memory_space<vmem>>, %arg6: memref<16x128xf32, #tpu.memory_space<vmem>>, %arg7: memref<16x128xf32, #tpu.memory_space<vmem>>, %arg8: memref<1x128x128xf32, #tpu.memory_space<vmem>>, %arg9: memref<128x512xf32, #tpu.memory_space<vmem>>) attributes {dimension_semantics = [#tpu.dimension_semantics<parallel>], iteration_bounds = array<i64: 2>, scalar_prefetch = 0 : i64, scratch_operands = 1 : i64, tpu.core_type = #tpu.core_type<tc>, window_params = [{transform_indices = @transform_0, window_bounds = array<i64: 1, 128, 64>}, {pipeline_mode = #tpu.pipeline_mode<synchronous>, transform_indices = @transform_1, window_bounds = array<i64: 192, 512>}, {pipeline_mode = #tpu.pipeline_mode<synchronous>, transform_indices = @transform_2, window_bounds = array<i64: 1, 512>}, {pipeline_mode = #tpu.pipeline_mode<synchronous>, transform_indices = @transform_3, window_bounds = array<i64: 384, 512>}, {pipeline_mode = #tpu.pipeline_mode<synchronous>, transform_indices = @transform_4, window_bounds = array<i64: 16, 128>}, {pipeline_mode = #tpu.pipeline_mode<synchronous>, transform_indices = @transform_5, window_bounds = array<i64: 16, 128>}, {pipeline_mode = #tpu.pipeline_mode<synchronous>, transform_indices = @transform_6, window_bounds = array<i64: 16, 128>}, {transform_indices = @transform_7, window_bounds = array<i64: 1, 128, 128>}]} {
    %c0 = arith.constant 0 : index
    %c0_0 = arith.constant 0 : index
    %c0_1 = arith.constant 0 : index
    %0 = vector.load %arg1[%c0, %c0_0, %c0_1] : memref<1x128x64xf32, #tpu.memory_space<vmem>>, vector<1x128x64xf32>
    %1 = vector.shape_cast %0 : vector<1x128x64xf32> to vector<128x64xf32>
    %cst = arith.constant 0.000000e+00 : f32
    %2 = vector.broadcast %cst : f32 to vector<1x64xf32>
    %3 = vector.extract_strided_slice %1 {offsets = [0, 0], sizes = [127, 64], strides = [1, 1]} : vector<128x64xf32> to vector<127x64xf32>
    %4 = tpu.concatenate %2, %3 in 0 : vector<1x64xf32>, vector<127x64xf32> -> vector<128x64xf32>
    %5 = tpu.iota {dimensions = array<i32: 0>} : vector<128x64xi32>
    %c16_i32 = arith.constant 16 : i32
    %c0_i32 = arith.constant 0 : i32
    %6 = arith.cmpi eq, %c16_i32, %c0_i32 : i32
    %c1_i32 = arith.constant 1 : i32
    %7 = arith.select %6, %c1_i32, %c16_i32 : i32
    %8 = vector.broadcast %7 : i32 to vector<128x64xi32>
    %9 = arith.remsi %5, %8 : vector<128x64xi32>
    %c0_i32_2 = arith.constant 0 : i32
    %10 = vector.broadcast %c0_i32_2 : i32 to vector<128x64xi32>
    %11 = arith.cmpi ne, %9, %10 : vector<128x64xi32>
    %c0_i32_3 = arith.constant 0 : i32
    %12 = vector.broadcast %c0_i32_3 : i32 to vector<128x64xi32>
    %13 = arith.cmpi slt, %9, %12 : vector<128x64xi32>
    %c0_i32_4 = arith.constant 0 : i32
    %14 = arith.cmpi slt, %7, %c0_i32_4 : i32
    %15 = vector.broadcast %14 : i1 to vector<128x64xi1>
    %16 = vector.broadcast %15 : vector<128x64xi1> to vector<128x64xi1>
    %17 = arith.xori %13, %16 : vector<128x64xi1>
    %18 = arith.andi %17, %11 : vector<128x64xi1>
    %19 = vector.broadcast %7 : i32 to vector<128x64xi32>
    %20 = arith.addi %9, %19 : vector<128x64xi32>
    %21 = arith.select %18, %20, %9 : vector<128x64xi1>, vector<128x64xi32>
    %c1_i32_5 = arith.constant 1 : i32
    %22 = vector.broadcast %c1_i32_5 : i32 to vector<128x64xi32>
    %23 = arith.cmpi sge, %21, %22 : vector<128x64xi32>
    %cst_6 = arith.constant 0.000000e+00 : f32
    %24 = vector.broadcast %cst_6 : f32 to vector<128x64xf32>
    %25 = arith.select %23, %4, %24 : vector<128x64xi1>, vector<128x64xf32>
    %cst_7 = arith.constant 0.000000e+00 : f32
    %26 = vector.broadcast %cst_7 : f32 to vector<1x64xf32>
    %27 = vector.extract_strided_slice %1 {offsets = [1, 0], sizes = [127, 64], strides = [1, 1]} : vector<128x64xf32> to vector<127x64xf32>
    %28 = tpu.concatenate %27, %26 in 0 : vector<127x64xf32>, vector<1x64xf32> -> vector<128x64xf32>
    %29 = tpu.iota {dimensions = array<i32: 0>} : vector<128x64xi32>
    %c16_i32_8 = arith.constant 16 : i32
    %c0_i32_9 = arith.constant 0 : i32
    %30 = arith.cmpi eq, %c16_i32_8, %c0_i32_9 : i32
    %c1_i32_10 = arith.constant 1 : i32
    %31 = arith.select %30, %c1_i32_10, %c16_i32_8 : i32
    %32 = vector.broadcast %31 : i32 to vector<128x64xi32>
    %33 = arith.remsi %29, %32 : vector<128x64xi32>
    %c0_i32_11 = arith.constant 0 : i32
    %34 = vector.broadcast %c0_i32_11 : i32 to vector<128x64xi32>
    %35 = arith.cmpi ne, %33, %34 : vector<128x64xi32>
    %c0_i32_12 = arith.constant 0 : i32
    %36 = vector.broadcast %c0_i32_12 : i32 to vector<128x64xi32>
    %37 = arith.cmpi slt, %33, %36 : vector<128x64xi32>
    %c0_i32_13 = arith.constant 0 : i32
    %38 = arith.cmpi slt, %31, %c0_i32_13 : i32
    %39 = vector.broadcast %38 : i1 to vector<128x64xi1>
    %40 = vector.broadcast %39 : vector<128x64xi1> to vector<128x64xi1>
    %41 = arith.xori %37, %40 : vector<128x64xi1>
    %42 = arith.andi %41, %35 : vector<128x64xi1>
    %43 = vector.broadcast %31 : i32 to vector<128x64xi32>
    %44 = arith.addi %33, %43 : vector<128x64xi32>
    %45 = arith.select %42, %44, %33 : vector<128x64xi1>, vector<128x64xi32>
    %c15_i32 = arith.constant 15 : i32
    %46 = vector.broadcast %c15_i32 : i32 to vector<128x64xi32>
    %47 = arith.cmpi slt, %45, %46 : vector<128x64xi32>
    %cst_14 = arith.constant 0.000000e+00 : f32
    %48 = vector.broadcast %cst_14 : f32 to vector<128x64xf32>
    %49 = arith.select %47, %28, %48 : vector<128x64xi1>, vector<128x64xf32>
    %50 = tpu.concatenate %25, %1, %49 in 1 : vector<128x64xf32>, vector<128x64xf32>, vector<128x64xf32> -> vector<128x192xf32>
    %c0_15 = arith.constant 0 : index
    %c0_16 = arith.constant 0 : index
    %51 = vector.load %arg3[%c0_15, %c0_16] : memref<1x512xf32, #tpu.memory_space<vmem>>, vector<1x512xf32>
    %c0_17 = arith.constant 0 : index
    %c0_18 = arith.constant 0 : index
    %52 = vector.load %arg2[%c0_17, %c0_18] : memref<192x512xf32, #tpu.memory_space<vmem>>, vector<192x512xf32>
    %cst_19 = arith.constant dense<0.000000e+00> : vector<128x512xf32>
    %53 = tpu.matmul %50, %52, %cst_19 {dimension_numbers = #tpu.dot_dimension_numbers<[1], [0], [0], [1], [0, 0, 1, 1], [], []>} : vector<128x192xf32>, vector<192x512xf32>, vector<128x512xf32> -> vector<128x512xf32>
    %54 = vector.broadcast %51 : vector<1x512xf32> to vector<128x512xf32>
    %55 = arith.addf %54, %53 : vector<128x512xf32>
    %c0_20 = arith.constant 0 : index
    %c0_21 = arith.constant 0 : index
    %56 = vector.load %arg9[%c0_20, %c0_21] : memref<128x512xf32, #tpu.memory_space<vmem>>, vector<128x512xf32>
    tpu.vector_store %arg9[%c0_20, %c0_21], %55 {strides = array<i32>} : memref<128x512xf32, #tpu.memory_space<vmem>>, vector<128x512xf32>,
    %c0_22 = arith.constant 0 : index
    %c0_23 = arith.constant 0 : index
    %57 = vector.load %arg5[%c0_22, %c0_23] : memref<16x128xf32, #tpu.memory_space<vmem>>, vector<16x128xf32>
    %c0_24 = arith.constant 0 : index
    %c0_25 = arith.constant 0 : index
    %58 = vector.load %arg6[%c0_24, %c0_25] : memref<16x128xf32, #tpu.memory_space<vmem>>, vector<16x128xf32>
    %c0_26 = arith.constant 0 : index
    %c0_27 = arith.constant 0 : index
    %59 = vector.load %arg7[%c0_26, %c0_27] : memref<16x128xf32, #tpu.memory_space<vmem>>, vector<16x128xf32>
    %cst_28 = arith.constant 0.000000e+00 : f32
    %60 = vector.broadcast %cst_28 : f32 to vector<16x128xf32>
    %cst_29 = arith.constant 0.000000e+00 : f32
    %61 = vector.broadcast %cst_29 : f32 to vector<16x128xf32>
    %c0_i32_30 = arith.constant 0 : i32
    %c16_i32_31 = arith.constant 16 : i32
    %62 = arith.muli %c0_i32_30, %c16_i32_31 : i32
    %63 = tpu.assume_multiple %62, 16 : i32
    %cst_32 = arith.constant 0.000000e+00 : f32
    %64 = vector.broadcast %cst_32 : f32 to vector<1x128xf32>
    %65 = vector.extract_strided_slice %60 {offsets = [0, 0], sizes = [15, 128], strides = [1, 1]} : vector<16x128xf32> to vector<15x128xf32>
    %66 = tpu.concatenate %64, %65 in 0 : vector<1x128xf32>, vector<15x128xf32> -> vector<16x128xf32>
    %cst_33 = arith.constant 0.000000e+00 : f32
    %67 = vector.broadcast %cst_33 : f32 to vector<1x128xf32>
    %68 = vector.extract_strided_slice %60 {offsets = [1, 0], sizes = [15, 128], strides = [1, 1]} : vector<16x128xf32> to vector<15x128xf32>
    %69 = tpu.concatenate %68, %67 in 0 : vector<15x128xf32>, vector<1x128xf32> -> vector<16x128xf32>
    %70 = tpu.concatenate %66, %60, %69 in 1 : vector<16x128xf32>, vector<16x128xf32>, vector<16x128xf32> -> vector<16x384xf32>
    %71 = arith.index_cast %63 : i32 to index
    %c0_34 = arith.constant 0 : index
    %72 = vector.load %arg9[%71, %c0_34] : memref<128x512xf32, #tpu.memory_space<vmem>>, vector<16x512xf32>
    %c0_35 = arith.constant 0 : index
    %c0_36 = arith.constant 0 : index
    %73 = vector.load %arg4[%c0_35, %c0_36] : memref<384x512xf32, #tpu.memory_space<vmem>>, vector<384x512xf32>
    %cst_37 = arith.constant dense<0.000000e+00> : vector<16x512xf32>
    %74 = tpu.matmul %70, %73, %cst_37 {dimension_numbers = #tpu.dot_dimension_numbers<[1], [0], [0], [1], [0, 0, 1, 1], [], []>} : vector<16x384xf32>, vector<384x512xf32>, vector<16x512xf32> -> vector<16x512xf32>
    %75 = arith.addf %72, %74 : vector<16x512xf32>
    %76 = vector.extract_strided_slice %75 {offsets = [0, 0], sizes = [16, 128], strides = [1, 1]} : vector<16x512xf32> to vector<16x128xf32>
    %77 = vector.extract_strided_slice %75 {offsets = [0, 128], sizes = [16, 128], strides = [1, 1]} : vector<16x512xf32> to vector<16x128xf32>
    %78 = vector.extract_strided_slice %75 {offsets = [0, 256], sizes = [16, 128], strides = [1, 1]} : vector<16x512xf32> to vector<16x128xf32>
    %79 = vector.extract_strided_slice %75 {offsets = [0, 384], sizes = [16, 128], strides = [1, 1]} : vector<16x512xf32> to vector<16x128xf32>
    %80 = arith.mulf %57, %61 : vector<16x128xf32>
    %81 = arith.addf %76, %80 : vector<16x128xf32>
    %cst_38 = arith.constant 5.000000e-01 : f32
    %82 = vector.broadcast %cst_38 : f32 to vector<16x128xf32>
    %83 = arith.mulf %82, %81 : vector<16x128xf32>
    %84 = math.tanh %83 : vector<16x128xf32>
    %cst_39 = arith.constant 5.000000e-01 : f32
    %85 = vector.broadcast %cst_39 : f32 to vector<16x128xf32>
    %86 = arith.mulf %85, %84 : vector<16x128xf32>
    %cst_40 = arith.constant 5.000000e-01 : f32
    %87 = vector.broadcast %cst_40 : f32 to vector<16x128xf32>
    %88 = arith.addf %86, %87 : vector<16x128xf32>
    %89 = arith.mulf %58, %61 : vector<16x128xf32>
    %90 = arith.addf %77, %89 : vector<16x128xf32>
    %cst_41 = arith.constant 5.000000e-01 : f32
    %91 = vector.broadcast %cst_41 : f32 to vector<16x128xf32>
    %92 = arith.mulf %91, %90 : vector<16x128xf32>
    %93 = math.tanh %92 : vector<16x128xf32>
    %cst_42 = arith.constant 5.000000e-01 : f32
    %94 = vector.broadcast %cst_42 : f32 to vector<16x128xf32>
    %95 = arith.mulf %94, %93 : vector<16x128xf32>
    %cst_43 = arith.constant 5.000000e-01 : f32
    %96 = vector.broadcast %cst_43 : f32 to vector<16x128xf32>
    %97 = arith.addf %95, %96 : vector<16x128xf32>
    %98 = arith.mulf %97, %61 : vector<16x128xf32>
    %99 = math.tanh %78 : vector<16x128xf32>
    %100 = arith.mulf %88, %99 : vector<16x128xf32>
    %101 = arith.addf %98, %100 : vector<16x128xf32>
    %102 = arith.mulf %59, %101 : vector<16x128xf32>
    %103 = arith.addf %79, %102 : vector<16x128xf32>
    %cst_44 = arith.constant 5.000000e-01 : f32
    %104 = vector.broadcast %cst_44 : f32 to vector<16x128xf32>
    %105 = arith.mulf %104, %103 : vector<16x128xf32>
    %106 = math.tanh %105 : vector<16x128xf32>
    %cst_45 = arith.constant 5.000000e-01 : f32
    %107 = vector.broadcast %cst_45 : f32 to vector<16x128xf32>
    %108 = arith.mulf %107, %106 : vector<16x128xf32>
    %cst_46 = arith.constant 5.000000e-01 : f32
    %109 = vector.broadcast %cst_46 : f32 to vector<16x128xf32>
    %110 = arith.addf %108, %109 : vector<16x128xf32>
    %111 = math.tanh %101 : vector<16x128xf32>
    %112 = arith.mulf %110, %111 : vector<16x128xf32>
    %c0_47 = arith.constant 0 : index
    %113 = arith.index_cast %63 : i32 to index
    %c0_48 = arith.constant 0 : index
    %114 = vector.load %arg8[%c0_47, %113, %c0_48] : memref<1x128x128xf32, #tpu.memory_space<vmem>>, vector<1x16x128xf32>
    %115 = vector.shape_cast %114 : vector<1x16x128xf32> to vector<16x128xf32>
    %116 = vector.shape_cast %112 : vector<16x128xf32> to vector<1x16x128xf32>
    tpu.vector_store %arg8[%c0_47, %113, %c0_48], %116 {strides = array<i32>} : memref<1x128x128xf32, #tpu.memory_space<vmem>>, vector<1x16x128xf32>,
    %c1_i32_49 = arith.constant 1 : i32
    %c16_i32_50 = arith.constant 16 : i32
    %117 = arith.muli %c1_i32_49, %c16_i32_50 : i32
    %118 = tpu.assume_multiple %117, 16 : i32
    %cst_51 = arith.constant 0.000000e+00 : f32
    %119 = vector.broadcast %cst_51 : f32 to vector<1x128xf32>
    %120 = vector.extract_strided_slice %112 {offsets = [0, 0], sizes = [15, 128], strides = [1, 1]} : vector<16x128xf32> to vector<15x128xf32>
    %121 = tpu.concatenate %119, %120 in 0 : vector<1x128xf32>, vector<15x128xf32> -> vector<16x128xf32>
    %cst_52 = arith.constant 0.000000e+00 : f32
    %122 = vector.broadcast %cst_52 : f32 to vector<1x128xf32>
    %123 = vector.extract_strided_slice %112 {offsets = [1, 0], sizes = [15, 128], strides = [1, 1]} : vector<16x128xf32> to vector<15x128xf32>
    %124 = tpu.concatenate %123, %122 in 0 : vector<15x128xf32>, vector<1x128xf32> -> vector<16x128xf32>
    %125 = tpu.concatenate %121, %112, %124 in 1 : vector<16x128xf32>, vector<16x128xf32>, vector<16x128xf32> -> vector<16x384xf32>
    %126 = arith.index_cast %118 : i32 to index
    %c0_53 = arith.constant 0 : index
    %127 = vector.load %arg9[%126, %c0_53] : memref<128x512xf32, #tpu.memory_space<vmem>>, vector<16x512xf32>
    %c0_54 = arith.constant 0 : index
    %c0_55 = arith.constant 0 : index
    %128 = vector.load %arg4[%c0_54, %c0_55] : memref<384x512xf32, #tpu.memory_space<vmem>>, vector<384x512xf32>
    %cst_56 = arith.constant dense<0.000000e+00> : vector<16x512xf32>
    %129 = tpu.matmul %125, %128, %cst_56 {dimension_numbers = #tpu.dot_dimension_numbers<[1], [0], [0], [1], [0, 0, 1, 1], [], []>} : vector<16x384xf32>, vector<384x512xf32>, vector<16x512xf32> -> vector<16x512xf32>
    %130 = arith.addf %127, %129 : vector<16x512xf32>
    %131 = vector.extract_strided_slice %130 {offsets = [0, 0], sizes = [16, 128], strides = [1, 1]} : vector<16x512xf32> to vector<16x128xf32>
    %132 = vector.extract_strided_slice %130 {offsets = [0, 128], sizes = [16, 128], strides = [1, 1]} : vector<16x512xf32> to vector<16x128xf32>
    %133 = vector.extract_strided_slice %130 {offsets = [0, 256], sizes = [16, 128], strides = [1, 1]} : vector<16x512xf32> to vector<16x128xf32>
    %134 = vector.extract_strided_slice %130 {offsets = [0, 384], sizes = [16, 128], strides = [1, 1]} : vector<16x512xf32> to vector<16x128xf32>
    %135 = arith.mulf %57, %101 : vector<16x128xf32>
    %136 = arith.addf %131, %135 : vector<16x128xf32>
    %cst_57 = arith.constant 5.000000e-01 : f32
    %137 = vector.broadcast %cst_57 : f32 to vector<16x128xf32>
    %138 = arith.mulf %137, %136 : vector<16x128xf32>
    %139 = math.tanh %138 : vector<16x128xf32>
    %cst_58 = arith.constant 5.000000e-01 : f32
    %140 = vector.broadcast %cst_58 : f32 to vector<16x128xf32>
    %141 = arith.mulf %140, %139 : vector<16x128xf32>
    %cst_59 = arith.constant 5.000000e-01 : f32
    %142 = vector.broadcast %cst_59 : f32 to vector<16x128xf32>
    %143 = arith.addf %141, %142 : vector<16x128xf32>
    %144 = arith.mulf %58, %101 : vector<16x128xf32>
    %145 = arith.addf %132, %144 : vector<16x128xf32>
    %cst_60 = arith.constant 5.000000e-01 : f32
    %146 = vector.broadcast %cst_60 : f32 to vector<16x128xf32>
    %147 = arith.mulf %146, %145 : vector<16x128xf32>
    %148 = math.tanh %147 : vector<16x128xf32>
    %cst_61 = arith.constant 5.000000e-01 : f32
    %149 = vector.broadcast %cst_61 : f32 to vector<16x128xf32>
    %150 = arith.mulf %149, %148 : vector<16x128xf32>
    %cst_62 = arith.constant 5.000000e-01 : f32
    %151 = vector.broadcast %cst_62 : f32 to vector<16x128xf32>
    %152 = arith.addf %150, %151 : vector<16x128xf32>
    %153 = arith.mulf %152, %101 : vector<16x128xf32>
    %154 = math.tanh %133 : vector<16x128xf32>
    %155 = arith.mulf %143, %154 : vector<16x128xf32>
    %156 = arith.addf %153, %155 : vector<16x128xf32>
    %157 = arith.mulf %59, %156 : vector<16x128xf32>
    %158 = arith.addf %134, %157 : vector<16x128xf32>
    %cst_63 = arith.constant 5.000000e-01 : f32
    %159 = vector.broadcast %cst_63 : f32 to vector<16x128xf32>
    %160 = arith.mulf %159, %158 : vector<16x128xf32>
    %161 = math.tanh %160 : vector<16x128xf32>
    %cst_64 = arith.constant 5.000000e-01 : f32
    %162 = vector.broadcast %cst_64 : f32 to vector<16x128xf32>
    %163 = arith.mulf %162, %161 : vector<16x128xf32>
    %cst_65 = arith.constant 5.000000e-01 : f32
    %164 = vector.broadcast %cst_65 : f32 to vector<16x128xf32>
    %165 = arith.addf %163, %164 : vector<16x128xf32>
    %166 = math.tanh %156 : vector<16x128xf32>
    %167 = arith.mulf %165, %166 : vector<16x128xf32>
    %c0_66 = arith.constant 0 : index
    %168 = arith.index_cast %118 : i32 to index
    %c0_67 = arith.constant 0 : index
    %169 = vector.load %arg8[%c0_66, %168, %c0_67] : memref<1x128x128xf32, #tpu.memory_space<vmem>>, vector<1x16x128xf32>
    %170 = vector.shape_cast %169 : vector<1x16x128xf32> to vector<16x128xf32>
    %171 = vector.shape_cast %167 : vector<16x128xf32> to vector<1x16x128xf32>
    tpu.vector_store %arg8[%c0_66, %168, %c0_67], %171 {strides = array<i32>} : memref<1x128x128xf32, #tpu.memory_space<vmem>>, vector<1x16x128xf32>,
    %c2_i32 = arith.constant 2 : i32
    %c16_i32_68 = arith.constant 16 : i32
    %172 = arith.muli %c2_i32, %c16_i32_68 : i32
    %173 = tpu.assume_multiple %172, 16 : i32
    %cst_69 = arith.constant 0.000000e+00 : f32
    %174 = vector.broadcast %cst_69 : f32 to vector<1x128xf32>
    %175 = vector.extract_strided_slice %167 {offsets = [0, 0], sizes = [15, 128], strides = [1, 1]} : vector<16x128xf32> to vector<15x128xf32>
    %176 = tpu.concatenate %174, %175 in 0 : vector<1x128xf32>, vector<15x128xf32> -> vector<16x128xf32>
    %cst_70 = arith.constant 0.000000e+00 : f32
    %177 = vector.broadcast %cst_70 : f32 to vector<1x128xf32>
    %178 = vector.extract_strided_slice %167 {offsets = [1, 0], sizes = [15, 128], strides = [1, 1]} : vector<16x128xf32> to vector<15x128xf32>
    %179 = tpu.concatenate %178, %177 in 0 : vector<15x128xf32>, vector<1x128xf32> -> vector<16x128xf32>
    %180 = tpu.concatenate %176, %167, %179 in 1 : vector<16x128xf32>, vector<16x128xf32>, vector<16x128xf32> -> vector<16x384xf32>
    %181 = arith.index_cast %173 : i32 to index
    %c0_71 = arith.constant 0 : index
    %182 = vector.load %arg9[%181, %c0_71] : memref<128x512xf32, #tpu.memory_space<vmem>>, vector<16x512xf32>
    %c0_72 = arith.constant 0 : index
    %c0_73 = arith.constant 0 : index
    %183 = vector.load %arg4[%c0_72, %c0_73] : memref<384x512xf32, #tpu.memory_space<vmem>>, vector<384x512xf32>
    %cst_74 = arith.constant dense<0.000000e+00> : vector<16x512xf32>
    %184 = tpu.matmul %180, %183, %cst_74 {dimension_numbers = #tpu.dot_dimension_numbers<[1], [0], [0], [1], [0, 0, 1, 1], [], []>} : vector<16x384xf32>, vector<384x512xf32>, vector<16x512xf32> -> vector<16x512xf32>
    %185 = arith.addf %182, %184 : vector<16x512xf32>
    %186 = vector.extract_strided_slice %185 {offsets = [0, 0], sizes = [16, 128], strides = [1, 1]} : vector<16x512xf32> to vector<16x128xf32>
    %187 = vector.extract_strided_slice %185 {offsets = [0, 128], sizes = [16, 128], strides = [1, 1]} : vector<16x512xf32> to vector<16x128xf32>
    %188 = vector.extract_strided_slice %185 {offsets = [0, 256], sizes = [16, 128], strides = [1, 1]} : vector<16x512xf32> to vector<16x128xf32>
    %189 = vector.extract_strided_slice %185 {offsets = [0, 384], sizes = [16, 128], strides = [1, 1]} : vector<16x512xf32> to vector<16x128xf32>
    %190 = arith.mulf %57, %156 : vector<16x128xf32>
    %191 = arith.addf %186, %190 : vector<16x128xf32>
    %cst_75 = arith.constant 5.000000e-01 : f32
    %192 = vector.broadcast %cst_75 : f32 to vector<16x128xf32>
    %193 = arith.mulf %192, %191 : vector<16x128xf32>
    %194 = math.tanh %193 : vector<16x128xf32>
    %cst_76 = arith.constant 5.000000e-01 : f32
    %195 = vector.broadcast %cst_76 : f32 to vector<16x128xf32>
    %196 = arith.mulf %195, %194 : vector<16x128xf32>
    %cst_77 = arith.constant 5.000000e-01 : f32
    %197 = vector.broadcast %cst_77 : f32 to vector<16x128xf32>
    %198 = arith.addf %196, %197 : vector<16x128xf32>
    %199 = arith.mulf %58, %156 : vector<16x128xf32>
    %200 = arith.addf %187, %199 : vector<16x128xf32>
    %cst_78 = arith.constant 5.000000e-01 : f32
    %201 = vector.broadcast %cst_78 : f32 to vector<16x128xf32>
    %202 = arith.mulf %201, %200 : vector<16x128xf32>
    %203 = math.tanh %202 : vector<16x128xf32>
    %cst_79 = arith.constant 5.000000e-01 : f32
    %204 = vector.broadcast %cst_79 : f32 to vector<16x128xf32>
    %205 = arith.mulf %204, %203 : vector<16x128xf32>
    %cst_80 = arith.constant 5.000000e-01 : f32
    %206 = vector.broadcast %cst_80 : f32 to vector<16x128xf32>
    %207 = arith.addf %205, %206 : vector<16x128xf32>
    %208 = arith.mulf %207, %156 : vector<16x128xf32>
    %209 = math.tanh %188 : vector<16x128xf32>
    %210 = arith.mulf %198, %209 : vector<16x128xf32>
    %211 = arith.addf %208, %210 : vector<16x128xf32>
    %212 = arith.mulf %59, %211 : vector<16x128xf32>
    %213 = arith.addf %189, %212 : vector<16x128xf32>
    %cst_81 = arith.constant 5.000000e-01 : f32
    %214 = vector.broadcast %cst_81 : f32 to vector<16x128xf32>
    %215 = arith.mulf %214, %213 : vector<16x128xf32>
    %216 = math.tanh %215 : vector<16x128xf32>
    %cst_82 = arith.constant 5.000000e-01 : f32
    %217 = vector.broadcast %cst_82 : f32 to vector<16x128xf32>
    %218 = arith.mulf %217, %216 : vector<16x128xf32>
    %cst_83 = arith.constant 5.000000e-01 : f32
    %219 = vector.broadcast %cst_83 : f32 to vector<16x128xf32>
    %220 = arith.addf %218, %219 : vector<16x128xf32>
    %221 = math.tanh %211 : vector<16x128xf32>
    %222 = arith.mulf %220, %221 : vector<16x128xf32>
    %c0_84 = arith.constant 0 : index
    %223 = arith.index_cast %173 : i32 to index
    %c0_85 = arith.constant 0 : index
    %224 = vector.load %arg8[%c0_84, %223, %c0_85] : memref<1x128x128xf32, #tpu.memory_space<vmem>>, vector<1x16x128xf32>
    %225 = vector.shape_cast %224 : vector<1x16x128xf32> to vector<16x128xf32>
    %226 = vector.shape_cast %222 : vector<16x128xf32> to vector<1x16x128xf32>
    tpu.vector_store %arg8[%c0_84, %223, %c0_85], %226 {strides = array<i32>} : memref<1x128x128xf32, #tpu.memory_space<vmem>>, vector<1x16x128xf32>,
    %c3_i32 = arith.constant 3 : i32
    %c16_i32_86 = arith.constant 16 : i32
    %227 = arith.muli %c3_i32, %c16_i32_86 : i32
    %228 = tpu.assume_multiple %227, 16 : i32
    %cst_87 = arith.constant 0.000000e+00 : f32
    %229 = vector.broadcast %cst_87 : f32 to vector<1x128xf32>
    %230 = vector.extract_strided_slice %222 {offsets = [0, 0], sizes = [15, 128], strides = [1, 1]} : vector<16x128xf32> to vector<15x128xf32>
    %231 = tpu.concatenate %229, %230 in 0 : vector<1x128xf32>, vector<15x128xf32> -> vector<16x128xf32>
    %cst_88 = arith.constant 0.000000e+00 : f32
    %232 = vector.broadcast %cst_88 : f32 to vector<1x128xf32>
    %233 = vector.extract_strided_slice %222 {offsets = [1, 0], sizes = [15, 128], strides = [1, 1]} : vector<16x128xf32> to vector<15x128xf32>
    %234 = tpu.concatenate %233, %232 in 0 : vector<15x128xf32>, vector<1x128xf32> -> vector<16x128xf32>
    %235 = tpu.concatenate %231, %222, %234 in 1 : vector<16x128xf32>, vector<16x128xf32>, vector<16x128xf32> -> vector<16x384xf32>
    %236 = arith.index_cast %228 : i32 to index
    %c0_89 = arith.constant 0 : index
    %237 = vector.load %arg9[%236, %c0_89] : memref<128x512xf32, #tpu.memory_space<vmem>>, vector<16x512xf32>
    %c0_90 = arith.constant 0 : index
    %c0_91 = arith.constant 0 : index
    %238 = vector.load %arg4[%c0_90, %c0_91] : memref<384x512xf32, #tpu.memory_space<vmem>>, vector<384x512xf32>
    %cst_92 = arith.constant dense<0.000000e+00> : vector<16x512xf32>
    %239 = tpu.matmul %235, %238, %cst_92 {dimension_numbers = #tpu.dot_dimension_numbers<[1], [0], [0], [1], [0, 0, 1, 1], [], []>} : vector<16x384xf32>, vector<384x512xf32>, vector<16x512xf32> -> vector<16x512xf32>
    %240 = arith.addf %237, %239 : vector<16x512xf32>
    %241 = vector.extract_strided_slice %240 {offsets = [0, 0], sizes = [16, 128], strides = [1, 1]} : vector<16x512xf32> to vector<16x128xf32>
    %242 = vector.extract_strided_slice %240 {offsets = [0, 128], sizes = [16, 128], strides = [1, 1]} : vector<16x512xf32> to vector<16x128xf32>
    %243 = vector.extract_strided_slice %240 {offsets = [0, 256], sizes = [16, 128], strides = [1, 1]} : vector<16x512xf32> to vector<16x128xf32>
    %244 = vector.extract_strided_slice %240 {offsets = [0, 384], sizes = [16, 128], strides = [1, 1]} : vector<16x512xf32> to vector<16x128xf32>
    %245 = arith.mulf %57, %211 : vector<16x128xf32>
    %246 = arith.addf %241, %245 : vector<16x128xf32>
    %cst_93 = arith.constant 5.000000e-01 : f32
    %247 = vector.broadcast %cst_93 : f32 to vector<16x128xf32>
    %248 = arith.mulf %247, %246 : vector<16x128xf32>
    %249 = math.tanh %248 : vector<16x128xf32>
    %cst_94 = arith.constant 5.000000e-01 : f32
    %250 = vector.broadcast %cst_94 : f32 to vector<16x128xf32>
    %251 = arith.mulf %250, %249 : vector<16x128xf32>
    %cst_95 = arith.constant 5.000000e-01 : f32
    %252 = vector.broadcast %cst_95 : f32 to vector<16x128xf32>
    %253 = arith.addf %251, %252 : vector<16x128xf32>
    %254 = arith.mulf %58, %211 : vector<16x128xf32>
    %255 = arith.addf %242, %254 : vector<16x128xf32>
    %cst_96 = arith.constant 5.000000e-01 : f32
    %256 = vector.broadcast %cst_96 : f32 to vector<16x128xf32>
    %257 = arith.mulf %256, %255 : vector<16x128xf32>
    %258 = math.tanh %257 : vector<16x128xf32>
    %cst_97 = arith.constant 5.000000e-01 : f32
    %259 = vector.broadcast %cst_97 : f32 to vector<16x128xf32>
    %260 = arith.mulf %259, %258 : vector<16x128xf32>
    %cst_98 = arith.constant 5.000000e-01 : f32
    %261 = vector.broadcast %cst_98 : f32 to vector<16x128xf32>
    %262 = arith.addf %260, %261 : vector<16x128xf32>
    %263 = arith.mulf %262, %211 : vector<16x128xf32>
    %264 = math.tanh %243 : vector<16x128xf32>
    %265 = arith.mulf %253, %264 : vector<16x128xf32>
    %266 = arith.addf %263, %265 : vector<16x128xf32>
    %267 = arith.mulf %59, %266 : vector<16x128xf32>
    %268 = arith.addf %244, %267 : vector<16x128xf32>
    %cst_99 = arith.constant 5.000000e-01 : f32
    %269 = vector.broadcast %cst_99 : f32 to vector<16x128xf32>
    %270 = arith.mulf %269, %268 : vector<16x128xf32>
    %271 = math.tanh %270 : vector<16x128xf32>
    %cst_100 = arith.constant 5.000000e-01 : f32
    %272 = vector.broadcast %cst_100 : f32 to vector<16x128xf32>
    %273 = arith.mulf %272, %271 : vector<16x128xf32>
    %cst_101 = arith.constant 5.000000e-01 : f32
    %274 = vector.broadcast %cst_101 : f32 to vector<16x128xf32>
    %275 = arith.addf %273, %274 : vector<16x128xf32>
    %276 = math.tanh %266 : vector<16x128xf32>
    %277 = arith.mulf %275, %276 : vector<16x128xf32>
    %c0_102 = arith.constant 0 : index
    %278 = arith.index_cast %228 : i32 to index
    %c0_103 = arith.constant 0 : index
    %279 = vector.load %arg8[%c0_102, %278, %c0_103] : memref<1x128x128xf32, #tpu.memory_space<vmem>>, vector<1x16x128xf32>
    %280 = vector.shape_cast %279 : vector<1x16x128xf32> to vector<16x128xf32>
    %281 = vector.shape_cast %277 : vector<16x128xf32> to vector<1x16x128xf32>
    tpu.vector_store %arg8[%c0_102, %278, %c0_103], %281 {strides = array<i32>} : memref<1x128x128xf32, #tpu.memory_space<vmem>>, vector<1x16x128xf32>,
    %c4_i32 = arith.constant 4 : i32
    %c16_i32_104 = arith.constant 16 : i32
    %282 = arith.muli %c4_i32, %c16_i32_104 : i32
    %283 = tpu.assume_multiple %282, 16 : i32
    %cst_105 = arith.constant 0.000000e+00 : f32
    %284 = vector.broadcast %cst_105 : f32 to vector<1x128xf32>
    %285 = vector.extract_strided_slice %277 {offsets = [0, 0], sizes = [15, 128], strides = [1, 1]} : vector<16x128xf32> to vector<15x128xf32>
    %286 = tpu.concatenate %284, %285 in 0 : vector<1x128xf32>, vector<15x128xf32> -> vector<16x128xf32>
    %cst_106 = arith.constant 0.000000e+00 : f32
    %287 = vector.broadcast %cst_106 : f32 to vector<1x128xf32>
    %288 = vector.extract_strided_slice %277 {offsets = [1, 0], sizes = [15, 128], strides = [1, 1]} : vector<16x128xf32> to vector<15x128xf32>
    %289 = tpu.concatenate %288, %287 in 0 : vector<15x128xf32>, vector<1x128xf32> -> vector<16x128xf32>
    %290 = tpu.concatenate %286, %277, %289 in 1 : vector<16x128xf32>, vector<16x128xf32>, vector<16x128xf32> -> vector<16x384xf32>
    %291 = arith.index_cast %283 : i32 to index
    %c0_107 = arith.constant 0 : index
    %292 = vector.load %arg9[%291, %c0_107] : memref<128x512xf32, #tpu.memory_space<vmem>>, vector<16x512xf32>
    %c0_108 = arith.constant 0 : index
    %c0_109 = arith.constant 0 : index
    %293 = vector.load %arg4[%c0_108, %c0_109] : memref<384x512xf32, #tpu.memory_space<vmem>>, vector<384x512xf32>
    %cst_110 = arith.constant dense<0.000000e+00> : vector<16x512xf32>
    %294 = tpu.matmul %290, %293, %cst_110 {dimension_numbers = #tpu.dot_dimension_numbers<[1], [0], [0], [1], [0, 0, 1, 1], [], []>} : vector<16x384xf32>, vector<384x512xf32>, vector<16x512xf32> -> vector<16x512xf32>
    %295 = arith.addf %292, %294 : vector<16x512xf32>
    %296 = vector.extract_strided_slice %295 {offsets = [0, 0], sizes = [16, 128], strides = [1, 1]} : vector<16x512xf32> to vector<16x128xf32>
    %297 = vector.extract_strided_slice %295 {offsets = [0, 128], sizes = [16, 128], strides = [1, 1]} : vector<16x512xf32> to vector<16x128xf32>
    %298 = vector.extract_strided_slice %295 {offsets = [0, 256], sizes = [16, 128], strides = [1, 1]} : vector<16x512xf32> to vector<16x128xf32>
    %299 = vector.extract_strided_slice %295 {offsets = [0, 384], sizes = [16, 128], strides = [1, 1]} : vector<16x512xf32> to vector<16x128xf32>
    %300 = arith.mulf %57, %266 : vector<16x128xf32>
    %301 = arith.addf %296, %300 : vector<16x128xf32>
    %cst_111 = arith.constant 5.000000e-01 : f32
    %302 = vector.broadcast %cst_111 : f32 to vector<16x128xf32>
    %303 = arith.mulf %302, %301 : vector<16x128xf32>
    %304 = math.tanh %303 : vector<16x128xf32>
    %cst_112 = arith.constant 5.000000e-01 : f32
    %305 = vector.broadcast %cst_112 : f32 to vector<16x128xf32>
    %306 = arith.mulf %305, %304 : vector<16x128xf32>
    %cst_113 = arith.constant 5.000000e-01 : f32
    %307 = vector.broadcast %cst_113 : f32 to vector<16x128xf32>
    %308 = arith.addf %306, %307 : vector<16x128xf32>
    %309 = arith.mulf %58, %266 : vector<16x128xf32>
    %310 = arith.addf %297, %309 : vector<16x128xf32>
    %cst_114 = arith.constant 5.000000e-01 : f32
    %311 = vector.broadcast %cst_114 : f32 to vector<16x128xf32>
    %312 = arith.mulf %311, %310 : vector<16x128xf32>
    %313 = math.tanh %312 : vector<16x128xf32>
    %cst_115 = arith.constant 5.000000e-01 : f32
    %314 = vector.broadcast %cst_115 : f32 to vector<16x128xf32>
    %315 = arith.mulf %314, %313 : vector<16x128xf32>
    %cst_116 = arith.constant 5.000000e-01 : f32
    %316 = vector.broadcast %cst_116 : f32 to vector<16x128xf32>
    %317 = arith.addf %315, %316 : vector<16x128xf32>
    %318 = arith.mulf %317, %266 : vector<16x128xf32>
    %319 = math.tanh %298 : vector<16x128xf32>
    %320 = arith.mulf %308, %319 : vector<16x128xf32>
    %321 = arith.addf %318, %320 : vector<16x128xf32>
    %322 = arith.mulf %59, %321 : vector<16x128xf32>
    %323 = arith.addf %299, %322 : vector<16x128xf32>
    %cst_117 = arith.constant 5.000000e-01 : f32
    %324 = vector.broadcast %cst_117 : f32 to vector<16x128xf32>
    %325 = arith.mulf %324, %323 : vector<16x128xf32>
    %326 = math.tanh %325 : vector<16x128xf32>
    %cst_118 = arith.constant 5.000000e-01 : f32
    %327 = vector.broadcast %cst_118 : f32 to vector<16x128xf32>
    %328 = arith.mulf %327, %326 : vector<16x128xf32>
    %cst_119 = arith.constant 5.000000e-01 : f32
    %329 = vector.broadcast %cst_119 : f32 to vector<16x128xf32>
    %330 = arith.addf %328, %329 : vector<16x128xf32>
    %331 = math.tanh %321 : vector<16x128xf32>
    %332 = arith.mulf %330, %331 : vector<16x128xf32>
    %c0_120 = arith.constant 0 : index
    %333 = arith.index_cast %283 : i32 to index
    %c0_121 = arith.constant 0 : index
    %334 = vector.load %arg8[%c0_120, %333, %c0_121] : memref<1x128x128xf32, #tpu.memory_space<vmem>>, vector<1x16x128xf32>
    %335 = vector.shape_cast %334 : vector<1x16x128xf32> to vector<16x128xf32>
    %336 = vector.shape_cast %332 : vector<16x128xf32> to vector<1x16x128xf32>
    tpu.vector_store %arg8[%c0_120, %333, %c0_121], %336 {strides = array<i32>} : memref<1x128x128xf32, #tpu.memory_space<vmem>>, vector<1x16x128xf32>,
    %c5_i32 = arith.constant 5 : i32
    %c16_i32_122 = arith.constant 16 : i32
    %337 = arith.muli %c5_i32, %c16_i32_122 : i32
    %338 = tpu.assume_multiple %337, 16 : i32
    %cst_123 = arith.constant 0.000000e+00 : f32
    %339 = vector.broadcast %cst_123 : f32 to vector<1x128xf32>
    %340 = vector.extract_strided_slice %332 {offsets = [0, 0], sizes = [15, 128], strides = [1, 1]} : vector<16x128xf32> to vector<15x128xf32>
    %341 = tpu.concatenate %339, %340 in 0 : vector<1x128xf32>, vector<15x128xf32> -> vector<16x128xf32>
    %cst_124 = arith.constant 0.000000e+00 : f32
    %342 = vector.broadcast %cst_124 : f32 to vector<1x128xf32>
    %343 = vector.extract_strided_slice %332 {offsets = [1, 0], sizes = [15, 128], strides = [1, 1]} : vector<16x128xf32> to vector<15x128xf32>
    %344 = tpu.concatenate %343, %342 in 0 : vector<15x128xf32>, vector<1x128xf32> -> vector<16x128xf32>
    %345 = tpu.concatenate %341, %332, %344 in 1 : vector<16x128xf32>, vector<16x128xf32>, vector<16x128xf32> -> vector<16x384xf32>
    %346 = arith.index_cast %338 : i32 to index
    %c0_125 = arith.constant 0 : index
    %347 = vector.load %arg9[%346, %c0_125] : memref<128x512xf32, #tpu.memory_space<vmem>>, vector<16x512xf32>
    %c0_126 = arith.constant 0 : index
    %c0_127 = arith.constant 0 : index
    %348 = vector.load %arg4[%c0_126, %c0_127] : memref<384x512xf32, #tpu.memory_space<vmem>>, vector<384x512xf32>
    %cst_128 = arith.constant dense<0.000000e+00> : vector<16x512xf32>
    %349 = tpu.matmul %345, %348, %cst_128 {dimension_numbers = #tpu.dot_dimension_numbers<[1], [0], [0], [1], [0, 0, 1, 1], [], []>} : vector<16x384xf32>, vector<384x512xf32>, vector<16x512xf32> -> vector<16x512xf32>
    %350 = arith.addf %347, %349 : vector<16x512xf32>
    %351 = vector.extract_strided_slice %350 {offsets = [0, 0], sizes = [16, 128], strides = [1, 1]} : vector<16x512xf32> to vector<16x128xf32>
    %352 = vector.extract_strided_slice %350 {offsets = [0, 128], sizes = [16, 128], strides = [1, 1]} : vector<16x512xf32> to vector<16x128xf32>
    %353 = vector.extract_strided_slice %350 {offsets = [0, 256], sizes = [16, 128], strides = [1, 1]} : vector<16x512xf32> to vector<16x128xf32>
    %354 = vector.extract_strided_slice %350 {offsets = [0, 384], sizes = [16, 128], strides = [1, 1]} : vector<16x512xf32> to vector<16x128xf32>
    %355 = arith.mulf %57, %321 : vector<16x128xf32>
    %356 = arith.addf %351, %355 : vector<16x128xf32>
    %cst_129 = arith.constant 5.000000e-01 : f32
    %357 = vector.broadcast %cst_129 : f32 to vector<16x128xf32>
    %358 = arith.mulf %357, %356 : vector<16x128xf32>
    %359 = math.tanh %358 : vector<16x128xf32>
    %cst_130 = arith.constant 5.000000e-01 : f32
    %360 = vector.broadcast %cst_130 : f32 to vector<16x128xf32>
    %361 = arith.mulf %360, %359 : vector<16x128xf32>
    %cst_131 = arith.constant 5.000000e-01 : f32
    %362 = vector.broadcast %cst_131 : f32 to vector<16x128xf32>
    %363 = arith.addf %361, %362 : vector<16x128xf32>
    %364 = arith.mulf %58, %321 : vector<16x128xf32>
    %365 = arith.addf %352, %364 : vector<16x128xf32>
    %cst_132 = arith.constant 5.000000e-01 : f32
    %366 = vector.broadcast %cst_132 : f32 to vector<16x128xf32>
    %367 = arith.mulf %366, %365 : vector<16x128xf32>
    %368 = math.tanh %367 : vector<16x128xf32>
    %cst_133 = arith.constant 5.000000e-01 : f32
    %369 = vector.broadcast %cst_133 : f32 to vector<16x128xf32>
    %370 = arith.mulf %369, %368 : vector<16x128xf32>
    %cst_134 = arith.constant 5.000000e-01 : f32
    %371 = vector.broadcast %cst_134 : f32 to vector<16x128xf32>
    %372 = arith.addf %370, %371 : vector<16x128xf32>
    %373 = arith.mulf %372, %321 : vector<16x128xf32>
    %374 = math.tanh %353 : vector<16x128xf32>
    %375 = arith.mulf %363, %374 : vector<16x128xf32>
    %376 = arith.addf %373, %375 : vector<16x128xf32>
    %377 = arith.mulf %59, %376 : vector<16x128xf32>
    %378 = arith.addf %354, %377 : vector<16x128xf32>
    %cst_135 = arith.constant 5.000000e-01 : f32
    %379 = vector.broadcast %cst_135 : f32 to vector<16x128xf32>
    %380 = arith.mulf %379, %378 : vector<16x128xf32>
    %381 = math.tanh %380 : vector<16x128xf32>
    %cst_136 = arith.constant 5.000000e-01 : f32
    %382 = vector.broadcast %cst_136 : f32 to vector<16x128xf32>
    %383 = arith.mulf %382, %381 : vector<16x128xf32>
    %cst_137 = arith.constant 5.000000e-01 : f32
    %384 = vector.broadcast %cst_137 : f32 to vector<16x128xf32>
    %385 = arith.addf %383, %384 : vector<16x128xf32>
    %386 = math.tanh %376 : vector<16x128xf32>
    %387 = arith.mulf %385, %386 : vector<16x128xf32>
    %c0_138 = arith.constant 0 : index
    %388 = arith.index_cast %338 : i32 to index
    %c0_139 = arith.constant 0 : index
    %389 = vector.load %arg8[%c0_138, %388, %c0_139] : memref<1x128x128xf32, #tpu.memory_space<vmem>>, vector<1x16x128xf32>
    %390 = vector.shape_cast %389 : vector<1x16x128xf32> to vector<16x128xf32>
    %391 = vector.shape_cast %387 : vector<16x128xf32> to vector<1x16x128xf32>
    tpu.vector_store %arg8[%c0_138, %388, %c0_139], %391 {strides = array<i32>} : memref<1x128x128xf32, #tpu.memory_space<vmem>>, vector<1x16x128xf32>,
    %c6_i32 = arith.constant 6 : i32
    %c16_i32_140 = arith.constant 16 : i32
    %392 = arith.muli %c6_i32, %c16_i32_140 : i32
    %393 = tpu.assume_multiple %392, 16 : i32
    %cst_141 = arith.constant 0.000000e+00 : f32
    %394 = vector.broadcast %cst_141 : f32 to vector<1x128xf32>
    %395 = vector.extract_strided_slice %387 {offsets = [0, 0], sizes = [15, 128], strides = [1, 1]} : vector<16x128xf32> to vector<15x128xf32>
    %396 = tpu.concatenate %394, %395 in 0 : vector<1x128xf32>, vector<15x128xf32> -> vector<16x128xf32>
    %cst_142 = arith.constant 0.000000e+00 : f32
    %397 = vector.broadcast %cst_142 : f32 to vector<1x128xf32>
    %398 = vector.extract_strided_slice %387 {offsets = [1, 0], sizes = [15, 128], strides = [1, 1]} : vector<16x128xf32> to vector<15x128xf32>
    %399 = tpu.concatenate %398, %397 in 0 : vector<15x128xf32>, vector<1x128xf32> -> vector<16x128xf32>
    %400 = tpu.concatenate %396, %387, %399 in 1 : vector<16x128xf32>, vector<16x128xf32>, vector<16x128xf32> -> vector<16x384xf32>
    %401 = arith.index_cast %393 : i32 to index
    %c0_143 = arith.constant 0 : index
    %402 = vector.load %arg9[%401, %c0_143] : memref<128x512xf32, #tpu.memory_space<vmem>>, vector<16x512xf32>
    %c0_144 = arith.constant 0 : index
    %c0_145 = arith.constant 0 : index
    %403 = vector.load %arg4[%c0_144, %c0_145] : memref<384x512xf32, #tpu.memory_space<vmem>>, vector<384x512xf32>
    %cst_146 = arith.constant dense<0.000000e+00> : vector<16x512xf32>
    %404 = tpu.matmul %400, %403, %cst_146 {dimension_numbers = #tpu.dot_dimension_numbers<[1], [0], [0], [1], [0, 0, 1, 1], [], []>} : vector<16x384xf32>, vector<384x512xf32>, vector<16x512xf32> -> vector<16x512xf32>
    %405 = arith.addf %402, %404 : vector<16x512xf32>
    %406 = vector.extract_strided_slice %405 {offsets = [0, 0], sizes = [16, 128], strides = [1, 1]} : vector<16x512xf32> to vector<16x128xf32>
    %407 = vector.extract_strided_slice %405 {offsets = [0, 128], sizes = [16, 128], strides = [1, 1]} : vector<16x512xf32> to vector<16x128xf32>
    %408 = vector.extract_strided_slice %405 {offsets = [0, 256], sizes = [16, 128], strides = [1, 1]} : vector<16x512xf32> to vector<16x128xf32>
    %409 = vector.extract_strided_slice %405 {offsets = [0, 384], sizes = [16, 128], strides = [1, 1]} : vector<16x512xf32> to vector<16x128xf32>
    %410 = arith.mulf %57, %376 : vector<16x128xf32>
    %411 = arith.addf %406, %410 : vector<16x128xf32>
    %cst_147 = arith.constant 5.000000e-01 : f32
    %412 = vector.broadcast %cst_147 : f32 to vector<16x128xf32>
    %413 = arith.mulf %412, %411 : vector<16x128xf32>
    %414 = math.tanh %413 : vector<16x128xf32>
    %cst_148 = arith.constant 5.000000e-01 : f32
    %415 = vector.broadcast %cst_148 : f32 to vector<16x128xf32>
    %416 = arith.mulf %415, %414 : vector<16x128xf32>
    %cst_149 = arith.constant 5.000000e-01 : f32
    %417 = vector.broadcast %cst_149 : f32 to vector<16x128xf32>
    %418 = arith.addf %416, %417 : vector<16x128xf32>
    %419 = arith.mulf %58, %376 : vector<16x128xf32>
    %420 = arith.addf %407, %419 : vector<16x128xf32>
    %cst_150 = arith.constant 5.000000e-01 : f32
    %421 = vector.broadcast %cst_150 : f32 to vector<16x128xf32>
    %422 = arith.mulf %421, %420 : vector<16x128xf32>
    %423 = math.tanh %422 : vector<16x128xf32>
    %cst_151 = arith.constant 5.000000e-01 : f32
    %424 = vector.broadcast %cst_151 : f32 to vector<16x128xf32>
    %425 = arith.mulf %424, %423 : vector<16x128xf32>
    %cst_152 = arith.constant 5.000000e-01 : f32
    %426 = vector.broadcast %cst_152 : f32 to vector<16x128xf32>
    %427 = arith.addf %425, %426 : vector<16x128xf32>
    %428 = arith.mulf %427, %376 : vector<16x128xf32>
    %429 = math.tanh %408 : vector<16x128xf32>
    %430 = arith.mulf %418, %429 : vector<16x128xf32>
    %431 = arith.addf %428, %430 : vector<16x128xf32>
    %432 = arith.mulf %59, %431 : vector<16x128xf32>
    %433 = arith.addf %409, %432 : vector<16x128xf32>
    %cst_153 = arith.constant 5.000000e-01 : f32
    %434 = vector.broadcast %cst_153 : f32 to vector<16x128xf32>
    %435 = arith.mulf %434, %433 : vector<16x128xf32>
    %436 = math.tanh %435 : vector<16x128xf32>
    %cst_154 = arith.constant 5.000000e-01 : f32
    %437 = vector.broadcast %cst_154 : f32 to vector<16x128xf32>
    %438 = arith.mulf %437, %436 : vector<16x128xf32>
    %cst_155 = arith.constant 5.000000e-01 : f32
    %439 = vector.broadcast %cst_155 : f32 to vector<16x128xf32>
    %440 = arith.addf %438, %439 : vector<16x128xf32>
    %441 = math.tanh %431 : vector<16x128xf32>
    %442 = arith.mulf %440, %441 : vector<16x128xf32>
    %c0_156 = arith.constant 0 : index
    %443 = arith.index_cast %393 : i32 to index
    %c0_157 = arith.constant 0 : index
    %444 = vector.load %arg8[%c0_156, %443, %c0_157] : memref<1x128x128xf32, #tpu.memory_space<vmem>>, vector<1x16x128xf32>
    %445 = vector.shape_cast %444 : vector<1x16x128xf32> to vector<16x128xf32>
    %446 = vector.shape_cast %442 : vector<16x128xf32> to vector<1x16x128xf32>
    tpu.vector_store %arg8[%c0_156, %443, %c0_157], %446 {strides = array<i32>} : memref<1x128x128xf32, #tpu.memory_space<vmem>>, vector<1x16x128xf32>,
    %c7_i32 = arith.constant 7 : i32
    %c16_i32_158 = arith.constant 16 : i32
    %447 = arith.muli %c7_i32, %c16_i32_158 : i32
    %448 = tpu.assume_multiple %447, 16 : i32
    %cst_159 = arith.constant 0.000000e+00 : f32
    %449 = vector.broadcast %cst_159 : f32 to vector<1x128xf32>
    %450 = vector.extract_strided_slice %442 {offsets = [0, 0], sizes = [15, 128], strides = [1, 1]} : vector<16x128xf32> to vector<15x128xf32>
    %451 = tpu.concatenate %449, %450 in 0 : vector<1x128xf32>, vector<15x128xf32> -> vector<16x128xf32>
    %cst_160 = arith.constant 0.000000e+00 : f32
    %452 = vector.broadcast %cst_160 : f32 to vector<1x128xf32>
    %453 = vector.extract_strided_slice %442 {offsets = [1, 0], sizes = [15, 128], strides = [1, 1]} : vector<16x128xf32> to vector<15x128xf32>
    %454 = tpu.concatenate %453, %452 in 0 : vector<15x128xf32>, vector<1x128xf32> -> vector<16x128xf32>
    %455 = tpu.concatenate %451, %442, %454 in 1 : vector<16x128xf32>, vector<16x128xf32>, vector<16x128xf32> -> vector<16x384xf32>
    %456 = arith.index_cast %448 : i32 to index
    %c0_161 = arith.constant 0 : index
    %457 = vector.load %arg9[%456, %c0_161] : memref<128x512xf32, #tpu.memory_space<vmem>>, vector<16x512xf32>
    %c0_162 = arith.constant 0 : index
    %c0_163 = arith.constant 0 : index
    %458 = vector.load %arg4[%c0_162, %c0_163] : memref<384x512xf32, #tpu.memory_space<vmem>>, vector<384x512xf32>
    %cst_164 = arith.constant dense<0.000000e+00> : vector<16x512xf32>
    %459 = tpu.matmul %455, %458, %cst_164 {dimension_numbers = #tpu.dot_dimension_numbers<[1], [0], [0], [1], [0, 0, 1, 1], [], []>} : vector<16x384xf32>, vector<384x512xf32>, vector<16x512xf32> -> vector<16x512xf32>
    %460 = arith.addf %457, %459 : vector<16x512xf32>
    %461 = vector.extract_strided_slice %460 {offsets = [0, 0], sizes = [16, 128], strides = [1, 1]} : vector<16x512xf32> to vector<16x128xf32>
    %462 = vector.extract_strided_slice %460 {offsets = [0, 128], sizes = [16, 128], strides = [1, 1]} : vector<16x512xf32> to vector<16x128xf32>
    %463 = vector.extract_strided_slice %460 {offsets = [0, 256], sizes = [16, 128], strides = [1, 1]} : vector<16x512xf32> to vector<16x128xf32>
    %464 = vector.extract_strided_slice %460 {offsets = [0, 384], sizes = [16, 128], strides = [1, 1]} : vector<16x512xf32> to vector<16x128xf32>
    %465 = arith.mulf %57, %431 : vector<16x128xf32>
    %466 = arith.addf %461, %465 : vector<16x128xf32>
    %cst_165 = arith.constant 5.000000e-01 : f32
    %467 = vector.broadcast %cst_165 : f32 to vector<16x128xf32>
    %468 = arith.mulf %467, %466 : vector<16x128xf32>
    %469 = math.tanh %468 : vector<16x128xf32>
    %cst_166 = arith.constant 5.000000e-01 : f32
    %470 = vector.broadcast %cst_166 : f32 to vector<16x128xf32>
    %471 = arith.mulf %470, %469 : vector<16x128xf32>
    %cst_167 = arith.constant 5.000000e-01 : f32
    %472 = vector.broadcast %cst_167 : f32 to vector<16x128xf32>
    %473 = arith.addf %471, %472 : vector<16x128xf32>
    %474 = arith.mulf %58, %431 : vector<16x128xf32>
    %475 = arith.addf %462, %474 : vector<16x128xf32>
    %cst_168 = arith.constant 5.000000e-01 : f32
    %476 = vector.broadcast %cst_168 : f32 to vector<16x128xf32>
    %477 = arith.mulf %476, %475 : vector<16x128xf32>
    %478 = math.tanh %477 : vector<16x128xf32>
    %cst_169 = arith.constant 5.000000e-01 : f32
    %479 = vector.broadcast %cst_169 : f32 to vector<16x128xf32>
    %480 = arith.mulf %479, %478 : vector<16x128xf32>
    %cst_170 = arith.constant 5.000000e-01 : f32
    %481 = vector.broadcast %cst_170 : f32 to vector<16x128xf32>
    %482 = arith.addf %480, %481 : vector<16x128xf32>
    %483 = arith.mulf %482, %431 : vector<16x128xf32>
    %484 = math.tanh %463 : vector<16x128xf32>
    %485 = arith.mulf %473, %484 : vector<16x128xf32>
    %486 = arith.addf %483, %485 : vector<16x128xf32>
    %487 = arith.mulf %59, %486 : vector<16x128xf32>
    %488 = arith.addf %464, %487 : vector<16x128xf32>
    %cst_171 = arith.constant 5.000000e-01 : f32
    %489 = vector.broadcast %cst_171 : f32 to vector<16x128xf32>
    %490 = arith.mulf %489, %488 : vector<16x128xf32>
    %491 = math.tanh %490 : vector<16x128xf32>
    %cst_172 = arith.constant 5.000000e-01 : f32
    %492 = vector.broadcast %cst_172 : f32 to vector<16x128xf32>
    %493 = arith.mulf %492, %491 : vector<16x128xf32>
    %cst_173 = arith.constant 5.000000e-01 : f32
    %494 = vector.broadcast %cst_173 : f32 to vector<16x128xf32>
    %495 = arith.addf %493, %494 : vector<16x128xf32>
    %496 = math.tanh %486 : vector<16x128xf32>
    %497 = arith.mulf %495, %496 : vector<16x128xf32>
    %c0_174 = arith.constant 0 : index
    %498 = arith.index_cast %448 : i32 to index
    %c0_175 = arith.constant 0 : index
    %499 = vector.load %arg8[%c0_174, %498, %c0_175] : memref<1x128x128xf32, #tpu.memory_space<vmem>>, vector<1x16x128xf32>
    %500 = vector.shape_cast %499 : vector<1x16x128xf32> to vector<16x128xf32>
    %501 = vector.shape_cast %497 : vector<16x128xf32> to vector<1x16x128xf32>
    tpu.vector_store %arg8[%c0_174, %498, %c0_175], %501 {strides = array<i32>} : memref<1x128x128xf32, #tpu.memory_space<vmem>>, vector<1x16x128xf32>,
    %c8_i32 = arith.constant 8 : i32
    return
  }
  func.func @transform_0(%arg0: i32) -> (i32, i32, i32) {
    %c0_i32 = arith.constant 0 : i32
    %c0_i32_0 = arith.constant 0 : i32
    %c0_i32_1 = arith.constant 0 : i32
    return %arg0, %c0_i32, %c0_i32_0 : i32, i32, i32
  }
  func.func @transform_1(%arg0: i32) -> (i32, i32) {
    %c0_i32 = arith.constant 0 : i32
    %c0_i32_0 = arith.constant 0 : i32
    %c0_i32_1 = arith.constant 0 : i32
    return %c0_i32, %c0_i32_0 : i32, i32
  }
  func.func @transform_2(%arg0: i32) -> (i32, i32) {
    %c0_i32 = arith.constant 0 : i32
    %c0_i32_0 = arith.constant 0 : i32
    %c0_i32_1 = arith.constant 0 : i32
    return %c0_i32, %c0_i32_0 : i32, i32
  }
  func.func @transform_3(%arg0: i32) -> (i32, i32) {
    %c0_i32 = arith.constant 0 : i32
    %c0_i32_0 = arith.constant 0 : i32
    %c0_i32_1 = arith.constant 0 : i32
    return %c0_i32, %c0_i32_0 : i32, i32
  }
  func.func @transform_4(%arg0: i32) -> (i32, i32) {
    %c0_i32 = arith.constant 0 : i32
    %c0_i32_0 = arith.constant 0 : i32
    %c0_i32_1 = arith.constant 0 : i32
    return %c0_i32, %c0_i32_0 : i32, i32
  }
  func.func @transform_5(%arg0: i32) -> (i32, i32) {
    %c0_i32 = arith.constant 0 : i32
    %c0_i32_0 = arith.constant 0 : i32
    %c0_i32_1 = arith.constant 0 : i32
    return %c0_i32, %c0_i32_0 : i32, i32
  }
  func.func @transform_6(%arg0: i32) -> (i32, i32) {
    %c0_i32 = arith.constant 0 : i32
    %c0_i32_0 = arith.constant 0 : i32
    %c0_i32_1 = arith.constant 0 : i32
    return %c0_i32, %c0_i32_0 : i32, i32
  }
  func.func @transform_7(%arg0: i32) -> (i32, i32, i32) {
    %c0_i32 = arith.constant 0 : i32
    %c0_i32_0 = arith.constant 0 : i32
    %c0_i32_1 = arith.constant 0 : i32
    return %arg0, %c0_i32, %c0_i32_0 : i32, i32, i32
  }
}

</mosaic_0001>

<llo_original>
// kernel: tpu_custom_call.1
$region0: #{tpu_custom_call.1}
  #allocation0 [shape = 'u32[]', space=smem, size = 0x4, offset = 0x4, fixed_abs, tag = 'smem constant byte address 0x4 - core index']
  #allocation1 [shape = 'u32[144,128]{1,0:T(1,128)}', space=vmem, size = 0x12000, scoped, tag = 'internal scratch']
  #allocation2 [shape = 'f32[128,512]{1,0:T(8,128)}', space=vmem, size = 0x40000, scoped, tag = 'scratch operand']
  %s0 = inlined_call_operand.vmem [shape: f32[2,128,64], index: 0, kind: input, shape index: {}]
  %s1 = inlined_call_operand.hbm [shape: f32[192,512], index: 1, kind: input, shape index: {}]
  %s2 = inlined_call_operand.vmem [shape: f32[1,512], index: 2, kind: input, shape index: {}]
  %s3 = inlined_call_operand.hbm [shape: f32[384,512], index: 3, kind: input, shape index: {}]
  %s4 = inlined_call_operand.vmem [shape: f32[16,128], index: 4, kind: input, shape index: {}]
  %s5 = inlined_call_operand.vmem [shape: f32[16,128], index: 5, kind: input, shape index: {}]
  %s6 = inlined_call_operand.vmem [shape: f32[16,128], index: 6, kind: input, shape index: {}]
  %s7 = inlined_call_operand.hbm [shape: f32[2,128,128], index: 7, kind: output, shape index: {}]
  %s8 = sld [smem:[#allocation0]]
  $region69: #{tpu_custom_call.1} parent=0
    _
  %s10 = ssub.s32 1, %s8
  %s11 = scalar_select 0, %s10, %s8
  $region1: #{tpu_custom_call.1} parent=0
    #allocation3 [shape = 'u8[393216]{0}', space=vmem, size = 0x60000, scoped, tag = 'input window, operand 1, single buffered']
    #allocation4 [shape = 's32[2]{0}', space=sflag, size = 0x8, scoped, tag = 'scoped memory for tpu_custom_call.1']
    #allocation5 [shape = 's32[2]{0}', space=sflag, size = 0x8, scoped, tag = 'scoped memory for tpu_custom_call.1']
    #allocation6 [shape = 'u8[786432]{0}', space=vmem, size = 0xc0000, scoped, tag = 'input window, operand 3, single buffered']
    #allocation7 [shape = 's32[1]{0}', space=sflag, size = 0x4, scoped, tag = 'scoped memory for tpu_custom_call.1']
    #allocation8 [shape = 'u8[131072]{0}', space=vmem, size = 0x20000, scoped, tag = 'output window, operand 0']
    %12 = vsyncpa [#allocation4], 0
    %13 = vsyncpa [#allocation7], 0
    %14 = vsyncpa [#allocation5], 0
    %s15 = scalar_lea.sflag [#allocation5], 1
    %16 = vsyncpa %s15, 0
    loop: start=0, step=1, limit=4
    $region2: #{tpu_custom_call.1} parent=1 // loop_pre_header
      _
    $region3: #{tpu_custom_call.1} parent=1 // loop_header
      %s18 = sphi 0, %s22
      %p19 = scmp.ge.s32.totalorder %s18, 4
      %s28 = sphi 0, %s30
      %s31 = sphi 0, %s28
      %s32 = sphi 0, %s31
      %s48 = sphi 0, %s32
      %s52 = sphi 0, %s52
      %s54 = sphi 0, %s52
      %s55 = sphi 0, %s54
      %s69 = sphi 0, %s55
      %s73 = sphi 0, %s73
      %s75 = sphi 0, %s73
      %s76 = sphi 0, %s75
      %s90 = sphi 0, %s76
      %s94 = sphi 0, %s94
      %s96 = sphi 0, %s94
      %s97 = sphi 0, %s96
      %s111 = sphi 0, %s97
      %s115 = sphi 0, %s115
      %s117 = sphi 0, %s115
      %s118 = sphi 0, %s117
      %s132 = sphi 0, %s118
      %s136 = sphi 0, %s136
      %s138 = sphi 0, %s136
      %s139 = sphi 0, %s138
      %s153 = sphi 0, %s139
      %s157 = sphi 0, %s157
      %s159 = sphi 0, %s157
      %s160 = sphi 0, %s159
      %s174 = sphi 0, %s160
      %s180 = sphi 0, %s182
      %s183 = sphi 0, %s180
      %s184 = sphi 0, %s183
      %s200 = sphi 0, %s184
    $region4: #{tpu_custom_call.1} parent=1 // loop_header_branch
      %21 = sbr.rel (%p19) target = $region8
    $region5: #{tpu_custom_call.1} parent=1 // loop_body
      %s23 = ssub.s32 %s18, 1
      %s24 = ssub.s32 %s18, 2
      %s25 = sadd.s32 %s18, 1
      %s26 = ssub.s32 %s18, %s25
      %p27 = scmp.eq.s32.totalorder %s26, 0
      %s29 = sadd.s32 %s28, 1
      %s30 = scalar_select %p27, %s28, %s29
      %p33 = pneg %p27
      %p34 = scmp.eq.s32.totalorder %s18, 1
      %p35 = por %p33, %p34
      %p36 = scmp.ne.s32.totalorder %s28, %s31
      %p37 = scmp.eq.s32.totalorder %s18, 0
      %p38 = por %p36, %p37
      %p39 = scmp.ne.s32.totalorder %s28, %s31
      %p40 = scmp.eq.s32.totalorder %s23, 1
      %p41 = por %p39, %p40
      %p42 = scmp.ne.s32.totalorder %s31, %s32
      %p43 = scmp.eq.s32.totalorder %s23, 0
      %p44 = por %p42, %p43
      %p45 = scmp.ne.s32.totalorder %s31, %s32
      %p46 = scmp.eq.s32.totalorder %s24, 1
      %p47 = por %p45, %p46
      %p49 = scmp.ne.s32.totalorder %s32, %s48
      %p50 = scmp.eq.s32.totalorder %s24, 0
      %p51 = por %p49, %p50
      %s53 = sadd.s32 %s52, 1
      %p56 = scmp.eq.s32.totalorder %s18, 1
      %p57 = scmp.ne.s32.totalorder %s52, %s54
      %p58 = scmp.eq.s32.totalorder %s18, 0
      %p59 = por %p57, %p58
      %p60 = scmp.ne.s32.totalorder %s52, %s54
      %p61 = scmp.eq.s32.totalorder %s23, 1
      %p62 = por %p60, %p61
      %p63 = scmp.ne.s32.totalorder %s54, %s55
      %p64 = scmp.eq.s32.totalorder %s23, 0
      %p65 = por %p63, %p64
      %p66 = scmp.ne.s32.totalorder %s54, %s55
      %p67 = scmp.eq.s32.totalorder %s24, 1
      %p68 = por %p66, %p67
      %p70 = scmp.ne.s32.totalorder %s55, %s69
      %p71 = scmp.eq.s32.totalorder %s24, 0
      %p72 = por %p70, %p71
      %s74 = sadd.s32 %s73, 1
      %p77 = scmp.eq.s32.totalorder %s18, 1
      %p78 = scmp.ne.s32.totalorder %s73, %s75
      %p79 = scmp.eq.s32.totalorder %s18, 0
      %p80 = por %p78, %p79
      %p81 = scmp.ne.s32.totalorder %s73, %s75
      %p82 = scmp.eq.s32.totalorder %s23, 1
      %p83 = por %p81, %p82
      %p84 = scmp.ne.s32.totalorder %s75, %s76
      %p85 = scmp.eq.s32.totalorder %s23, 0
      %p86 = por %p84, %p85
      %p87 = scmp.ne.s32.totalorder %s75, %s76
      %p88 = scmp.eq.s32.totalorder %s24, 1
      %p89 = por %p87, %p88
      %p91 = scmp.ne.s32.totalorder %s76, %s90
      %p92 = scmp.eq.s32.totalorder %s24, 0
      %p93 = por %p91, %p92
      %s95 = sadd.s32 %s94, 1
      %p98 = scmp.eq.s32.totalorder %s18, 1
      %p99 = scmp.ne.s32.totalorder %s94, %s96
      %p100 = scmp.eq.s32.totalorder %s18, 0
      %p101 = por %p99, %p100
      %p102 = scmp.ne.s32.totalorder %s94, %s96
      %p103 = scmp.eq.s32.totalorder %s23, 1
      %p104 = por %p102, %p103
      %p105 = scmp.ne.s32.totalorder %s96, %s97
      %p106 = scmp.eq.s32.totalorder %s23, 0
      %p107 = por %p105, %p106
      %p108 = scmp.ne.s32.totalorder %s96, %s97
      %p109 = scmp.eq.s32.totalorder %s24, 1
      %p110 = por %p108, %p109
      %p112 = scmp.ne.s32.totalorder %s97, %s111
      %p113 = scmp.eq.s32.totalorder %s24, 0
      %p114 = por %p112, %p113
      %s116 = sadd.s32 %s115, 1
      %p119 = scmp.eq.s32.totalorder %s18, 1
      %p120 = scmp.ne.s32.totalorder %s115, %s117
      %p121 = scmp.eq.s32.totalorder %s18, 0
      %p122 = por %p120, %p121
      %p123 = scmp.ne.s32.totalorder %s115, %s117
      %p124 = scmp.eq.s32.totalorder %s23, 1
      %p125 = por %p123, %p124
      %p126 = scmp.ne.s32.totalorder %s117, %s118
      %p127 = scmp.eq.s32.totalorder %s23, 0
      %p128 = por %p126, %p127
      %p129 = scmp.ne.s32.totalorder %s117, %s118
      %p130 = scmp.eq.s32.totalorder %s24, 1
      %p131 = por %p129, %p130
      %p133 = scmp.ne.s32.totalorder %s118, %s132
      %p134 = scmp.eq.s32.totalorder %s24, 0
      %p135 = por %p133, %p134
      %s137 = sadd.s32 %s136, 1
      %p140 = scmp.eq.s32.totalorder %s18, 1
      %p141 = scmp.ne.s32.totalorder %s136, %s138
      %p142 = scmp.eq.s32.totalorder %s18, 0
      %p143 = por %p141, %p142
      %p144 = scmp.ne.s32.totalorder %s136, %s138
      %p145 = scmp.eq.s32.totalorder %s23, 1
      %p146 = por %p144, %p145
      %p147 = scmp.ne.s32.totalorder %s138, %s139
      %p148 = scmp.eq.s32.totalorder %s23, 0
      %p149 = por %p147, %p148
      %p150 = scmp.ne.s32.totalorder %s138, %s139
      %p151 = scmp.eq.s32.totalorder %s24, 1
      %p152 = por %p150, %p151
      %p154 = scmp.ne.s32.totalorder %s139, %s153
      %p155 = scmp.eq.s32.totalorder %s24, 0
      %p156 = por %p154, %p155
      %s158 = sadd.s32 %s157, 1
      %p161 = scmp.eq.s32.totalorder %s18, 1
      %p162 = scmp.ne.s32.totalorder %s157, %s159
      %p163 = scmp.eq.s32.totalorder %s18, 0
      %p164 = por %p162, %p163
      %p165 = scmp.ne.s32.totalorder %s157, %s159
      %p166 = scmp.eq.s32.totalorder %s23, 1
      %p167 = por %p165, %p166
      %p168 = scmp.ne.s32.totalorder %s159, %s160
      %p169 = scmp.eq.s32.totalorder %s23, 0
      %p170 = por %p168, %p169
      %p171 = scmp.ne.s32.totalorder %s159, %s160
      %p172 = scmp.eq.s32.totalorder %s24, 1
      %p173 = por %p171, %p172
      %p175 = scmp.ne.s32.totalorder %s160, %s174
      %p176 = scmp.eq.s32.totalorder %s24, 0
      %p177 = por %p175, %p176
      %s178 = ssub.s32 %s18, %s25
      %p179 = scmp.eq.s32.totalorder %s178, 0
      %s181 = sadd.s32 %s180, 1
      %s182 = scalar_select %p179, %s180, %s181
      %p185 = pneg %p179
      %p186 = scmp.eq.s32.totalorder %s18, 1
      %p187 = por %p185, %p186
      %p188 = scmp.ne.s32.totalorder %s180, %s183
      %p189 = scmp.eq.s32.totalorder %s18, 0
      %p190 = por %p188, %p189
      %p191 = scmp.ne.s32.totalorder %s180, %s183
      %p192 = scmp.eq.s32.totalorder %s23, 1
      %p193 = por %p191, %p192
      %p194 = scmp.ne.s32.totalorder %s183, %s184
      %p195 = scmp.eq.s32.totalorder %s23, 0
      %p196 = por %p194, %p195
      %p197 = scmp.ne.s32.totalorder %s183, %s184
      %p198 = scmp.eq.s32.totalorder %s24, 1
      %p199 = por %p197, %p198
      %p201 = scmp.ne.s32.totalorder %s184, %s200
      %p202 = scmp.eq.s32.totalorder %s24, 0
      %p203 = por %p201, %p202
      %p204 = scmp.le.s32.totalorder 1, %s18
      %p205 = scmp.lt.s32.totalorder %s18, 3
      %p206 = pnand %p204, %p205
      %p207 = pneg %p206
      // Predicated region
      $region9: #{tpu_custom_call.1} parent=5 // pred_check
        _
      $region10: #{tpu_custom_call.1} parent=5 // pred_check_branch
        %209 = sbr.rel (%p206) target = $region12
      $region11: #{tpu_custom_call.1} parent=5 // pred_region
        %s210 = ssub.s32 %s18, 1
        // Predicated region
        $region13: #{tpu_custom_call.1} parent=11 // pred_check
          %p211 = pneg %p65
        $region14: #{tpu_custom_call.1} parent=11 // pred_check_branch
          %213 = sbr.rel (%p211) target = $region16
        $region15: #{tpu_custom_call.1} parent=11 // pred_region
          %s215 = ssub.s32 12288, 12288
          %216 = vsyncadd [#allocation4], %s215
          %s217 = sshll.u32 [#allocation3], 4
          %s218 = int_to_ptr.vmem [resolvable:$true] %s217
          %223 = dma.hbm_to_vmem [thread:$0]  %s1, 12288, %s218, [#allocation4], 512, 512, 32
        $region16: #{tpu_custom_call.1} parent=11 // pred_fallthru
          _
        // Predicated region
        $region17: #{tpu_custom_call.1} parent=11 // pred_check
          %p224 = pneg %p86
        $region18: #{tpu_custom_call.1} parent=11 // pred_check_branch
          %226 = sbr.rel (%p224) target = $region20
        $region19: #{tpu_custom_call.1} parent=11 // pred_region
          _
        $region20: #{tpu_custom_call.1} parent=11 // pred_fallthru
          _
        // Predicated region
        $region21: #{tpu_custom_call.1} parent=11 // pred_check
          %p227 = pneg %p107
        $region22: #{tpu_custom_call.1} parent=11 // pred_check_branch
          %229 = sbr.rel (%p227) target = $region24
        $region23: #{tpu_custom_call.1} parent=11 // pred_region
          %s231 = ssub.s32 24576, 24576
          %232 = vsyncadd [#allocation7], %s231
          %s233 = sshll.u32 [#allocation6], 4
          %s234 = int_to_ptr.vmem [resolvable:$true] %s233
          %239 = dma.hbm_to_vmem [thread:$0]  %s3, 24576, %s234, [#allocation7], 512, 512, 32
        $region24: #{tpu_custom_call.1} parent=11 // pred_fallthru
          _
        // Predicated region
        $region25: #{tpu_custom_call.1} parent=11 // pred_check
          %p240 = pneg %p128
        $region26: #{tpu_custom_call.1} parent=11 // pred_check_branch
          %242 = sbr.rel (%p240) target = $region28
        $region27: #{tpu_custom_call.1} parent=11 // pred_region
          _
        $region28: #{tpu_custom_call.1} parent=11 // pred_fallthru
          _
        // Predicated region
        $region29: #{tpu_custom_call.1} parent=11 // pred_check
          %p243 = pneg %p149
        $region30: #{tpu_custom_call.1} parent=11 // pred_check_branch
          %245 = sbr.rel (%p243) target = $region32
        $region31: #{tpu_custom_call.1} parent=11 // pred_region
          _
        $region32: #{tpu_custom_call.1} parent=11 // pred_fallthru
          _
        // Predicated region
        $region33: #{tpu_custom_call.1} parent=11 // pred_check
          %p246 = pneg %p170
        $region34: #{tpu_custom_call.1} parent=11 // pred_check_branch
          %248 = sbr.rel (%p246) target = $region36
        $region35: #{tpu_custom_call.1} parent=11 // pred_region
          _
        $region36: #{tpu_custom_call.1} parent=11 // pred_fallthru
          _
      $region12: #{tpu_custom_call.1} parent=5 // pred_fallthru
        _
      %p249 = scmp.lt.s32.totalorder %s18, 2
      // Predicated region
      $region37: #{tpu_custom_call.1} parent=5 // pred_check
        %p250 = pneg %p249
      $region38: #{tpu_custom_call.1} parent=5 // pred_check_branch
        %252 = sbr.rel (%p250) target = $region40
      $region39: #{tpu_custom_call.1} parent=5 // pred_region
        // Predicated region
        $region41: #{tpu_custom_call.1} parent=39 // pred_check
          %p253 = pneg %p38
        $region42: #{tpu_custom_call.1} parent=39 // pred_check_branch
          %255 = sbr.rel (%p253) target = $region44
        $region43: #{tpu_custom_call.1} parent=39 // pred_region
          %p256 = scmp.lt.s32.totalorder %s18, 1
          %s257 = scalar_select %p256, %s18, 1
          %s258 = smul.addr %s257, 16
          %s259 = smul.addr %s258, 8
          %s260 = scalar_lea.vmem %s0, %s259
        $region44: #{tpu_custom_call.1} parent=39 // pred_fallthru
          _
      $region40: #{tpu_custom_call.1} parent=5 // pred_fallthru
        _
      %p261 = scmp.le.s32.totalorder 1, %s18
      %p262 = scmp.lt.s32.totalorder %s18, 3
      %p263 = pnand %p261, %p262
      %p264 = pneg %p263
      // Predicated region
      $region45: #{tpu_custom_call.1} parent=5 // pred_check
        _
      $region46: #{tpu_custom_call.1} parent=5 // pred_check_branch
        %266 = sbr.rel (%p263) target = $region48
      $region47: #{tpu_custom_call.1} parent=5 // pred_region
        %s267 = ssub.s32 %s18, 1
        // Predicated region
        $region49: #{tpu_custom_call.1} parent=47 // pred_check
          %p268 = pneg %p65
        $region50: #{tpu_custom_call.1} parent=47 // pred_check_branch
          %270 = sbr.rel (%p268) target = $region52
        $region51: #{tpu_custom_call.1} parent=47 // pred_region
          %271 = dma.done [#allocation4], 12288
        $region52: #{tpu_custom_call.1} parent=47 // pred_fallthru
          _
        // Predicated region
        $region53: #{tpu_custom_call.1} parent=47 // pred_check
          %p272 = pneg %p107
        $region54: #{tpu_custom_call.1} parent=47 // pred_check_branch
          %274 = sbr.rel (%p272) target = $region56
        $region55: #{tpu_custom_call.1} parent=47 // pred_region
          %275 = dma.done [#allocation7], 24576
        $region56: #{tpu_custom_call.1} parent=47 // pred_fallthru
          _
        %p276 = scmp.lt.s32.totalorder %s23, 1
        %s277 = scalar_select %p276, %s23, 1
        %s278 = smul.addr %s277, 16
        %s279 = smul.addr %s278, 8
        %s280 = scalar_lea.vmem %s0, %s279
        %p281 = pneg %p44
        %p282 = pneg %p41
        %p283 = pneg %p65
        %p284 = pneg %p62
        %p285 = pneg %p86
        %p286 = pneg %p83
        %p287 = pneg %p107
        %p288 = pneg %p104
        %p289 = pneg %p128
        %p290 = pneg %p125
        %p291 = pneg %p149
        %p292 = pneg %p146
        %p293 = pneg %p170
        %p294 = pneg %p167
        %p295 = pneg %p196
        %p296 = pneg %p193
        %s297 = sand.u32 %s183, 1
        %s298 = scalar_lea.sflag [#allocation5], %s297
        %s299 = sand.u32 %s183, 1
        %s300 = smul.addr %s299, 128
        %s301 = scalar_lea.vmem [#allocation8], %s300
        %p302 = scmp.lt.s32.totalorder %s23, 1
        %s303 = scalar_select %p302, %s23, 1
        %s304 = smul.addr %s303, 16
        %s305 = smul.addr %s304, 8
        %s306 = scalar_lea.vmem %s0, %s305
        %v307 = vld [vmem:[%s306] sm:$0xff]
        %v308 = vld [vmem:[%s306 + $0x8] sm:$0xff]
        %v309 = vld [vmem:[%s306 + $0x10] sm:$0xff]
        %v310 = vld [vmem:[%s306 + $0x18] sm:$0xff]
        %v311 = vld [vmem:[%s306 + $0x20] sm:$0xff]
        %v312 = vld [vmem:[%s306 + $0x28] sm:$0xff]
        %v313 = vld [vmem:[%s306 + $0x30] sm:$0xff]
        %v314 = vld [vmem:[%s306 + $0x38] sm:$0xff]
        %v315 = vld [vmem:[%s306 + $0x40] sm:$0xff]
        %v316 = vld [vmem:[%s306 + $0x48] sm:$0xff]
        %v317 = vld [vmem:[%s306 + $0x50] sm:$0xff]
        %v318 = vld [vmem:[%s306 + $0x58] sm:$0xff]
        %v319 = vld [vmem:[%s306 + $0x60] sm:$0xff]
        %v320 = vld [vmem:[%s306 + $0x68] sm:$0xff]
        %v321 = vld [vmem:[%s306 + $0x70] sm:$0xff]
        %v322 = vld [vmem:[%s306 + $0x78] sm:$0xff]
        %vm339 = vcmask 1040384
        %v340 = vrot.slane %v307, 7
        %v341 = vrot.slane %v308, 7
        %v342 = vsel %vm339, %v340, %v341
        %v343 = vrot.slane %v309, 7
        %v344 = vsel %vm339, %v341, %v343
        %v345 = vrot.slane %v310, 7
        %v346 = vsel %vm339, %v343, %v345
        %v347 = vrot.slane %v311, 7
        %v348 = vsel %vm339, %v345, %v347
        %v349 = vrot.slane %v312, 7
        %v350 = vsel %vm339, %v347, %v349
        %v351 = vrot.slane %v313, 7
        %v352 = vsel %vm339, %v349, %v351
        %v353 = vrot.slane %v314, 7
        %v354 = vsel %vm339, %v351, %v353
        %v355 = vrot.slane %v315, 7
        %v356 = vsel %vm339, %v353, %v355
        %v357 = vrot.slane %v316, 7
        %v358 = vsel %vm339, %v355, %v357
        %v359 = vrot.slane %v317, 7
        %v360 = vsel %vm339, %v357, %v359
        %v361 = vrot.slane %v318, 7
        %v362 = vsel %vm339, %v359, %v361
        %v363 = vrot.slane %v319, 7
        %v364 = vsel %vm339, %v361, %v363
        %v365 = vrot.slane %v320, 7
        %v366 = vsel %vm339, %v363, %v365
        %v367 = vrot.slane %v321, 7
        %v368 = vsel %vm339, %v365, %v367
        %v369 = vrot.slane %v322, 7
        %v370 = vsel %vm339, %v367, %v369
        %v387 = vsel %vm339, 0.0, %v340
        %v388 = vlaneseq
        %v389 = vshrl.u32 %v388, 7
        %v390 = vadd.s32 %v389, 8
        %v391 = vadd.s32 %v389, 16
        %v392 = vadd.s32 %v389, 24
        %v393 = vadd.s32 %v389, 32
        %v394 = vadd.s32 %v389, 40
        %v395 = vadd.s32 %v389, 48
        %v396 = vadd.s32 %v389, 56
        %v397 = vadd.s32 %v389, 64
        %v398 = vadd.s32 %v389, 72
        %v399 = vadd.s32 %v389, 80
        %v400 = vadd.s32 %v389, 88
        %v401 = vadd.s32 %v389, 96
        %v402 = vadd.s32 %v389, 104
        %v403 = vadd.s32 %v389, 112
        %v404 = vadd.s32 %v389, 120
        %vm405 = vcmp.lt.s32.totalorder %v389, 0
        %v406 = vsub.s32 0, %v389
        %v407 = vsel %vm405, %v406, %v389
        %v408 = vshrl.u32 %v407, 4
        %v409 = vand.u32 %v407, 15
        %v410 = vsub.s32 0, %v409
        %v411 = vsel %vm405, %v410, %v409
        %vm412 = vcmp.lt.s32.totalorder %v390, 0
        %v413 = vsub.s32 0, %v390
        %v414 = vsel %vm412, %v413, %v390
        %v415 = vshrl.u32 %v414, 4
        %v416 = vand.u32 %v414, 15
        %v417 = vsub.s32 0, %v416
        %v418 = vsel %vm412, %v417, %v416
        %vm419 = vcmp.lt.s32.totalorder %v391, 0
        %v420 = vsub.s32 0, %v391
        %v421 = vsel %vm419, %v420, %v391
        %v422 = vshrl.u32 %v421, 4
        %v423 = vand.u32 %v421, 15
        %v424 = vsub.s32 0, %v423
        %v425 = vsel %vm419, %v424, %v423
        %vm426 = vcmp.lt.s32.totalorder %v392, 0
        %v427 = vsub.s32 0, %v392
        %v428 = vsel %vm426, %v427, %v392
        %v429 = vshrl.u32 %v428, 4
        %v430 = vand.u32 %v428, 15
        %v431 = vsub.s32 0, %v430
        %v432 = vsel %vm426, %v431, %v430
        %vm433 = vcmp.lt.s32.totalorder %v393, 0
        %v434 = vsub.s32 0, %v393
        %v435 = vsel %vm433, %v434, %v393
        %v436 = vshrl.u32 %v435, 4
        %v437 = vand.u32 %v435, 15
        %v438 = vsub.s32 0, %v437
        %v439 = vsel %vm433, %v438, %v437
        %vm440 = vcmp.lt.s32.totalorder %v394, 0
        %v441 = vsub.s32 0, %v394
        %v442 = vsel %vm440, %v441, %v394
        %v443 = vshrl.u32 %v442, 4
        %v444 = vand.u32 %v442, 15
        %v445 = vsub.s32 0, %v444
        %v446 = vsel %vm440, %v445, %v444
        %vm447 = vcmp.lt.s32.totalorder %v395, 0
        %v448 = vsub.s32 0, %v395
        %v449 = vsel %vm447, %v448, %v395
        %v450 = vshrl.u32 %v449, 4
        %v451 = vand.u32 %v449, 15
        %v452 = vsub.s32 0, %v451
        %v453 = vsel %vm447, %v452, %v451
        %vm454 = vcmp.lt.s32.totalorder %v396, 0
        %v455 = vsub.s32 0, %v396
        %v456 = vsel %vm454, %v455, %v396
        %v457 = vshrl.u32 %v456, 4
        %v458 = vand.u32 %v456, 15
        %v459 = vsub.s32 0, %v458
        %v460 = vsel %vm454, %v459, %v458
        %vm461 = vcmp.lt.s32.totalorder %v397, 0
        %v462 = vsub.s32 0, %v397
        %v463 = vsel %vm461, %v462, %v397
        %v464 = vshrl.u32 %v463, 4
        %v465 = vand.u32 %v463, 15
        %v466 = vsub.s32 0, %v465
        %v467 = vsel %vm461, %v466, %v465
        %vm468 = vcmp.lt.s32.totalorder %v398, 0
        %v469 = vsub.s32 0, %v398
        %v470 = vsel %vm468, %v469, %v398
        %v471 = vshrl.u32 %v470, 4
        %v472 = vand.u32 %v470, 15
        %v473 = vsub.s32 0, %v472
        %v474 = vsel %vm468, %v473, %v472
        %vm475 = vcmp.lt.s32.totalorder %v399, 0
        %v476 = vsub.s32 0, %v399
        %v477 = vsel %vm475, %v476, %v399
        %v478 = vshrl.u32 %v477, 4
        %v479 = vand.u32 %v477, 15
        %v480 = vsub.s32 0, %v479
        %v481 = vsel %vm475, %v480, %v479
        %vm482 = vcmp.lt.s32.totalorder %v400, 0
        %v483 = vsub.s32 0, %v400
        %v484 = vsel %vm482, %v483, %v400
        %v485 = vshrl.u32 %v484, 4
        %v486 = vand.u32 %v484, 15
        %v487 = vsub.s32 0, %v486
        %v488 = vsel %vm482, %v487, %v486
        %vm489 = vcmp.lt.s32.totalorder %v401, 0
        %v490 = vsub.s32 0, %v401
        %v491 = vsel %vm489, %v490, %v401
        %v492 = vshrl.u32 %v491, 4
        %v493 = vand.u32 %v491, 15
        %v494 = vsub.s32 0, %v493
        %v495 = vsel %vm489, %v494, %v493
        %vm496 = vcmp.lt.s32.totalorder %v402, 0
        %v497 = vsub.s32 0, %v402
        %v498 = vsel %vm496, %v497, %v402
        %v499 = vshrl.u32 %v498, 4
        %v500 = vand.u32 %v498, 15
        %v501 = vsub.s32 0, %v500
        %v502 = vsel %vm496, %v501, %v500
        %vm503 = vcmp.lt.s32.totalorder %v403, 0
        %v504 = vsub.s32 0, %v403
        %v505 = vsel %vm503, %v504, %v403
        %v506 = vshrl.u32 %v505, 4
        %v507 = vand.u32 %v505, 15
        %v508 = vsub.s32 0, %v507
        %v509 = vsel %vm503, %v508, %v507
        %vm510 = vcmp.lt.s32.totalorder %v404, 0
        %v511 = vsub.s32 0, %v404
        %v512 = vsel %vm510, %v511, %v404
        %v513 = vshrl.u32 %v512, 4
        %v514 = vand.u32 %v512, 15
        %v515 = vsub.s32 0, %v514
        %v516 = vsel %vm510, %v515, %v514
        %vm517 = vcmp.ne.s32.totalorder %v411, 0
        %vm518 = vcmp.ne.s32.totalorder %v418, 0
        %vm519 = vcmp.ne.s32.totalorder %v425, 0
        %vm520 = vcmp.ne.s32.totalorder %v432, 0
        %vm521 = vcmp.ne.s32.totalorder %v439, 0
        %vm522 = vcmp.ne.s32.totalorder %v446, 0
        %vm523 = vcmp.ne.s32.totalorder %v453, 0
        %vm524 = vcmp.ne.s32.totalorder %v460, 0
        %vm525 = vcmp.ne.s32.totalorder %v467, 0
        %vm526 = vcmp.ne.s32.totalorder %v474, 0
        %vm527 = vcmp.ne.s32.totalorder %v481, 0
        %vm528 = vcmp.ne.s32.totalorder %v488, 0
        %vm529 = vcmp.ne.s32.totalorder %v495, 0
        %vm530 = vcmp.ne.s32.totalorder %v502, 0
        %vm531 = vcmp.ne.s32.totalorder %v509, 0
        %vm532 = vcmp.ne.s32.totalorder %v516, 0
        %vm533 = vcmp.lt.s32.totalorder %v411, 0
        %vm534 = vcmp.lt.s32.totalorder %v418, 0
        %vm535 = vcmp.lt.s32.totalorder %v425, 0
        %vm536 = vcmp.lt.s32.totalorder %v432, 0
        %vm537 = vcmp.lt.s32.totalorder %v439, 0
        %vm538 = vcmp.lt.s32.totalorder %v446, 0
        %vm539 = vcmp.lt.s32.totalorder %v453, 0
        %vm540 = vcmp.lt.s32.totalorder %v460, 0
        %vm541 = vcmp.lt.s32.totalorder %v467, 0
        %vm542 = vcmp.lt.s32.totalorder %v474, 0
        %vm543 = vcmp.lt.s32.totalorder %v481, 0
        %vm544 = vcmp.lt.s32.totalorder %v488, 0
        %vm545 = vcmp.lt.s32.totalorder %v495, 0
        %vm546 = vcmp.lt.s32.totalorder %v502, 0
        %vm547 = vcmp.lt.s32.totalorder %v509, 0
        %vm548 = vcmp.lt.s32.totalorder %v516, 0
        %vm549 = vmand %vm533, %vm517
        %vm550 = vmand %vm534, %vm518
        %vm551 = vmand %vm535, %vm519
        %vm552 = vmand %vm536, %vm520
        %vm553 = vmand %vm537, %vm521
        %vm554 = vmand %vm538, %vm522
        %vm555 = vmand %vm539, %vm523
        %vm556 = vmand %vm540, %vm524
        %vm557 = vmand %vm541, %vm525
        %vm558 = vmand %vm542, %vm526
        %vm559 = vmand %vm543, %vm527
        %vm560 = vmand %vm544, %vm528
        %vm561 = vmand %vm545, %vm529
        %vm562 = vmand %vm546, %vm530
        %vm563 = vmand %vm547, %vm531
        %vm564 = vmand %vm548, %vm532
        %v565 = vadd.s32 %v411, 16
        %v566 = vadd.s32 %v418, 16
        %v567 = vadd.s32 %v425, 16
        %v568 = vadd.s32 %v432, 16
        %v569 = vadd.s32 %v439, 16
        %v570 = vadd.s32 %v446, 16
        %v571 = vadd.s32 %v453, 16
        %v572 = vadd.s32 %v460, 16
        %v573 = vadd.s32 %v467, 16
        %v574 = vadd.s32 %v474, 16
        %v575 = vadd.s32 %v481, 16
        %v576 = vadd.s32 %v488, 16
        %v577 = vadd.s32 %v495, 16
        %v578 = vadd.s32 %v502, 16
        %v579 = vadd.s32 %v509, 16
        %v580 = vadd.s32 %v516, 16
        %v581 = vsel %vm549, %v565, %v411
        %v582 = vsel %vm550, %v566, %v418
        %v583 = vsel %vm551, %v567, %v425
        %v584 = vsel %vm552, %v568, %v432
        %v585 = vsel %vm553, %v569, %v439
        %v586 = vsel %vm554, %v570, %v446
        %v587 = vsel %vm555, %v571, %v453
        %v588 = vsel %vm556, %v572, %v460
        %v589 = vsel %vm557, %v573, %v467
        %v590 = vsel %vm558, %v574, %v474
        %v591 = vsel %vm559, %v575, %v481
        %v592 = vsel %vm560, %v576, %v488
        %v593 = vsel %vm561, %v577, %v495
        %v594 = vsel %vm562, %v578, %v502
        %v595 = vsel %vm563, %v579, %v509
        %v596 = vsel %vm564, %v580, %v516
        %vm597 = vcmp.ge.s32.totalorder %v581, 1
        %vm598 = vcmp.ge.s32.totalorder %v582, 1
        %vm599 = vcmp.ge.s32.totalorder %v583, 1
        %vm600 = vcmp.ge.s32.totalorder %v584, 1
        %vm601 = vcmp.ge.s32.totalorder %v585, 1
        %vm602 = vcmp.ge.s32.totalorder %v586, 1
        %vm603 = vcmp.ge.s32.totalorder %v587, 1
        %vm604 = vcmp.ge.s32.totalorder %v588, 1
        %vm605 = vcmp.ge.s32.totalorder %v589, 1
        %vm606 = vcmp.ge.s32.totalorder %v590, 1
        %vm607 = vcmp.ge.s32.totalorder %v591, 1
        %vm608 = vcmp.ge.s32.totalorder %v592, 1
        %vm609 = vcmp.ge.s32.totalorder %v593, 1
        %vm610 = vcmp.ge.s32.totalorder %v594, 1
        %vm611 = vcmp.ge.s32.totalorder %v595, 1
        %vm612 = vcmp.ge.s32.totalorder %v596, 1
        %v613 = vsel %vm597, %v387, 0.0
        %v614 = vsel %vm598, %v342, 0.0
        %v615 = vsel %vm599, %v344, 0.0
        %v616 = vsel %vm600, %v346, 0.0
        %v617 = vsel %vm601, %v348, 0.0
        %v618 = vsel %vm602, %v350, 0.0
        %v619 = vsel %vm603, %v352, 0.0
        %v620 = vsel %vm604, %v354, 0.0
        %v621 = vsel %vm605, %v356, 0.0
        %v622 = vsel %vm606, %v358, 0.0
        %v623 = vsel %vm607, %v360, 0.0
        %v624 = vsel %vm608, %v362, 0.0
        %v625 = vsel %vm609, %v364, 0.0
        %v626 = vsel %vm610, %v366, 0.0
        %v627 = vsel %vm611, %v368, 0.0
        %v628 = vsel %vm612, %v370, 0.0
        %vm629 = vcmask 1046528
        %v630 = vrot.slane %v307, 1
        %v631 = vrot.slane %v308, 1
        %v632 = vsel %vm629, %v630, %v631
        %v633 = vrot.slane %v309, 1
        %v634 = vsel %vm629, %v631, %v633
        %v635 = vrot.slane %v310, 1
        %v636 = vsel %vm629, %v633, %v635
        %v637 = vrot.slane %v311, 1
        %v638 = vsel %vm629, %v635, %v637
        %v639 = vrot.slane %v312, 1
        %v640 = vsel %vm629, %v637, %v639
        %v641 = vrot.slane %v313, 1
        %v642 = vsel %vm629, %v639, %v641
        %v643 = vrot.slane %v314, 1
        %v644 = vsel %vm629, %v641, %v643
        %v645 = vrot.slane %v315, 1
        %v646 = vsel %vm629, %v643, %v645
        %v647 = vrot.slane %v316, 1
        %v648 = vsel %vm629, %v645, %v647
        %v649 = vrot.slane %v317, 1
        %v650 = vsel %vm629, %v647, %v649
        %v651 = vrot.slane %v318, 1
        %v652 = vsel %vm629, %v649, %v651
        %v653 = vrot.slane %v319, 1
        %v654 = vsel %vm629, %v651, %v653
        %v655 = vrot.slane %v320, 1
        %v656 = vsel %vm629, %v653, %v655
        %v657 = vrot.slane %v321, 1
        %v658 = vsel %vm629, %v655, %v657
        %v659 = vrot.slane %v322, 1
        %v660 = vsel %vm629, %v657, %v659
        %v677 = vsel %vm629, %v659, 0.0
        %vm678 = vcmp.lt.s32.totalorder %v581, 15
        %vm679 = vcmp.lt.s32.totalorder %v582, 15
        %vm680 = vcmp.lt.s32.totalorder %v583, 15
        %vm681 = vcmp.lt.s32.totalorder %v584, 15
        %vm682 = vcmp.lt.s32.totalorder %v585, 15
        %vm683 = vcmp.lt.s32.totalorder %v586, 15
        %vm684 = vcmp.lt.s32.totalorder %v587, 15
        %vm685 = vcmp.lt.s32.totalorder %v588, 15
        %vm686 = vcmp.lt.s32.totalorder %v589, 15
        %vm687 = vcmp.lt.s32.totalorder %v590, 15
        %vm688 = vcmp.lt.s32.totalorder %v591, 15
        %vm689 = vcmp.lt.s32.totalorder %v592, 15
        %vm690 = vcmp.lt.s32.totalorder %v593, 15
        %vm691 = vcmp.lt.s32.totalorder %v594, 15
        %vm692 = vcmp.lt.s32.totalorder %v595, 15
        %vm693 = vcmp.lt.s32.totalorder %v596, 15
        %v694 = vsel %vm678, %v632, 0.0
        %v695 = vsel %vm679, %v634, 0.0
        %v696 = vsel %vm680, %v636, 0.0
        %v697 = vsel %vm681, %v638, 0.0
        %v698 = vsel %vm682, %v640, 0.0
        %v699 = vsel %vm683, %v642, 0.0
        %v700 = vsel %vm684, %v644, 0.0
        %v701 = vsel %vm685, %v646, 0.0
        %v702 = vsel %vm686, %v648, 0.0
        %v703 = vsel %vm687, %v650, 0.0
        %v704 = vsel %vm688, %v652, 0.0
        %v705 = vsel %vm689, %v654, 0.0
        %v706 = vsel %vm690, %v656, 0.0
        %v707 = vsel %vm691, %v658, 0.0
        %v708 = vsel %vm692, %v660, 0.0
        %v709 = vsel %vm693, %v677, 0.0
        %710 = vrot.lane.b32.xlu0 %v307, 64
        %v711 = vpop.permute.xlu0 %710
        %712 = vrot.lane.b32.xlu0 %v308, 64
        %v713 = vpop.permute.xlu0 %712
        %714 = vrot.lane.b32.xlu0 %v309, 64
        %v715 = vpop.permute.xlu0 %714
        %716 = vrot.lane.b32.xlu0 %v310, 64
        %v717 = vpop.permute.xlu0 %716
        %718 = vrot.lane.b32.xlu0 %v311, 64
        %v719 = vpop.permute.xlu0 %718
        %720 = vrot.lane.b32.xlu0 %v312, 64
        %v721 = vpop.permute.xlu0 %720
        %722 = vrot.lane.b32.xlu0 %v313, 64
        %v723 = vpop.permute.xlu0 %722
        %724 = vrot.lane.b32.xlu0 %v314, 64
        %v725 = vpop.permute.xlu0 %724
        %726 = vrot.lane.b32.xlu0 %v315, 64
        %v727 = vpop.permute.xlu0 %726
        %728 = vrot.lane.b32.xlu0 %v316, 64
        %v729 = vpop.permute.xlu0 %728
        %730 = vrot.lane.b32.xlu0 %v317, 64
        %v731 = vpop.permute.xlu0 %730
        %732 = vrot.lane.b32.xlu0 %v318, 64
        %v733 = vpop.permute.xlu0 %732
        %734 = vrot.lane.b32.xlu0 %v319, 64
        %v735 = vpop.permute.xlu0 %734
        %736 = vrot.lane.b32.xlu0 %v320, 64
        %v737 = vpop.permute.xlu0 %736
        %738 = vrot.lane.b32.xlu0 %v321, 64
        %v739 = vpop.permute.xlu0 %738
        %740 = vrot.lane.b32.xlu0 %v322, 64
        %v741 = vpop.permute.xlu0 %740
        %vm758 = vcmask 523264
        %v759 = vsel %vm758, %v613, %v711
        %v760 = vsel %vm758, %v614, %v713
        %v761 = vsel %vm758, %v615, %v715
        %v762 = vsel %vm758, %v616, %v717
        %v763 = vsel %vm758, %v617, %v719
        %v764 = vsel %vm758, %v618, %v721
        %v765 = vsel %vm758, %v619, %v723
        %v766 = vsel %vm758, %v620, %v725
        %v767 = vsel %vm758, %v621, %v727
        %v768 = vsel %vm758, %v622, %v729
        %v769 = vsel %vm758, %v623, %v731
        %v770 = vsel %vm758, %v624, %v733
        %v771 = vsel %vm758, %v625, %v735
        %v772 = vsel %vm758, %v626, %v737
        %v773 = vsel %vm758, %v627, %v739
        %v774 = vsel %vm758, %v628, %v741
        %v775 = vld [vmem:[%s2] sm:$0xf]
        %v776 = vld [vmem:[#allocation3] sm:$0xff]
        %v777 = vld [vmem:[#allocation3 + $0x8] sm:$0xff]
        %v778 = vld [vmem:[#allocation3 + $0x10] sm:$0xff]
        %v779 = vld [vmem:[#allocation3 + $0x18] sm:$0xff]
        %v780 = vld [vmem:[#allocation3 + $0x20] sm:$0xff]
        %v781 = vld [vmem:[#allocation3 + $0x28] sm:$0xff]
        %v782 = vld [vmem:[#allocation3 + $0x30] sm:$0xff]
        %v783 = vld [vmem:[#allocation3 + $0x38] sm:$0xff]
        %v784 = vld [vmem:[#allocation3 + $0x40] sm:$0xff]
        %v785 = vld [vmem:[#allocation3 + $0x48] sm:$0xff]
        %v786 = vld [vmem:[#allocation3 + $0x50] sm:$0xff]
        %v787 = vld [vmem:[#allocation3 + $0x58] sm:$0xff]
        %v788 = vld [vmem:[#allocation3 + $0x60] sm:$0xff]
        %v789 = vld [vmem:[#allocation3 + $0x68] sm:$0xff]
        %v790 = vld [vmem:[#allocation3 + $0x70] sm:$0xff]
        %v791 = vld [vmem:[#allocation3 + $0x78] sm:$0xff]
        %v792 = vld [vmem:[#allocation3 + $0x80] sm:$0xff]
        %v793 = vld [vmem:[#allocation3 + $0x88] sm:$0xff]
        %v794 = vld [vmem:[#allocation3 + $0x90] sm:$0xff]
        %v795 = vld [vmem:[#allocation3 + $0x98] sm:$0xff]
        %v796 = vld [vmem:[#allocation3 + $0xa0] sm:$0xff]
        %v797 = vld [vmem:[#allocation3 + $0xa8] sm:$0xff]
        %v798 = vld [vmem:[#allocation3 + $0xb0] sm:$0xff]
        %v799 = vld [vmem:[#allocation3 + $0xb8] sm:$0xff]
        %v800 = vld [vmem:[#allocation3 + $0xc0] sm:$0xff]
        %v801 = vld [vmem:[#allocation3 + $0xc8] sm:$0xff]
        %v802 = vld [vmem:[#allocation3 + $0xd0] sm:$0xff]
        %v803 = vld [vmem:[#allocation3 + $0xd8] sm:$0xff]
        %v804 = vld [vmem:[#allocation3 + $0xe0] sm:$0xff]
        %v805 = vld [vmem:[#allocation3 + $0xe8] sm:$0xff]
        %v806 = vld [vmem:[#allocation3 + $0xf0] sm:$0xff]
        %v807 = vld [vmem:[#allocation3 + $0xf8] sm:$0xff]
        %v808 = vld [vmem:[#allocation3 + $0x100] sm:$0xff]
        %v809 = vld [vmem:[#allocation3 + $0x108] sm:$0xff]
        %v810 = vld [vmem:[#allocation3 + $0x110] sm:$0xff]
        %v811 = vld [vmem:[#allocation3 + $0x118] sm:$0xff]
        %v812 = vld [vmem:[#allocation3 + $0x120] sm:$0xff]
        %v813 = vld [vmem:[#allocation3 + $0x128] sm:$0xff]
        %v814 = vld [vmem:[#allocation3 + $0x130] sm:$0xff]
        %v815 = vld [vmem:[#allocation3 + $0x138] sm:$0xff]
        %v816 = vld [vmem:[#allocation3 + $0x140] sm:$0xff]
        %v817 = vld [vmem:[#allocation3 + $0x148] sm:$0xff]
        %v818 = vld [vmem:[#allocation3 + $0x150] sm:$0xff]
        %v819 = vld [vmem:[#allocation3 + $0x158] sm:$0xff]
        %v820 = vld [vmem:[#allocation3 + $0x160] sm:$0xff]
        %v821 = vld [vmem:[#allocation3 + $0x168] sm:$0xff]
        %v822 = vld [vmem:[#allocation3 + $0x170] sm:$0xff]
        %v823 = vld [vmem:[#allocation3 + $0x178] sm:$0xff]
        %v824 = vld [vmem:[#allocation3 + $0x180] sm:$0xff]
        %v825 = vld [vmem:[#allocation3 + $0x188] sm:$0xff]
        %v826 = vld [vmem:[#allocation3 + $0x190] sm:$0xff]
        %v827 = vld [vmem:[#allocation3 + $0x198] sm:$0xff]
        %v828 = vld [vmem:[#allocation3 + $0x1a0] sm:$0xff]
        %v829 = vld [vmem:[#allocation3 + $0x1a8] sm:$0xff]
        %v830 = vld [vmem:[#allocation3 + $0x1b0] sm:$0xff]
        %v831 = vld [vmem:[#allocation3 + $0x1b8] sm:$0xff]
        %v832 = vld [vmem:[#allocation3 + $0x1c0] sm:$0xff]
        %v833 = vld [vmem:[#allocation3 + $0x1c8] sm:$0xff]
        %v834 = vld [vmem:[#allocation3 + $0x1d0] sm:$0xff]
        %v835 = vld [vmem:[#allocation3 + $0x1d8] sm:$0xff]
        %v836 = vld [vmem:[#allocation3 + $0x1e0] sm:$0xff]
        %v837 = vld [vmem:[#allocation3 + $0x1e8] sm:$0xff]
        %v838 = vld [vmem:[#allocation3 + $0x1f0] sm:$0xff]
        %v839 = vld [vmem:[#allocation3 + $0x1f8] sm:$0xff]
        %v840 = vld [vmem:[#allocation3 + $0x200] sm:$0xff]
        %v841 = vld [vmem:[#allocation3 + $0x208] sm:$0xff]
        %v842 = vld [vmem:[#allocation3 + $0x210] sm:$0xff]
        %v843 = vld [vmem:[#allocation3 + $0x218] sm:$0xff]
        %v844 = vld [vmem:[#allocation3 + $0x220] sm:$0xff]
        %v845 = vld [vmem:[#allocation3 + $0x228] sm:$0xff]
        %v846 = vld [vmem:[#allocation3 + $0x230] sm:$0xff]
        %v847 = vld [vmem:[#allocation3 + $0x238] sm:$0xff]
        %v848 = vld [vmem:[#allocation3 + $0x240] sm:$0xff]
        %v849 = vld [vmem:[#allocation3 + $0x248] sm:$0xff]
        %v850 = vld [vmem:[#allocation3 + $0x250] sm:$0xff]
        %v851 = vld [vmem:[#allocation3 + $0x258] sm:$0xff]
        %v852 = vld [vmem:[#allocation3 + $0x260] sm:$0xff]
        %v853 = vld [vmem:[#allocation3 + $0x268] sm:$0xff]
        %v854 = vld [vmem:[#allocation3 + $0x270] sm:$0xff]
        %v855 = vld [vmem:[#allocation3 + $0x278] sm:$0xff]
        %v856 = vld [vmem:[#allocation3 + $0x280] sm:$0xff]
        %v857 = vld [vmem:[#allocation3 + $0x288] sm:$0xff]
        %v858 = vld [vmem:[#allocation3 + $0x290] sm:$0xff]
        %v859 = vld [vmem:[#allocation3 + $0x298] sm:$0xff]
        %v860 = vld [vmem:[#allocation3 + $0x2a0] sm:$0xff]
        %v861 = vld [vmem:[#allocation3 + $0x2a8] sm:$0xff]
        %v862 = vld [vmem:[#allocation3 + $0x2b0] sm:$0xff]
        %v863 = vld [vmem:[#allocation3 + $0x2b8] sm:$0xff]
        %v864 = vld [vmem:[#allocation3 + $0x2c0] sm:$0xff]
        %v865 = vld [vmem:[#allocation3 + $0x2c8] sm:$0xff]
        %v866 = vld [vmem:[#allocation3 + $0x2d0] sm:$0xff]
        %v867 = vld [vmem:[#allocation3 + $0x2d8] sm:$0xff]
        %v868 = vld [vmem:[#allocation3 + $0x2e0] sm:$0xff]
        %v869 = vld [vmem:[#allocation3 + $0x2e8] sm:$0xff]
        %v870 = vld [vmem:[#allocation3 + $0x2f0] sm:$0xff]
        %v871 = vld [vmem:[#allocation3 + $0x2f8] sm:$0xff]
        %v873 = vsel %vm758, %v694, 0
        %v876 = vsel %vm758, %v695, 0
        %v879 = vsel %vm758, %v696, 0
        %v882 = vsel %vm758, %v697, 0
        %v885 = vsel %vm758, %v698, 0
        %v888 = vsel %vm758, %v699, 0
        %v891 = vsel %vm758, %v700, 0
        %v894 = vsel %vm758, %v701, 0
        %v897 = vsel %vm758, %v702, 0
        %v900 = vsel %vm758, %v703, 0
        %v903 = vsel %vm758, %v704, 0
        %v906 = vsel %vm758, %v705, 0
        %v909 = vsel %vm758, %v706, 0
        %v912 = vsel %vm758, %v707, 0
        %v915 = vsel %vm758, %v708, 0
        %v918 = vsel %vm758, %v709, 0
        %920 = vmatprep.subr.mxu0 %v837
        %921 = vmatpush1.msra.mxu0 %v836
        %922 = vmatprep.subr.mxu0 %v833
        %923 = vmatpush1.msra.mxu0 %v832
        %924 = vmatprep.subr.mxu0 %v829
        %925 = vmatpush1.msra.mxu0 %v828
        %926 = vmatprep.subr.mxu0 %v825
        %927 = vmatpush1.msra.mxu0 %v824
        %928 = vmatprep.subr.mxu0 %v821
        %929 = vmatpush1.msra.mxu0 %v820
        %930 = vmatprep.subr.mxu0 %v817
        %931 = vmatpush1.msra.mxu0 %v816
        %932 = vmatprep.subr.mxu0 %v813
        %933 = vmatpush1.msra.mxu0 %v812
        %934 = vmatprep.subr.mxu0 %v809
        %935 = vmatpush1.msra.mxu0 %v808
        %936 = vmatprep.subr.mxu0 %v805
        %937 = vmatpush1.msra.mxu0 %v804
        %938 = vmatprep.subr.mxu0 %v801
        %939 = vmatpush1.msra.mxu0 %v800
        %940 = vmatprep.subr.mxu0 %v797
        %941 = vmatpush1.msra.mxu0 %v796
        %942 = vmatprep.subr.mxu0 %v793
        %943 = vmatpush1.msra.mxu0 %v792
        %944 = vmatprep.subr.mxu0 %v789
        %945 = vmatpush1.msra.mxu0 %v788
        %946 = vmatprep.subr.mxu0 %v785
        %947 = vmatpush1.msra.mxu0 %v784
        %948 = vmatprep.subr.mxu0 %v781
        %949 = vmatpush1.msra.mxu0 %v780
        %950 = vmatprep.subr.mxu0 %v777
        %951 = vmatpush1.msra.mxu0 %v776
        %952 = vmatprep.subr.mxu0 0.0
        %953 = vmatpush2.msra.mxu0 0.0
        %954 = vmatprep.subr.mxu0 0.0
        %955 = vmatpush2.msra.mxu0 0.0
        %956 = vmatprep.subr.mxu0 0.0
        %957 = vmatpush2.msra.mxu0 0.0
        %958 = vmatprep.subr.mxu0 0.0
        %959 = vmatpush2.msra.mxu0 0.0
        %960 = vmatprep.subr.mxu0 0.0
        %961 = vmatpush2.msra.mxu0 0.0
        %962 = vmatprep.subr.mxu0 0.0
        %963 = vmatpush2.msra.mxu0 0.0
        %964 = vmatprep.subr.mxu0 0.0
        %965 = vmatpush2.msra.mxu0 0.0
        %966 = vmatprep.subr.mxu0 0.0
        %967 = vmatpush2.msra.mxu0 0.0
        %968 = vmatprep.subr.mxu0 %v869
        %969 = vmatpush2.msra.mxu0 %v868
        %970 = vmatprep.subr.mxu0 %v865
        %971 = vmatpush2.msra.mxu0 %v864
        %972 = vmatprep.subr.mxu0 %v861
        %973 = vmatpush2.msra.mxu0 %v860
        %974 = vmatprep.subr.mxu0 %v857
        %975 = vmatpush2.msra.mxu0 %v856
        %976 = vmatprep.subr.mxu0 %v853
        %977 = vmatpush2.msra.mxu0 %v852
        %978 = vmatprep.subr.mxu0 %v849
        %979 = vmatpush2.msra.mxu0 %v848
        %980 = vmatprep.subr.mxu0 %v845
        %981 = vmatpush2.msra.mxu0 %v844
        %982 = vmatprep.subr.mxu0 %v841
        %983 = vmatpush2.msra.mxu0 %v840
        %984 = vmatprep.mubr.f32.mxu0 %v873
        %985 = vmatmul.mubr.f32.gmra.mxu0 %v759
        %v986 = vpop.f32.mrf.mxu0
        %v987 = vadd.f32 0.0, %v986
        %v988 = vpop.f32.mrf.mxu0
        %v989 = vadd.f32 0.0, %v988
        %990 = vmatprep.mubr.f32.mxu0 %v876
        %991 = vmatmul.mubr.f32.gmra.mxu0 %v760
        %v992 = vpop.f32.mrf.mxu0
        %v993 = vadd.f32 0.0, %v992
        %v994 = vpop.f32.mrf.mxu0
        %v995 = vadd.f32 0.0, %v994
        %996 = vmatprep.mubr.f32.mxu0 %v879
        %997 = vmatmul.mubr.f32.gmra.mxu0 %v761
        %v998 = vpop.f32.mrf.mxu0
        %v999 = vadd.f32 0.0, %v998
        %v1000 = vpop.f32.mrf.mxu0
        %v1001 = vadd.f32 0.0, %v1000
        %1002 = vmatprep.mubr.f32.mxu0 %v882
        %1003 = vmatmul.mubr.f32.gmra.mxu0 %v762
        %v1004 = vpop.f32.mrf.mxu0
        %v1005 = vadd.f32 0.0, %v1004
        %v1006 = vpop.f32.mrf.mxu0
        %v1007 = vadd.f32 0.0, %v1006
        %1008 = vmatprep.mubr.f32.mxu0 %v885
        %1009 = vmatmul.mubr.f32.gmra.mxu0 %v763
        %v1010 = vpop.f32.mrf.mxu0
        %v1011 = vadd.f32 0.0, %v1010
        %v1012 = vpop.f32.mrf.mxu0
        %v1013 = vadd.f32 0.0, %v1012
        %1014 = vmatprep.mubr.f32.mxu0 %v888
        %1015 = vmatmul.mubr.f32.gmra.mxu0 %v764
        %v1016 = vpop.f32.mrf.mxu0
        %v1017 = vadd.f32 0.0, %v1016
        %v1018 = vpop.f32.mrf.mxu0
        %v1019 = vadd.f32 0.0, %v1018
        %1020 = vmatprep.mubr.f32.mxu0 %v891
        %1021 = vmatmul.mubr.f32.gmra.mxu0 %v765
        %v1022 = vpop.f32.mrf.mxu0
        %v1023 = vadd.f32 0.0, %v1022
        %v1024 = vpop.f32.mrf.mxu0
        %v1025 = vadd.f32 0.0, %v1024
        %1026 = vmatprep.mubr.f32.mxu0 %v894
        %1027 = vmatmul.mubr.f32.gmra.mxu0 %v766
        %v1028 = vpop.f32.mrf.mxu0
        %v1029 = vadd.f32 0.0, %v1028
        %v1030 = vpop.f32.mrf.mxu0
        %v1031 = vadd.f32 0.0, %v1030
        %1032 = vmatprep.mubr.f32.mxu0 %v897
        %1033 = vmatmul.mubr.f32.gmra.mxu0 %v767
        %v1034 = vpop.f32.mrf.mxu0
        %v1035 = vadd.f32 0.0, %v1034
        %v1036 = vpop.f32.mrf.mxu0
        %v1037 = vadd.f32 0.0, %v1036
        %1038 = vmatprep.mubr.f32.mxu0 %v900
        %1039 = vmatmul.mubr.f32.gmra.mxu0 %v768
        %v1040 = vpop.f32.mrf.mxu0
        %v1041 = vadd.f32 0.0, %v1040
        %v1042 = vpop.f32.mrf.mxu0
        %v1043 = vadd.f32 0.0, %v1042
        %1044 = vmatprep.mubr.f32.mxu0 %v903
        %1045 = vmatmul.mubr.f32.gmra.mxu0 %v769
        %v1046 = vpop.f32.mrf.mxu0
        %v1047 = vadd.f32 0.0, %v1046
        %v1048 = vpop.f32.mrf.mxu0
        %v1049 = vadd.f32 0.0, %v1048
        %1050 = vmatprep.mubr.f32.mxu0 %v906
        %1051 = vmatmul.mubr.f32.gmra.mxu0 %v770
        %v1052 = vpop.f32.mrf.mxu0
        %v1053 = vadd.f32 0.0, %v1052
        %v1054 = vpop.f32.mrf.mxu0
        %v1055 = vadd.f32 0.0, %v1054
        %1056 = vmatprep.mubr.f32.mxu0 %v909
        %1057 = vmatmul.mubr.f32.gmra.mxu0 %v771
        %v1058 = vpop.f32.mrf.mxu0
        %v1059 = vadd.f32 0.0, %v1058
        %v1060 = vpop.f32.mrf.mxu0
        %v1061 = vadd.f32 0.0, %v1060
        %1062 = vmatprep.mubr.f32.mxu0 %v912
        %1063 = vmatmul.mubr.f32.gmra.mxu0 %v772
        %v1064 = vpop.f32.mrf.mxu0
        %v1065 = vadd.f32 0.0, %v1064
        %v1066 = vpop.f32.mrf.mxu0
        %v1067 = vadd.f32 0.0, %v1066
        %1068 = vmatprep.mubr.f32.mxu0 %v915
        %1069 = vmatmul.mubr.f32.gmra.mxu0 %v773
        %v1070 = vpop.f32.mrf.mxu0
        %v1071 = vadd.f32 0.0, %v1070
        %v1072 = vpop.f32.mrf.mxu0
        %v1073 = vadd.f32 0.0, %v1072
        %1074 = vmatprep.mubr.f32.mxu0 %v918
        %1075 = vmatmul.mubr.f32.gmra.mxu0 %v774
        %v1076 = vpop.f32.mrf.mxu0
        %v1077 = vadd.f32 0.0, %v1076
        %v1078 = vpop.f32.mrf.mxu0
        %v1079 = vadd.f32 0.0, %v1078
        %1080 = vdwg.mxu0
        %1081 = vmatprep.subr.mxu0 %v839
        %1082 = vmatpush1.msra.mxu0 %v838
        %1083 = vmatprep.subr.mxu0 %v835
        %1084 = vmatpush1.msra.mxu0 %v834
        %1085 = vmatprep.subr.mxu0 %v831
        %1086 = vmatpush1.msra.mxu0 %v830
        %1087 = vmatprep.subr.mxu0 %v827
        %1088 = vmatpush1.msra.mxu0 %v826
        %1089 = vmatprep.subr.mxu0 %v823
        %1090 = vmatpush1.msra.mxu0 %v822
        %1091 = vmatprep.subr.mxu0 %v819
        %1092 = vmatpush1.msra.mxu0 %v818
        %1093 = vmatprep.subr.mxu0 %v815
        %1094 = vmatpush1.msra.mxu0 %v814
        %1095 = vmatprep.subr.mxu0 %v811
        %1096 = vmatpush1.msra.mxu0 %v810
        %1097 = vmatprep.subr.mxu0 %v807
        %1098 = vmatpush1.msra.mxu0 %v806
        %1099 = vmatprep.subr.mxu0 %v803
        %1100 = vmatpush1.msra.mxu0 %v802
        %1101 = vmatprep.subr.mxu0 %v799
        %1102 = vmatpush1.msra.mxu0 %v798
        %1103 = vmatprep.subr.mxu0 %v795
        %1104 = vmatpush1.msra.mxu0 %v794
        %1105 = vmatprep.subr.mxu0 %v791
        %1106 = vmatpush1.msra.mxu0 %v790
        %1107 = vmatprep.subr.mxu0 %v787
        %1108 = vmatpush1.msra.mxu0 %v786
        %1109 = vmatprep.subr.mxu0 %v783
        %1110 = vmatpush1.msra.mxu0 %v782
        %1111 = vmatprep.subr.mxu0 %v779
        %1112 = vmatpush1.msra.mxu0 %v778
        %1113 = vmatprep.subr.mxu0 0.0
        %1114 = vmatpush2.msra.mxu0 0.0
        %1115 = vmatprep.subr.mxu0 0.0
        %1116 = vmatpush2.msra.mxu0 0.0
        %1117 = vmatprep.subr.mxu0 0.0
        %1118 = vmatpush2.msra.mxu0 0.0
        %1119 = vmatprep.subr.mxu0 0.0
        %1120 = vmatpush2.msra.mxu0 0.0
        %1121 = vmatprep.subr.mxu0 0.0
        %1122 = vmatpush2.msra.mxu0 0.0
        %1123 = vmatprep.subr.mxu0 0.0
        %1124 = vmatpush2.msra.mxu0 0.0
        %1125 = vmatprep.subr.mxu0 0.0
        %1126 = vmatpush2.msra.mxu0 0.0
        %1127 = vmatprep.subr.mxu0 0.0
        %1128 = vmatpush2.msra.mxu0 0.0
        %1129 = vmatprep.subr.mxu0 %v871
        %1130 = vmatpush2.msra.mxu0 %v870
        %1131 = vmatprep.subr.mxu0 %v867
        %1132 = vmatpush2.msra.mxu0 %v866
        %1133 = vmatprep.subr.mxu0 %v863
        %1134 = vmatpush2.msra.mxu0 %v862
        %1135 = vmatprep.subr.mxu0 %v859
        %1136 = vmatpush2.msra.mxu0 %v858
        %1137 = vmatprep.subr.mxu0 %v855
        %1138 = vmatpush2.msra.mxu0 %v854
        %1139 = vmatprep.subr.mxu0 %v851
        %1140 = vmatpush2.msra.mxu0 %v850
        %1141 = vmatprep.subr.mxu0 %v847
        %1142 = vmatpush2.msra.mxu0 %v846
        %1143 = vmatprep.subr.mxu0 %v843
        %1144 = vmatpush2.msra.mxu0 %v842
        %1145 = vmatprep.mubr.f32.mxu0 %v873
        %1146 = vmatmul.mubr.f32.gmra.mxu0 %v759
        %v1147 = vpop.f32.mrf.mxu0
        %v1148 = vadd.f32 0.0, %v1147
        %v1149 = vpop.f32.mrf.mxu0
        %v1150 = vadd.f32 0.0, %v1149
        %1151 = vmatprep.mubr.f32.mxu0 %v876
        %1152 = vmatmul.mubr.f32.gmra.mxu0 %v760
        %v1153 = vpop.f32.mrf.mxu0
        %v1154 = vadd.f32 0.0, %v1153
        %v1155 = vpop.f32.mrf.mxu0
        %v1156 = vadd.f32 0.0, %v1155
        %1157 = vmatprep.mubr.f32.mxu0 %v879
        %1158 = vmatmul.mubr.f32.gmra.mxu0 %v761
        %v1159 = vpop.f32.mrf.mxu0
        %v1160 = vadd.f32 0.0, %v1159
        %v1161 = vpop.f32.mrf.mxu0
        %v1162 = vadd.f32 0.0, %v1161
        %1163 = vmatprep.mubr.f32.mxu0 %v882
        %1164 = vmatmul.mubr.f32.gmra.mxu0 %v762
        %v1165 = vpop.f32.mrf.mxu0
        %v1166 = vadd.f32 0.0, %v1165
        %v1167 = vpop.f32.mrf.mxu0
        %v1168 = vadd.f32 0.0, %v1167
        %1169 = vmatprep.mubr.f32.mxu0 %v885
        %1170 = vmatmul.mubr.f32.gmra.mxu0 %v763
        %v1171 = vpop.f32.mrf.mxu0
        %v1172 = vadd.f32 0.0, %v1171
        %v1173 = vpop.f32.mrf.mxu0
        %v1174 = vadd.f32 0.0, %v1173
        %1175 = vmatprep.mubr.f32.mxu0 %v888
        %1176 = vmatmul.mubr.f32.gmra.mxu0 %v764
        %v1177 = vpop.f32.mrf.mxu0
        %v1178 = vadd.f32 0.0, %v1177
        %v1179 = vpop.f32.mrf.mxu0
        %v1180 = vadd.f32 0.0, %v1179
        %1181 = vmatprep.mubr.f32.mxu0 %v891
        %1182 = vmatmul.mubr.f32.gmra.mxu0 %v765
        %v1183 = vpop.f32.mrf.mxu0
        %v1184 = vadd.f32 0.0, %v1183
        %v1185 = vpop.f32.mrf.mxu0
        %v1186 = vadd.f32 0.0, %v1185
        %1187 = vmatprep.mubr.f32.mxu0 %v894
        %1188 = vmatmul.mubr.f32.gmra.mxu0 %v766
        %v1189 = vpop.f32.mrf.mxu0
        %v1190 = vadd.f32 0.0, %v1189
        %v1191 = vpop.f32.mrf.mxu0
        %v1192 = vadd.f32 0.0, %v1191
        %1193 = vmatprep.mubr.f32.mxu0 %v897
        %1194 = vmatmul.mubr.f32.gmra.mxu0 %v767
        %v1195 = vpop.f32.mrf.mxu0
        %v1196 = vadd.f32 0.0, %v1195
        %v1197 = vpop.f32.mrf.mxu0
        %v1198 = vadd.f32 0.0, %v1197
        %1199 = vmatprep.mubr.f32.mxu0 %v900
        %1200 = vmatmul.mubr.f32.gmra.mxu0 %v768
        %v1201 = vpop.f32.mrf.mxu0
        %v1202 = vadd.f32 0.0, %v1201
        %v1203 = vpop.f32.mrf.mxu0
        %v1204 = vadd.f32 0.0, %v1203
        %1205 = vmatprep.mubr.f32.mxu0 %v903
        %1206 = vmatmul.mubr.f32.gmra.mxu0 %v769
        %v1207 = vpop.f32.mrf.mxu0
        %v1208 = vadd.f32 0.0, %v1207
        %v1209 = vpop.f32.mrf.mxu0
        %v1210 = vadd.f32 0.0, %v1209
        %1211 = vmatprep.mubr.f32.mxu0 %v906
        %1212 = vmatmul.mubr.f32.gmra.mxu0 %v770
        %v1213 = vpop.f32.mrf.mxu0
        %v1214 = vadd.f32 0.0, %v1213
        %v1215 = vpop.f32.mrf.mxu0
        %v1216 = vadd.f32 0.0, %v1215
        %1217 = vmatprep.mubr.f32.mxu0 %v909
        %1218 = vmatmul.mubr.f32.gmra.mxu0 %v771
        %v1219 = vpop.f32.mrf.mxu0
        %v1220 = vadd.f32 0.0, %v1219
        %v1221 = vpop.f32.mrf.mxu0
        %v1222 = vadd.f32 0.0, %v1221
        %1223 = vmatprep.mubr.f32.mxu0 %v912
        %1224 = vmatmul.mubr.f32.gmra.mxu0 %v772
        %v1225 = vpop.f32.mrf.mxu0
        %v1226 = vadd.f32 0.0, %v1225
        %v1227 = vpop.f32.mrf.mxu0
        %v1228 = vadd.f32 0.0, %v1227
        %1229 = vmatprep.mubr.f32.mxu0 %v915
        %1230 = vmatmul.mubr.f32.gmra.mxu0 %v773
        %v1231 = vpop.f32.mrf.mxu0
        %v1232 = vadd.f32 0.0, %v1231
        %v1233 = vpop.f32.mrf.mxu0
        %v1234 = vadd.f32 0.0, %v1233
        %1235 = vmatprep.mubr.f32.mxu0 %v918
        %1236 = vmatmul.mubr.f32.gmra.mxu0 %v774
        %v1237 = vpop.f32.mrf.mxu0
        %v1238 = vadd.f32 0.0, %v1237
        %v1239 = vpop.f32.mrf.mxu0
        %v1240 = vadd.f32 0.0, %v1239
        %1241 = vdwg.mxu0
        %v1243 = vlaneseq
        %v1244 = vshrl.u32 %v1243, 7
        %v1245 = vsub.s32 0, %v1244
        %v1246 = vrot.slane %v775, %v1245
        %v1247 = vlaneseq
        %v1248 = vshrl.u32 %v1247, 7
        %v1249 = vsub.s32 1, %v1248
        %v1250 = vrot.slane %v775, %v1249
        %v1251 = vlaneseq
        %v1252 = vshrl.u32 %v1251, 7
        %v1253 = vsub.s32 2, %v1252
        %v1254 = vrot.slane %v775, %v1253
        %v1255 = vlaneseq
        %v1256 = vshrl.u32 %v1255, 7
        %v1257 = vsub.s32 3, %v1256
        %v1258 = vrot.slane %v775, %v1257
        %v1263 = vadd.f32 %v1246, %v987
        %v1264 = vadd.f32 %v1250, %v989
        %v1265 = vadd.f32 %v1254, %v1148
        %v1266 = vadd.f32 %v1258, %v1150
        %v1267 = vadd.f32 %v1246, %v993
        %v1268 = vadd.f32 %v1250, %v995
        %v1269 = vadd.f32 %v1254, %v1154
        %v1270 = vadd.f32 %v1258, %v1156
        %v1271 = vadd.f32 %v1246, %v999
        %v1272 = vadd.f32 %v1250, %v1001
        %v1273 = vadd.f32 %v1254, %v1160
        %v1274 = vadd.f32 %v1258, %v1162
        %v1275 = vadd.f32 %v1246, %v1005
        %v1276 = vadd.f32 %v1250, %v1007
        %v1277 = vadd.f32 %v1254, %v1166
        %v1278 = vadd.f32 %v1258, %v1168
        %v1279 = vadd.f32 %v1246, %v1011
        %v1280 = vadd.f32 %v1250, %v1013
        %v1281 = vadd.f32 %v1254, %v1172
        %v1282 = vadd.f32 %v1258, %v1174
        %v1283 = vadd.f32 %v1246, %v1017
        %v1284 = vadd.f32 %v1250, %v1019
        %v1285 = vadd.f32 %v1254, %v1178
        %v1286 = vadd.f32 %v1258, %v1180
        %v1287 = vadd.f32 %v1246, %v1023
        %v1288 = vadd.f32 %v1250, %v1025
        %v1289 = vadd.f32 %v1254, %v1184
        %v1290 = vadd.f32 %v1258, %v1186
        %v1291 = vadd.f32 %v1246, %v1029
        %v1292 = vadd.f32 %v1250, %v1031
        %v1293 = vadd.f32 %v1254, %v1190
        %v1294 = vadd.f32 %v1258, %v1192
        %v1295 = vadd.f32 %v1246, %v1035
        %v1296 = vadd.f32 %v1250, %v1037
        %v1297 = vadd.f32 %v1254, %v1196
        %v1298 = vadd.f32 %v1258, %v1198
        %v1299 = vadd.f32 %v1246, %v1041
        %v1300 = vadd.f32 %v1250, %v1043
        %v1301 = vadd.f32 %v1254, %v1202
        %v1302 = vadd.f32 %v1258, %v1204
        %v1303 = vadd.f32 %v1246, %v1047
        %v1304 = vadd.f32 %v1250, %v1049
        %v1305 = vadd.f32 %v1254, %v1208
        %v1306 = vadd.f32 %v1258, %v1210
        %v1307 = vadd.f32 %v1246, %v1053
        %v1308 = vadd.f32 %v1250, %v1055
        %v1309 = vadd.f32 %v1254, %v1214
        %v1310 = vadd.f32 %v1258, %v1216
        %v1311 = vadd.f32 %v1246, %v1059
        %v1312 = vadd.f32 %v1250, %v1061
        %v1313 = vadd.f32 %v1254, %v1220
        %v1314 = vadd.f32 %v1258, %v1222
        %v1315 = vadd.f32 %v1246, %v1065
        %v1316 = vadd.f32 %v1250, %v1067
        %v1317 = vadd.f32 %v1254, %v1226
        %v1318 = vadd.f32 %v1258, %v1228
        %v1319 = vadd.f32 %v1246, %v1071
        %v1320 = vadd.f32 %v1250, %v1073
        %v1321 = vadd.f32 %v1254, %v1232
        %v1322 = vadd.f32 %v1258, %v1234
        %v1323 = vadd.f32 %v1246, %v1077
        %v1324 = vadd.f32 %v1250, %v1079
        %v1325 = vadd.f32 %v1254, %v1238
        %v1326 = vadd.f32 %v1258, %v1240
        %1327 = vst [vmem:[#allocation2] sm:$0xff] %v1263
        %1328 = vst [vmem:[#allocation2 + $0x8] sm:$0xff] %v1264
        %1329 = vst [vmem:[#allocation2 + $0x10] sm:$0xff] %v1265
        %1330 = vst [vmem:[#allocation2 + $0x18] sm:$0xff] %v1266
        %1331 = vst [vmem:[#allocation2 + $0x20] sm:$0xff] %v1267
        %1332 = vst [vmem:[#allocation2 + $0x28] sm:$0xff] %v1268
        %1333 = vst [vmem:[#allocation2 + $0x30] sm:$0xff] %v1269
        %1334 = vst [vmem:[#allocation2 + $0x38] sm:$0xff] %v1270
        %1335 = vst [vmem:[#allocation2 + $0x40] sm:$0xff] %v1271
        %1336 = vst [vmem:[#allocation2 + $0x48] sm:$0xff] %v1272
        %1337 = vst [vmem:[#allocation2 + $0x50] sm:$0xff] %v1273
        %1338 = vst [vmem:[#allocation2 + $0x58] sm:$0xff] %v1274
        %1339 = vst [vmem:[#allocation2 + $0x60] sm:$0xff] %v1275
        %1340 = vst [vmem:[#allocation2 + $0x68] sm:$0xff] %v1276
        %1341 = vst [vmem:[#allocation2 + $0x70] sm:$0xff] %v1277
        %1342 = vst [vmem:[#allocation2 + $0x78] sm:$0xff] %v1278
        %1343 = vst [vmem:[#allocation2 + $0x80] sm:$0xff] %v1279
        %1344 = vst [vmem:[#allocation2 + $0x88] sm:$0xff] %v1280
        %1345 = vst [vmem:[#allocation2 + $0x90] sm:$0xff] %v1281
        %1346 = vst [vmem:[#allocation2 + $0x98] sm:$0xff] %v1282
        %1347 = vst [vmem:[#allocation2 + $0xa0] sm:$0xff] %v1283
        %1348 = vst [vmem:[#allocation2 + $0xa8] sm:$0xff] %v1284
        %1349 = vst [vmem:[#allocation2 + $0xb0] sm:$0xff] %v1285
        %1350 = vst [vmem:[#allocation2 + $0xb8] sm:$0xff] %v1286
        %1351 = vst [vmem:[#allocation2 + $0xc0] sm:$0xff] %v1287
        %1352 = vst [vmem:[#allocation2 + $0xc8] sm:$0xff] %v1288
        %1353 = vst [vmem:[#allocation2 + $0xd0] sm:$0xff] %v1289
        %1354 = vst [vmem:[#allocation2 + $0xd8] sm:$0xff] %v1290
        %1355 = vst [vmem:[#allocation2 + $0xe0] sm:$0xff] %v1291
        %1356 = vst [vmem:[#allocation2 + $0xe8] sm:$0xff] %v1292
        %1357 = vst [vmem:[#allocation2 + $0xf0] sm:$0xff] %v1293
        %1358 = vst [vmem:[#allocation2 + $0xf8] sm:$0xff] %v1294
        %1359 = vst [vmem:[#allocation2 + $0x100] sm:$0xff] %v1295
        %1360 = vst [vmem:[#allocation2 + $0x108] sm:$0xff] %v1296
        %1361 = vst [vmem:[#allocation2 + $0x110] sm:$0xff] %v1297
        %1362 = vst [vmem:[#allocation2 + $0x118] sm:$0xff] %v1298
        %1363 = vst [vmem:[#allocation2 + $0x120] sm:$0xff] %v1299
        %1364 = vst [vmem:[#allocation2 + $0x128] sm:$0xff] %v1300
        %1365 = vst [vmem:[#allocation2 + $0x130] sm:$0xff] %v1301
        %1366 = vst [vmem:[#allocation2 + $0x138] sm:$0xff] %v1302
        %1367 = vst [vmem:[#allocation2 + $0x140] sm:$0xff] %v1303
        %1368 = vst [vmem:[#allocation2 + $0x148] sm:$0xff] %v1304
        %1369 = vst [vmem:[#allocation2 + $0x150] sm:$0xff] %v1305
        %1370 = vst [vmem:[#allocation2 + $0x158] sm:$0xff] %v1306
        %1371 = vst [vmem:[#allocation2 + $0x160] sm:$0xff] %v1307
        %1372 = vst [vmem:[#allocation2 + $0x168] sm:$0xff] %v1308
        %1373 = vst [vmem:[#allocation2 + $0x170] sm:$0xff] %v1309
        %1374 = vst [vmem:[#allocation2 + $0x178] sm:$0xff] %v1310
        %1375 = vst [vmem:[#allocation2 + $0x180] sm:$0xff] %v1311
        %1376 = vst [vmem:[#allocation2 + $0x188] sm:$0xff] %v1312
        %1377 = vst [vmem:[#allocation2 + $0x190] sm:$0xff] %v1313
        %1378 = vst [vmem:[#allocation2 + $0x198] sm:$0xff] %v1314
        %1379 = vst [vmem:[#allocation2 + $0x1a0] sm:$0xff] %v1315
        %1380 = vst [vmem:[#allocation2 + $0x1a8] sm:$0xff] %v1316
        %1381 = vst [vmem:[#allocation2 + $0x1b0] sm:$0xff] %v1317
        %1382 = vst [vmem:[#allocation2 + $0x1b8] sm:$0xff] %v1318
        %1383 = vst [vmem:[#allocation2 + $0x1c0] sm:$0xff] %v1319
        %1384 = vst [vmem:[#allocation2 + $0x1c8] sm:$0xff] %v1320
        %1385 = vst [vmem:[#allocation2 + $0x1d0] sm:$0xff] %v1321
        %1386 = vst [vmem:[#allocation2 + $0x1d8] sm:$0xff] %v1322
        %1387 = vst [vmem:[#allocation2 + $0x1e0] sm:$0xff] %v1323
        %1388 = vst [vmem:[#allocation2 + $0x1e8] sm:$0xff] %v1324
        %1389 = vst [vmem:[#allocation2 + $0x1f0] sm:$0xff] %v1325
        %1390 = vst [vmem:[#allocation2 + $0x1f8] sm:$0xff] %v1326
        %v1391 = vld [vmem:[%s4] sm:$0xff]
        %v1392 = vld [vmem:[%s4 + $0x8] sm:$0xff]
        %v1393 = vld [vmem:[%s5] sm:$0xff]
        %v1394 = vld [vmem:[%s5 + $0x8] sm:$0xff]
        %v1395 = vld [vmem:[%s6] sm:$0xff]
        %v1396 = vld [vmem:[%s6 + $0x8] sm:$0xff]
        %s1397 = smul.u32 0, 4
        %s1398 = smul.addr %s1397, 8
        %s1399 = scalar_lea.vmem [#allocation2], %s1398
        %v1400 = vld [vmem:[%s1399] sm:$0xff]
        %v1401 = vld [vmem:[%s1399 + $0x8] sm:$0xff]
        %v1402 = vld [vmem:[%s1399 + $0x10] sm:$0xff]
        %v1403 = vld [vmem:[%s1399 + $0x18] sm:$0xff]
        %v1404 = vld [vmem:[%s1399 + $0x20] sm:$0xff]
        %v1405 = vld [vmem:[%s1399 + $0x28] sm:$0xff]
        %v1406 = vld [vmem:[%s1399 + $0x30] sm:$0xff]
        %v1407 = vld [vmem:[%s1399 + $0x38] sm:$0xff]
        %v1408 = vld [vmem:[#allocation6] sm:$0xff]
        %v1409 = vld [vmem:[#allocation6 + $0x8] sm:$0xff]
        %v1410 = vld [vmem:[#allocation6 + $0x10] sm:$0xff]
        %v1411 = vld [vmem:[#allocation6 + $0x18] sm:$0xff]
        %v1412 = vld [vmem:[#allocation6 + $0x20] sm:$0xff]
        %v1413 = vld [vmem:[#allocation6 + $0x28] sm:$0xff]
        %v1414 = vld [vmem:[#allocation6 + $0x30] sm:$0xff]
        %v1415 = vld [vmem:[#allocation6 + $0x38] sm:$0xff]
        %v1416 = vld [vmem:[#allocation6 + $0x40] sm:$0xff]
        %v1417 = vld [vmem:[#allocation6 + $0x48] sm:$0xff]
        %v1418 = vld [vmem:[#allocation6 + $0x50] sm:$0xff]
        %v1419 = vld [vmem:[#allocation6 + $0x58] sm:$0xff]
        %v1420 = vld [vmem:[#allocation6 + $0x60] sm:$0xff]
        %v1421 = vld [vmem:[#allocation6 + $0x68] sm:$0xff]
        %v1422 = vld [vmem:[#allocation6 + $0x70] sm:$0xff]
        %v1423 = vld [vmem:[#allocation6 + $0x78] sm:$0xff]
        %v1424 = vld [vmem:[#allocation6 + $0x80] sm:$0xff]
        %v1425 = vld [vmem:[#allocation6 + $0x88] sm:$0xff]
        %v1426 = vld [vmem:[#allocation6 + $0x90] sm:$0xff]
        %v1427 = vld [vmem:[#allocation6 + $0x98] sm:$0xff]
        %v1428 = vld [vmem:[#allocation6 + $0xa0] sm:$0xff]
        %v1429 = vld [vmem:[#allocation6 + $0xa8] sm:$0xff]
        %v1430 = vld [vmem:[#allocation6 + $0xb0] sm:$0xff]
        %v1431 = vld [vmem:[#allocation6 + $0xb8] sm:$0xff]
        %v1432 = vld [vmem:[#allocation6 + $0xc0] sm:$0xff]
        %v1433 = vld [vmem:[#allocation6 + $0xc8] sm:$0xff]
        %v1434 = vld [vmem:[#allocation6 + $0xd0] sm:$0xff]
        %v1435 = vld [vmem:[#allocation6 + $0xd8] sm:$0xff]
        %v1436 = vld [vmem:[#allocation6 + $0xe0] sm:$0xff]
        %v1437 = vld [vmem:[#allocation6 + $0xe8] sm:$0xff]
        %v1438 = vld [vmem:[#allocation6 + $0xf0] sm:$0xff]
        %v1439 = vld [vmem:[#allocation6 + $0xf8] sm:$0xff]
        %v1440 = vld [vmem:[#allocation6 + $0x100] sm:$0xff]
        %v1441 = vld [vmem:[#allocation6 + $0x108] sm:$0xff]
        %v1442 = vld [vmem:[#allocation6 + $0x110] sm:$0xff]
        %v1443 = vld [vmem:[#allocation6 + $0x118] sm:$0xff]
        %v1444 = vld [vmem:[#allocation6 + $0x120] sm:$0xff]
        %v1445 = vld [vmem:[#allocation6 + $0x128] sm:$0xff]
        %v1446 = vld [vmem:[#allocation6 + $0x130] sm:$0xff]
        %v1447 = vld [vmem:[#allocation6 + $0x138] sm:$0xff]
        %v1448 = vld [vmem:[#allocation6 + $0x140] sm:$0xff]
        %v1449 = vld [vmem:[#allocation6 + $0x148] sm:$0xff]
        %v1450 = vld [vmem:[#allocation6 + $0x150] sm:$0xff]
        %v1451 = vld [vmem:[#allocation6 + $0x158] sm:$0xff]
        %v1452 = vld [vmem:[#allocation6 + $0x160] sm:$0xff]
        %v1453 = vld [vmem:[#allocation6 + $0x168] sm:$0xff]
        %v1454 = vld [vmem:[#allocation6 + $0x170] sm:$0xff]
        %v1455 = vld [vmem:[#allocation6 + $0x178] sm:$0xff]
        %v1456 = vld [vmem:[#allocation6 + $0x180] sm:$0xff]
        %v1457 = vld [vmem:[#allocation6 + $0x188] sm:$0xff]
        %v1458 = vld [vmem:[#allocation6 + $0x190] sm:$0xff]
        %v1459 = vld [vmem:[#allocation6 + $0x198] sm:$0xff]
        %v1460 = vld [vmem:[#allocation6 + $0x1a0] sm:$0xff]
        %v1461 = vld [vmem:[#allocation6 + $0x1a8] sm:$0xff]
        %v1462 = vld [vmem:[#allocation6 + $0x1b0] sm:$0xff]
        %v1463 = vld [vmem:[#allocation6 + $0x1b8] sm:$0xff]
        %v1464 = vld [vmem:[#allocation6 + $0x1c0] sm:$0xff]
        %v1465 = vld [vmem:[#allocation6 + $0x1c8] sm:$0xff]
        %v1466 = vld [vmem:[#allocation6 + $0x1d0] sm:$0xff]
        %v1467 = vld [vmem:[#allocation6 + $0x1d8] sm:$0xff]
        %v1468 = vld [vmem:[#allocation6 + $0x1e0] sm:$0xff]
        %v1469 = vld [vmem:[#allocation6 + $0x1e8] sm:$0xff]
        %v1470 = vld [vmem:[#allocation6 + $0x1f0] sm:$0xff]
        %v1471 = vld [vmem:[#allocation6 + $0x1f8] sm:$0xff]
        %v1472 = vld [vmem:[#allocation6 + $0x200] sm:$0xff]
        %v1473 = vld [vmem:[#allocation6 + $0x208] sm:$0xff]
        %v1474 = vld [vmem:[#allocation6 + $0x210] sm:$0xff]
        %v1475 = vld [vmem:[#allocation6 + $0x218] sm:$0xff]
        %v1476 = vld [vmem:[#allocation6 + $0x220] sm:$0xff]
        %v1477 = vld [vmem:[#allocation6 + $0x228] sm:$0xff]
        %v1478 = vld [vmem:[#allocation6 + $0x230] sm:$0xff]
        %v1479 = vld [vmem:[#allocation6 + $0x238] sm:$0xff]
        %v1480 = vld [vmem:[#allocation6 + $0x240] sm:$0xff]
        %v1481 = vld [vmem:[#allocation6 + $0x248] sm:$0xff]
        %v1482 = vld [vmem:[#allocation6 + $0x250] sm:$0xff]
        %v1483 = vld [vmem:[#allocation6 + $0x258] sm:$0xff]
        %v1484 = vld [vmem:[#allocation6 + $0x260] sm:$0xff]
        %v1485 = vld [vmem:[#allocation6 + $0x268] sm:$0xff]
        %v1486 = vld [vmem:[#allocation6 + $0x270] sm:$0xff]
        %v1487 = vld [vmem:[#allocation6 + $0x278] sm:$0xff]
        %v1488 = vld [vmem:[#allocation6 + $0x280] sm:$0xff]
        %v1489 = vld [vmem:[#allocation6 + $0x288] sm:$0xff]
        %v1490 = vld [vmem:[#allocation6 + $0x290] sm:$0xff]
        %v1491 = vld [vmem:[#allocation6 + $0x298] sm:$0xff]
        %v1492 = vld [vmem:[#allocation6 + $0x2a0] sm:$0xff]
        %v1493 = vld [vmem:[#allocation6 + $0x2a8] sm:$0xff]
        %v1494 = vld [vmem:[#allocation6 + $0x2b0] sm:$0xff]
        %v1495 = vld [vmem:[#allocation6 + $0x2b8] sm:$0xff]
        %v1496 = vld [vmem:[#allocation6 + $0x2c0] sm:$0xff]
        %v1497 = vld [vmem:[#allocation6 + $0x2c8] sm:$0xff]
        %v1498 = vld [vmem:[#allocation6 + $0x2d0] sm:$0xff]
        %v1499 = vld [vmem:[#allocation6 + $0x2d8] sm:$0xff]
        %v1500 = vld [vmem:[#allocation6 + $0x2e0] sm:$0xff]
        %v1501 = vld [vmem:[#allocation6 + $0x2e8] sm:$0xff]
        %v1502 = vld [vmem:[#allocation6 + $0x2f0] sm:$0xff]
        %v1503 = vld [vmem:[#allocation6 + $0x2f8] sm:$0xff]
        %v1504 = vld [vmem:[#allocation6 + $0x300] sm:$0xff]
        %v1505 = vld [vmem:[#allocation6 + $0x308] sm:$0xff]
        %v1506 = vld [vmem:[#allocation6 + $0x310] sm:$0xff]
        %v1507 = vld [vmem:[#allocation6 + $0x318] sm:$0xff]
        %v1508 = vld [vmem:[#allocation6 + $0x320] sm:$0xff]
        %v1509 = vld [vmem:[#allocation6 + $0x328] sm:$0xff]
        %v1510 = vld [vmem:[#allocation6 + $0x330] sm:$0xff]
        %v1511 = vld [vmem:[#allocation6 + $0x338] sm:$0xff]
        %v1512 = vld [vmem:[#allocation6 + $0x340] sm:$0xff]
        %v1513 = vld [vmem:[#allocation6 + $0x348] sm:$0xff]
        %v1514 = vld [vmem:[#allocation6 + $0x350] sm:$0xff]
        %v1515 = vld [vmem:[#allocation6 + $0x358] sm:$0xff]
        %v1516 = vld [vmem:[#allocation6 + $0x360] sm:$0xff]
        %v1517 = vld [vmem:[#allocation6 + $0x368] sm:$0xff]
        %v1518 = vld [vmem:[#allocation6 + $0x370] sm:$0xff]
        %v1519 = vld [vmem:[#allocation6 + $0x378] sm:$0xff]
        %v1520 = vld [vmem:[#allocation6 + $0x380] sm:$0xff]
        %v1521 = vld [vmem:[#allocation6 + $0x388] sm:$0xff]
        %v1522 = vld [vmem:[#allocation6 + $0x390] sm:$0xff]
        %v1523 = vld [vmem:[#allocation6 + $0x398] sm:$0xff]
        %v1524 = vld [vmem:[#allocation6 + $0x3a0] sm:$0xff]
        %v1525 = vld [vmem:[#allocation6 + $0x3a8] sm:$0xff]
        %v1526 = vld [vmem:[#allocation6 + $0x3b0] sm:$0xff]
        %v1527 = vld [vmem:[#allocation6 + $0x3b8] sm:$0xff]
        %v1528 = vld [vmem:[#allocation6 + $0x3c0] sm:$0xff]
        %v1529 = vld [vmem:[#allocation6 + $0x3c8] sm:$0xff]
        %v1530 = vld [vmem:[#allocation6 + $0x3d0] sm:$0xff]
        %v1531 = vld [vmem:[#allocation6 + $0x3d8] sm:$0xff]
        %v1532 = vld [vmem:[#allocation6 + $0x3e0] sm:$0xff]
        %v1533 = vld [vmem:[#allocation6 + $0x3e8] sm:$0xff]
        %v1534 = vld [vmem:[#allocation6 + $0x3f0] sm:$0xff]
        %v1535 = vld [vmem:[#allocation6 + $0x3f8] sm:$0xff]
        %v1536 = vld [vmem:[#allocation6 + $0x400] sm:$0xff]
        %v1537 = vld [vmem:[#allocation6 + $0x408] sm:$0xff]
        %v1538 = vld [vmem:[#allocation6 + $0x410] sm:$0xff]
        %v1539 = vld [vmem:[#allocation6 + $0x418] sm:$0xff]
        %v1540 = vld [vmem:[#allocation6 + $0x420] sm:$0xff]
        %v1541 = vld [vmem:[#allocation6 + $0x428] sm:$0xff]
        %v1542 = vld [vmem:[#allocation6 + $0x430] sm:$0xff]
        %v1543 = vld [vmem:[#allocation6 + $0x438] sm:$0xff]
        %v1544 = vld [vmem:[#allocation6 + $0x440] sm:$0xff]
        %v1545 = vld [vmem:[#allocation6 + $0x448] sm:$0xff]
        %v1546 = vld [vmem:[#allocation6 + $0x450] sm:$0xff]
        %v1547 = vld [vmem:[#allocation6 + $0x458] sm:$0xff]
        %v1548 = vld [vmem:[#allocation6 + $0x460] sm:$0xff]
        %v1549 = vld [vmem:[#allocation6 + $0x468] sm:$0xff]
        %v1550 = vld [vmem:[#allocation6 + $0x470] sm:$0xff]
        %v1551 = vld [vmem:[#allocation6 + $0x478] sm:$0xff]
        %v1552 = vld [vmem:[#allocation6 + $0x480] sm:$0xff]
        %v1553 = vld [vmem:[#allocation6 + $0x488] sm:$0xff]
        %v1554 = vld [vmem:[#allocation6 + $0x490] sm:$0xff]
        %v1555 = vld [vmem:[#allocation6 + $0x498] sm:$0xff]
        %v1556 = vld [vmem:[#allocation6 + $0x4a0] sm:$0xff]
        %v1557 = vld [vmem:[#allocation6 + $0x4a8] sm:$0xff]
        %v1558 = vld [vmem:[#allocation6 + $0x4b0] sm:$0xff]
        %v1559 = vld [vmem:[#allocation6 + $0x4b8] sm:$0xff]
        %v1560 = vld [vmem:[#allocation6 + $0x4c0] sm:$0xff]
        %v1561 = vld [vmem:[#allocation6 + $0x4c8] sm:$0xff]
        %v1562 = vld [vmem:[#allocation6 + $0x4d0] sm:$0xff]
        %v1563 = vld [vmem:[#allocation6 + $0x4d8] sm:$0xff]
        %v1564 = vld [vmem:[#allocation6 + $0x4e0] sm:$0xff]
        %v1565 = vld [vmem:[#allocation6 + $0x4e8] sm:$0xff]
        %v1566 = vld [vmem:[#allocation6 + $0x4f0] sm:$0xff]
        %v1567 = vld [vmem:[#allocation6 + $0x4f8] sm:$0xff]
        %v1568 = vld [vmem:[#allocation6 + $0x500] sm:$0xff]
        %v1569 = vld [vmem:[#allocation6 + $0x508] sm:$0xff]
        %v1570 = vld [vmem:[#allocation6 + $0x510] sm:$0xff]
        %v1571 = vld [vmem:[#allocation6 + $0x518] sm:$0xff]
        %v1572 = vld [vmem:[#allocation6 + $0x520] sm:$0xff]
        %v1573 = vld [vmem:[#allocation6 + $0x528] sm:$0xff]
        %v1574 = vld [vmem:[#allocation6 + $0x530] sm:$0xff]
        %v1575 = vld [vmem:[#allocation6 + $0x538] sm:$0xff]
        %v1576 = vld [vmem:[#allocation6 + $0x540] sm:$0xff]
        %v1577 = vld [vmem:[#allocation6 + $0x548] sm:$0xff]
        %v1578 = vld [vmem:[#allocation6 + $0x550] sm:$0xff]
        %v1579 = vld [vmem:[#allocation6 + $0x558] sm:$0xff]
        %v1580 = vld [vmem:[#allocation6 + $0x560] sm:$0xff]
        %v1581 = vld [vmem:[#allocation6 + $0x568] sm:$0xff]
        %v1582 = vld [vmem:[#allocation6 + $0x570] sm:$0xff]
        %v1583 = vld [vmem:[#allocation6 + $0x578] sm:$0xff]
        %v1584 = vld [vmem:[#allocation6 + $0x580] sm:$0xff]
        %v1585 = vld [vmem:[#allocation6 + $0x588] sm:$0xff]
        %v1586 = vld [vmem:[#allocation6 + $0x590] sm:$0xff]
        %v1587 = vld [vmem:[#allocation6 + $0x598] sm:$0xff]
        %v1588 = vld [vmem:[#allocation6 + $0x5a0] sm:$0xff]
        %v1589 = vld [vmem:[#allocation6 + $0x5a8] sm:$0xff]
        %v1590 = vld [vmem:[#allocation6 + $0x5b0] sm:$0xff]
        %v1591 = vld [vmem:[#allocation6 + $0x5b8] sm:$0xff]
        %v1592 = vld [vmem:[#allocation6 + $0x5c0] sm:$0xff]
        %v1593 = vld [vmem:[#allocation6 + $0x5c8] sm:$0xff]
        %v1594 = vld [vmem:[#allocation6 + $0x5d0] sm:$0xff]
        %v1595 = vld [vmem:[#allocation6 + $0x5d8] sm:$0xff]
        %v1596 = vld [vmem:[#allocation6 + $0x5e0] sm:$0xff]
        %v1597 = vld [vmem:[#allocation6 + $0x5e8] sm:$0xff]
        %v1598 = vld [vmem:[#allocation6 + $0x5f0] sm:$0xff]
        %v1599 = vld [vmem:[#allocation6 + $0x5f8] sm:$0xff]
        %1600 = vmatprep.subr.mxu0 %v1469
        %1601 = vmatpush1.msra.mxu0 %v1468
        %1602 = vmatprep.subr.mxu0 %v1465
        %1603 = vmatpush1.msra.mxu0 %v1464
        %1604 = vmatprep.subr.mxu0 %v1461
        %1605 = vmatpush1.msra.mxu0 %v1460
        %1606 = vmatprep.subr.mxu0 %v1457
        %1607 = vmatpush1.msra.mxu0 %v1456
        %1608 = vmatprep.subr.mxu0 %v1453
        %1609 = vmatpush1.msra.mxu0 %v1452
        %1610 = vmatprep.subr.mxu0 %v1449
        %1611 = vmatpush1.msra.mxu0 %v1448
        %1612 = vmatprep.subr.mxu0 %v1445
        %1613 = vmatpush1.msra.mxu0 %v1444
        %1614 = vmatprep.subr.mxu0 %v1441
        %1615 = vmatpush1.msra.mxu0 %v1440
        %1616 = vmatprep.subr.mxu0 %v1437
        %1617 = vmatpush1.msra.mxu0 %v1436
        %1618 = vmatprep.subr.mxu0 %v1433
        %1619 = vmatpush1.msra.mxu0 %v1432
        %1620 = vmatprep.subr.mxu0 %v1429
        %1621 = vmatpush1.msra.mxu0 %v1428
        %1622 = vmatprep.subr.mxu0 %v1425
        %1623 = vmatpush1.msra.mxu0 %v1424
        %1624 = vmatprep.subr.mxu0 %v1421
        %1625 = vmatpush1.msra.mxu0 %v1420
        %1626 = vmatprep.subr.mxu0 %v1417
        %1627 = vmatpush1.msra.mxu0 %v1416
        %1628 = vmatprep.subr.mxu0 %v1413
        %1629 = vmatpush1.msra.mxu0 %v1412
        %1630 = vmatprep.subr.mxu0 %v1409
        %1631 = vmatpush1.msra.mxu0 %v1408
        %1632 = vmatprep.subr.mxu0 %v1533
        %1633 = vmatpush2.msra.mxu0 %v1532
        %1634 = vmatprep.subr.mxu0 %v1529
        %1635 = vmatpush2.msra.mxu0 %v1528
        %1636 = vmatprep.subr.mxu0 %v1525
        %1637 = vmatpush2.msra.mxu0 %v1524
        %1638 = vmatprep.subr.mxu0 %v1521
        %1639 = vmatpush2.msra.mxu0 %v1520
        %1640 = vmatprep.subr.mxu0 %v1517
        %1641 = vmatpush2.msra.mxu0 %v1516
        %1642 = vmatprep.subr.mxu0 %v1513
        %1643 = vmatpush2.msra.mxu0 %v1512
        %1644 = vmatprep.subr.mxu0 %v1509
        %1645 = vmatpush2.msra.mxu0 %v1508
        %1646 = vmatprep.subr.mxu0 %v1505
        %1647 = vmatpush2.msra.mxu0 %v1504
        %1648 = vmatprep.subr.mxu0 %v1501
        %1649 = vmatpush2.msra.mxu0 %v1500
        %1650 = vmatprep.subr.mxu0 %v1497
        %1651 = vmatpush2.msra.mxu0 %v1496
        %1652 = vmatprep.subr.mxu0 %v1493
        %1653 = vmatpush2.msra.mxu0 %v1492
        %1654 = vmatprep.subr.mxu0 %v1489
        %1655 = vmatpush2.msra.mxu0 %v1488
        %1656 = vmatprep.subr.mxu0 %v1485
        %1657 = vmatpush2.msra.mxu0 %v1484
        %1658 = vmatprep.subr.mxu0 %v1481
        %1659 = vmatpush2.msra.mxu0 %v1480
        %1660 = vmatprep.subr.mxu0 %v1477
        %1661 = vmatpush2.msra.mxu0 %v1476
        %1662 = vmatprep.subr.mxu0 %v1473
        %1663 = vmatpush2.msra.mxu0 %v1472
        %1664 = vmatprep.mubr.f32.mxu0 0.0
        %1665 = vmatmul.mubr.f32.gmra.mxu0 0.0
        %v1666 = vpop.f32.mrf.mxu0
        %v1667 = vadd.f32 0.0, %v1666
        %v1668 = vpop.f32.mrf.mxu0
        %v1669 = vadd.f32 0.0, %v1668
        %1670 = vmatprep.mubr.f32.mxu0 0.0
        %1671 = vmatmul.mubr.f32.gmra.mxu0 0.0
        %v1672 = vpop.f32.mrf.mxu0
        %v1673 = vadd.f32 0.0, %v1672
        %v1674 = vpop.f32.mrf.mxu0
        %v1675 = vadd.f32 0.0, %v1674
        %1676 = vdwg.mxu0
        %1677 = vmatprep.subr.mxu0 %v1597
        %1678 = vmatpush1.msra.mxu0 %v1596
        %1679 = vmatprep.subr.mxu0 %v1593
        %1680 = vmatpush1.msra.mxu0 %v1592
        %1681 = vmatprep.subr.mxu0 %v1589
        %1682 = vmatpush1.msra.mxu0 %v1588
        %1683 = vmatprep.subr.mxu0 %v1585
        %1684 = vmatpush1.msra.mxu0 %v1584
        %1685 = vmatprep.subr.mxu0 %v1581
        %1686 = vmatpush1.msra.mxu0 %v1580
        %1687 = vmatprep.subr.mxu0 %v1577
        %1688 = vmatpush1.msra.mxu0 %v1576
        %1689 = vmatprep.subr.mxu0 %v1573
        %1690 = vmatpush1.msra.mxu0 %v1572
        %1691 = vmatprep.subr.mxu0 %v1569
        %1692 = vmatpush1.msra.mxu0 %v1568
        %1693 = vmatprep.subr.mxu0 %v1565
        %1694 = vmatpush1.msra.mxu0 %v1564
        %1695 = vmatprep.subr.mxu0 %v1561
        %1696 = vmatpush1.msra.mxu0 %v1560
        %1697 = vmatprep.subr.mxu0 %v1557
        %1698 = vmatpush1.msra.mxu0 %v1556
        %1699 = vmatprep.subr.mxu0 %v1553
        %1700 = vmatpush1.msra.mxu0 %v1552
        %1701 = vmatprep.subr.mxu0 %v1549
        %1702 = vmatpush1.msra.mxu0 %v1548
        %1703 = vmatprep.subr.mxu0 %v1545
        %1704 = vmatpush1.msra.mxu0 %v1544
        %1705 = vmatprep.subr.mxu0 %v1541
        %1706 = vmatpush1.msra.mxu0 %v1540
        %1707 = vmatprep.subr.mxu0 %v1537
        %1708 = vmatpush1.msra.mxu0 %v1536
        %1709 = vmatprep.subr.mxu0 0.0
        %1710 = vmatpush2.msra.mxu0 0.0
        %1711 = vmatprep.subr.mxu0 0.0
        %1712 = vmatpush2.msra.mxu0 0.0
        %1713 = vmatprep.subr.mxu0 0.0
        %1714 = vmatpush2.msra.mxu0 0.0
        %1715 = vmatprep.subr.mxu0 0.0
        %1716 = vmatpush2.msra.mxu0 0.0
        %1717 = vmatprep.subr.mxu0 0.0
        %1718 = vmatpush2.msra.mxu0 0.0
        %1719 = vmatprep.subr.mxu0 0.0
        %1720 = vmatpush2.msra.mxu0 0.0
        %1721 = vmatprep.subr.mxu0 0.0
        %1722 = vmatpush2.msra.mxu0 0.0
        %1723 = vmatprep.subr.mxu0 0.0
        %1724 = vmatpush2.msra.mxu0 0.0
        %1725 = vmatprep.subr.mxu0 0.0
        %1726 = vmatpush2.msra.mxu0 0.0
        %1727 = vmatprep.subr.mxu0 0.0
        %1728 = vmatpush2.msra.mxu0 0.0
        %1729 = vmatprep.subr.mxu0 0.0
        %1730 = vmatpush2.msra.mxu0 0.0
        %1731 = vmatprep.subr.mxu0 0.0
        %1732 = vmatpush2.msra.mxu0 0.0
        %1733 = vmatprep.subr.mxu0 0.0
        %1734 = vmatpush2.msra.mxu0 0.0
        %1735 = vmatprep.subr.mxu0 0.0
        %1736 = vmatpush2.msra.mxu0 0.0
        %1737 = vmatprep.subr.mxu0 0.0
        %1738 = vmatpush2.msra.mxu0 0.0
        %1739 = vmatprep.subr.mxu0 0.0
        %1740 = vmatpush2.msra.mxu0 0.0
        %1741 = vmatprep.mubr.f32.mxu0 0.0
        %1742 = vmatmul.mubr.f32.gmra.mxu0 0.0
        %v1743 = vpop.f32.mrf.mxu0
        %v1744 = vadd.f32 %v1667, %v1743
        %v1745 = vpop.f32.mrf.mxu0
        %v1746 = vadd.f32 %v1669, %v1745
        %1747 = vmatprep.mubr.f32.mxu0 0.0
        %1748 = vmatmul.mubr.f32.gmra.mxu0 0.0
        %v1749 = vpop.f32.mrf.mxu0
        %v1750 = vadd.f32 %v1673, %v1749
        %v1751 = vpop.f32.mrf.mxu0
        %v1752 = vadd.f32 %v1675, %v1751
        %1753 = vdwg.mxu0
        %1754 = vmatprep.subr.mxu0 %v1471
        %1755 = vmatpush1.msra.mxu0 %v1470
        %1756 = vmatprep.subr.mxu0 %v1467
        %1757 = vmatpush1.msra.mxu0 %v1466
        %1758 = vmatprep.subr.mxu0 %v1463
        %1759 = vmatpush1.msra.mxu0 %v1462
        %1760 = vmatprep.subr.mxu0 %v1459
        %1761 = vmatpush1.msra.mxu0 %v1458
        %1762 = vmatprep.subr.mxu0 %v1455
        %1763 = vmatpush1.msra.mxu0 %v1454
        %1764 = vmatprep.subr.mxu0 %v1451
        %1765 = vmatpush1.msra.mxu0 %v1450
        %1766 = vmatprep.subr.mxu0 %v1447
        %1767 = vmatpush1.msra.mxu0 %v1446
        %1768 = vmatprep.subr.mxu0 %v1443
        %1769 = vmatpush1.msra.mxu0 %v1442
        %1770 = vmatprep.subr.mxu0 %v1439
        %1771 = vmatpush1.msra.mxu0 %v1438
        %1772 = vmatprep.subr.mxu0 %v1435
        %1773 = vmatpush1.msra.mxu0 %v1434
        %1774 = vmatprep.subr.mxu0 %v1431
        %1775 = vmatpush1.msra.mxu0 %v1430
        %1776 = vmatprep.subr.mxu0 %v1427
        %1777 = vmatpush1.msra.mxu0 %v1426
        %1778 = vmatprep.subr.mxu0 %v1423
        %1779 = vmatpush1.msra.mxu0 %v1422
        %1780 = vmatprep.subr.mxu0 %v1419
        %1781 = vmatpush1.msra.mxu0 %v1418
        %1782 = vmatprep.subr.mxu0 %v1415
        %1783 = vmatpush1.msra.mxu0 %v1414
        %1784 = vmatprep.subr.mxu0 %v1411
        %1785 = vmatpush1.msra.mxu0 %v1410
        %1786 = vmatprep.subr.mxu0 %v1535
        %1787 = vmatpush2.msra.mxu0 %v1534
        %1788 = vmatprep.subr.mxu0 %v1531
        %1789 = vmatpush2.msra.mxu0 %v1530
        %1790 = vmatprep.subr.mxu0 %v1527
        %1791 = vmatpush2.msra.mxu0 %v1526
        %1792 = vmatprep.subr.mxu0 %v1523
        %1793 = vmatpush2.msra.mxu0 %v1522
        %1794 = vmatprep.subr.mxu0 %v1519
        %1795 = vmatpush2.msra.mxu0 %v1518
        %1796 = vmatprep.subr.mxu0 %v1515
        %1797 = vmatpush2.msra.mxu0 %v1514
        %1798 = vmatprep.subr.mxu0 %v1511
        %1799 = vmatpush2.msra.mxu0 %v1510
        %1800 = vmatprep.subr.mxu0 %v1507
        %1801 = vmatpush2.msra.mxu0 %v1506
        %1802 = vmatprep.subr.mxu0 %v1503
        %1803 = vmatpush2.msra.mxu0 %v1502
        %1804 = vmatprep.subr.mxu0 %v1499
        %1805 = vmatpush2.msra.mxu0 %v1498
        %1806 = vmatprep.subr.mxu0 %v1495
        %1807 = vmatpush2.msra.mxu0 %v1494
        %1808 = vmatprep.subr.mxu0 %v1491
        %1809 = vmatpush2.msra.mxu0 %v1490
        %1810 = vmatprep.subr.mxu0 %v1487
        %1811 = vmatpush2.msra.mxu0 %v1486
        %1812 = vmatprep.subr.mxu0 %v1483
        %1813 = vmatpush2.msra.mxu0 %v1482
        %1814 = vmatprep.subr.mxu0 %v1479
        %1815 = vmatpush2.msra.mxu0 %v1478
        %1816 = vmatprep.subr.mxu0 %v1475
        %1817 = vmatpush2.msra.mxu0 %v1474
        %1818 = vmatprep.mubr.f32.mxu0 0.0
        %1819 = vmatmul.mubr.f32.gmra.mxu0 0.0
        %v1820 = vpop.f32.mrf.mxu0
        %v1821 = vadd.f32 0.0, %v1820
        %v1822 = vpop.f32.mrf.mxu0
        %v1823 = vadd.f32 0.0, %v1822
        %1824 = vmatprep.mubr.f32.mxu0 0.0
        %1825 = vmatmul.mubr.f32.gmra.mxu0 0.0
        %v1826 = vpop.f32.mrf.mxu0
        %v1827 = vadd.f32 0.0, %v1826
        %v1828 = vpop.f32.mrf.mxu0
        %v1829 = vadd.f32 0.0, %v1828
        %1830 = vdwg.mxu0
        %1831 = vmatprep.subr.mxu0 %v1599
        %1832 = vmatpush1.msra.mxu0 %v1598
        %1833 = vmatprep.subr.mxu0 %v1595
        %1834 = vmatpush1.msra.mxu0 %v1594
        %1835 = vmatprep.subr.mxu0 %v1591
        %1836 = vmatpush1.msra.mxu0 %v1590
        %1837 = vmatprep.subr.mxu0 %v1587
        %1838 = vmatpush1.msra.mxu0 %v1586
        %1839 = vmatprep.subr.mxu0 %v1583
        %1840 = vmatpush1.msra.mxu0 %v1582
        %1841 = vmatprep.subr.mxu0 %v1579
        %1842 = vmatpush1.msra.mxu0 %v1578
        %1843 = vmatprep.subr.mxu0 %v1575
        %1844 = vmatpush1.msra.mxu0 %v1574
        %1845 = vmatprep.subr.mxu0 %v1571
        %1846 = vmatpush1.msra.mxu0 %v1570
        %1847 = vmatprep.subr.mxu0 %v1567
        %1848 = vmatpush1.msra.mxu0 %v1566
        %1849 = vmatprep.subr.mxu0 %v1563
        %1850 = vmatpush1.msra.mxu0 %v1562
        %1851 = vmatprep.subr.mxu0 %v1559
        %1852 = vmatpush1.msra.mxu0 %v1558
        %1853 = vmatprep.subr.mxu0 %v1555
        %1854 = vmatpush1.msra.mxu0 %v1554
        %1855 = vmatprep.subr.mxu0 %v1551
        %1856 = vmatpush1.msra.mxu0 %v1550
        %1857 = vmatprep.subr.mxu0 %v1547
        %1858 = vmatpush1.msra.mxu0 %v1546
        %1859 = vmatprep.subr.mxu0 %v1543
        %1860 = vmatpush1.msra.mxu0 %v1542
        %1861 = vmatprep.subr.mxu0 %v1539
        %1862 = vmatpush1.msra.mxu0 %v1538
        %1863 = vmatprep.subr.mxu0 0.0
        %1864 = vmatpush2.msra.mxu0 0.0
        %1865 = vmatprep.subr.mxu0 0.0
        %1866 = vmatpush2.msra.mxu0 0.0
        %1867 = vmatprep.subr.mxu0 0.0
        %1868 = vmatpush2.msra.mxu0 0.0
        %1869 = vmatprep.subr.mxu0 0.0
        %1870 = vmatpush2.msra.mxu0 0.0
        %1871 = vmatprep.subr.mxu0 0.0
        %1872 = vmatpush2.msra.mxu0 0.0
        %1873 = vmatprep.subr.mxu0 0.0
        %1874 = vmatpush2.msra.mxu0 0.0
        %1875 = vmatprep.subr.mxu0 0.0
        %1876 = vmatpush2.msra.mxu0 0.0
        %1877 = vmatprep.subr.mxu0 0.0
        %1878 = vmatpush2.msra.mxu0 0.0
        %1879 = vmatprep.subr.mxu0 0.0
        %1880 = vmatpush2.msra.mxu0 0.0
        %1881 = vmatprep.subr.mxu0 0.0
        %1882 = vmatpush2.msra.mxu0 0.0
        %1883 = vmatprep.subr.mxu0 0.0
        %1884 = vmatpush2.msra.mxu0 0.0
        %1885 = vmatprep.subr.mxu0 0.0
        %1886 = vmatpush2.msra.mxu0 0.0
        %1887 = vmatprep.subr.mxu0 0.0
        %1888 = vmatpush2.msra.mxu0 0.0
        %1889 = vmatprep.subr.mxu0 0.0
        %1890 = vmatpush2.msra.mxu0 0.0
        %1891 = vmatprep.subr.mxu0 0.0
        %1892 = vmatpush2.msra.mxu0 0.0
        %1893 = vmatprep.subr.mxu0 0.0
        %1894 = vmatpush2.msra.mxu0 0.0
        %1895 = vmatprep.mubr.f32.mxu0 0.0
        %1896 = vmatmul.mubr.f32.gmra.mxu0 0.0
        %v1897 = vpop.f32.mrf.mxu0
        %v1898 = vadd.f32 %v1821, %v1897
        %v1899 = vpop.f32.mrf.mxu0
        %v1900 = vadd.f32 %v1823, %v1899
        %1901 = vmatprep.mubr.f32.mxu0 0.0
        %1902 = vmatmul.mubr.f32.gmra.mxu0 0.0
        %v1903 = vpop.f32.mrf.mxu0
        %v1904 = vadd.f32 %v1827, %v1903
        %v1905 = vpop.f32.mrf.mxu0
        %v1906 = vadd.f32 %v1829, %v1905
        %1907 = vdwg.mxu0
        %v1908 = vadd.f32 %v1400, %v1744
        %v1909 = vadd.f32 %v1401, %v1746
        %v1910 = vadd.f32 %v1402, %v1898
        %v1911 = vadd.f32 %v1403, %v1900
        %v1912 = vadd.f32 %v1404, %v1750
        %v1913 = vadd.f32 %v1405, %v1752
        %v1914 = vadd.f32 %v1406, %v1904
        %v1915 = vadd.f32 %v1407, %v1906
        %v1916 = vmul.f32 %v1391, 0.0
        %v1917 = vmul.f32 %v1392, 0.0
        %v1918 = vadd.f32 %v1908, %v1916
        %v1919 = vadd.f32 %v1912, %v1917
        %v1920 = vmul.f32 %v1918, 0.5
        %v1921 = vmul.f32 %v1919, 0.5
        %v1922 = vtanh.pop %v1920
        %v1923 = vtanh.pop %v1921
        %v1924 = vmul.f32 %v1922, 0.5
        %v1925 = vmul.f32 %v1923, 0.5
        %v1926 = vadd.f32 %v1924, 0.5
        %v1927 = vadd.f32 %v1925, 0.5
        %v1928 = vmul.f32 %v1393, 0.0
        %v1929 = vmul.f32 %v1394, 0.0
        %v1930 = vadd.f32 %v1909, %v1928
        %v1931 = vadd.f32 %v1913, %v1929
        %v1932 = vmul.f32 %v1930, 0.5
        %v1933 = vmul.f32 %v1931, 0.5
        %v1934 = vtanh.pop %v1932
        %v1935 = vtanh.pop %v1933
        %v1936 = vmul.f32 %v1934, 0.5
        %v1937 = vmul.f32 %v1935, 0.5
        %v1938 = vadd.f32 %v1936, 0.5
        %v1939 = vadd.f32 %v1937, 0.5
        %v1940 = vmul.f32 %v1938, 0.0
        %v1941 = vmul.f32 %v1939, 0.0
        %v1942 = vtanh.pop %v1910
        %v1943 = vtanh.pop %v1914
        %v1944 = vmul.f32 %v1926, %v1942
        %v1945 = vmul.f32 %v1927, %v1943
        %v1946 = vadd.f32 %v1940, %v1944
        %v1947 = vadd.f32 %v1941, %v1945
        %v1948 = vmul.f32 %v1395, %v1946
        %v1949 = vmul.f32 %v1396, %v1947
        %v1950 = vadd.f32 %v1911, %v1948
        %v1951 = vadd.f32 %v1915, %v1949
        %v1952 = vmul.f32 %v1950, 0.5
        %v1953 = vmul.f32 %v1951, 0.5
        %v1954 = vtanh.pop %v1952
        %v1955 = vtanh.pop %v1953
        %v1956 = vmul.f32 %v1954, 0.5
        %v1957 = vmul.f32 %v1955, 0.5
        %v1958 = vadd.f32 %v1956, 0.5
        %v1959 = vadd.f32 %v1957, 0.5
        %v1960 = vtanh.pop %v1946
        %v1961 = vtanh.pop %v1947
        %v1962 = vmul.f32 %v1958, %v1960
        %v1963 = vmul.f32 %v1959, %v1961
        %1964 = vst [vmem:[%s301] sm:$0xff] %v1962
        %1965 = vst [vmem:[%s301 + $0x8] sm:$0xff] %v1963
        %v1968 = vrot.slane %v1962, 7
        %v1969 = vrot.slane %v1963, 7
        %v1970 = vsel %vm339, %v1968, %v1969
        %v1973 = vsel %vm339, 0.0, %v1968
        %v1974 = vrot.slane %v1962, 1
        %v1975 = vrot.slane %v1963, 1
        %v1976 = vsel %vm629, %v1974, %v1975
        %v1979 = vsel %vm629, %v1975, 0.0
        %s1980 = smul.u32 2, 4
        %s1981 = smul.addr %s1980, 8
        %s1982 = scalar_lea.vmem [#allocation2], %s1981
        %v1983 = vld [vmem:[%s1982] sm:$0xff]
        %v1984 = vld [vmem:[%s1982 + $0x8] sm:$0xff]
        %v1985 = vld [vmem:[%s1982 + $0x10] sm:$0xff]
        %v1986 = vld [vmem:[%s1982 + $0x18] sm:$0xff]
        %v1987 = vld [vmem:[%s1982 + $0x20] sm:$0xff]
        %v1988 = vld [vmem:[%s1982 + $0x28] sm:$0xff]
        %v1989 = vld [vmem:[%s1982 + $0x30] sm:$0xff]
        %v1990 = vld [vmem:[%s1982 + $0x38] sm:$0xff]
        %v1991 = vld [vmem:[#allocation6] sm:$0xff]
        %v1992 = vld [vmem:[#allocation6 + $0x8] sm:$0xff]
        %v1993 = vld [vmem:[#allocation6 + $0x10] sm:$0xff]
        %v1994 = vld [vmem:[#allocation6 + $0x18] sm:$0xff]
        %v1995 = vld [vmem:[#allocation6 + $0x20] sm:$0xff]
        %v1996 = vld [vmem:[#allocation6 + $0x28] sm:$0xff]
        %v1997 = vld [vmem:[#allocation6 + $0x30] sm:$0xff]
        %v1998 = vld [vmem:[#allocation6 + $0x38] sm:$0xff]
        %v1999 = vld [vmem:[#allocation6 + $0x40] sm:$0xff]
        %v2000 = vld [vmem:[#allocation6 + $0x48] sm:$0xff]
        %v2001 = vld [vmem:[#allocation6 + $0x50] sm:$0xff]
        %v2002 = vld [vmem:[#allocation6 + $0x58] sm:$0xff]
        %v2003 = vld [vmem:[#allocation6 + $0x60] sm:$0xff]
        %v2004 = vld [vmem:[#allocation6 + $0x68] sm:$0xff]
        %v2005 = vld [vmem:[#allocation6 + $0x70] sm:$0xff]
        %v2006 = vld [vmem:[#allocation6 + $0x78] sm:$0xff]
        %v2007 = vld [vmem:[#allocation6 + $0x80] sm:$0xff]
        %v2008 = vld [vmem:[#allocation6 + $0x88] sm:$0xff]
        %v2009 = vld [vmem:[#allocation6 + $0x90] sm:$0xff]
        %v2010 = vld [vmem:[#allocation6 + $0x98] sm:$0xff]
        %v2011 = vld [vmem:[#allocation6 + $0xa0] sm:$0xff]
        %v2012 = vld [vmem:[#allocation6 + $0xa8] sm:$0xff]
        %v2013 = vld [vmem:[#allocation6 + $0xb0] sm:$0xff]
        %v2014 = vld [vmem:[#allocation6 + $0xb8] sm:$0xff]
        %v2015 = vld [vmem:[#allocation6 + $0xc0] sm:$0xff]
        %v2016 = vld [vmem:[#allocation6 + $0xc8] sm:$0xff]
        %v2017 = vld [vmem:[#allocation6 + $0xd0] sm:$0xff]
        %v2018 = vld [vmem:[#allocation6 + $0xd8] sm:$0xff]
        %v2019 = vld [vmem:[#allocation6 + $0xe0] sm:$0xff]
        %v2020 = vld [vmem:[#allocation6 + $0xe8] sm:$0xff]
        %v2021 = vld [vmem:[#allocation6 + $0xf0] sm:$0xff]
        %v2022 = vld [vmem:[#allocation6 + $0xf8] sm:$0xff]
        %v2023 = vld [vmem:[#allocation6 + $0x100] sm:$0xff]
        %v2024 = vld [vmem:[#allocation6 + $0x108] sm:$0xff]
        %v2025 = vld [vmem:[#allocation6 + $0x110] sm:$0xff]
        %v2026 = vld [vmem:[#allocation6 + $0x118] sm:$0xff]
        %v2027 = vld [vmem:[#allocation6 + $0x120] sm:$0xff]
        %v2028 = vld [vmem:[#allocation6 + $0x128] sm:$0xff]
        %v2029 = vld [vmem:[#allocation6 + $0x130] sm:$0xff]
        %v2030 = vld [vmem:[#allocation6 + $0x138] sm:$0xff]
        %v2031 = vld [vmem:[#allocation6 + $0x140] sm:$0xff]
        %v2032 = vld [vmem:[#allocation6 + $0x148] sm:$0xff]
        %v2033 = vld [vmem:[#allocation6 + $0x150] sm:$0xff]
        %v2034 = vld [vmem:[#allocation6 + $0x158] sm:$0xff]
        %v2035 = vld [vmem:[#allocation6 + $0x160] sm:$0xff]
        %v2036 = vld [vmem:[#allocation6 + $0x168] sm:$0xff]
        %v2037 = vld [vmem:[#allocation6 + $0x170] sm:$0xff]
        %v2038 = vld [vmem:[#allocation6 + $0x178] sm:$0xff]
        %v2039 = vld [vmem:[#allocation6 + $0x180] sm:$0xff]
        %v2040 = vld [vmem:[#allocation6 + $0x188] sm:$0xff]
        %v2041 = vld [vmem:[#allocation6 + $0x190] sm:$0xff]
        %v2042 = vld [vmem:[#allocation6 + $0x198] sm:$0xff]
        %v2043 = vld [vmem:[#allocation6 + $0x1a0] sm:$0xff]
        %v2044 = vld [vmem:[#allocation6 + $0x1a8] sm:$0xff]
        %v2045 = vld [vmem:[#allocation6 + $0x1b0] sm:$0xff]
        %v2046 = vld [vmem:[#allocation6 + $0x1b8] sm:$0xff]
        %v2047 = vld [vmem:[#allocation6 + $0x1c0] sm:$0xff]
        %v2048 = vld [vmem:[#allocation6 + $0x1c8] sm:$0xff]
        %v2049 = vld [vmem:[#allocation6 + $0x1d0] sm:$0xff]
        %v2050 = vld [vmem:[#allocation6 + $0x1d8] sm:$0xff]
        %v2051 = vld [vmem:[#allocation6 + $0x1e0] sm:$0xff]
        %v2052 = vld [vmem:[#allocation6 + $0x1e8] sm:$0xff]
        %v2053 = vld [vmem:[#allocation6 + $0x1f0] sm:$0xff]
        %v2054 = vld [vmem:[#allocation6 + $0x1f8] sm:$0xff]
        %v2055 = vld [vmem:[#allocation6 + $0x200] sm:$0xff]
        %v2056 = vld [vmem:[#allocation6 + $0x208] sm:$0xff]
        %v2057 = vld [vmem:[#allocation6 + $0x210] sm:$0xff]
        %v2058 = vld [vmem:[#allocation6 + $0x218] sm:$0xff]
        %v2059 = vld [vmem:[#allocation6 + $0x220] sm:$0xff]
        %v2060 = vld [vmem:[#allocation6 + $0x228] sm:$0xff]
        %v2061 = vld [vmem:[#allocation6 + $0x230] sm:$0xff]
        %v2062 = vld [vmem:[#allocation6 + $0x238] sm:$0xff]
        %v2063 = vld [vmem:[#allocation6 + $0x240] sm:$0xff]
        %v2064 = vld [vmem:[#allocation6 + $0x248] sm:$0xff]
        %v2065 = vld [vmem:[#allocation6 + $0x250] sm:$0xff]
        %v2066 = vld [vmem:[#allocation6 + $0x258] sm:$0xff]
        %v2067 = vld [vmem:[#allocation6 + $0x260] sm:$0xff]
        %v2068 = vld [vmem:[#allocation6 + $0x268] sm:$0xff]
        %v2069 = vld [vmem:[#allocation6 + $0x270] sm:$0xff]
        %v2070 = vld [vmem:[#allocation6 + $0x278] sm:$0xff]
        %v2071 = vld [vmem:[#allocation6 + $0x280] sm:$0xff]
        %v2072 = vld [vmem:[#allocation6 + $0x288] sm:$0xff]
        %v2073 = vld [vmem:[#allocation6 + $0x290] sm:$0xff]
        %v2074 = vld [vmem:[#allocation6 + $0x298] sm:$0xff]
        %v2075 = vld [vmem:[#allocation6 + $0x2a0] sm:$0xff]
        %v2076 = vld [vmem:[#allocation6 + $0x2a8] sm:$0xff]
        %v2077 = vld [vmem:[#allocation6 + $0x2b0] sm:$0xff]
        %v2078 = vld [vmem:[#allocation6 + $0x2b8] sm:$0xff]
        %v2079 = vld [vmem:[#allocation6 + $0x2c0] sm:$0xff]
        %v2080 = vld [vmem:[#allocation6 + $0x2c8] sm:$0xff]
        %v2081 = vld [vmem:[#allocation6 + $0x2d0] sm:$0xff]
        %v2082 = vld [vmem:[#allocation6 + $0x2d8] sm:$0xff]
        %v2083 = vld [vmem:[#allocation6 + $0x2e0] sm:$0xff]
        %v2084 = vld [vmem:[#allocation6 + $0x2e8] sm:$0xff]
        %v2085 = vld [vmem:[#allocation6 + $0x2f0] sm:$0xff]
        %v2086 = vld [vmem:[#allocation6 + $0x2f8] sm:$0xff]
        %v2087 = vld [vmem:[#allocation6 + $0x300] sm:$0xff]
        %v2088 = vld [vmem:[#allocation6 + $0x308] sm:$0xff]
        %v2089 = vld [vmem:[#allocation6 + $0x310] sm:$0xff]
        %v2090 = vld [vmem:[#allocation6 + $0x318] sm:$0xff]
        %v2091 = vld [vmem:[#allocation6 + $0x320] sm:$0xff]
        %v2092 = vld [vmem:[#allocation6 + $0x328] sm:$0xff]
        %v2093 = vld [vmem:[#allocation6 + $0x330] sm:$0xff]
        %v2094 = vld [vmem:[#allocation6 + $0x338] sm:$0xff]
        %v2095 = vld [vmem:[#allocation6 + $0x340] sm:$0xff]
        %v2096 = vld [vmem:[#allocation6 + $0x348] sm:$0xff]
        %v2097 = vld [vmem:[#allocation6 + $0x350] sm:$0xff]
        %v2098 = vld [vmem:[#allocation6 + $0x358] sm:$0xff]
        %v2099 = vld [vmem:[#allocation6 + $0x360] sm:$0xff]
        %v2100 = vld [vmem:[#allocation6 + $0x368] sm:$0xff]
        %v2101 = vld [vmem:[#allocation6 + $0x370] sm:$0xff]
        %v2102 = vld [vmem:[#allocation6 + $0x378] sm:$0xff]
        %v2103 = vld [vmem:[#allocation6 + $0x380] sm:$0xff]
        %v2104 = vld [vmem:[#allocation6 + $0x388] sm:$0xff]
        %v2105 = vld [vmem:[#allocation6 + $0x390] sm:$0xff]
        %v2106 = vld [vmem:[#allocation6 + $0x398] sm:$0xff]
        %v2107 = vld [vmem:[#allocation6 + $0x3a0] sm:$0xff]
        %v2108 = vld [vmem:[#allocation6 + $0x3a8] sm:$0xff]
        %v2109 = vld [vmem:[#allocation6 + $0x3b0] sm:$0xff]
        %v2110 = vld [vmem:[#allocation6 + $0x3b8] sm:$0xff]
        %v2111 = vld [vmem:[#allocation6 + $0x3c0] sm:$0xff]
        %v2112 = vld [vmem:[#allocation6 + $0x3c8] sm:$0xff]
        %v2113 = vld [vmem:[#allocation6 + $0x3d0] sm:$0xff]
        %v2114 = vld [vmem:[#allocation6 + $0x3d8] sm:$0xff]
        %v2115 = vld [vmem:[#allocation6 + $0x3e0] sm:$0xff]
        %v2116 = vld [vmem:[#allocation6 + $0x3e8] sm:$0xff]
        %v2117 = vld [vmem:[#allocation6 + $0x3f0] sm:$0xff]
        %v2118 = vld [vmem:[#allocation6 + $0x3f8] sm:$0xff]
        %v2119 = vld [vmem:[#allocation6 + $0x400] sm:$0xff]
        %v2120 = vld [vmem:[#allocation6 + $0x408] sm:$0xff]
        %v2121 = vld [vmem:[#allocation6 + $0x410] sm:$0xff]
        %v2122 = vld [vmem:[#allocation6 + $0x418] sm:$0xff]
        %v2123 = vld [vmem:[#allocation6 + $0x420] sm:$0xff]
        %v2124 = vld [vmem:[#allocation6 + $0x428] sm:$0xff]
        %v2125 = vld [vmem:[#allocation6 + $0x430] sm:$0xff]
        %v2126 = vld [vmem:[#allocation6 + $0x438] sm:$0xff]
        %v2127 = vld [vmem:[#allocation6 + $0x440] sm:$0xff]
        %v2128 = vld [vmem:[#allocation6 + $0x448] sm:$0xff]
        %v2129 = vld [vmem:[#allocation6 + $0x450] sm:$0xff]
        %v2130 = vld [vmem:[#allocation6 + $0x458] sm:$0xff]
        %v2131 = vld [vmem:[#allocation6 + $0x460] sm:$0xff]
        %v2132 = vld [vmem:[#allocation6 + $0x468] sm:$0xff]
        %v2133 = vld [vmem:[#allocation6 + $0x470] sm:$0xff]
        %v2134 = vld [vmem:[#allocation6 + $0x478] sm:$0xff]
        %v2135 = vld [vmem:[#allocation6 + $0x480] sm:$0xff]
        %v2136 = vld [vmem:[#allocation6 + $0x488] sm:$0xff]
        %v2137 = vld [vmem:[#allocation6 + $0x490] sm:$0xff]
        %v2138 = vld [vmem:[#allocation6 + $0x498] sm:$0xff]
        %v2139 = vld [vmem:[#allocation6 + $0x4a0] sm:$0xff]
        %v2140 = vld [vmem:[#allocation6 + $0x4a8] sm:$0xff]
        %v2141 = vld [vmem:[#allocation6 + $0x4b0] sm:$0xff]
        %v2142 = vld [vmem:[#allocation6 + $0x4b8] sm:$0xff]
        %v2143 = vld [vmem:[#allocation6 + $0x4c0] sm:$0xff]
        %v2144 = vld [vmem:[#allocation6 + $0x4c8] sm:$0xff]
        %v2145 = vld [vmem:[#allocation6 + $0x4d0] sm:$0xff]
        %v2146 = vld [vmem:[#allocation6 + $0x4d8] sm:$0xff]
        %v2147 = vld [vmem:[#allocation6 + $0x4e0] sm:$0xff]
        %v2148 = vld [vmem:[#allocation6 + $0x4e8] sm:$0xff]
        %v2149 = vld [vmem:[#allocation6 + $0x4f0] sm:$0xff]
        %v2150 = vld [vmem:[#allocation6 + $0x4f8] sm:$0xff]
        %v2151 = vld [vmem:[#allocation6 + $0x500] sm:$0xff]
        %v2152 = vld [vmem:[#allocation6 + $0x508] sm:$0xff]
        %v2153 = vld [vmem:[#allocation6 + $0x510] sm:$0xff]
        %v2154 = vld [vmem:[#allocation6 + $0x518] sm:$0xff]
        %v2155 = vld [vmem:[#allocation6 + $0x520] sm:$0xff]
        %v2156 = vld [vmem:[#allocation6 + $0x528] sm:$0xff]
        %v2157 = vld [vmem:[#allocation6 + $0x530] sm:$0xff]
        %v2158 = vld [vmem:[#allocation6 + $0x538] sm:$0xff]
        %v2159 = vld [vmem:[#allocation6 + $0x540] sm:$0xff]
        %v2160 = vld [vmem:[#allocation6 + $0x548] sm:$0xff]
        %v2161 = vld [vmem:[#allocation6 + $0x550] sm:$0xff]
        %v2162 = vld [vmem:[#allocation6 + $0x558] sm:$0xff]
        %v2163 = vld [vmem:[#allocation6 + $0x560] sm:$0xff]
        %v2164 = vld [vmem:[#allocation6 + $0x568] sm:$0xff]
        %v2165 = vld [vmem:[#allocation6 + $0x570] sm:$0xff]
        %v2166 = vld [vmem:[#allocation6 + $0x578] sm:$0xff]
        %v2167 = vld [vmem:[#allocation6 + $0x580] sm:$0xff]
        %v2168 = vld [vmem:[#allocation6 + $0x588] sm:$0xff]
        %v2169 = vld [vmem:[#allocation6 + $0x590] sm:$0xff]
        %v2170 = vld [vmem:[#allocation6 + $0x598] sm:$0xff]
        %v2171 = vld [vmem:[#allocation6 + $0x5a0] sm:$0xff]
        %v2172 = vld [vmem:[#allocation6 + $0x5a8] sm:$0xff]
        %v2173 = vld [vmem:[#allocation6 + $0x5b0] sm:$0xff]
        %v2174 = vld [vmem:[#allocation6 + $0x5b8] sm:$0xff]
        %v2175 = vld [vmem:[#allocation6 + $0x5c0] sm:$0xff]
        %v2176 = vld [vmem:[#allocation6 + $0x5c8] sm:$0xff]
        %v2177 = vld [vmem:[#allocation6 + $0x5d0] sm:$0xff]
        %v2178 = vld [vmem:[#allocation6 + $0x5d8] sm:$0xff]
        %v2179 = vld [vmem:[#allocation6 + $0x5e0] sm:$0xff]
        %v2180 = vld [vmem:[#allocation6 + $0x5e8] sm:$0xff]
        %v2181 = vld [vmem:[#allocation6 + $0x5f0] sm:$0xff]
        %v2182 = vld [vmem:[#allocation6 + $0x5f8] sm:$0xff]
        %2183 = vmatprep.subr.mxu0 %v2052
        %2184 = vmatpush1.msra.mxu0 %v2051
        %2185 = vmatprep.subr.mxu0 %v2048
        %2186 = vmatpush1.msra.mxu0 %v2047
        %2187 = vmatprep.subr.mxu0 %v2044
        %2188 = vmatpush1.msra.mxu0 %v2043
        %2189 = vmatprep.subr.mxu0 %v2040
        %2190 = vmatpush1.msra.mxu0 %v2039
        %2191 = vmatprep.subr.mxu0 %v2036
        %2192 = vmatpush1.msra.mxu0 %v2035
        %2193 = vmatprep.subr.mxu0 %v2032
        %2194 = vmatpush1.msra.mxu0 %v2031
        %2195 = vmatprep.subr.mxu0 %v2028
        %2196 = vmatpush1.msra.mxu0 %v2027
        %2197 = vmatprep.subr.mxu0 %v2024
        %2198 = vmatpush1.msra.mxu0 %v2023
        %2199 = vmatprep.subr.mxu0 %v2020
        %2200 = vmatpush1.msra.mxu0 %v2019
        %2201 = vmatprep.subr.mxu0 %v2016
        %2202 = vmatpush1.msra.mxu0 %v2015
        %2203 = vmatprep.subr.mxu0 %v2012
        %2204 = vmatpush1.msra.mxu0 %v2011
        %2205 = vmatprep.subr.mxu0 %v2008
        %2206 = vmatpush1.msra.mxu0 %v2007
        %2207 = vmatprep.subr.mxu0 %v2004
        %2208 = vmatpush1.msra.mxu0 %v2003
        %2209 = vmatprep.subr.mxu0 %v2000
        %2210 = vmatpush1.msra.mxu0 %v1999
        %2211 = vmatprep.subr.mxu0 %v1996
        %2212 = vmatpush1.msra.mxu0 %v1995
        %2213 = vmatprep.subr.mxu0 %v1992
        %2214 = vmatpush1.msra.mxu0 %v1991
        %2215 = vmatprep.subr.mxu0 %v2116
        %2216 = vmatpush2.msra.mxu0 %v2115
        %2217 = vmatprep.subr.mxu0 %v2112
        %2218 = vmatpush2.msra.mxu0 %v2111
        %2219 = vmatprep.subr.mxu0 %v2108
        %2220 = vmatpush2.msra.mxu0 %v2107
        %2221 = vmatprep.subr.mxu0 %v2104
        %2222 = vmatpush2.msra.mxu0 %v2103
        %2223 = vmatprep.subr.mxu0 %v2100
        %2224 = vmatpush2.msra.mxu0 %v2099
        %2225 = vmatprep.subr.mxu0 %v2096
        %2226 = vmatpush2.msra.mxu0 %v2095
        %2227 = vmatprep.subr.mxu0 %v2092
        %2228 = vmatpush2.msra.mxu0 %v2091
        %2229 = vmatprep.subr.mxu0 %v2088
        %2230 = vmatpush2.msra.mxu0 %v2087
        %2231 = vmatprep.subr.mxu0 %v2084
        %2232 = vmatpush2.msra.mxu0 %v2083
        %2233 = vmatprep.subr.mxu0 %v2080
        %2234 = vmatpush2.msra.mxu0 %v2079
        %2235 = vmatprep.subr.mxu0 %v2076
        %2236 = vmatpush2.msra.mxu0 %v2075
        %2237 = vmatprep.subr.mxu0 %v2072
        %2238 = vmatpush2.msra.mxu0 %v2071
        %2239 = vmatprep.subr.mxu0 %v2068
        %2240 = vmatpush2.msra.mxu0 %v2067
        %2241 = vmatprep.subr.mxu0 %v2064
        %2242 = vmatpush2.msra.mxu0 %v2063
        %2243 = vmatprep.subr.mxu0 %v2060
        %2244 = vmatpush2.msra.mxu0 %v2059
        %2245 = vmatprep.subr.mxu0 %v2056
        %2246 = vmatpush2.msra.mxu0 %v2055
        %2247 = vmatprep.mubr.f32.mxu0 %v1962
        %2248 = vmatmul.mubr.f32.gmra.mxu0 %v1973
        %v2249 = vpop.f32.mrf.mxu0
        %v2250 = vadd.f32 0.0, %v2249
        %v2251 = vpop.f32.mrf.mxu0
        %v2252 = vadd.f32 0.0, %v2251
        %2253 = vmatprep.mubr.f32.mxu0 %v1963
        %2254 = vmatmul.mubr.f32.gmra.mxu0 %v1970
        %v2255 = vpop.f32.mrf.mxu0
        %v2256 = vadd.f32 0.0, %v2255
        %v2257 = vpop.f32.mrf.mxu0
        %v2258 = vadd.f32 0.0, %v2257
        %2259 = vdwg.mxu0
        %2260 = vmatprep.subr.mxu0 %v2180
        %2261 = vmatpush1.msra.mxu0 %v2179
        %2262 = vmatprep.subr.mxu0 %v2176
        %2263 = vmatpush1.msra.mxu0 %v2175
        %2264 = vmatprep.subr.mxu0 %v2172
        %2265 = vmatpush1.msra.mxu0 %v2171
        %2266 = vmatprep.subr.mxu0 %v2168
        %2267 = vmatpush1.msra.mxu0 %v2167
        %2268 = vmatprep.subr.mxu0 %v2164
        %2269 = vmatpush1.msra.mxu0 %v2163
        %2270 = vmatprep.subr.mxu0 %v2160
        %2271 = vmatpush1.msra.mxu0 %v2159
        %2272 = vmatprep.subr.mxu0 %v2156
        %2273 = vmatpush1.msra.mxu0 %v2155
        %2274 = vmatprep.subr.mxu0 %v2152
        %2275 = vmatpush1.msra.mxu0 %v2151
        %2276 = vmatprep.subr.mxu0 %v2148
        %2277 = vmatpush1.msra.mxu0 %v2147
        %2278 = vmatprep.subr.mxu0 %v2144
        %2279 = vmatpush1.msra.mxu0 %v2143
        %2280 = vmatprep.subr.mxu0 %v2140
        %2281 = vmatpush1.msra.mxu0 %v2139
        %2282 = vmatprep.subr.mxu0 %v2136
        %2283 = vmatpush1.msra.mxu0 %v2135
        %2284 = vmatprep.subr.mxu0 %v2132
        %2285 = vmatpush1.msra.mxu0 %v2131
        %2286 = vmatprep.subr.mxu0 %v2128
        %2287 = vmatpush1.msra.mxu0 %v2127
        %2288 = vmatprep.subr.mxu0 %v2124
        %2289 = vmatpush1.msra.mxu0 %v2123
        %2290 = vmatprep.subr.mxu0 %v2120
        %2291 = vmatpush1.msra.mxu0 %v2119
        %2292 = vmatprep.subr.mxu0 0.0
        %2293 = vmatpush2.msra.mxu0 0.0
        %2294 = vmatprep.subr.mxu0 0.0
        %2295 = vmatpush2.msra.mxu0 0.0
        %2296 = vmatprep.subr.mxu0 0.0
        %2297 = vmatpush2.msra.mxu0 0.0
        %2298 = vmatprep.subr.mxu0 0.0
        %2299 = vmatpush2.msra.mxu0 0.0
        %2300 = vmatprep.subr.mxu0 0.0
        %2301 = vmatpush2.msra.mxu0 0.0
        %2302 = vmatprep.subr.mxu0 0.0
        %2303 = vmatpush2.msra.mxu0 0.0
        %2304 = vmatprep.subr.mxu0 0.0
        %2305 = vmatpush2.msra.mxu0 0.0
        %2306 = vmatprep.subr.mxu0 0.0
        %2307 = vmatpush2.msra.mxu0 0.0
        %2308 = vmatprep.subr.mxu0 0.0
        %2309 = vmatpush2.msra.mxu0 0.0
        %2310 = vmatprep.subr.mxu0 0.0
        %2311 = vmatpush2.msra.mxu0 0.0
        %2312 = vmatprep.subr.mxu0 0.0
        %2313 = vmatpush2.msra.mxu0 0.0
        %2314 = vmatprep.subr.mxu0 0.0
        %2315 = vmatpush2.msra.mxu0 0.0
        %2316 = vmatprep.subr.mxu0 0.0
        %2317 = vmatpush2.msra.mxu0 0.0
        %2318 = vmatprep.subr.mxu0 0.0
        %2319 = vmatpush2.msra.mxu0 0.0
        %2320 = vmatprep.subr.mxu0 0.0
        %2321 = vmatpush2.msra.mxu0 0.0
        %2322 = vmatprep.subr.mxu0 0.0
        %2323 = vmatpush2.msra.mxu0 0.0
        %2324 = vmatprep.mubr.f32.mxu0 0.0
        %2325 = vmatmul.mubr.f32.gmra.mxu0 %v1976
        %v2326 = vpop.f32.mrf.mxu0
        %v2327 = vadd.f32 %v2250, %v2326
        %v2328 = vpop.f32.mrf.mxu0
        %v2329 = vadd.f32 %v2252, %v2328
        %2330 = vmatprep.mubr.f32.mxu0 0.0
        %2331 = vmatmul.mubr.f32.gmra.mxu0 %v1979
        %v2332 = vpop.f32.mrf.mxu0
        %v2333 = vadd.f32 %v2256, %v2332
        %v2334 = vpop.f32.mrf.mxu0
        %v2335 = vadd.f32 %v2258, %v2334
        %2336 = vdwg.mxu0
        %2337 = vmatprep.subr.mxu0 %v2054
        %2338 = vmatpush1.msra.mxu0 %v2053
        %2339 = vmatprep.subr.mxu0 %v2050
        %2340 = vmatpush1.msra.mxu0 %v2049
        %2341 = vmatprep.subr.mxu0 %v2046
        %2342 = vmatpush1.msra.mxu0 %v2045
        %2343 = vmatprep.subr.mxu0 %v2042
        %2344 = vmatpush1.msra.mxu0 %v2041
        %2345 = vmatprep.subr.mxu0 %v2038
        %2346 = vmatpush1.msra.mxu0 %v2037
        %2347 = vmatprep.subr.mxu0 %v2034
        %2348 = vmatpush1.msra.mxu0 %v2033
        %2349 = vmatprep.subr.mxu0 %v2030
        %2350 = vmatpush1.msra.mxu0 %v2029
        %2351 = vmatprep.subr.mxu0 %v2026
        %2352 = vmatpush1.msra.mxu0 %v2025
        %2353 = vmatprep.subr.mxu0 %v2022
        %2354 = vmatpush1.msra.mxu0 %v2021
        %2355 = vmatprep.subr.mxu0 %v2018
        %2356 = vmatpush1.msra.mxu0 %v2017
        %2357 = vmatprep.subr.mxu0 %v2014
        %2358 = vmatpush1.msra.mxu0 %v2013
        %2359 = vmatprep.subr.mxu0 %v2010
        %2360 = vmatpush1.msra.mxu0 %v2009
        %2361 = vmatprep.subr.mxu0 %v2006
        %2362 = vmatpush1.msra.mxu0 %v2005
        %2363 = vmatprep.subr.mxu0 %v2002
        %2364 = vmatpush1.msra.mxu0 %v2001
        %2365 = vmatprep.subr.mxu0 %v1998
        %2366 = vmatpush1.msra.mxu0 %v1997
        %2367 = vmatprep.subr.mxu0 %v1994
        %2368 = vmatpush1.msra.mxu0 %v1993
        %2369 = vmatprep.subr.mxu0 %v2118
        %2370 = vmatpush2.msra.mxu0 %v2117
        %2371 = vmatprep.subr.mxu0 %v2114
        %2372 = vmatpush2.msra.mxu0 %v2113
        %2373 = vmatprep.subr.mxu0 %v2110
        %2374 = vmatpush2.msra.mxu0 %v2109
        %2375 = vmatprep.subr.mxu0 %v2106
        %2376 = vmatpush2.msra.mxu0 %v2105
        %2377 = vmatprep.subr.mxu0 %v2102
        %2378 = vmatpush2.msra.mxu0 %v2101
        %2379 = vmatprep.subr.mxu0 %v2098
        %2380 = vmatpush2.msra.mxu0 %v2097
        %2381 = vmatprep.subr.mxu0 %v2094
        %2382 = vmatpush2.msra.mxu0 %v2093
        %2383 = vmatprep.subr.mxu0 %v2090
        %2384 = vmatpush2.msra.mxu0 %v2089
        %2385 = vmatprep.subr.mxu0 %v2086
        %2386 = vmatpush2.msra.mxu0 %v2085
        %2387 = vmatprep.subr.mxu0 %v2082
        %2388 = vmatpush2.msra.mxu0 %v2081
        %2389 = vmatprep.subr.mxu0 %v2078
        %2390 = vmatpush2.msra.mxu0 %v2077
        %2391 = vmatprep.subr.mxu0 %v2074
        %2392 = vmatpush2.msra.mxu0 %v2073
        %2393 = vmatprep.subr.mxu0 %v2070
        %2394 = vmatpush2.msra.mxu0 %v2069
        %2395 = vmatprep.subr.mxu0 %v2066
        %2396 = vmatpush2.msra.mxu0 %v2065
        %2397 = vmatprep.subr.mxu0 %v2062
        %2398 = vmatpush2.msra.mxu0 %v2061
        %2399 = vmatprep.subr.mxu0 %v2058
        %2400 = vmatpush2.msra.mxu0 %v2057
        %2401 = vmatprep.mubr.f32.mxu0 %v1962
        %2402 = vmatmul.mubr.f32.gmra.mxu0 %v1973
        %v2403 = vpop.f32.mrf.mxu0
        %v2404 = vadd.f32 0.0, %v2403
        %v2405 = vpop.f32.mrf.mxu0
        %v2406 = vadd.f32 0.0, %v2405
        %2407 = vmatprep.mubr.f32.mxu0 %v1963
        %2408 = vmatmul.mubr.f32.gmra.mxu0 %v1970
        %v2409 = vpop.f32.mrf.mxu0
        %v2410 = vadd.f32 0.0, %v2409
        %v2411 = vpop.f32.mrf.mxu0
        %v2412 = vadd.f32 0.0, %v2411
        %2413 = vdwg.mxu0
        %2414 = vmatprep.subr.mxu0 %v2182
        %2415 = vmatpush1.msra.mxu0 %v2181
        %2416 = vmatprep.subr.mxu0 %v2178
        %2417 = vmatpush1.msra.mxu0 %v2177
        %2418 = vmatprep.subr.mxu0 %v2174
        %2419 = vmatpush1.msra.mxu0 %v2173
        %2420 = vmatprep.subr.mxu0 %v2170
        %2421 = vmatpush1.msra.mxu0 %v2169
        %2422 = vmatprep.subr.mxu0 %v2166
        %2423 = vmatpush1.msra.mxu0 %v2165
        %2424 = vmatprep.subr.mxu0 %v2162
        %2425 = vmatpush1.msra.mxu0 %v2161
        %2426 = vmatprep.subr.mxu0 %v2158
        %2427 = vmatpush1.msra.mxu0 %v2157
        %2428 = vmatprep.subr.mxu0 %v2154
        %2429 = vmatpush1.msra.mxu0 %v2153
        %2430 = vmatprep.subr.mxu0 %v2150
        %2431 = vmatpush1.msra.mxu0 %v2149
        %2432 = vmatprep.subr.mxu0 %v2146
        %2433 = vmatpush1.msra.mxu0 %v2145
        %2434 = vmatprep.subr.mxu0 %v2142
        %2435 = vmatpush1.msra.mxu0 %v2141
        %2436 = vmatprep.subr.mxu0 %v2138
        %2437 = vmatpush1.msra.mxu0 %v2137
        %2438 = vmatprep.subr.mxu0 %v2134
        %2439 = vmatpush1.msra.mxu0 %v2133
        %2440 = vmatprep.subr.mxu0 %v2130
        %2441 = vmatpush1.msra.mxu0 %v2129
        %2442 = vmatprep.subr.mxu0 %v2126
        %2443 = vmatpush1.msra.mxu0 %v2125
        %2444 = vmatprep.subr.mxu0 %v2122
        %2445 = vmatpush1.msra.mxu0 %v2121
        %2446 = vmatprep.subr.mxu0 0.0
        %2447 = vmatpush2.msra.mxu0 0.0
        %2448 = vmatprep.subr.mxu0 0.0
        %2449 = vmatpush2.msra.mxu0 0.0
        %2450 = vmatprep.subr.mxu0 0.0
        %2451 = vmatpush2.msra.mxu0 0.0
        %2452 = vmatprep.subr.mxu0 0.0
        %2453 = vmatpush2.msra.mxu0 0.0
        %2454 = vmatprep.subr.mxu0 0.0
        %2455 = vmatpush2.msra.mxu0 0.0
        %2456 = vmatprep.subr.mxu0 0.0
        %2457 = vmatpush2.msra.mxu0 0.0
        %2458 = vmatprep.subr.mxu0 0.0
        %2459 = vmatpush2.msra.mxu0 0.0
        %2460 = vmatprep.subr.mxu0 0.0
        %2461 = vmatpush2.msra.mxu0 0.0
        %2462 = vmatprep.subr.mxu0 0.0
        %2463 = vmatpush2.msra.mxu0 0.0
        %2464 = vmatprep.subr.mxu0 0.0
        %2465 = vmatpush2.msra.mxu0 0.0
        %2466 = vmatprep.subr.mxu0 0.0
        %2467 = vmatpush2.msra.mxu0 0.0
        %2468 = vmatprep.subr.mxu0 0.0
        %2469 = vmatpush2.msra.mxu0 0.0
        %2470 = vmatprep.subr.mxu0 0.0
        %2471 = vmatpush2.msra.mxu0 0.0
        %2472 = vmatprep.subr.mxu0 0.0
        %2473 = vmatpush2.msra.mxu0 0.0
        %2474 = vmatprep.subr.mxu0 0.0
        %2475 = vmatpush2.msra.mxu0 0.0
        %2476 = vmatprep.subr.mxu0 0.0
        %2477 = vmatpush2.msra.mxu0 0.0
        %2478 = vmatprep.mubr.f32.mxu0 0.0
        %2479 = vmatmul.mubr.f32.gmra.mxu0 %v1976
        %v2480 = vpop.f32.mrf.mxu0
        %v2481 = vadd.f32 %v2404, %v2480
        %v2482 = vpop.f32.mrf.mxu0
        %v2483 = vadd.f32 %v2406, %v2482
        %2484 = vmatprep.mubr.f32.mxu0 0.0
        %2485 = vmatmul.mubr.f32.gmra.mxu0 %v1979
        %v2486 = vpop.f32.mrf.mxu0
        %v2487 = vadd.f32 %v2410, %v2486
        %v2488 = vpop.f32.mrf.mxu0
        %v2489 = vadd.f32 %v2412, %v2488
        %2490 = vdwg.mxu0
        %v2491 = vadd.f32 %v1983, %v2327
        %v2492 = vadd.f32 %v1984, %v2329
        %v2493 = vadd.f32 %v1985, %v2481
        %v2494 = vadd.f32 %v1986, %v2483
        %v2495 = vadd.f32 %v1987, %v2333
        %v2496 = vadd.f32 %v1988, %v2335
        %v2497 = vadd.f32 %v1989, %v2487
        %v2498 = vadd.f32 %v1990, %v2489
        %v2499 = vmul.f32 %v1391, %v1946
        %v2500 = vmul.f32 %v1392, %v1947
        %v2501 = vadd.f32 %v2491, %v2499
        %v2502 = vadd.f32 %v2495, %v2500
        %v2503 = vmul.f32 %v2501, 0.5
        %v2504 = vmul.f32 %v2502, 0.5
        %v2505 = vtanh.pop %v2503
        %v2506 = vtanh.pop %v2504
        %v2507 = vmul.f32 %v2505, 0.5
        %v2508 = vmul.f32 %v2506, 0.5
        %v2509 = vadd.f32 %v2507, 0.5
        %v2510 = vadd.f32 %v2508, 0.5
        %v2511 = vmul.f32 %v1393, %v1946
        %v2512 = vmul.f32 %v1394, %v1947
        %v2513 = vadd.f32 %v2492, %v2511
        %v2514 = vadd.f32 %v2496, %v2512
        %v2515 = vmul.f32 %v2513, 0.5
        %v2516 = vmul.f32 %v2514, 0.5
        %v2517 = vtanh.pop %v2515
        %v2518 = vtanh.pop %v2516
        %v2519 = vmul.f32 %v2517, 0.5
        %v2520 = vmul.f32 %v2518, 0.5
        %v2521 = vadd.f32 %v2519, 0.5
        %v2522 = vadd.f32 %v2520, 0.5
        %v2523 = vmul.f32 %v2521, %v1946
        %v2524 = vmul.f32 %v2522, %v1947
        %v2525 = vtanh.pop %v2493
        %v2526 = vtanh.pop %v2497
        %v2527 = vmul.f32 %v2509, %v2525
        %v2528 = vmul.f32 %v2510, %v2526
        %v2529 = vadd.f32 %v2523, %v2527
        %v2530 = vadd.f32 %v2524, %v2528
        %v2531 = vmul.f32 %v1395, %v2529
        %v2532 = vmul.f32 %v1396, %v2530
        %v2533 = vadd.f32 %v2494, %v2531
        %v2534 = vadd.f32 %v2498, %v2532
        %v2535 = vmul.f32 %v2533, 0.5
        %v2536 = vmul.f32 %v2534, 0.5
        %v2537 = vtanh.pop %v2535
        %v2538 = vtanh.pop %v2536
        %v2539 = vmul.f32 %v2537, 0.5
        %v2540 = vmul.f32 %v2538, 0.5
        %v2541 = vadd.f32 %v2539, 0.5
        %v2542 = vadd.f32 %v2540, 0.5
        %v2543 = vtanh.pop %v2529
        %v2544 = vtanh.pop %v2530
        %v2545 = vmul.f32 %v2541, %v2543
        %v2546 = vmul.f32 %v2542, %v2544
        %s2547 = scalar_lea.vmem %s301, 16 [#allocation8]
        %2548 = vst [vmem:[%s2547] sm:$0xff] %v2545
        %2549 = vst [vmem:[%s2547 + $0x8] sm:$0xff] %v2546
        %v2552 = vrot.slane %v2545, 7
        %v2553 = vrot.slane %v2546, 7
        %v2554 = vsel %vm339, %v2552, %v2553
        %v2557 = vsel %vm339, 0.0, %v2552
        %v2558 = vrot.slane %v2545, 1
        %v2559 = vrot.slane %v2546, 1
        %v2560 = vsel %vm629, %v2558, %v2559
        %v2563 = vsel %vm629, %v2559, 0.0
        %s2564 = smul.u32 4, 4
        %s2565 = smul.addr %s2564, 8
        %s2566 = scalar_lea.vmem [#allocation2], %s2565
        %v2567 = vld [vmem:[%s2566] sm:$0xff]
        %v2568 = vld [vmem:[%s2566 + $0x8] sm:$0xff]
        %v2569 = vld [vmem:[%s2566 + $0x10] sm:$0xff]
        %v2570 = vld [vmem:[%s2566 + $0x18] sm:$0xff]
        %v2571 = vld [vmem:[%s2566 + $0x20] sm:$0xff]
        %v2572 = vld [vmem:[%s2566 + $0x28] sm:$0xff]
        %v2573 = vld [vmem:[%s2566 + $0x30] sm:$0xff]
        %v2574 = vld [vmem:[%s2566 + $0x38] sm:$0xff]
        %v2575 = vld [vmem:[#allocation6] sm:$0xff]
        %v2576 = vld [vmem:[#allocation6 + $0x8] sm:$0xff]
        %v2577 = vld [vmem:[#allocation6 + $0x10] sm:$0xff]
        %v2578 = vld [vmem:[#allocation6 + $0x18] sm:$0xff]
        %v2579 = vld [vmem:[#allocation6 + $0x20] sm:$0xff]
        %v2580 = vld [vmem:[#allocation6 + $0x28] sm:$0xff]
        %v2581 = vld [vmem:[#allocation6 + $0x30] sm:$0xff]
        %v2582 = vld [vmem:[#allocation6 + $0x38] sm:$0xff]
        %v2583 = vld [vmem:[#allocation6 + $0x40] sm:$0xff]
        %v2584 = vld [vmem:[#allocation6 + $0x48] sm:$0xff]
        %v2585 = vld [vmem:[#allocation6 + $0x50] sm:$0xff]
        %v2586 = vld [vmem:[#allocation6 + $0x58] sm:$0xff]
        %v2587 = vld [vmem:[#allocation6 + $0x60] sm:$0xff]
        %v2588 = vld [vmem:[#allocation6 + $0x68] sm:$0xff]
        %v2589 = vld [vmem:[#allocation6 + $0x70] sm:$0xff]
        %v2590 = vld [vmem:[#allocation6 + $0x78] sm:$0xff]
        %v2591 = vld [vmem:[#allocation6 + $0x80] sm:$0xff]
        %v2592 = vld [vmem:[#allocation6 + $0x88] sm:$0xff]
        %v2593 = vld [vmem:[#allocation6 + $0x90] sm:$0xff]
        %v2594 = vld [vmem:[#allocation6 + $0x98] sm:$0xff]
        %v2595 = vld [vmem:[#allocation6 + $0xa0] sm:$0xff]
        %v2596 = vld [vmem:[#allocation6 + $0xa8] sm:$0xff]
        %v2597 = vld [vmem:[#allocation6 + $0xb0] sm:$0xff]
        %v2598 = vld [vmem:[#allocation6 + $0xb8] sm:$0xff]
        %v2599 = vld [vmem:[#allocation6 + $0xc0] sm:$0xff]
        %v2600 = vld [vmem:[#allocation6 + $0xc8] sm:$0xff]
        %v2601 = vld [vmem:[#allocation6 + $0xd0] sm:$0xff]
        %v2602 = vld [vmem:[#allocation6 + $0xd8] sm:$0xff]
        %v2603 = vld [vmem:[#allocation6 + $0xe0] sm:$0xff]
        %v2604 = vld [vmem:[#allocation6 + $0xe8] sm:$0xff]
        %v2605 = vld [vmem:[#allocation6 + $0xf0] sm:$0xff]
        %v2606 = vld [vmem:[#allocation6 + $0xf8] sm:$0xff]
        %v2607 = vld [vmem:[#allocation6 + $0x100] sm:$0xff]
        %v2608 = vld [vmem:[#allocation6 + $0x108] sm:$0xff]
        %v2609 = vld [vmem:[#allocation6 + $0x110] sm:$0xff]
        %v2610 = vld [vmem:[#allocation6 + $0x118] sm:$0xff]
        %v2611 = vld [vmem:[#allocation6 + $0x120] sm:$0xff]
        %v2612 = vld [vmem:[#allocation6 + $0x128] sm:$0xff]
        %v2613 = vld [vmem:[#allocation6 + $0x130] sm:$0xff]
        %v2614 = vld [vmem:[#allocation6 + $0x138] sm:$0xff]
        %v2615 = vld [vmem:[#allocation6 + $0x140] sm:$0xff]
        %v2616 = vld [vmem:[#allocation6 + $0x148] sm:$0xff]
        %v2617 = vld [vmem:[#allocation6 + $0x150] sm:$0xff]
        %v2618 = vld [vmem:[#allocation6 + $0x158] sm:$0xff]
        %v2619 = vld [vmem:[#allocation6 + $0x160] sm:$0xff]
        %v2620 = vld [vmem:[#allocation6 + $0x168] sm:$0xff]
        %v2621 = vld [vmem:[#allocation6 + $0x170] sm:$0xff]
        %v2622 = vld [vmem:[#allocation6 + $0x178] sm:$0xff]
        %v2623 = vld [vmem:[#allocation6 + $0x180] sm:$0xff]
        %v2624 = vld [vmem:[#allocation6 + $0x188] sm:$0xff]
        %v2625 = vld [vmem:[#allocation6 + $0x190] sm:$0xff]
        %v2626 = vld [vmem:[#allocation6 + $0x198] sm:$0xff]
        %v2627 = vld [vmem:[#allocation6 + $0x1a0] sm:$0xff]
        %v2628 = vld [vmem:[#allocation6 + $0x1a8] sm:$0xff]
        %v2629 = vld [vmem:[#allocation6 + $0x1b0] sm:$0xff]
        %v2630 = vld [vmem:[#allocation6 + $0x1b8] sm:$0xff]
        %v2631 = vld [vmem:[#allocation6 + $0x1c0] sm:$0xff]
        %v2632 = vld [vmem:[#allocation6 + $0x1c8] sm:$0xff]
        %v2633 = vld [vmem:[#allocation6 + $0x1d0] sm:$0xff]
        %v2634 = vld [vmem:[#allocation6 + $0x1d8] sm:$0xff]
        %v2635 = vld [vmem:[#allocation6 + $0x1e0] sm:$0xff]
        %v2636 = vld [vmem:[#allocation6 + $0x1e8] sm:$0xff]
        %v2637 = vld [vmem:[#allocation6 + $0x1f0] sm:$0xff]
        %v2638 = vld [vmem:[#allocation6 + $0x1f8] sm:$0xff]
        %v2639 = vld [vmem:[#allocation6 + $0x200] sm:$0xff]
        %v2640 = vld [vmem:[#allocation6 + $0x208] sm:$0xff]
        %v2641 = vld [vmem:[#allocation6 + $0x210] sm:$0xff]
        %v2642 = vld [vmem:[#allocation6 + $0x218] sm:$0xff]
        %v2643 = vld [vmem:[#allocation6 + $0x220] sm:$0xff]
        %v2644 = vld [vmem:[#allocation6 + $0x228] sm:$0xff]
        %v2645 = vld [vmem:[#allocation6 + $0x230] sm:$0xff]
        %v2646 = vld [vmem:[#allocation6 + $0x238] sm:$0xff]
        %v2647 = vld [vmem:[#allocation6 + $0x240] sm:$0xff]
        %v2648 = vld [vmem:[#allocation6 + $0x248] sm:$0xff]
        %v2649 = vld [vmem:[#allocation6 + $0x250] sm:$0xff]
        %v2650 = vld [vmem:[#allocation6 + $0x258] sm:$0xff]
        %v2651 = vld [vmem:[#allocation6 + $0x260] sm:$0xff]
        %v2652 = vld [vmem:[#allocation6 + $0x268] sm:$0xff]
        %v2653 = vld [vmem:[#allocation6 + $0x270] sm:$0xff]
        %v2654 = vld [vmem:[#allocation6 + $0x278] sm:$0xff]
        %v2655 = vld [vmem:[#allocation6 + $0x280] sm:$0xff]
        %v2656 = vld [vmem:[#allocation6 + $0x288] sm:$0xff]
        %v2657 = vld [vmem:[#allocation6 + $0x290] sm:$0xff]
        %v2658 = vld [vmem:[#allocation6 + $0x298] sm:$0xff]
        %v2659 = vld [vmem:[#allocation6 + $0x2a0] sm:$0xff]
        %v2660 = vld [vmem:[#allocation6 + $0x2a8] sm:$0xff]
        %v2661 = vld [vmem:[#allocation6 + $0x2b0] sm:$0xff]
        %v2662 = vld [vmem:[#allocation6 + $0x2b8] sm:$0xff]
        %v2663 = vld [vmem:[#allocation6 + $0x2c0] sm:$0xff]
        %v2664 = vld [vmem:[#allocation6 + $0x2c8] sm:$0xff]
        %v2665 = vld [vmem:[#allocation6 + $0x2d0] sm:$0xff]
        %v2666 = vld [vmem:[#allocation6 + $0x2d8] sm:$0xff]
        %v2667 = vld [vmem:[#allocation6 + $0x2e0] sm:$0xff]
        %v2668 = vld [vmem:[#allocation6 + $0x2e8] sm:$0xff]
        %v2669 = vld [vmem:[#allocation6 + $0x2f0] sm:$0xff]
        %v2670 = vld [vmem:[#allocation6 + $0x2f8] sm:$0xff]
        %v2671 = vld [vmem:[#allocation6 + $0x300] sm:$0xff]
        %v2672 = vld [vmem:[#allocation6 + $0x308] sm:$0xff]
        %v2673 = vld [vmem:[#allocation6 + $0x310] sm:$0xff]
        %v2674 = vld [vmem:[#allocation6 + $0x318] sm:$0xff]
        %v2675 = vld [vmem:[#allocation6 + $0x320] sm:$0xff]
        %v2676 = vld [vmem:[#allocation6 + $0x328] sm:$0xff]
        %v2677 = vld [vmem:[#allocation6 + $0x330] sm:$0xff]
        %v2678 = vld [vmem:[#allocation6 + $0x338] sm:$0xff]
        %v2679 = vld [vmem:[#allocation6 + $0x340] sm:$0xff]
        %v2680 = vld [vmem:[#allocation6 + $0x348] sm:$0xff]
        %v2681 = vld [vmem:[#allocation6 + $0x350] sm:$0xff]
        %v2682 = vld [vmem:[#allocation6 + $0x358] sm:$0xff]
        %v2683 = vld [vmem:[#allocation6 + $0x360] sm:$0xff]
        %v2684 = vld [vmem:[#allocation6 + $0x368] sm:$0xff]
        %v2685 = vld [vmem:[#allocation6 + $0x370] sm:$0xff]
        %v2686 = vld [vmem:[#allocation6 + $0x378] sm:$0xff]
        %v2687 = vld [vmem:[#allocation6 + $0x380] sm:$0xff]
        %v2688 = vld [vmem:[#allocation6 + $0x388] sm:$0xff]
        %v2689 = vld [vmem:[#allocation6 + $0x390] sm:$0xff]
        %v2690 = vld [vmem:[#allocation6 + $0x398] sm:$0xff]
        %v2691 = vld [vmem:[#allocation6 + $0x3a0] sm:$0xff]
        %v2692 = vld [vmem:[#allocation6 + $0x3a8] sm:$0xff]
        %v2693 = vld [vmem:[#allocation6 + $0x3b0] sm:$0xff]
        %v2694 = vld [vmem:[#allocation6 + $0x3b8] sm:$0xff]
        %v2695 = vld [vmem:[#allocation6 + $0x3c0] sm:$0xff]
        %v2696 = vld [vmem:[#allocation6 + $0x3c8] sm:$0xff]
        %v2697 = vld [vmem:[#allocation6 + $0x3d0] sm:$0xff]
        %v2698 = vld [vmem:[#allocation6 + $0x3d8] sm:$0xff]
        %v2699 = vld [vmem:[#allocation6 + $0x3e0] sm:$0xff]
        %v2700 = vld [vmem:[#allocation6 + $0x3e8] sm:$0xff]
        %v2701 = vld [vmem:[#allocation6 + $0x3f0] sm:$0xff]
        %v2702 = vld [vmem:[#allocation6 + $0x3f8] sm:$0xff]
        %v2703 = vld [vmem:[#allocation6 + $0x400] sm:$0xff]
        %v2704 = vld [vmem:[#allocation6 + $0x408] sm:$0xff]
        %v2705 = vld [vmem:[#allocation6 + $0x410] sm:$0xff]
        %v2706 = vld [vmem:[#allocation6 + $0x418] sm:$0xff]
        %v2707 = vld [vmem:[#allocation6 + $0x420] sm:$0xff]
        %v2708 = vld [vmem:[#allocation6 + $0x428] sm:$0xff]
        %v2709 = vld [vmem:[#allocation6 + $0x430] sm:$0xff]
        %v2710 = vld [vmem:[#allocation6 + $0x438] sm:$0xff]
        %v2711 = vld [vmem:[#allocation6 + $0x440] sm:$0xff]
        %v2712 = vld [vmem:[#allocation6 + $0x448] sm:$0xff]
        %v2713 = vld [vmem:[#allocation6 + $0x450] sm:$0xff]
        %v2714 = vld [vmem:[#allocation6 + $0x458] sm:$0xff]
        %v2715 = vld [vmem:[#allocation6 + $0x460] sm:$0xff]
        %v2716 = vld [vmem:[#allocation6 + $0x468] sm:$0xff]
        %v2717 = vld [vmem:[#allocation6 + $0x470] sm:$0xff]
        %v2718 = vld [vmem:[#allocation6 + $0x478] sm:$0xff]
        %v2719 = vld [vmem:[#allocation6 + $0x480] sm:$0xff]
        %v2720 = vld [vmem:[#allocation6 + $0x488] sm:$0xff]
        %v2721 = vld [vmem:[#allocation6 + $0x490] sm:$0xff]
        %v2722 = vld [vmem:[#allocation6 + $0x498] sm:$0xff]
        %v2723 = vld [vmem:[#allocation6 + $0x4a0] sm:$0xff]
        %v2724 = vld [vmem:[#allocation6 + $0x4a8] sm:$0xff]
        %v2725 = vld [vmem:[#allocation6 + $0x4b0] sm:$0xff]
        %v2726 = vld [vmem:[#allocation6 + $0x4b8] sm:$0xff]
        %v2727 = vld [vmem:[#allocation6 + $0x4c0] sm:$0xff]
        %v2728 = vld [vmem:[#allocation6 + $0x4c8] sm:$0xff]
        %v2729 = vld [vmem:[#allocation6 + $0x4d0] sm:$0xff]
        %v2730 = vld [vmem:[#allocation6 + $0x4d8] sm:$0xff]
        %v2731 = vld [vmem:[#allocation6 + $0x4e0] sm:$0xff]
        %v2732 = vld [vmem:[#allocation6 + $0x4e8] sm:$0xff]
        %v2733 = vld [vmem:[#allocation6 + $0x4f0] sm:$0xff]
        %v2734 = vld [vmem:[#allocation6 + $0x4f8] sm:$0xff]
        %v2735 = vld [vmem:[#allocation6 + $0x500] sm:$0xff]
        %v2736 = vld [vmem:[#allocation6 + $0x508] sm:$0xff]
        %v2737 = vld [vmem:[#allocation6 + $0x510] sm:$0xff]
        %v2738 = vld [vmem:[#allocation6 + $0x518] sm:$0xff]
        %v2739 = vld [vmem:[#allocation6 + $0x520] sm:$0xff]
        %v2740 = vld [vmem:[#allocation6 + $0x528] sm:$0xff]
        %v2741 = vld [vmem:[#allocation6 + $0x530] sm:$0xff]
        %v2742 = vld [vmem:[#allocation6 + $0x538] sm:$0xff]
        %v2743 = vld [vmem:[#allocation6 + $0x540] sm:$0xff]
        %v2744 = vld [vmem:[#allocation6 + $0x548] sm:$0xff]
        %v2745 = vld [vmem:[#allocation6 + $0x550] sm:$0xff]
        %v2746 = vld [vmem:[#allocation6 + $0x558] sm:$0xff]
        %v2747 = vld [vmem:[#allocation6 + $0x560] sm:$0xff]
        %v2748 = vld [vmem:[#allocation6 + $0x568] sm:$0xff]
        %v2749 = vld [vmem:[#allocation6 + $0x570] sm:$0xff]
        %v2750 = vld [vmem:[#allocation6 + $0x578] sm:$0xff]
        %v2751 = vld [vmem:[#allocation6 + $0x580] sm:$0xff]
        %v2752 = vld [vmem:[#allocation6 + $0x588] sm:$0xff]
        %v2753 = vld [vmem:[#allocation6 + $0x590] sm:$0xff]
        %v2754 = vld [vmem:[#allocation6 + $0x598] sm:$0xff]
        %v2755 = vld [vmem:[#allocation6 + $0x5a0] sm:$0xff]
        %v2756 = vld [vmem:[#allocation6 + $0x5a8] sm:$0xff]
        %v2757 = vld [vmem:[#allocation6 + $0x5b0] sm:$0xff]
        %v2758 = vld [vmem:[#allocation6 + $0x5b8] sm:$0xff]
        %v2759 = vld [vmem:[#allocation6 + $0x5c0] sm:$0xff]
        %v2760 = vld [vmem:[#allocation6 + $0x5c8] sm:$0xff]
        %v2761 = vld [vmem:[#allocation6 + $0x5d0] sm:$0xff]
        %v2762 = vld [vmem:[#allocation6 + $0x5d8] sm:$0xff]
        %v2763 = vld [vmem:[#allocation6 + $0x5e0] sm:$0xff]
        %v2764 = vld [vmem:[#allocation6 + $0x5e8] sm:$0xff]
        %v2765 = vld [vmem:[#allocation6 + $0x5f0] sm:$0xff]
        %v2766 = vld [vmem:[#allocation6 + $0x5f8] sm:$0xff]
        %2767 = vmatprep.subr.mxu0 %v2636
        %2768 = vmatpush1.msra.mxu0 %v2635
        %2769 = vmatprep.subr.mxu0 %v2632
        %2770 = vmatpush1.msra.mxu0 %v2631
        %2771 = vmatprep.subr.mxu0 %v2628
        %2772 = vmatpush1.msra.mxu0 %v2627
        %2773 = vmatprep.subr.mxu0 %v2624
        %2774 = vmatpush1.msra.mxu0 %v2623
        %2775 = vmatprep.subr.mxu0 %v2620
        %2776 = vmatpush1.msra.mxu0 %v2619
        %2777 = vmatprep.subr.mxu0 %v2616
        %2778 = vmatpush1.msra.mxu0 %v2615
        %2779 = vmatprep.subr.mxu0 %v2612
        %2780 = vmatpush1.msra.mxu0 %v2611
        %2781 = vmatprep.subr.mxu0 %v2608
        %2782 = vmatpush1.msra.mxu0 %v2607
        %2783 = vmatprep.subr.mxu0 %v2604
        %2784 = vmatpush1.msra.mxu0 %v2603
        %2785 = vmatprep.subr.mxu0 %v2600
        %2786 = vmatpush1.msra.mxu0 %v2599
        %2787 = vmatprep.subr.mxu0 %v2596
        %2788 = vmatpush1.msra.mxu0 %v2595
        %2789 = vmatprep.subr.mxu0 %v2592
        %2790 = vmatpush1.msra.mxu0 %v2591
        %2791 = vmatprep.subr.mxu0 %v2588
        %2792 = vmatpush1.msra.mxu0 %v2587
        %2793 = vmatprep.subr.mxu0 %v2584
        %2794 = vmatpush1.msra.mxu0 %v2583
        %2795 = vmatprep.subr.mxu0 %v2580
        %2796 = vmatpush1.msra.mxu0 %v2579
        %2797 = vmatprep.subr.mxu0 %v2576
        %2798 = vmatpush1.msra.mxu0 %v2575
        %2799 = vmatprep.subr.mxu0 %v2700
        %2800 = vmatpush2.msra.mxu0 %v2699
        %2801 = vmatprep.subr.mxu0 %v2696
        %2802 = vmatpush2.msra.mxu0 %v2695
        %2803 = vmatprep.subr.mxu0 %v2692
        %2804 = vmatpush2.msra.mxu0 %v2691
        %2805 = vmatprep.subr.mxu0 %v2688
        %2806 = vmatpush2.msra.mxu0 %v2687
        %2807 = vmatprep.subr.mxu0 %v2684
        %2808 = vmatpush2.msra.mxu0 %v2683
        %2809 = vmatprep.subr.mxu0 %v2680
        %2810 = vmatpush2.msra.mxu0 %v2679
        %2811 = vmatprep.subr.mxu0 %v2676
        %2812 = vmatpush2.msra.mxu0 %v2675
        %2813 = vmatprep.subr.mxu0 %v2672
        %2814 = vmatpush2.msra.mxu0 %v2671
        %2815 = vmatprep.subr.mxu0 %v2668
        %2816 = vmatpush2.msra.mxu0 %v2667
        %2817 = vmatprep.subr.mxu0 %v2664
        %2818 = vmatpush2.msra.mxu0 %v2663
        %2819 = vmatprep.subr.mxu0 %v2660
        %2820 = vmatpush2.msra.mxu0 %v2659
        %2821 = vmatprep.subr.mxu0 %v2656
        %2822 = vmatpush2.msra.mxu0 %v2655
        %2823 = vmatprep.subr.mxu0 %v2652
        %2824 = vmatpush2.msra.mxu0 %v2651
        %2825 = vmatprep.subr.mxu0 %v2648
        %2826 = vmatpush2.msra.mxu0 %v2647
        %2827 = vmatprep.subr.mxu0 %v2644
        %2828 = vmatpush2.msra.mxu0 %v2643
        %2829 = vmatprep.subr.mxu0 %v2640
        %2830 = vmatpush2.msra.mxu0 %v2639
        %2831 = vmatprep.mubr.f32.mxu0 %v2545
        %2832 = vmatmul.mubr.f32.gmra.mxu0 %v2557
        %v2833 = vpop.f32.mrf.mxu0
        %v2834 = vadd.f32 0.0, %v2833
        %v2835 = vpop.f32.mrf.mxu0
        %v2836 = vadd.f32 0.0, %v2835
        %2837 = vmatprep.mubr.f32.mxu0 %v2546
        %2838 = vmatmul.mubr.f32.gmra.mxu0 %v2554
        %v2839 = vpop.f32.mrf.mxu0
        %v2840 = vadd.f32 0.0, %v2839
        %v2841 = vpop.f32.mrf.mxu0
        %v2842 = vadd.f32 0.0, %v2841
        %2843 = vdwg.mxu0
        %2844 = vmatprep.subr.mxu0 %v2764
        %2845 = vmatpush1.msra.mxu0 %v2763
        %2846 = vmatprep.subr.mxu0 %v2760
        %2847 = vmatpush1.msra.mxu0 %v2759
        %2848 = vmatprep.subr.mxu0 %v2756
        %2849 = vmatpush1.msra.mxu0 %v2755
        %2850 = vmatprep.subr.mxu0 %v2752
        %2851 = vmatpush1.msra.mxu0 %v2751
        %2852 = vmatprep.subr.mxu0 %v2748
        %2853 = vmatpush1.msra.mxu0 %v2747
        %2854 = vmatprep.subr.mxu0 %v2744
        %2855 = vmatpush1.msra.mxu0 %v2743
        %2856 = vmatprep.subr.mxu0 %v2740
        %2857 = vmatpush1.msra.mxu0 %v2739
        %2858 = vmatprep.subr.mxu0 %v2736
        %2859 = vmatpush1.msra.mxu0 %v2735
        %2860 = vmatprep.subr.mxu0 %v2732
        %2861 = vmatpush1.msra.mxu0 %v2731
        %2862 = vmatprep.subr.mxu0 %v2728
        %2863 = vmatpush1.msra.mxu0 %v2727
        %2864 = vmatprep.subr.mxu0 %v2724
        %2865 = vmatpush1.msra.mxu0 %v2723
        %2866 = vmatprep.subr.mxu0 %v2720
        %2867 = vmatpush1.msra.mxu0 %v2719
        %2868 = vmatprep.subr.mxu0 %v2716
        %2869 = vmatpush1.msra.mxu0 %v2715
        %2870 = vmatprep.subr.mxu0 %v2712
        %2871 = vmatpush1.msra.mxu0 %v2711
        %2872 = vmatprep.subr.mxu0 %v2708
        %2873 = vmatpush1.msra.mxu0 %v2707
        %2874 = vmatprep.subr.mxu0 %v2704
        %2875 = vmatpush1.msra.mxu0 %v2703
        %2876 = vmatprep.subr.mxu0 0.0
        %2877 = vmatpush2.msra.mxu0 0.0
        %2878 = vmatprep.subr.mxu0 0.0
        %2879 = vmatpush2.msra.mxu0 0.0
        %2880 = vmatprep.subr.mxu0 0.0
        %2881 = vmatpush2.msra.mxu0 0.0
        %2882 = vmatprep.subr.mxu0 0.0
        %2883 = vmatpush2.msra.mxu0 0.0
        %2884 = vmatprep.subr.mxu0 0.0
        %2885 = vmatpush2.msra.mxu0 0.0
        %2886 = vmatprep.subr.mxu0 0.0
        %2887 = vmatpush2.msra.mxu0 0.0
        %2888 = vmatprep.subr.mxu0 0.0
        %2889 = vmatpush2.msra.mxu0 0.0
        %2890 = vmatprep.subr.mxu0 0.0
        %2891 = vmatpush2.msra.mxu0 0.0
        %2892 = vmatprep.subr.mxu0 0.0
        %2893 = vmatpush2.msra.mxu0 0.0
        %2894 = vmatprep.subr.mxu0 0.0
        %2895 = vmatpush2.msra.mxu0 0.0
        %2896 = vmatprep.subr.mxu0 0.0
        %2897 = vmatpush2.msra.mxu0 0.0
        %2898 = vmatprep.subr.mxu0 0.0
        %2899 = vmatpush2.msra.mxu0 0.0
        %2900 = vmatprep.subr.mxu0 0.0
        %2901 = vmatpush2.msra.mxu0 0.0
        %2902 = vmatprep.subr.mxu0 0.0
        %2903 = vmatpush2.msra.mxu0 0.0
        %2904 = vmatprep.subr.mxu0 0.0
        %2905 = vmatpush2.msra.mxu0 0.0
        %2906 = vmatprep.subr.mxu0 0.0
        %2907 = vmatpush2.msra.mxu0 0.0
        %2908 = vmatprep.mubr.f32.mxu0 0.0
        %2909 = vmatmul.mubr.f32.gmra.mxu0 %v2560
        %v2910 = vpop.f32.mrf.mxu0
        %v2911 = vadd.f32 %v2834, %v2910
        %v2912 = vpop.f32.mrf.mxu0
        %v2913 = vadd.f32 %v2836, %v2912
        %2914 = vmatprep.mubr.f32.mxu0 0.0
        %2915 = vmatmul.mubr.f32.gmra.mxu0 %v2563
        %v2916 = vpop.f32.mrf.mxu0
        %v2917 = vadd.f32 %v2840, %v2916
        %v2918 = vpop.f32.mrf.mxu0
        %v2919 = vadd.f32 %v2842, %v2918
        %2920 = vdwg.mxu0
        %2921 = vmatprep.subr.mxu0 %v2638
        %2922 = vmatpush1.msra.mxu0 %v2637
        %2923 = vmatprep.subr.mxu0 %v2634
        %2924 = vmatpush1.msra.mxu0 %v2633
        %2925 = vmatprep.subr.mxu0 %v2630
        %2926 = vmatpush1.msra.mxu0 %v2629
        %2927 = vmatprep.subr.mxu0 %v2626
        %2928 = vmatpush1.msra.mxu0 %v2625
        %2929 = vmatprep.subr.mxu0 %v2622
        %2930 = vmatpush1.msra.mxu0 %v2621
        %2931 = vmatprep.subr.mxu0 %v2618
        %2932 = vmatpush1.msra.mxu0 %v2617
        %2933 = vmatprep.subr.mxu0 %v2614
        %2934 = vmatpush1.msra.mxu0 %v2613
        %2935 = vmatprep.subr.mxu0 %v2610
        %2936 = vmatpush1.msra.mxu0 %v2609
        %2937 = vmatprep.subr.mxu0 %v2606
        %2938 = vmatpush1.msra.mxu0 %v2605
        %2939 = vmatprep.subr.mxu0 %v2602
        %2940 = vmatpush1.msra.mxu0 %v2601
        %2941 = vmatprep.subr.mxu0 %v2598
        %2942 = vmatpush1.msra.mxu0 %v2597
        %2943 = vmatprep.subr.mxu0 %v2594
        %2944 = vmatpush1.msra.mxu0 %v2593
        %2945 = vmatprep.subr.mxu0 %v2590
        %2946 = vmatpush1.msra.mxu0 %v2589
        %2947 = vmatprep.subr.mxu0 %v2586
        %2948 = vmatpush1.msra.mxu0 %v2585
        %2949 = vmatprep.subr.mxu0 %v2582
        %2950 = vmatpush1.msra.mxu0 %v2581
        %2951 = vmatprep.subr.mxu0 %v2578
        %2952 = vmatpush1.msra.mxu0 %v2577
        %2953 = vmatprep.subr.mxu0 %v2702
        %2954 = vmatpush2.msra.mxu0 %v2701
        %2955 = vmatprep.subr.mxu0 %v2698
        %2956 = vmatpush2.msra.mxu0 %v2697
        %2957 = vmatprep.subr.mxu0 %v2694
        %2958 = vmatpush2.msra.mxu0 %v2693
        %2959 = vmatprep.subr.mxu0 %v2690
        %2960 = vmatpush2.msra.mxu0 %v2689
        %2961 = vmatprep.subr.mxu0 %v2686
        %2962 = vmatpush2.msra.mxu0 %v2685
        %2963 = vmatprep.subr.mxu0 %v2682
        %2964 = vmatpush2.msra.mxu0 %v2681
        %2965 = vmatprep.subr.mxu0 %v2678
        %2966 = vmatpush2.msra.mxu0 %v2677
        %2967 = vmatprep.subr.mxu0 %v2674
        %2968 = vmatpush2.msra.mxu0 %v2673
        %2969 = vmatprep.subr.mxu0 %v2670
        %2970 = vmatpush2.msra.mxu0 %v2669
        %2971 = vmatprep.subr.mxu0 %v2666
        %2972 = vmatpush2.msra.mxu0 %v2665
        %2973 = vmatprep.subr.mxu0 %v2662
        %2974 = vmatpush2.msra.mxu0 %v2661
        %2975 = vmatprep.subr.mxu0 %v2658
        %2976 = vmatpush2.msra.mxu0 %v2657
        %2977 = vmatprep.subr.mxu0 %v2654
        %2978 = vmatpush2.msra.mxu0 %v2653
        %2979 = vmatprep.subr.mxu0 %v2650
        %2980 = vmatpush2.msra.mxu0 %v2649
        %2981 = vmatprep.subr.mxu0 %v2646
        %2982 = vmatpush2.msra.mxu0 %v2645
        %2983 = vmatprep.subr.mxu0 %v2642
        %2984 = vmatpush2.msra.mxu0 %v2641
        %2985 = vmatprep.mubr.f32.mxu0 %v2545
        %2986 = vmatmul.mubr.f32.gmra.mxu0 %v2557
        %v2987 = vpop.f32.mrf.mxu0
        %v2988 = vadd.f32 0.0, %v2987
        %v2989 = vpop.f32.mrf.mxu0
        %v2990 = vadd.f32 0.0, %v2989
        %2991 = vmatprep.mubr.f32.mxu0 %v2546
        %2992 = vmatmul.mubr.f32.gmra.mxu0 %v2554
        %v2993 = vpop.f32.mrf.mxu0
        %v2994 = vadd.f32 0.0, %v2993
        %v2995 = vpop.f32.mrf.mxu0
        %v2996 = vadd.f32 0.0, %v2995
        %2997 = vdwg.mxu0
        %2998 = vmatprep.subr.mxu0 %v2766
        %2999 = vmatpush1.msra.mxu0 %v2765
        %3000 = vmatprep.subr.mxu0 %v2762
        %3001 = vmatpush1.msra.mxu0 %v2761
        %3002 = vmatprep.subr.mxu0 %v2758
        %3003 = vmatpush1.msra.mxu0 %v2757
        %3004 = vmatprep.subr.mxu0 %v2754
        %3005 = vmatpush1.msra.mxu0 %v2753
        %3006 = vmatprep.subr.mxu0 %v2750
        %3007 = vmatpush1.msra.mxu0 %v2749
        %3008 = vmatprep.subr.mxu0 %v2746
        %3009 = vmatpush1.msra.mxu0 %v2745
        %3010 = vmatprep.subr.mxu0 %v2742
        %3011 = vmatpush1.msra.mxu0 %v2741
        %3012 = vmatprep.subr.mxu0 %v2738
        %3013 = vmatpush1.msra.mxu0 %v2737
        %3014 = vmatprep.subr.mxu0 %v2734
        %3015 = vmatpush1.msra.mxu0 %v2733
        %3016 = vmatprep.subr.mxu0 %v2730
        %3017 = vmatpush1.msra.mxu0 %v2729
        %3018 = vmatprep.subr.mxu0 %v2726
        %3019 = vmatpush1.msra.mxu0 %v2725
        %3020 = vmatprep.subr.mxu0 %v2722
        %3021 = vmatpush1.msra.mxu0 %v2721
        %3022 = vmatprep.subr.mxu0 %v2718
        %3023 = vmatpush1.msra.mxu0 %v2717
        %3024 = vmatprep.subr.mxu0 %v2714
        %3025 = vmatpush1.msra.mxu0 %v2713
        %3026 = vmatprep.subr.mxu0 %v2710
        %3027 = vmatpush1.msra.mxu0 %v2709
        %3028 = vmatprep.subr.mxu0 %v2706
        %3029 = vmatpush1.msra.mxu0 %v2705
        %3030 = vmatprep.subr.mxu0 0.0
        %3031 = vmatpush2.msra.mxu0 0.0
        %3032 = vmatprep.subr.mxu0 0.0
        %3033 = vmatpush2.msra.mxu0 0.0
        %3034 = vmatprep.subr.mxu0 0.0
        %3035 = vmatpush2.msra.mxu0 0.0
        %3036 = vmatprep.subr.mxu0 0.0
        %3037 = vmatpush2.msra.mxu0 0.0
        %3038 = vmatprep.subr.mxu0 0.0
        %3039 = vmatpush2.msra.mxu0 0.0
        %3040 = vmatprep.subr.mxu0 0.0
        %3041 = vmatpush2.msra.mxu0 0.0
        %3042 = vmatprep.subr.mxu0 0.0
        %3043 = vmatpush2.msra.mxu0 0.0
        %3044 = vmatprep.subr.mxu0 0.0
        %3045 = vmatpush2.msra.mxu0 0.0
        %3046 = vmatprep.subr.mxu0 0.0
        %3047 = vmatpush2.msra.mxu0 0.0
        %3048 = vmatprep.subr.mxu0 0.0
        %3049 = vmatpush2.msra.mxu0 0.0
        %3050 = vmatprep.subr.mxu0 0.0
        %3051 = vmatpush2.msra.mxu0 0.0
        %3052 = vmatprep.subr.mxu0 0.0
        %3053 = vmatpush2.msra.mxu0 0.0
        %3054 = vmatprep.subr.mxu0 0.0
        %3055 = vmatpush2.msra.mxu0 0.0
        %3056 = vmatprep.subr.mxu0 0.0
        %3057 = vmatpush2.msra.mxu0 0.0
        %3058 = vmatprep.subr.mxu0 0.0
        %3059 = vmatpush2.msra.mxu0 0.0
        %3060 = vmatprep.subr.mxu0 0.0
        %3061 = vmatpush2.msra.mxu0 0.0
        %3062 = vmatprep.mubr.f32.mxu0 0.0
        %3063 = vmatmul.mubr.f32.gmra.mxu0 %v2560
        %v3064 = vpop.f32.mrf.mxu0
        %v3065 = vadd.f32 %v2988, %v3064
        %v3066 = vpop.f32.mrf.mxu0
        %v3067 = vadd.f32 %v2990, %v3066
        %3068 = vmatprep.mubr.f32.mxu0 0.0
        %3069 = vmatmul.mubr.f32.gmra.mxu0 %v2563
        %v3070 = vpop.f32.mrf.mxu0
        %v3071 = vadd.f32 %v2994, %v3070
        %v3072 = vpop.f32.mrf.mxu0
        %v3073 = vadd.f32 %v2996, %v3072
        %3074 = vdwg.mxu0
        %v3075 = vadd.f32 %v2567, %v2911
        %v3076 = vadd.f32 %v2568, %v2913
        %v3077 = vadd.f32 %v2569, %v3065
        %v3078 = vadd.f32 %v2570, %v3067
        %v3079 = vadd.f32 %v2571, %v2917
        %v3080 = vadd.f32 %v2572, %v2919
        %v3081 = vadd.f32 %v2573, %v3071
        %v3082 = vadd.f32 %v2574, %v3073
        %v3083 = vmul.f32 %v1391, %v2529
        %v3084 = vmul.f32 %v1392, %v2530
        %v3085 = vadd.f32 %v3075, %v3083
        %v3086 = vadd.f32 %v3079, %v3084
        %v3087 = vmul.f32 %v3085, 0.5
        %v3088 = vmul.f32 %v3086, 0.5
        %v3089 = vtanh.pop %v3087
        %v3090 = vtanh.pop %v3088
        %v3091 = vmul.f32 %v3089, 0.5
        %v3092 = vmul.f32 %v3090, 0.5
        %v3093 = vadd.f32 %v3091, 0.5
        %v3094 = vadd.f32 %v3092, 0.5
        %v3095 = vmul.f32 %v1393, %v2529
        %v3096 = vmul.f32 %v1394, %v2530
        %v3097 = vadd.f32 %v3076, %v3095
        %v3098 = vadd.f32 %v3080, %v3096
        %v3099 = vmul.f32 %v3097, 0.5
        %v3100 = vmul.f32 %v3098, 0.5
        %v3101 = vtanh.pop %v3099
        %v3102 = vtanh.pop %v3100
        %v3103 = vmul.f32 %v3101, 0.5
        %v3104 = vmul.f32 %v3102, 0.5
        %v3105 = vadd.f32 %v3103, 0.5
        %v3106 = vadd.f32 %v3104, 0.5
        %v3107 = vmul.f32 %v3105, %v2529
        %v3108 = vmul.f32 %v3106, %v2530
        %v3109 = vtanh.pop %v3077
        %v3110 = vtanh.pop %v3081
        %v3111 = vmul.f32 %v3093, %v3109
        %v3112 = vmul.f32 %v3094, %v3110
        %v3113 = vadd.f32 %v3107, %v3111
        %v3114 = vadd.f32 %v3108, %v3112
        %v3115 = vmul.f32 %v1395, %v3113
        %v3116 = vmul.f32 %v1396, %v3114
        %v3117 = vadd.f32 %v3078, %v3115
        %v3118 = vadd.f32 %v3082, %v3116
        %v3119 = vmul.f32 %v3117, 0.5
        %v3120 = vmul.f32 %v3118, 0.5
        %v3121 = vtanh.pop %v3119
        %v3122 = vtanh.pop %v3120
        %v3123 = vmul.f32 %v3121, 0.5
        %v3124 = vmul.f32 %v3122, 0.5
        %v3125 = vadd.f32 %v3123, 0.5
        %v3126 = vadd.f32 %v3124, 0.5
        %v3127 = vtanh.pop %v3113
        %v3128 = vtanh.pop %v3114
        %v3129 = vmul.f32 %v3125, %v3127
        %v3130 = vmul.f32 %v3126, %v3128
        %s3131 = scalar_lea.vmem %s301, 32 [#allocation8]
        %3132 = vst [vmem:[%s3131] sm:$0xff] %v3129
        %3133 = vst [vmem:[%s3131 + $0x8] sm:$0xff] %v3130
        %v3136 = vrot.slane %v3129, 7
        %v3137 = vrot.slane %v3130, 7
        %v3138 = vsel %vm339, %v3136, %v3137
        %v3141 = vsel %vm339, 0.0, %v3136
        %v3142 = vrot.slane %v3129, 1
        %v3143 = vrot.slane %v3130, 1
        %v3144 = vsel %vm629, %v3142, %v3143
        %v3147 = vsel %vm629, %v3143, 0.0
        %s3148 = smul.u32 6, 4
        %s3149 = smul.addr %s3148, 8
        %s3150 = scalar_lea.vmem [#allocation2], %s3149
        %v3151 = vld [vmem:[%s3150] sm:$0xff]
        %v3152 = vld [vmem:[%s3150 + $0x8] sm:$0xff]
        %v3153 = vld [vmem:[%s3150 + $0x10] sm:$0xff]
        %v3154 = vld [vmem:[%s3150 + $0x18] sm:$0xff]
        %v3155 = vld [vmem:[%s3150 + $0x20] sm:$0xff]
        %v3156 = vld [vmem:[%s3150 + $0x28] sm:$0xff]
        %v3157 = vld [vmem:[%s3150 + $0x30] sm:$0xff]
        %v3158 = vld [vmem:[%s3150 + $0x38] sm:$0xff]
        %v3159 = vld [vmem:[#allocation6] sm:$0xff]
        %v3160 = vld [vmem:[#allocation6 + $0x8] sm:$0xff]
        %v3161 = vld [vmem:[#allocation6 + $0x10] sm:$0xff]
        %v3162 = vld [vmem:[#allocation6 + $0x18] sm:$0xff]
        %v3163 = vld [vmem:[#allocation6 + $0x20] sm:$0xff]
        %v3164 = vld [vmem:[#allocation6 + $0x28] sm:$0xff]
        %v3165 = vld [vmem:[#allocation6 + $0x30] sm:$0xff]
        %v3166 = vld [vmem:[#allocation6 + $0x38] sm:$0xff]
        %v3167 = vld [vmem:[#allocation6 + $0x40] sm:$0xff]
        %v3168 = vld [vmem:[#allocation6 + $0x48] sm:$0xff]
        %v3169 = vld [vmem:[#allocation6 + $0x50] sm:$0xff]
        %v3170 = vld [vmem:[#allocation6 + $0x58] sm:$0xff]
        %v3171 = vld [vmem:[#allocation6 + $0x60] sm:$0xff]
        %v3172 = vld [vmem:[#allocation6 + $0x68] sm:$0xff]
        %v3173 = vld [vmem:[#allocation6 + $0x70] sm:$0xff]
        %v3174 = vld [vmem:[#allocation6 + $0x78] sm:$0xff]
        %v3175 = vld [vmem:[#allocation6 + $0x80] sm:$0xff]
        %v3176 = vld [vmem:[#allocation6 + $0x88] sm:$0xff]
        %v3177 = vld [vmem:[#allocation6 + $0x90] sm:$0xff]
        %v3178 = vld [vmem:[#allocation6 + $0x98] sm:$0xff]
        %v3179 = vld [vmem:[#allocation6 + $0xa0] sm:$0xff]
        %v3180 = vld [vmem:[#allocation6 + $0xa8] sm:$0xff]
        %v3181 = vld [vmem:[#allocation6 + $0xb0] sm:$0xff]
        %v3182 = vld [vmem:[#allocation6 + $0xb8] sm:$0xff]
        %v3183 = vld [vmem:[#allocation6 + $0xc0] sm:$0xff]
        %v3184 = vld [vmem:[#allocation6 + $0xc8] sm:$0xff]
        %v3185 = vld [vmem:[#allocation6 + $0xd0] sm:$0xff]
        %v3186 = vld [vmem:[#allocation6 + $0xd8] sm:$0xff]
        %v3187 = vld [vmem:[#allocation6 + $0xe0] sm:$0xff]
        %v3188 = vld [vmem:[#allocation6 + $0xe8] sm:$0xff]
        %v3189 = vld [vmem:[#allocation6 + $0xf0] sm:$0xff]
        %v3190 = vld [vmem:[#allocation6 + $0xf8] sm:$0xff]
        %v3191 = vld [vmem:[#allocation6 + $0x100] sm:$0xff]
        %v3192 = vld [vmem:[#allocation6 + $0x108] sm:$0xff]
        %v3193 = vld [vmem:[#allocation6 + $0x110] sm:$0xff]
        %v3194 = vld [vmem:[#allocation6 + $0x118] sm:$0xff]
        %v3195 = vld [vmem:[#allocation6 + $0x120] sm:$0xff]
        %v3196 = vld [vmem:[#allocation6 + $0x128] sm:$0xff]
        %v3197 = vld [vmem:[#allocation6 + $0x130] sm:$0xff]
        %v3198 = vld [vmem:[#allocation6 + $0x138] sm:$0xff]
        %v3199 = vld [vmem:[#allocation6 + $0x140] sm:$0xff]
        %v3200 = vld [vmem:[#allocation6 + $0x148] sm:$0xff]
        %v3201 = vld [vmem:[#allocation6 + $0x150] sm:$0xff]
        %v3202 = vld [vmem:[#allocation6 + $0x158] sm:$0xff]
        %v3203 = vld [vmem:[#allocation6 + $0x160] sm:$0xff]
        %v3204 = vld [vmem:[#allocation6 + $0x168] sm:$0xff]
        %v3205 = vld [vmem:[#allocation6 + $0x170] sm:$0xff]
        %v3206 = vld [vmem:[#allocation6 + $0x178] sm:$0xff]
        %v3207 = vld [vmem:[#allocation6 + $0x180] sm:$0xff]
        %v3208 = vld [vmem:[#allocation6 + $0x188] sm:$0xff]
        %v3209 = vld [vmem:[#allocation6 + $0x190] sm:$0xff]
        %v3210 = vld [vmem:[#allocation6 + $0x198] sm:$0xff]
        %v3211 = vld [vmem:[#allocation6 + $0x1a0] sm:$0xff]
        %v3212 = vld [vmem:[#allocation6 + $0x1a8] sm:$0xff]
        %v3213 = vld [vmem:[#allocation6 + $0x1b0] sm:$0xff]
        %v3214 = vld [vmem:[#allocation6 + $0x1b8] sm:$0xff]
        %v3215 = vld [vmem:[#allocation6 + $0x1c0] sm:$0xff]
        %v3216 = vld [vmem:[#allocation6 + $0x1c8] sm:$0xff]
        %v3217 = vld [vmem:[#allocation6 + $0x1d0] sm:$0xff]
        %v3218 = vld [vmem:[#allocation6 + $0x1d8] sm:$0xff]
        %v3219 = vld [vmem:[#allocation6 + $0x1e0] sm:$0xff]
        %v3220 = vld [vmem:[#allocation6 + $0x1e8] sm:$0xff]
        %v3221 = vld [vmem:[#allocation6 + $0x1f0] sm:$0xff]
        %v3222 = vld [vmem:[#allocation6 + $0x1f8] sm:$0xff]
        %v3223 = vld [vmem:[#allocation6 + $0x200] sm:$0xff]
        %v3224 = vld [vmem:[#allocation6 + $0x208] sm:$0xff]
        %v3225 = vld [vmem:[#allocation6 + $0x210] sm:$0xff]
        %v3226 = vld [vmem:[#allocation6 + $0x218] sm:$0xff]
        %v3227 = vld [vmem:[#allocation6 + $0x220] sm:$0xff]
        %v3228 = vld [vmem:[#allocation6 + $0x228] sm:$0xff]
        %v3229 = vld [vmem:[#allocation6 + $0x230] sm:$0xff]
        %v3230 = vld [vmem:[#allocation6 + $0x238] sm:$0xff]
        %v3231 = vld [vmem:[#allocation6 + $0x240] sm:$0xff]
        %v3232 = vld [vmem:[#allocation6 + $0x248] sm:$0xff]
        %v3233 = vld [vmem:[#allocation6 + $0x250] sm:$0xff]
        %v3234 = vld [vmem:[#allocation6 + $0x258] sm:$0xff]
        %v3235 = vld [vmem:[#allocation6 + $0x260] sm:$0xff]
        %v3236 = vld [vmem:[#allocation6 + $0x268] sm:$0xff]
        %v3237 = vld [vmem:[#allocation6 + $0x270] sm:$0xff]
        %v3238 = vld [vmem:[#allocation6 + $0x278] sm:$0xff]
        %v3239 = vld [vmem:[#allocation6 + $0x280] sm:$0xff]
        %v3240 = vld [vmem:[#allocation6 + $0x288] sm:$0xff]
        %v3241 = vld [vmem:[#allocation6 + $0x290] sm:$0xff]
        %v3242 = vld [vmem:[#allocation6 + $0x298] sm:$0xff]
        %v3243 = vld [vmem:[#allocation6 + $0x2a0] sm:$0xff]
        %v3244 = vld [vmem:[#allocation6 + $0x2a8] sm:$0xff]
        %v3245 = vld [vmem:[#allocation6 + $0x2b0] sm:$0xff]
        %v3246 = vld [vmem:[#allocation6 + $0x2b8] sm:$0xff]
        %v3247 = vld [vmem:[#allocation6 + $0x2c0] sm:$0xff]
        %v3248 = vld [vmem:[#allocation6 + $0x2c8] sm:$0xff]
        %v3249 = vld [vmem:[#allocation6 + $0x2d0] sm:$0xff]
        %v3250 = vld [vmem:[#allocation6 + $0x2d8] sm:$0xff]
        %v3251 = vld [vmem:[#allocation6 + $0x2e0] sm:$0xff]
        %v3252 = vld [vmem:[#allocation6 + $0x2e8] sm:$0xff]
        %v3253 = vld [vmem:[#allocation6 + $0x2f0] sm:$0xff]
        %v3254 = vld [vmem:[#allocation6 + $0x2f8] sm:$0xff]
        %v3255 = vld [vmem:[#allocation6 + $0x300] sm:$0xff]
        %v3256 = vld [vmem:[#allocation6 + $0x308] sm:$0xff]
        %v3257 = vld [vmem:[#allocation6 + $0x310] sm:$0xff]
        %v3258 = vld [vmem:[#allocation6 + $0x318] sm:$0xff]
        %v3259 = vld [vmem:[#allocation6 + $0x320] sm:$0xff]
        %v3260 = vld [vmem:[#allocation6 + $0x328] sm:$0xff]
        %v3261 = vld [vmem:[#allocation6 + $0x330] sm:$0xff]
        %v3262 = vld [vmem:[#allocation6 + $0x338] sm:$0xff]
        %v3263 = vld [vmem:[#allocation6 + $0x340] sm:$0xff]
        %v3264 = vld [vmem:[#allocation6 + $0x348] sm:$0xff]
        %v3265 = vld [vmem:[#allocation6 + $0x350] sm:$0xff]
        %v3266 = vld [vmem:[#allocation6 + $0x358] sm:$0xff]
        %v3267 = vld [vmem:[#allocation6 + $0x360] sm:$0xff]
        %v3268 = vld [vmem:[#allocation6 + $0x368] sm:$0xff]
        %v3269 = vld [vmem:[#allocation6 + $0x370] sm:$0xff]
        %v3270 = vld [vmem:[#allocation6 + $0x378] sm:$0xff]
        %v3271 = vld [vmem:[#allocation6 + $0x380] sm:$0xff]
        %v3272 = vld [vmem:[#allocation6 + $0x388] sm:$0xff]
        %v3273 = vld [vmem:[#allocation6 + $0x390] sm:$0xff]
        %v3274 = vld [vmem:[#allocation6 + $0x398] sm:$0xff]
        %v3275 = vld [vmem:[#allocation6 + $0x3a0] sm:$0xff]
        %v3276 = vld [vmem:[#allocation6 + $0x3a8] sm:$0xff]
        %v3277 = vld [vmem:[#allocation6 + $0x3b0] sm:$0xff]
        %v3278 = vld [vmem:[#allocation6 + $0x3b8] sm:$0xff]
        %v3279 = vld [vmem:[#allocation6 + $0x3c0] sm:$0xff]
        %v3280 = vld [vmem:[#allocation6 + $0x3c8] sm:$0xff]
        %v3281 = vld [vmem:[#allocation6 + $0x3d0] sm:$0xff]
        %v3282 = vld [vmem:[#allocation6 + $0x3d8] sm:$0xff]
        %v3283 = vld [vmem:[#allocation6 + $0x3e0] sm:$0xff]
        %v3284 = vld [vmem:[#allocation6 + $0x3e8] sm:$0xff]
        %v3285 = vld [vmem:[#allocation6 + $0x3f0] sm:$0xff]
        %v3286 = vld [vmem:[#allocation6 + $0x3f8] sm:$0xff]
        %v3287 = vld [vmem:[#allocation6 + $0x400] sm:$0xff]
        %v3288 = vld [vmem:[#allocation6 + $0x408] sm:$0xff]
        %v3289 = vld [vmem:[#allocation6 + $0x410] sm:$0xff]
        %v3290 = vld [vmem:[#allocation6 + $0x418] sm:$0xff]
        %v3291 = vld [vmem:[#allocation6 + $0x420] sm:$0xff]
        %v3292 = vld [vmem:[#allocation6 + $0x428] sm:$0xff]
        %v3293 = vld [vmem:[#allocation6 + $0x430] sm:$0xff]
        %v3294 = vld [vmem:[#allocation6 + $0x438] sm:$0xff]
        %v3295 = vld [vmem:[#allocation6 + $0x440] sm:$0xff]
        %v3296 = vld [vmem:[#allocation6 + $0x448] sm:$0xff]
        %v3297 = vld [vmem:[#allocation6 + $0x450] sm:$0xff]
        %v3298 = vld [vmem:[#allocation6 + $0x458] sm:$0xff]
        %v3299 = vld [vmem:[#allocation6 + $0x460] sm:$0xff]
        %v3300 = vld [vmem:[#allocation6 + $0x468] sm:$0xff]
        %v3301 = vld [vmem:[#allocation6 + $0x470] sm:$0xff]
        %v3302 = vld [vmem:[#allocation6 + $0x478] sm:$0xff]
        %v3303 = vld [vmem:[#allocation6 + $0x480] sm:$0xff]
        %v3304 = vld [vmem:[#allocation6 + $0x488] sm:$0xff]
        %v3305 = vld [vmem:[#allocation6 + $0x490] sm:$0xff]
        %v3306 = vld [vmem:[#allocation6 + $0x498] sm:$0xff]
        %v3307 = vld [vmem:[#allocation6 + $0x4a0] sm:$0xff]
        %v3308 = vld [vmem:[#allocation6 + $0x4a8] sm:$0xff]
        %v3309 = vld [vmem:[#allocation6 + $0x4b0] sm:$0xff]
        %v3310 = vld [vmem:[#allocation6 + $0x4b8] sm:$0xff]
        %v3311 = vld [vmem:[#allocation6 + $0x4c0] sm:$0xff]
        %v3312 = vld [vmem:[#allocation6 + $0x4c8] sm:$0xff]
        %v3313 = vld [vmem:[#allocation6 + $0x4d0] sm:$0xff]
        %v3314 = vld [vmem:[#allocation6 + $0x4d8] sm:$0xff]
        %v3315 = vld [vmem:[#allocation6 + $0x4e0] sm:$0xff]
        %v3316 = vld [vmem:[#allocation6 + $0x4e8] sm:$0xff]
        %v3317 = vld [vmem:[#allocation6 + $0x4f0] sm:$0xff]
        %v3318 = vld [vmem:[#allocation6 + $0x4f8] sm:$0xff]
        %v3319 = vld [vmem:[#allocation6 + $0x500] sm:$0xff]
        %v3320 = vld [vmem:[#allocation6 + $0x508] sm:$0xff]
        %v3321 = vld [vmem:[#allocation6 + $0x510] sm:$0xff]
        %v3322 = vld [vmem:[#allocation6 + $0x518] sm:$0xff]
        %v3323 = vld [vmem:[#allocation6 + $0x520] sm:$0xff]
        %v3324 = vld [vmem:[#allocation6 + $0x528] sm:$0xff]
        %v3325 = vld [vmem:[#allocation6 + $0x530] sm:$0xff]
        %v3326 = vld [vmem:[#allocation6 + $0x538] sm:$0xff]
        %v3327 = vld [vmem:[#allocation6 + $0x540] sm:$0xff]
        %v3328 = vld [vmem:[#allocation6 + $0x548] sm:$0xff]
        %v3329 = vld [vmem:[#allocation6 + $0x550] sm:$0xff]
        %v3330 = vld [vmem:[#allocation6 + $0x558] sm:$0xff]
        %v3331 = vld [vmem:[#allocation6 + $0x560] sm:$0xff]
        %v3332 = vld [vmem:[#allocation6 + $0x568] sm:$0xff]
        %v3333 = vld [vmem:[#allocation6 + $0x570] sm:$0xff]
        %v3334 = vld [vmem:[#allocation6 + $0x578] sm:$0xff]
        %v3335 = vld [vmem:[#allocation6 + $0x580] sm:$0xff]
        %v3336 = vld [vmem:[#allocation6 + $0x588] sm:$0xff]
        %v3337 = vld [vmem:[#allocation6 + $0x590] sm:$0xff]
        %v3338 = vld [vmem:[#allocation6 + $0x598] sm:$0xff]
        %v3339 = vld [vmem:[#allocation6 + $0x5a0] sm:$0xff]
        %v3340 = vld [vmem:[#allocation6 + $0x5a8] sm:$0xff]
        %v3341 = vld [vmem:[#allocation6 + $0x5b0] sm:$0xff]
        %v3342 = vld [vmem:[#allocation6 + $0x5b8] sm:$0xff]
        %v3343 = vld [vmem:[#allocation6 + $0x5c0] sm:$0xff]
        %v3344 = vld [vmem:[#allocation6 + $0x5c8] sm:$0xff]
        %v3345 = vld [vmem:[#allocation6 + $0x5d0] sm:$0xff]
        %v3346 = vld [vmem:[#allocation6 + $0x5d8] sm:$0xff]
        %v3347 = vld [vmem:[#allocation6 + $0x5e0] sm:$0xff]
        %v3348 = vld [vmem:[#allocation6 + $0x5e8] sm:$0xff]
        %v3349 = vld [vmem:[#allocation6 + $0x5f0] sm:$0xff]
        %v3350 = vld [vmem:[#allocation6 + $0x5f8] sm:$0xff]
        %3351 = vmatprep.subr.mxu0 %v3220
        %3352 = vmatpush1.msra.mxu0 %v3219
        %3353 = vmatprep.subr.mxu0 %v3216
        %3354 = vmatpush1.msra.mxu0 %v3215
        %3355 = vmatprep.subr.mxu0 %v3212
        %3356 = vmatpush1.msra.mxu0 %v3211
        %3357 = vmatprep.subr.mxu0 %v3208
        %3358 = vmatpush1.msra.mxu0 %v3207
        %3359 = vmatprep.subr.mxu0 %v3204
        %3360 = vmatpush1.msra.mxu0 %v3203
        %3361 = vmatprep.subr.mxu0 %v3200
        %3362 = vmatpush1.msra.mxu0 %v3199
        %3363 = vmatprep.subr.mxu0 %v3196
        %3364 = vmatpush1.msra.mxu0 %v3195
        %3365 = vmatprep.subr.mxu0 %v3192
        %3366 = vmatpush1.msra.mxu0 %v3191
        %3367 = vmatprep.subr.mxu0 %v3188
        %3368 = vmatpush1.msra.mxu0 %v3187
        %3369 = vmatprep.subr.mxu0 %v3184
        %3370 = vmatpush1.msra.mxu0 %v3183
        %3371 = vmatprep.subr.mxu0 %v3180
        %3372 = vmatpush1.msra.mxu0 %v3179
        %3373 = vmatprep.subr.mxu0 %v3176
        %3374 = vmatpush1.msra.mxu0 %v3175
        %3375 = vmatprep.subr.mxu0 %v3172
        %3376 = vmatpush1.msra.mxu0 %v3171
        %3377 = vmatprep.subr.mxu0 %v3168
        %3378 = vmatpush1.msra.mxu0 %v3167
        %3379 = vmatprep.subr.mxu0 %v3164
        %3380 = vmatpush1.msra.mxu0 %v3163
        %3381 = vmatprep.subr.mxu0 %v3160
        %3382 = vmatpush1.msra.mxu0 %v3159
        %3383 = vmatprep.subr.mxu0 %v3284
        %3384 = vmatpush2.msra.mxu0 %v3283
        %3385 = vmatprep.subr.mxu0 %v3280
        %3386 = vmatpush2.msra.mxu0 %v3279
        %3387 = vmatprep.subr.mxu0 %v3276
        %3388 = vmatpush2.msra.mxu0 %v3275
        %3389 = vmatprep.subr.mxu0 %v3272
        %3390 = vmatpush2.msra.mxu0 %v3271
        %3391 = vmatprep.subr.mxu0 %v3268
        %3392 = vmatpush2.msra.mxu0 %v3267
        %3393 = vmatprep.subr.mxu0 %v3264
        %3394 = vmatpush2.msra.mxu0 %v3263
        %3395 = vmatprep.subr.mxu0 %v3260
        %3396 = vmatpush2.msra.mxu0 %v3259
        %3397 = vmatprep.subr.mxu0 %v3256
        %3398 = vmatpush2.msra.mxu0 %v3255
        %3399 = vmatprep.subr.mxu0 %v3252
        %3400 = vmatpush2.msra.mxu0 %v3251
        %3401 = vmatprep.subr.mxu0 %v3248
        %3402 = vmatpush2.msra.mxu0 %v3247
        %3403 = vmatprep.subr.mxu0 %v3244
        %3404 = vmatpush2.msra.mxu0 %v3243
        %3405 = vmatprep.subr.mxu0 %v3240
        %3406 = vmatpush2.msra.mxu0 %v3239
        %3407 = vmatprep.subr.mxu0 %v3236
        %3408 = vmatpush2.msra.mxu0 %v3235
        %3409 = vmatprep.subr.mxu0 %v3232
        %3410 = vmatpush2.msra.mxu0 %v3231
        %3411 = vmatprep.subr.mxu0 %v3228
        %3412 = vmatpush2.msra.mxu0 %v3227
        %3413 = vmatprep.subr.mxu0 %v3224
        %3414 = vmatpush2.msra.mxu0 %v3223
        %3415 = vmatprep.mubr.f32.mxu0 %v3129
        %3416 = vmatmul.mubr.f32.gmra.mxu0 %v3141
        %v3417 = vpop.f32.mrf.mxu0
        %v3418 = vadd.f32 0.0, %v3417
        %v3419 = vpop.f32.mrf.mxu0
        %v3420 = vadd.f32 0.0, %v3419
        %3421 = vmatprep.mubr.f32.mxu0 %v3130
        %3422 = vmatmul.mubr.f32.gmra.mxu0 %v3138
        %v3423 = vpop.f32.mrf.mxu0
        %v3424 = vadd.f32 0.0, %v3423
        %v3425 = vpop.f32.mrf.mxu0
        %v3426 = vadd.f32 0.0, %v3425
        %3427 = vdwg.mxu0
        %3428 = vmatprep.subr.mxu0 %v3348
        %3429 = vmatpush1.msra.mxu0 %v3347
        %3430 = vmatprep.subr.mxu0 %v3344
        %3431 = vmatpush1.msra.mxu0 %v3343
        %3432 = vmatprep.subr.mxu0 %v3340
        %3433 = vmatpush1.msra.mxu0 %v3339
        %3434 = vmatprep.subr.mxu0 %v3336
        %3435 = vmatpush1.msra.mxu0 %v3335
        %3436 = vmatprep.subr.mxu0 %v3332
        %3437 = vmatpush1.msra.mxu0 %v3331
        %3438 = vmatprep.subr.mxu0 %v3328
        %3439 = vmatpush1.msra.mxu0 %v3327
        %3440 = vmatprep.subr.mxu0 %v3324
        %3441 = vmatpush1.msra.mxu0 %v3323
        %3442 = vmatprep.subr.mxu0 %v3320
        %3443 = vmatpush1.msra.mxu0 %v3319
        %3444 = vmatprep.subr.mxu0 %v3316
        %3445 = vmatpush1.msra.mxu0 %v3315
        %3446 = vmatprep.subr.mxu0 %v3312
        %3447 = vmatpush1.msra.mxu0 %v3311
        %3448 = vmatprep.subr.mxu0 %v3308
        %3449 = vmatpush1.msra.mxu0 %v3307
        %3450 = vmatprep.subr.mxu0 %v3304
        %3451 = vmatpush1.msra.mxu0 %v3303
        %3452 = vmatprep.subr.mxu0 %v3300
        %3453 = vmatpush1.msra.mxu0 %v3299
        %3454 = vmatprep.subr.mxu0 %v3296
        %3455 = vmatpush1.msra.mxu0 %v3295
        %3456 = vmatprep.subr.mxu0 %v3292
        %3457 = vmatpush1.msra.mxu0 %v3291
        %3458 = vmatprep.subr.mxu0 %v3288
        %3459 = vmatpush1.msra.mxu0 %v3287
        %3460 = vmatprep.subr.mxu0 0.0
        %3461 = vmatpush2.msra.mxu0 0.0
        %3462 = vmatprep.subr.mxu0 0.0
        %3463 = vmatpush2.msra.mxu0 0.0
        %3464 = vmatprep.subr.mxu0 0.0
        %3465 = vmatpush2.msra.mxu0 0.0
        %3466 = vmatprep.subr.mxu0 0.0
        %3467 = vmatpush2.msra.mxu0 0.0
        %3468 = vmatprep.subr.mxu0 0.0
        %3469 = vmatpush2.msra.mxu0 0.0
        %3470 = vmatprep.subr.mxu0 0.0
        %3471 = vmatpush2.msra.mxu0 0.0
        %3472 = vmatprep.subr.mxu0 0.0
        %3473 = vmatpush2.msra.mxu0 0.0
        %3474 = vmatprep.subr.mxu0 0.0
        %3475 = vmatpush2.msra.mxu0 0.0
        %3476 = vmatprep.subr.mxu0 0.0
        %3477 = vmatpush2.msra.mxu0 0.0
        %3478 = vmatprep.subr.mxu0 0.0
        %3479 = vmatpush2.msra.mxu0 0.0
        %3480 = vmatprep.subr.mxu0 0.0
        %3481 = vmatpush2.msra.mxu0 0.0
        %3482 = vmatprep.subr.mxu0 0.0
        %3483 = vmatpush2.msra.mxu0 0.0
        %3484 = vmatprep.subr.mxu0 0.0
        %3485 = vmatpush2.msra.mxu0 0.0
        %3486 = vmatprep.subr.mxu0 0.0
        %3487 = vmatpush2.msra.mxu0 0.0
        %3488 = vmatprep.subr.mxu0 0.0
        %3489 = vmatpush2.msra.mxu0 0.0
        %3490 = vmatprep.subr.mxu0 0.0
        %3491 = vmatpush2.msra.mxu0 0.0
        %3492 = vmatprep.mubr.f32.mxu0 0.0
        %3493 = vmatmul.mubr.f32.gmra.mxu0 %v3144
        %v3494 = vpop.f32.mrf.mxu0
        %v3495 = vadd.f32 %v3418, %v3494
        %v3496 = vpop.f32.mrf.mxu0
        %v3497 = vadd.f32 %v3420, %v3496
        %3498 = vmatprep.mubr.f32.mxu0 0.0
        %3499 = vmatmul.mubr.f32.gmra.mxu0 %v3147
        %v3500 = vpop.f32.mrf.mxu0
        %v3501 = vadd.f32 %v3424, %v3500
        %v3502 = vpop.f32.mrf.mxu0
        %v3503 = vadd.f32 %v3426, %v3502
        %3504 = vdwg.mxu0
        %3505 = vmatprep.subr.mxu0 %v3222
        %3506 = vmatpush1.msra.mxu0 %v3221
        %3507 = vmatprep.subr.mxu0 %v3218
        %3508 = vmatpush1.msra.mxu0 %v3217
        %3509 = vmatprep.subr.mxu0 %v3214
        %3510 = vmatpush1.msra.mxu0 %v3213
        %3511 = vmatprep.subr.mxu0 %v3210
        %3512 = vmatpush1.msra.mxu0 %v3209
        %3513 = vmatprep.subr.mxu0 %v3206
        %3514 = vmatpush1.msra.mxu0 %v3205
        %3515 = vmatprep.subr.mxu0 %v3202
        %3516 = vmatpush1.msra.mxu0 %v3201
        %3517 = vmatprep.subr.mxu0 %v3198
        %3518 = vmatpush1.msra.mxu0 %v3197
        %3519 = vmatprep.subr.mxu0 %v3194
        %3520 = vmatpush1.msra.mxu0 %v3193
        %3521 = vmatprep.subr.mxu0 %v3190
        %3522 = vmatpush1.msra.mxu0 %v3189
        %3523 = vmatprep.subr.mxu0 %v3186
        %3524 = vmatpush1.msra.mxu0 %v3185
        %3525 = vmatprep.subr.mxu0 %v3182
        %3526 = vmatpush1.msra.mxu0 %v3181
        %3527 = vmatprep.subr.mxu0 %v3178
        %3528 = vmatpush1.msra.mxu0 %v3177
        %3529 = vmatprep.subr.mxu0 %v3174
        %3530 = vmatpush1.msra.mxu0 %v3173
        %3531 = vmatprep.subr.mxu0 %v3170
        %3532 = vmatpush1.msra.mxu0 %v3169
        %3533 = vmatprep.subr.mxu0 %v3166
        %3534 = vmatpush1.msra.mxu0 %v3165
        %3535 = vmatprep.subr.mxu0 %v3162
        %3536 = vmatpush1.msra.mxu0 %v3161
        %3537 = vmatprep.subr.mxu0 %v3286
        %3538 = vmatpush2.msra.mxu0 %v3285
        %3539 = vmatprep.subr.mxu0 %v3282
        %3540 = vmatpush2.msra.mxu0 %v3281
        %3541 = vmatprep.subr.mxu0 %v3278
        %3542 = vmatpush2.msra.mxu0 %v3277
        %3543 = vmatprep.subr.mxu0 %v3274
        %3544 = vmatpush2.msra.mxu0 %v3273
        %3545 = vmatprep.subr.mxu0 %v3270
        %3546 = vmatpush2.msra.mxu0 %v3269
        %3547 = vmatprep.subr.mxu0 %v3266
        %3548 = vmatpush2.msra.mxu0 %v3265
        %3549 = vmatprep.subr.mxu0 %v3262
        %3550 = vmatpush2.msra.mxu0 %v3261
        %3551 = vmatprep.subr.mxu0 %v3258
        %3552 = vmatpush2.msra.mxu0 %v3257
        %3553 = vmatprep.subr.mxu0 %v3254
        %3554 = vmatpush2.msra.mxu0 %v3253
        %3555 = vmatprep.subr.mxu0 %v3250
        %3556 = vmatpush2.msra.mxu0 %v3249
        %3557 = vmatprep.subr.mxu0 %v3246
        %3558 = vmatpush2.msra.mxu0 %v3245
        %3559 = vmatprep.subr.mxu0 %v3242
        %3560 = vmatpush2.msra.mxu0 %v3241
        %3561 = vmatprep.subr.mxu0 %v3238
        %3562 = vmatpush2.msra.mxu0 %v3237
        %3563 = vmatprep.subr.mxu0 %v3234
        %3564 = vmatpush2.msra.mxu0 %v3233
        %3565 = vmatprep.subr.mxu0 %v3230
        %3566 = vmatpush2.msra.mxu0 %v3229
        %3567 = vmatprep.subr.mxu0 %v3226
        %3568 = vmatpush2.msra.mxu0 %v3225
        %3569 = vmatprep.mubr.f32.mxu0 %v3129
        %3570 = vmatmul.mubr.f32.gmra.mxu0 %v3141
        %v3571 = vpop.f32.mrf.mxu0
        %v3572 = vadd.f32 0.0, %v3571
        %v3573 = vpop.f32.mrf.mxu0
        %v3574 = vadd.f32 0.0, %v3573
        %3575 = vmatprep.mubr.f32.mxu0 %v3130
        %3576 = vmatmul.mubr.f32.gmra.mxu0 %v3138
        %v3577 = vpop.f32.mrf.mxu0
        %v3578 = vadd.f32 0.0, %v3577
        %v3579 = vpop.f32.mrf.mxu0
        %v3580 = vadd.f32 0.0, %v3579
        %3581 = vdwg.mxu0
        %3582 = vmatprep.subr.mxu0 %v3350
        %3583 = vmatpush1.msra.mxu0 %v3349
        %3584 = vmatprep.subr.mxu0 %v3346
        %3585 = vmatpush1.msra.mxu0 %v3345
        %3586 = vmatprep.subr.mxu0 %v3342
        %3587 = vmatpush1.msra.mxu0 %v3341
        %3588 = vmatprep.subr.mxu0 %v3338
        %3589 = vmatpush1.msra.mxu0 %v3337
        %3590 = vmatprep.subr.mxu0 %v3334
        %3591 = vmatpush1.msra.mxu0 %v3333
        %3592 = vmatprep.subr.mxu0 %v3330
        %3593 = vmatpush1.msra.mxu0 %v3329
        %3594 = vmatprep.subr.mxu0 %v3326
        %3595 = vmatpush1.msra.mxu0 %v3325
        %3596 = vmatprep.subr.mxu0 %v3322
        %3597 = vmatpush1.msra.mxu0 %v3321
        %3598 = vmatprep.subr.mxu0 %v3318
        %3599 = vmatpush1.msra.mxu0 %v3317
        %3600 = vmatprep.subr.mxu0 %v3314
        %3601 = vmatpush1.msra.mxu0 %v3313
        %3602 = vmatprep.subr.mxu0 %v3310
        %3603 = vmatpush1.msra.mxu0 %v3309
        %3604 = vmatprep.subr.mxu0 %v3306
        %3605 = vmatpush1.msra.mxu0 %v3305
        %3606 = vmatprep.subr.mxu0 %v3302
        %3607 = vmatpush1.msra.mxu0 %v3301
        %3608 = vmatprep.subr.mxu0 %v3298
        %3609 = vmatpush1.msra.mxu0 %v3297
        %3610 = vmatprep.subr.mxu0 %v3294
        %3611 = vmatpush1.msra.mxu0 %v3293
        %3612 = vmatprep.subr.mxu0 %v3290
        %3613 = vmatpush1.msra.mxu0 %v3289
        %3614 = vmatprep.subr.mxu0 0.0
        %3615 = vmatpush2.msra.mxu0 0.0
        %3616 = vmatprep.subr.mxu0 0.0
        %3617 = vmatpush2.msra.mxu0 0.0
        %3618 = vmatprep.subr.mxu0 0.0
        %3619 = vmatpush2.msra.mxu0 0.0
        %3620 = vmatprep.subr.mxu0 0.0
        %3621 = vmatpush2.msra.mxu0 0.0
        %3622 = vmatprep.subr.mxu0 0.0
        %3623 = vmatpush2.msra.mxu0 0.0
        %3624 = vmatprep.subr.mxu0 0.0
        %3625 = vmatpush2.msra.mxu0 0.0
        %3626 = vmatprep.subr.mxu0 0.0
        %3627 = vmatpush2.msra.mxu0 0.0
        %3628 = vmatprep.subr.mxu0 0.0
        %3629 = vmatpush2.msra.mxu0 0.0
        %3630 = vmatprep.subr.mxu0 0.0
        %3631 = vmatpush2.msra.mxu0 0.0
        %3632 = vmatprep.subr.mxu0 0.0
        %3633 = vmatpush2.msra.mxu0 0.0
        %3634 = vmatprep.subr.mxu0 0.0
        %3635 = vmatpush2.msra.mxu0 0.0
        %3636 = vmatprep.subr.mxu0 0.0
        %3637 = vmatpush2.msra.mxu0 0.0
        %3638 = vmatprep.subr.mxu0 0.0
        %3639 = vmatpush2.msra.mxu0 0.0
        %3640 = vmatprep.subr.mxu0 0.0
        %3641 = vmatpush2.msra.mxu0 0.0
        %3642 = vmatprep.subr.mxu0 0.0
        %3643 = vmatpush2.msra.mxu0 0.0
        %3644 = vmatprep.subr.mxu0 0.0
        %3645 = vmatpush2.msra.mxu0 0.0
        %3646 = vmatprep.mubr.f32.mxu0 0.0
        %3647 = vmatmul.mubr.f32.gmra.mxu0 %v3144
        %v3648 = vpop.f32.mrf.mxu0
        %v3649 = vadd.f32 %v3572, %v3648
        %v3650 = vpop.f32.mrf.mxu0
        %v3651 = vadd.f32 %v3574, %v3650
        %3652 = vmatprep.mubr.f32.mxu0 0.0
        %3653 = vmatmul.mubr.f32.gmra.mxu0 %v3147
        %v3654 = vpop.f32.mrf.mxu0
        %v3655 = vadd.f32 %v3578, %v3654
        %v3656 = vpop.f32.mrf.mxu0
        %v3657 = vadd.f32 %v3580, %v3656
        %3658 = vdwg.mxu0
        %v3659 = vadd.f32 %v3151, %v3495
        %v3660 = vadd.f32 %v3152, %v3497
        %v3661 = vadd.f32 %v3153, %v3649
        %v3662 = vadd.f32 %v3154, %v3651
        %v3663 = vadd.f32 %v3155, %v3501
        %v3664 = vadd.f32 %v3156, %v3503
        %v3665 = vadd.f32 %v3157, %v3655
        %v3666 = vadd.f32 %v3158, %v3657
        %v3667 = vmul.f32 %v1391, %v3113
        %v3668 = vmul.f32 %v1392, %v3114
        %v3669 = vadd.f32 %v3659, %v3667
        %v3670 = vadd.f32 %v3663, %v3668
        %v3671 = vmul.f32 %v3669, 0.5
        %v3672 = vmul.f32 %v3670, 0.5
        %v3673 = vtanh.pop %v3671
        %v3674 = vtanh.pop %v3672
        %v3675 = vmul.f32 %v3673, 0.5
        %v3676 = vmul.f32 %v3674, 0.5
        %v3677 = vadd.f32 %v3675, 0.5
        %v3678 = vadd.f32 %v3676, 0.5
        %v3679 = vmul.f32 %v1393, %v3113
        %v3680 = vmul.f32 %v1394, %v3114
        %v3681 = vadd.f32 %v3660, %v3679
        %v3682 = vadd.f32 %v3664, %v3680
        %v3683 = vmul.f32 %v3681, 0.5
        %v3684 = vmul.f32 %v3682, 0.5
        %v3685 = vtanh.pop %v3683
        %v3686 = vtanh.pop %v3684
        %v3687 = vmul.f32 %v3685, 0.5
        %v3688 = vmul.f32 %v3686, 0.5
        %v3689 = vadd.f32 %v3687, 0.5
        %v3690 = vadd.f32 %v3688, 0.5
        %v3691 = vmul.f32 %v3689, %v3113
        %v3692 = vmul.f32 %v3690, %v3114
        %v3693 = vtanh.pop %v3661
        %v3694 = vtanh.pop %v3665
        %v3695 = vmul.f32 %v3677, %v3693
        %v3696 = vmul.f32 %v3678, %v3694
        %v3697 = vadd.f32 %v3691, %v3695
        %v3698 = vadd.f32 %v3692, %v3696
        %v3699 = vmul.f32 %v1395, %v3697
        %v3700 = vmul.f32 %v1396, %v3698
        %v3701 = vadd.f32 %v3662, %v3699
        %v3702 = vadd.f32 %v3666, %v3700
        %v3703 = vmul.f32 %v3701, 0.5
        %v3704 = vmul.f32 %v3702, 0.5
        %v3705 = vtanh.pop %v3703
        %v3706 = vtanh.pop %v3704
        %v3707 = vmul.f32 %v3705, 0.5
        %v3708 = vmul.f32 %v3706, 0.5
        %v3709 = vadd.f32 %v3707, 0.5
        %v3710 = vadd.f32 %v3708, 0.5
        %v3711 = vtanh.pop %v3697
        %v3712 = vtanh.pop %v3698
        %v3713 = vmul.f32 %v3709, %v3711
        %v3714 = vmul.f32 %v3710, %v3712
        %s3715 = scalar_lea.vmem %s301, 48 [#allocation8]
        %3716 = vst [vmem:[%s3715] sm:$0xff] %v3713
        %3717 = vst [vmem:[%s3715 + $0x8] sm:$0xff] %v3714
        %v3720 = vrot.slane %v3713, 7
        %v3721 = vrot.slane %v3714, 7
        %v3722 = vsel %vm339, %v3720, %v3721
        %v3725 = vsel %vm339, 0.0, %v3720
        %v3726 = vrot.slane %v3713, 1
        %v3727 = vrot.slane %v3714, 1
        %v3728 = vsel %vm629, %v3726, %v3727
        %v3731 = vsel %vm629, %v3727, 0.0
        %s3732 = smul.u32 8, 4
        %s3733 = smul.addr %s3732, 8
        %s3734 = scalar_lea.vmem [#allocation2], %s3733
        %v3735 = vld [vmem:[%s3734] sm:$0xff]
        %v3736 = vld [vmem:[%s3734 + $0x8] sm:$0xff]
        %v3737 = vld [vmem:[%s3734 + $0x10] sm:$0xff]
        %v3738 = vld [vmem:[%s3734 + $0x18] sm:$0xff]
        %v3739 = vld [vmem:[%s3734 + $0x20] sm:$0xff]
        %v3740 = vld [vmem:[%s3734 + $0x28] sm:$0xff]
        %v3741 = vld [vmem:[%s3734 + $0x30] sm:$0xff]
        %v3742 = vld [vmem:[%s3734 + $0x38] sm:$0xff]
        %v3743 = vld [vmem:[#allocation6] sm:$0xff]
        %v3744 = vld [vmem:[#allocation6 + $0x8] sm:$0xff]
        %v3745 = vld [vmem:[#allocation6 + $0x10] sm:$0xff]
        %v3746 = vld [vmem:[#allocation6 + $0x18] sm:$0xff]
        %v3747 = vld [vmem:[#allocation6 + $0x20] sm:$0xff]
        %v3748 = vld [vmem:[#allocation6 + $0x28] sm:$0xff]
        %v3749 = vld [vmem:[#allocation6 + $0x30] sm:$0xff]
        %v3750 = vld [vmem:[#allocation6 + $0x38] sm:$0xff]
        %v3751 = vld [vmem:[#allocation6 + $0x40] sm:$0xff]
        %v3752 = vld [vmem:[#allocation6 + $0x48] sm:$0xff]
        %v3753 = vld [vmem:[#allocation6 + $0x50] sm:$0xff]
        %v3754 = vld [vmem:[#allocation6 + $0x58] sm:$0xff]
        %v3755 = vld [vmem:[#allocation6 + $0x60] sm:$0xff]
        %v3756 = vld [vmem:[#allocation6 + $0x68] sm:$0xff]
        %v3757 = vld [vmem:[#allocation6 + $0x70] sm:$0xff]
        %v3758 = vld [vmem:[#allocation6 + $0x78] sm:$0xff]
        %v3759 = vld [vmem:[#allocation6 + $0x80] sm:$0xff]
        %v3760 = vld [vmem:[#allocation6 + $0x88] sm:$0xff]
        %v3761 = vld [vmem:[#allocation6 + $0x90] sm:$0xff]
        %v3762 = vld [vmem:[#allocation6 + $0x98] sm:$0xff]
        %v3763 = vld [vmem:[#allocation6 + $0xa0] sm:$0xff]
        %v3764 = vld [vmem:[#allocation6 + $0xa8] sm:$0xff]
        %v3765 = vld [vmem:[#allocation6 + $0xb0] sm:$0xff]
        %v3766 = vld [vmem:[#allocation6 + $0xb8] sm:$0xff]
        %v3767 = vld [vmem:[#allocation6 + $0xc0] sm:$0xff]
        %v3768 = vld [vmem:[#allocation6 + $0xc8] sm:$0xff]
        %v3769 = vld [vmem:[#allocation6 + $0xd0] sm:$0xff]
        %v3770 = vld [vmem:[#allocation6 + $0xd8] sm:$0xff]
        %v3771 = vld [vmem:[#allocation6 + $0xe0] sm:$0xff]
        %v3772 = vld [vmem:[#allocation6 + $0xe8] sm:$0xff]
        %v3773 = vld [vmem:[#allocation6 + $0xf0] sm:$0xff]
        %v3774 = vld [vmem:[#allocation6 + $0xf8] sm:$0xff]
        %v3775 = vld [vmem:[#allocation6 + $0x100] sm:$0xff]
        %v3776 = vld [vmem:[#allocation6 + $0x108] sm:$0xff]
        %v3777 = vld [vmem:[#allocation6 + $0x110] sm:$0xff]
        %v3778 = vld [vmem:[#allocation6 + $0x118] sm:$0xff]
        %v3779 = vld [vmem:[#allocation6 + $0x120] sm:$0xff]
        %v3780 = vld [vmem:[#allocation6 + $0x128] sm:$0xff]
        %v3781 = vld [vmem:[#allocation6 + $0x130] sm:$0xff]
        %v3782 = vld [vmem:[#allocation6 + $0x138] sm:$0xff]
        %v3783 = vld [vmem:[#allocation6 + $0x140] sm:$0xff]
        %v3784 = vld [vmem:[#allocation6 + $0x148] sm:$0xff]
        %v3785 = vld [vmem:[#allocation6 + $0x150] sm:$0xff]
        %v3786 = vld [vmem:[#allocation6 + $0x158] sm:$0xff]
        %v3787 = vld [vmem:[#allocation6 + $0x160] sm:$0xff]
        %v3788 = vld [vmem:[#allocation6 + $0x168] sm:$0xff]
        %v3789 = vld [vmem:[#allocation6 + $0x170] sm:$0xff]
        %v3790 = vld [vmem:[#allocation6 + $0x178] sm:$0xff]
        %v3791 = vld [vmem:[#allocation6 + $0x180] sm:$0xff]
        %v3792 = vld [vmem:[#allocation6 + $0x188] sm:$0xff]
        %v3793 = vld [vmem:[#allocation6 + $0x190] sm:$0xff]
        %v3794 = vld [vmem:[#allocation6 + $0x198] sm:$0xff]
        %v3795 = vld [vmem:[#allocation6 + $0x1a0] sm:$0xff]
        %v3796 = vld [vmem:[#allocation6 + $0x1a8] sm:$0xff]
        %v3797 = vld [vmem:[#allocation6 + $0x1b0] sm:$0xff]
        %v3798 = vld [vmem:[#allocation6 + $0x1b8] sm:$0xff]
        %v3799 = vld [vmem:[#allocation6 + $0x1c0] sm:$0xff]
        %v3800 = vld [vmem:[#allocation6 + $0x1c8] sm:$0xff]
        %v3801 = vld [vmem:[#allocation6 + $0x1d0] sm:$0xff]
        %v3802 = vld [vmem:[#allocation6 + $0x1d8] sm:$0xff]
        %v3803 = vld [vmem:[#allocation6 + $0x1e0] sm:$0xff]
        %v3804 = vld [vmem:[#allocation6 + $0x1e8] sm:$0xff]
        %v3805 = vld [vmem:[#allocation6 + $0x1f0] sm:$0xff]
        %v3806 = vld [vmem:[#allocation6 + $0x1f8] sm:$0xff]
        %v3807 = vld [vmem:[#allocation6 + $0x200] sm:$0xff]
        %v3808 = vld [vmem:[#allocation6 + $0x208] sm:$0xff]
        %v3809 = vld [vmem:[#allocation6 + $0x210] sm:$0xff]
        %v3810 = vld [vmem:[#allocation6 + $0x218] sm:$0xff]
        %v3811 = vld [vmem:[#allocation6 + $0x220] sm:$0xff]
        %v3812 = vld [vmem:[#allocation6 + $0x228] sm:$0xff]
        %v3813 = vld [vmem:[#allocation6 + $0x230] sm:$0xff]
        %v3814 = vld [vmem:[#allocation6 + $0x238] sm:$0xff]
        %v3815 = vld [vmem:[#allocation6 + $0x240] sm:$0xff]
        %v3816 = vld [vmem:[#allocation6 + $0x248] sm:$0xff]
        %v3817 = vld [vmem:[#allocation6 + $0x250] sm:$0xff]
        %v3818 = vld [vmem:[#allocation6 + $0x258] sm:$0xff]
        %v3819 = vld [vmem:[#allocation6 + $0x260] sm:$0xff]
        %v3820 = vld [vmem:[#allocation6 + $0x268] sm:$0xff]
        %v3821 = vld [vmem:[#allocation6 + $0x270] sm:$0xff]
        %v3822 = vld [vmem:[#allocation6 + $0x278] sm:$0xff]
        %v3823 = vld [vmem:[#allocation6 + $0x280] sm:$0xff]
        %v3824 = vld [vmem:[#allocation6 + $0x288] sm:$0xff]
        %v3825 = vld [vmem:[#allocation6 + $0x290] sm:$0xff]
        %v3826 = vld [vmem:[#allocation6 + $0x298] sm:$0xff]
        %v3827 = vld [vmem:[#allocation6 + $0x2a0] sm:$0xff]
        %v3828 = vld [vmem:[#allocation6 + $0x2a8] sm:$0xff]
        %v3829 = vld [vmem:[#allocation6 + $0x2b0] sm:$0xff]
        %v3830 = vld [vmem:[#allocation6 + $0x2b8] sm:$0xff]
        %v3831 = vld [vmem:[#allocation6 + $0x2c0] sm:$0xff]
        %v3832 = vld [vmem:[#allocation6 + $0x2c8] sm:$0xff]
        %v3833 = vld [vmem:[#allocation6 + $0x2d0] sm:$0xff]
        %v3834 = vld [vmem:[#allocation6 + $0x2d8] sm:$0xff]
        %v3835 = vld [vmem:[#allocation6 + $0x2e0] sm:$0xff]
        %v3836 = vld [vmem:[#allocation6 + $0x2e8] sm:$0xff]
        %v3837 = vld [vmem:[#allocation6 + $0x2f0] sm:$0xff]
        %v3838 = vld [vmem:[#allocation6 + $0x2f8] sm:$0xff]
        %v3839 = vld [vmem:[#allocation6 + $0x300] sm:$0xff]
        %v3840 = vld [vmem:[#allocation6 + $0x308] sm:$0xff]
        %v3841 = vld [vmem:[#allocation6 + $0x310] sm:$0xff]
        %v3842 = vld [vmem:[#allocation6 + $0x318] sm:$0xff]
        %v3843 = vld [vmem:[#allocation6 + $0x320] sm:$0xff]
        %v3844 = vld [vmem:[#allocation6 + $0x328] sm:$0xff]
        %v3845 = vld [vmem:[#allocation6 + $0x330] sm:$0xff]
        %v3846 = vld [vmem:[#allocation6 + $0x338] sm:$0xff]
        %v3847 = vld [vmem:[#allocation6 + $0x340] sm:$0xff]
        %v3848 = vld [vmem:[#allocation6 + $0x348] sm:$0xff]
        %v3849 = vld [vmem:[#allocation6 + $0x350] sm:$0xff]
        %v3850 = vld [vmem:[#allocation6 + $0x358] sm:$0xff]
        %v3851 = vld [vmem:[#allocation6 + $0x360] sm:$0xff]
        %v3852 = vld [vmem:[#allocation6 + $0x368] sm:$0xff]
        %v3853 = vld [vmem:[#allocation6 + $0x370] sm:$0xff]
        %v3854 = vld [vmem:[#allocation6 + $0x378] sm:$0xff]
        %v3855 = vld [vmem:[#allocation6 + $0x380] sm:$0xff]
        %v3856 = vld [vmem:[#allocation6 + $0x388] sm:$0xff]
        %v3857 = vld [vmem:[#allocation6 + $0x390] sm:$0xff]
        %v3858 = vld [vmem:[#allocation6 + $0x398] sm:$0xff]
        %v3859 = vld [vmem:[#allocation6 + $0x3a0] sm:$0xff]
        %v3860 = vld [vmem:[#allocation6 + $0x3a8] sm:$0xff]
        %v3861 = vld [vmem:[#allocation6 + $0x3b0] sm:$0xff]
        %v3862 = vld [vmem:[#allocation6 + $0x3b8] sm:$0xff]
        %v3863 = vld [vmem:[#allocation6 + $0x3c0] sm:$0xff]
        %v3864 = vld [vmem:[#allocation6 + $0x3c8] sm:$0xff]
        %v3865 = vld [vmem:[#allocation6 + $0x3d0] sm:$0xff]
        %v3866 = vld [vmem:[#allocation6 + $0x3d8] sm:$0xff]
        %v3867 = vld [vmem:[#allocation6 + $0x3e0] sm:$0xff]
        %v3868 = vld [vmem:[#allocation6 + $0x3e8] sm:$0xff]
        %v3869 = vld [vmem:[#allocation6 + $0x3f0] sm:$0xff]
        %v3870 = vld [vmem:[#allocation6 + $0x3f8] sm:$0xff]
        %v3871 = vld [vmem:[#allocation6 + $0x400] sm:$0xff]
        %v3872 = vld [vmem:[#allocation6 + $0x408] sm:$0xff]
        %v3873 = vld [vmem:[#allocation6 + $0x410] sm:$0xff]
        %v3874 = vld [vmem:[#allocation6 + $0x418] sm:$0xff]
        %v3875 = vld [vmem:[#allocation6 + $0x420] sm:$0xff]
        %v3876 = vld [vmem:[#allocation6 + $0x428] sm:$0xff]
        %v3877 = vld [vmem:[#allocation6 + $0x430] sm:$0xff]
        %v3878 = vld [vmem:[#allocation6 + $0x438] sm:$0xff]
        %v3879 = vld [vmem:[#allocation6 + $0x440] sm:$0xff]
        %v3880 = vld [vmem:[#allocation6 + $0x448] sm:$0xff]
        %v3881 = vld [vmem:[#allocation6 + $0x450] sm:$0xff]
        %v3882 = vld [vmem:[#allocation6 + $0x458] sm:$0xff]
        %v3883 = vld [vmem:[#allocation6 + $0x460] sm:$0xff]
        %v3884 = vld [vmem:[#allocation6 + $0x468] sm:$0xff]
        %v3885 = vld [vmem:[#allocation6 + $0x470] sm:$0xff]
        %v3886 = vld [vmem:[#allocation6 + $0x478] sm:$0xff]
        %v3887 = vld [vmem:[#allocation6 + $0x480] sm:$0xff]
        %v3888 = vld [vmem:[#allocation6 + $0x488] sm:$0xff]
        %v3889 = vld [vmem:[#allocation6 + $0x490] sm:$0xff]
        %v3890 = vld [vmem:[#allocation6 + $0x498] sm:$0xff]
        %v3891 = vld [vmem:[#allocation6 + $0x4a0] sm:$0xff]
        %v3892 = vld [vmem:[#allocation6 + $0x4a8] sm:$0xff]
        %v3893 = vld [vmem:[#allocation6 + $0x4b0] sm:$0xff]
        %v3894 = vld [vmem:[#allocation6 + $0x4b8] sm:$0xff]
        %v3895 = vld [vmem:[#allocation6 + $0x4c0] sm:$0xff]
        %v3896 = vld [vmem:[#allocation6 + $0x4c8] sm:$0xff]
        %v3897 = vld [vmem:[#allocation6 + $0x4d0] sm:$0xff]
        %v3898 = vld [vmem:[#allocation6 + $0x4d8] sm:$0xff]
        %v3899 = vld [vmem:[#allocation6 + $0x4e0] sm:$0xff]
        %v3900 = vld [vmem:[#allocation6 + $0x4e8] sm:$0xff]
        %v3901 = vld [vmem:[#allocation6 + $0x4f0] sm:$0xff]
        %v3902 = vld [vmem:[#allocation6 + $0x4f8] sm:$0xff]
        %v3903 = vld [vmem:[#allocation6 + $0x500] sm:$0xff]
        %v3904 = vld [vmem:[#allocation6 + $0x508] sm:$0xff]
        %v3905 = vld [vmem:[#allocation6 + $0x510] sm:$0xff]
        %v3906 = vld [vmem:[#allocation6 + $0x518] sm:$0xff]
        %v3907 = vld [vmem:[#allocation6 + $0x520] sm:$0xff]
        %v3908 = vld [vmem:[#allocation6 + $0x528] sm:$0xff]
        %v3909 = vld [vmem:[#allocation6 + $0x530] sm:$0xff]
        %v3910 = vld [vmem:[#allocation6 + $0x538] sm:$0xff]
        %v3911 = vld [vmem:[#allocation6 + $0x540] sm:$0xff]
        %v3912 = vld [vmem:[#allocation6 + $0x548] sm:$0xff]
        %v3913 = vld [vmem:[#allocation6 + $0x550] sm:$0xff]
        %v3914 = vld [vmem:[#allocation6 + $0x558] sm:$0xff]
        %v3915 = vld [vmem:[#allocation6 + $0x560] sm:$0xff]
        %v3916 = vld [vmem:[#allocation6 + $0x568] sm:$0xff]
        %v3917 = vld [vmem:[#allocation6 + $0x570] sm:$0xff]
        %v3918 = vld [vmem:[#allocation6 + $0x578] sm:$0xff]
        %v3919 = vld [vmem:[#allocation6 + $0x580] sm:$0xff]
        %v3920 = vld [vmem:[#allocation6 + $0x588] sm:$0xff]
        %v3921 = vld [vmem:[#allocation6 + $0x590] sm:$0xff]
        %v3922 = vld [vmem:[#allocation6 + $0x598] sm:$0xff]
        %v3923 = vld [vmem:[#allocation6 + $0x5a0] sm:$0xff]
        %v3924 = vld [vmem:[#allocation6 + $0x5a8] sm:$0xff]
        %v3925 = vld [vmem:[#allocation6 + $0x5b0] sm:$0xff]
        %v3926 = vld [vmem:[#allocation6 + $0x5b8] sm:$0xff]
        %v3927 = vld [vmem:[#allocation6 + $0x5c0] sm:$0xff]
        %v3928 = vld [vmem:[#allocation6 + $0x5c8] sm:$0xff]
        %v3929 = vld [vmem:[#allocation6 + $0x5d0] sm:$0xff]
        %v3930 = vld [vmem:[#allocation6 + $0x5d8] sm:$0xff]
        %v3931 = vld [vmem:[#allocation6 + $0x5e0] sm:$0xff]
        %v3932 = vld [vmem:[#allocation6 + $0x5e8] sm:$0xff]
        %v3933 = vld [vmem:[#allocation6 + $0x5f0] sm:$0xff]
        %v3934 = vld [vmem:[#allocation6 + $0x5f8] sm:$0xff]
        %3935 = vmatprep.subr.mxu0 %v3804
        %3936 = vmatpush1.msra.mxu0 %v3803
        %3937 = vmatprep.subr.mxu0 %v3800
        %3938 = vmatpush1.msra.mxu0 %v3799
        %3939 = vmatprep.subr.mxu0 %v3796
        %3940 = vmatpush1.msra.mxu0 %v3795
        %3941 = vmatprep.subr.mxu0 %v3792
        %3942 = vmatpush1.msra.mxu0 %v3791
        %3943 = vmatprep.subr.mxu0 %v3788
        %3944 = vmatpush1.msra.mxu0 %v3787
        %3945 = vmatprep.subr.mxu0 %v3784
        %3946 = vmatpush1.msra.mxu0 %v3783
        %3947 = vmatprep.subr.mxu0 %v3780
        %3948 = vmatpush1.msra.mxu0 %v3779
        %3949 = vmatprep.subr.mxu0 %v3776
        %3950 = vmatpush1.msra.mxu0 %v3775
        %3951 = vmatprep.subr.mxu0 %v3772
        %3952 = vmatpush1.msra.mxu0 %v3771
        %3953 = vmatprep.subr.mxu0 %v3768
        %3954 = vmatpush1.msra.mxu0 %v3767
        %3955 = vmatprep.subr.mxu0 %v3764
        %3956 = vmatpush1.msra.mxu0 %v3763
        %3957 = vmatprep.subr.mxu0 %v3760
        %3958 = vmatpush1.msra.mxu0 %v3759
        %3959 = vmatprep.subr.mxu0 %v3756
        %3960 = vmatpush1.msra.mxu0 %v3755
        %3961 = vmatprep.subr.mxu0 %v3752
        %3962 = vmatpush1.msra.mxu0 %v3751
        %3963 = vmatprep.subr.mxu0 %v3748
        %3964 = vmatpush1.msra.mxu0 %v3747
        %3965 = vmatprep.subr.mxu0 %v3744
        %3966 = vmatpush1.msra.mxu0 %v3743
        %3967 = vmatprep.subr.mxu0 %v3868
        %3968 = vmatpush2.msra.mxu0 %v3867
        %3969 = vmatprep.subr.mxu0 %v3864
        %3970 = vmatpush2.msra.mxu0 %v3863
        %3971 = vmatprep.subr.mxu0 %v3860
        %3972 = vmatpush2.msra.mxu0 %v3859
        %3973 = vmatprep.subr.mxu0 %v3856
        %3974 = vmatpush2.msra.mxu0 %v3855
        %3975 = vmatprep.subr.mxu0 %v3852
        %3976 = vmatpush2.msra.mxu0 %v3851
        %3977 = vmatprep.subr.mxu0 %v3848
        %3978 = vmatpush2.msra.mxu0 %v3847
        %3979 = vmatprep.subr.mxu0 %v3844
        %3980 = vmatpush2.msra.mxu0 %v3843
        %3981 = vmatprep.subr.mxu0 %v3840
        %3982 = vmatpush2.msra.mxu0 %v3839
        %3983 = vmatprep.subr.mxu0 %v3836
        %3984 = vmatpush2.msra.mxu0 %v3835
        %3985 = vmatprep.subr.mxu0 %v3832
        %3986 = vmatpush2.msra.mxu0 %v3831
        %3987 = vmatprep.subr.mxu0 %v3828
        %3988 = vmatpush2.msra.mxu0 %v3827
        %3989 = vmatprep.subr.mxu0 %v3824
        %3990 = vmatpush2.msra.mxu0 %v3823
        %3991 = vmatprep.subr.mxu0 %v3820
        %3992 = vmatpush2.msra.mxu0 %v3819
        %3993 = vmatprep.subr.mxu0 %v3816
        %3994 = vmatpush2.msra.mxu0 %v3815
        %3995 = vmatprep.subr.mxu0 %v3812
        %3996 = vmatpush2.msra.mxu0 %v3811
        %3997 = vmatprep.subr.mxu0 %v3808
        %3998 = vmatpush2.msra.mxu0 %v3807
        %3999 = vmatprep.mubr.f32.mxu0 %v3713
        %4000 = vmatmul.mubr.f32.gmra.mxu0 %v3725
        %v4001 = vpop.f32.mrf.mxu0
        %v4002 = vadd.f32 0.0, %v4001
        %v4003 = vpop.f32.mrf.mxu0
        %v4004 = vadd.f32 0.0, %v4003
        %4005 = vmatprep.mubr.f32.mxu0 %v3714
        %4006 = vmatmul.mubr.f32.gmra.mxu0 %v3722
        %v4007 = vpop.f32.mrf.mxu0
        %v4008 = vadd.f32 0.0, %v4007
        %v4009 = vpop.f32.mrf.mxu0
        %v4010 = vadd.f32 0.0, %v4009
        %4011 = vdwg.mxu0
        %4012 = vmatprep.subr.mxu0 %v3932
        %4013 = vmatpush1.msra.mxu0 %v3931
        %4014 = vmatprep.subr.mxu0 %v3928
        %4015 = vmatpush1.msra.mxu0 %v3927
        %4016 = vmatprep.subr.mxu0 %v3924
        %4017 = vmatpush1.msra.mxu0 %v3923
        %4018 = vmatprep.subr.mxu0 %v3920
        %4019 = vmatpush1.msra.mxu0 %v3919
        %4020 = vmatprep.subr.mxu0 %v3916
        %4021 = vmatpush1.msra.mxu0 %v3915
        %4022 = vmatprep.subr.mxu0 %v3912
        %4023 = vmatpush1.msra.mxu0 %v3911
        %4024 = vmatprep.subr.mxu0 %v3908
        %4025 = vmatpush1.msra.mxu0 %v3907
        %4026 = vmatprep.subr.mxu0 %v3904
        %4027 = vmatpush1.msra.mxu0 %v3903
        %4028 = vmatprep.subr.mxu0 %v3900
        %4029 = vmatpush1.msra.mxu0 %v3899
        %4030 = vmatprep.subr.mxu0 %v3896
        %4031 = vmatpush1.msra.mxu0 %v3895
        %4032 = vmatprep.subr.mxu0 %v3892
        %4033 = vmatpush1.msra.mxu0 %v3891
        %4034 = vmatprep.subr.mxu0 %v3888
        %4035 = vmatpush1.msra.mxu0 %v3887
        %4036 = vmatprep.subr.mxu0 %v3884
        %4037 = vmatpush1.msra.mxu0 %v3883
        %4038 = vmatprep.subr.mxu0 %v3880
        %4039 = vmatpush1.msra.mxu0 %v3879
        %4040 = vmatprep.subr.mxu0 %v3876
        %4041 = vmatpush1.msra.mxu0 %v3875
        %4042 = vmatprep.subr.mxu0 %v3872
        %4043 = vmatpush1.msra.mxu0 %v3871
        %4044 = vmatprep.subr.mxu0 0.0
        %4045 = vmatpush2.msra.mxu0 0.0
        %4046 = vmatprep.subr.mxu0 0.0
        %4047 = vmatpush2.msra.mxu0 0.0
        %4048 = vmatprep.subr.mxu0 0.0
        %4049 = vmatpush2.msra.mxu0 0.0
        %4050 = vmatprep.subr.mxu0 0.0
        %4051 = vmatpush2.msra.mxu0 0.0
        %4052 = vmatprep.subr.mxu0 0.0
        %4053 = vmatpush2.msra.mxu0 0.0
        %4054 = vmatprep.subr.mxu0 0.0
        %4055 = vmatpush2.msra.mxu0 0.0
        %4056 = vmatprep.subr.mxu0 0.0
        %4057 = vmatpush2.msra.mxu0 0.0
        %4058 = vmatprep.subr.mxu0 0.0
        %4059 = vmatpush2.msra.mxu0 0.0
        %4060 = vmatprep.subr.mxu0 0.0
        %4061 = vmatpush2.msra.mxu0 0.0
        %4062 = vmatprep.subr.mxu0 0.0
        %4063 = vmatpush2.msra.mxu0 0.0
        %4064 = vmatprep.subr.mxu0 0.0
        %4065 = vmatpush2.msra.mxu0 0.0
        %4066 = vmatprep.subr.mxu0 0.0
        %4067 = vmatpush2.msra.mxu0 0.0
        %4068 = vmatprep.subr.mxu0 0.0
        %4069 = vmatpush2.msra.mxu0 0.0
        %4070 = vmatprep.subr.mxu0 0.0
        %4071 = vmatpush2.msra.mxu0 0.0
        %4072 = vmatprep.subr.mxu0 0.0
        %4073 = vmatpush2.msra.mxu0 0.0
        %4074 = vmatprep.subr.mxu0 0.0
        %4075 = vmatpush2.msra.mxu0 0.0
        %4076 = vmatprep.mubr.f32.mxu0 0.0
        %4077 = vmatmul.mubr.f32.gmra.mxu0 %v3728
        %v4078 = vpop.f32.mrf.mxu0
        %v4079 = vadd.f32 %v4002, %v4078
        %v4080 = vpop.f32.mrf.mxu0
        %v4081 = vadd.f32 %v4004, %v4080
        %4082 = vmatprep.mubr.f32.mxu0 0.0
        %4083 = vmatmul.mubr.f32.gmra.mxu0 %v3731
        %v4084 = vpop.f32.mrf.mxu0
        %v4085 = vadd.f32 %v4008, %v4084
        %v4086 = vpop.f32.mrf.mxu0
        %v4087 = vadd.f32 %v4010, %v4086
        %4088 = vdwg.mxu0
        %4089 = vmatprep.subr.mxu0 %v3806
        %4090 = vmatpush1.msra.mxu0 %v3805
        %4091 = vmatprep.subr.mxu0 %v3802
        %4092 = vmatpush1.msra.mxu0 %v3801
        %4093 = vmatprep.subr.mxu0 %v3798
        %4094 = vmatpush1.msra.mxu0 %v3797
        %4095 = vmatprep.subr.mxu0 %v3794
        %4096 = vmatpush1.msra.mxu0 %v3793
        %4097 = vmatprep.subr.mxu0 %v3790
        %4098 = vmatpush1.msra.mxu0 %v3789
        %4099 = vmatprep.subr.mxu0 %v3786
        %4100 = vmatpush1.msra.mxu0 %v3785
        %4101 = vmatprep.subr.mxu0 %v3782
        %4102 = vmatpush1.msra.mxu0 %v3781
        %4103 = vmatprep.subr.mxu0 %v3778
        %4104 = vmatpush1.msra.mxu0 %v3777
        %4105 = vmatprep.subr.mxu0 %v3774
        %4106 = vmatpush1.msra.mxu0 %v3773
        %4107 = vmatprep.subr.mxu0 %v3770
        %4108 = vmatpush1.msra.mxu0 %v3769
        %4109 = vmatprep.subr.mxu0 %v3766
        %4110 = vmatpush1.msra.mxu0 %v3765
        %4111 = vmatprep.subr.mxu0 %v3762
        %4112 = vmatpush1.msra.mxu0 %v3761
        %4113 = vmatprep.subr.mxu0 %v3758
        %4114 = vmatpush1.msra.mxu0 %v3757
        %4115 = vmatprep.subr.mxu0 %v3754
        %4116 = vmatpush1.msra.mxu0 %v3753
        %4117 = vmatprep.subr.mxu0 %v3750
        %4118 = vmatpush1.msra.mxu0 %v3749
        %4119 = vmatprep.subr.mxu0 %v3746
        %4120 = vmatpush1.msra.mxu0 %v3745
        %4121 = vmatprep.subr.mxu0 %v3870
        %4122 = vmatpush2.msra.mxu0 %v3869
        %4123 = vmatprep.subr.mxu0 %v3866
        %4124 = vmatpush2.msra.mxu0 %v3865
        %4125 = vmatprep.subr.mxu0 %v3862
        %4126 = vmatpush2.msra.mxu0 %v3861
        %4127 = vmatprep.subr.mxu0 %v3858
        %4128 = vmatpush2.msra.mxu0 %v3857
        %4129 = vmatprep.subr.mxu0 %v3854
        %4130 = vmatpush2.msra.mxu0 %v3853
        %4131 = vmatprep.subr.mxu0 %v3850
        %4132 = vmatpush2.msra.mxu0 %v3849
        %4133 = vmatprep.subr.mxu0 %v3846
        %4134 = vmatpush2.msra.mxu0 %v3845
        %4135 = vmatprep.subr.mxu0 %v3842
        %4136 = vmatpush2.msra.mxu0 %v3841
        %4137 = vmatprep.subr.mxu0 %v3838
        %4138 = vmatpush2.msra.mxu0 %v3837
        %4139 = vmatprep.subr.mxu0 %v3834
        %4140 = vmatpush2.msra.mxu0 %v3833
        %4141 = vmatprep.subr.mxu0 %v3830
        %4142 = vmatpush2.msra.mxu0 %v3829
        %4143 = vmatprep.subr.mxu0 %v3826
        %4144 = vmatpush2.msra.mxu0 %v3825
        %4145 = vmatprep.subr.mxu0 %v3822
        %4146 = vmatpush2.msra.mxu0 %v3821
        %4147 = vmatprep.subr.mxu0 %v3818
        %4148 = vmatpush2.msra.mxu0 %v3817
        %4149 = vmatprep.subr.mxu0 %v3814
        %4150 = vmatpush2.msra.mxu0 %v3813
        %4151 = vmatprep.subr.mxu0 %v3810
        %4152 = vmatpush2.msra.mxu0 %v3809
        %4153 = vmatprep.mubr.f32.mxu0 %v3713
        %4154 = vmatmul.mubr.f32.gmra.mxu0 %v3725
        %v4155 = vpop.f32.mrf.mxu0
        %v4156 = vadd.f32 0.0, %v4155
        %v4157 = vpop.f32.mrf.mxu0
        %v4158 = vadd.f32 0.0, %v4157
        %4159 = vmatprep.mubr.f32.mxu0 %v3714
        %4160 = vmatmul.mubr.f32.gmra.mxu0 %v3722
        %v4161 = vpop.f32.mrf.mxu0
        %v4162 = vadd.f32 0.0, %v4161
        %v4163 = vpop.f32.mrf.mxu0
        %v4164 = vadd.f32 0.0, %v4163
        %4165 = vdwg.mxu0
        %4166 = vmatprep.subr.mxu0 %v3934
        %4167 = vmatpush1.msra.mxu0 %v3933
        %4168 = vmatprep.subr.mxu0 %v3930
        %4169 = vmatpush1.msra.mxu0 %v3929
        %4170 = vmatprep.subr.mxu0 %v3926
        %4171 = vmatpush1.msra.mxu0 %v3925
        %4172 = vmatprep.subr.mxu0 %v3922
        %4173 = vmatpush1.msra.mxu0 %v3921
        %4174 = vmatprep.subr.mxu0 %v3918
        %4175 = vmatpush1.msra.mxu0 %v3917
        %4176 = vmatprep.subr.mxu0 %v3914
        %4177 = vmatpush1.msra.mxu0 %v3913
        %4178 = vmatprep.subr.mxu0 %v3910
        %4179 = vmatpush1.msra.mxu0 %v3909
        %4180 = vmatprep.subr.mxu0 %v3906
        %4181 = vmatpush1.msra.mxu0 %v3905
        %4182 = vmatprep.subr.mxu0 %v3902
        %4183 = vmatpush1.msra.mxu0 %v3901
        %4184 = vmatprep.subr.mxu0 %v3898
        %4185 = vmatpush1.msra.mxu0 %v3897
        %4186 = vmatprep.subr.mxu0 %v3894
        %4187 = vmatpush1.msra.mxu0 %v3893
        %4188 = vmatprep.subr.mxu0 %v3890
        %4189 = vmatpush1.msra.mxu0 %v3889
        %4190 = vmatprep.subr.mxu0 %v3886
        %4191 = vmatpush1.msra.mxu0 %v3885
        %4192 = vmatprep.subr.mxu0 %v3882
        %4193 = vmatpush1.msra.mxu0 %v3881
        %4194 = vmatprep.subr.mxu0 %v3878
        %4195 = vmatpush1.msra.mxu0 %v3877
        %4196 = vmatprep.subr.mxu0 %v3874
        %4197 = vmatpush1.msra.mxu0 %v3873
        %4198 = vmatprep.subr.mxu0 0.0
        %4199 = vmatpush2.msra.mxu0 0.0
        %4200 = vmatprep.subr.mxu0 0.0
        %4201 = vmatpush2.msra.mxu0 0.0
        %4202 = vmatprep.subr.mxu0 0.0
        %4203 = vmatpush2.msra.mxu0 0.0
        %4204 = vmatprep.subr.mxu0 0.0
        %4205 = vmatpush2.msra.mxu0 0.0
        %4206 = vmatprep.subr.mxu0 0.0
        %4207 = vmatpush2.msra.mxu0 0.0
        %4208 = vmatprep.subr.mxu0 0.0
        %4209 = vmatpush2.msra.mxu0 0.0
        %4210 = vmatprep.subr.mxu0 0.0
        %4211 = vmatpush2.msra.mxu0 0.0
        %4212 = vmatprep.subr.mxu0 0.0
        %4213 = vmatpush2.msra.mxu0 0.0
        %4214 = vmatprep.subr.mxu0 0.0
        %4215 = vmatpush2.msra.mxu0 0.0
        %4216 = vmatprep.subr.mxu0 0.0
        %4217 = vmatpush2.msra.mxu0 0.0
        %4218 = vmatprep.subr.mxu0 0.0
        %4219 = vmatpush2.msra.mxu0 0.0
        %4220 = vmatprep.subr.mxu0 0.0
        %4221 = vmatpush2.msra.mxu0 0.0
        %4222 = vmatprep.subr.mxu0 0.0
        %4223 = vmatpush2.msra.mxu0 0.0
        %4224 = vmatprep.subr.mxu0 0.0
        %4225 = vmatpush2.msra.mxu0 0.0
        %4226 = vmatprep.subr.mxu0 0.0
        %4227 = vmatpush2.msra.mxu0 0.0
        %4228 = vmatprep.subr.mxu0 0.0
        %4229 = vmatpush2.msra.mxu0 0.0
        %4230 = vmatprep.mubr.f32.mxu0 0.0
        %4231 = vmatmul.mubr.f32.gmra.mxu0 %v3728
        %v4232 = vpop.f32.mrf.mxu0
        %v4233 = vadd.f32 %v4156, %v4232
        %v4234 = vpop.f32.mrf.mxu0
        %v4235 = vadd.f32 %v4158, %v4234
        %4236 = vmatprep.mubr.f32.mxu0 0.0
        %4237 = vmatmul.mubr.f32.gmra.mxu0 %v3731
        %v4238 = vpop.f32.mrf.mxu0
        %v4239 = vadd.f32 %v4162, %v4238
        %v4240 = vpop.f32.mrf.mxu0
        %v4241 = vadd.f32 %v4164, %v4240
        %4242 = vdwg.mxu0
        %v4243 = vadd.f32 %v3735, %v4079
        %v4244 = vadd.f32 %v3736, %v4081
        %v4245 = vadd.f32 %v3737, %v4233
        %v4246 = vadd.f32 %v3738, %v4235
        %v4247 = vadd.f32 %v3739, %v4085
        %v4248 = vadd.f32 %v3740, %v4087
        %v4249 = vadd.f32 %v3741, %v4239
        %v4250 = vadd.f32 %v3742, %v4241
        %v4251 = vmul.f32 %v1391, %v3697
        %v4252 = vmul.f32 %v1392, %v3698
        %v4253 = vadd.f32 %v4243, %v4251
        %v4254 = vadd.f32 %v4247, %v4252
        %v4255 = vmul.f32 %v4253, 0.5
        %v4256 = vmul.f32 %v4254, 0.5
        %v4257 = vtanh.pop %v4255
        %v4258 = vtanh.pop %v4256
        %v4259 = vmul.f32 %v4257, 0.5
        %v4260 = vmul.f32 %v4258, 0.5
        %v4261 = vadd.f32 %v4259, 0.5
        %v4262 = vadd.f32 %v4260, 0.5
        %v4263 = vmul.f32 %v1393, %v3697
        %v4264 = vmul.f32 %v1394, %v3698
        %v4265 = vadd.f32 %v4244, %v4263
        %v4266 = vadd.f32 %v4248, %v4264
        %v4267 = vmul.f32 %v4265, 0.5
        %v4268 = vmul.f32 %v4266, 0.5
        %v4269 = vtanh.pop %v4267
        %v4270 = vtanh.pop %v4268
        %v4271 = vmul.f32 %v4269, 0.5
        %v4272 = vmul.f32 %v4270, 0.5
        %v4273 = vadd.f32 %v4271, 0.5
        %v4274 = vadd.f32 %v4272, 0.5
        %v4275 = vmul.f32 %v4273, %v3697
        %v4276 = vmul.f32 %v4274, %v3698
        %v4277 = vtanh.pop %v4245
        %v4278 = vtanh.pop %v4249
        %v4279 = vmul.f32 %v4261, %v4277
        %v4280 = vmul.f32 %v4262, %v4278
        %v4281 = vadd.f32 %v4275, %v4279
        %v4282 = vadd.f32 %v4276, %v4280
        %v4283 = vmul.f32 %v1395, %v4281
        %v4284 = vmul.f32 %v1396, %v4282
        %v4285 = vadd.f32 %v4246, %v4283
        %v4286 = vadd.f32 %v4250, %v4284
        %v4287 = vmul.f32 %v4285, 0.5
        %v4288 = vmul.f32 %v4286, 0.5
        %v4289 = vtanh.pop %v4287
        %v4290 = vtanh.pop %v4288
        %v4291 = vmul.f32 %v4289, 0.5
        %v4292 = vmul.f32 %v4290, 0.5
        %v4293 = vadd.f32 %v4291, 0.5
        %v4294 = vadd.f32 %v4292, 0.5
        %v4295 = vtanh.pop %v4281
        %v4296 = vtanh.pop %v4282
        %v4297 = vmul.f32 %v4293, %v4295
        %v4298 = vmul.f32 %v4294, %v4296
        %s4299 = scalar_lea.vmem %s301, 64 [#allocation8]
        %4300 = vst [vmem:[%s4299] sm:$0xff] %v4297
        %4301 = vst [vmem:[%s4299 + $0x8] sm:$0xff] %v4298
        %v4304 = vrot.slane %v4297, 7
        %v4305 = vrot.slane %v4298, 7
        %v4306 = vsel %vm339, %v4304, %v4305
        %v4309 = vsel %vm339, 0.0, %v4304
        %v4310 = vrot.slane %v4297, 1
        %v4311 = vrot.slane %v4298, 1
        %v4312 = vsel %vm629, %v4310, %v4311
        %v4315 = vsel %vm629, %v4311, 0.0
        %s4316 = smul.u32 10, 4
        %s4317 = smul.addr %s4316, 8
        %s4318 = scalar_lea.vmem [#allocation2], %s4317
        %v4319 = vld [vmem:[%s4318] sm:$0xff]
        %v4320 = vld [vmem:[%s4318 + $0x8] sm:$0xff]
        %v4321 = vld [vmem:[%s4318 + $0x10] sm:$0xff]
        %v4322 = vld [vmem:[%s4318 + $0x18] sm:$0xff]
        %v4323 = vld [vmem:[%s4318 + $0x20] sm:$0xff]
        %v4324 = vld [vmem:[%s4318 + $0x28] sm:$0xff]
        %v4325 = vld [vmem:[%s4318 + $0x30] sm:$0xff]
        %v4326 = vld [vmem:[%s4318 + $0x38] sm:$0xff]
        %v4327 = vld [vmem:[#allocation6] sm:$0xff]
        %v4328 = vld [vmem:[#allocation6 + $0x8] sm:$0xff]
        %v4329 = vld [vmem:[#allocation6 + $0x10] sm:$0xff]
        %v4330 = vld [vmem:[#allocation6 + $0x18] sm:$0xff]
        %v4331 = vld [vmem:[#allocation6 + $0x20] sm:$0xff]
        %v4332 = vld [vmem:[#allocation6 + $0x28] sm:$0xff]
        %v4333 = vld [vmem:[#allocation6 + $0x30] sm:$0xff]
        %v4334 = vld [vmem:[#allocation6 + $0x38] sm:$0xff]
        %v4335 = vld [vmem:[#allocation6 + $0x40] sm:$0xff]
        %v4336 = vld [vmem:[#allocation6 + $0x48] sm:$0xff]
        %v4337 = vld [vmem:[#allocation6 + $0x50] sm:$0xff]
        %v4338 = vld [vmem:[#allocation6 + $0x58] sm:$0xff]
        %v4339 = vld [vmem:[#allocation6 + $0x60] sm:$0xff]
        %v4340 = vld [vmem:[#allocation6 + $0x68] sm:$0xff]
        %v4341 = vld [vmem:[#allocation6 + $0x70] sm:$0xff]
        %v4342 = vld [vmem:[#allocation6 + $0x78] sm:$0xff]
        %v4343 = vld [vmem:[#allocation6 + $0x80] sm:$0xff]
        %v4344 = vld [vmem:[#allocation6 + $0x88] sm:$0xff]
        %v4345 = vld [vmem:[#allocation6 + $0x90] sm:$0xff]
        %v4346 = vld [vmem:[#allocation6 + $0x98] sm:$0xff]
        %v4347 = vld [vmem:[#allocation6 + $0xa0] sm:$0xff]
        %v4348 = vld [vmem:[#allocation6 + $0xa8] sm:$0xff]
        %v4349 = vld [vmem:[#allocation6 + $0xb0] sm:$0xff]
        %v4350 = vld [vmem:[#allocation6 + $0xb8] sm:$0xff]
        %v4351 = vld [vmem:[#allocation6 + $0xc0] sm:$0xff]
        %v4352 = vld [vmem:[#allocation6 + $0xc8] sm:$0xff]
        %v4353 = vld [vmem:[#allocation6 + $0xd0] sm:$0xff]
        %v4354 = vld [vmem:[#allocation6 + $0xd8] sm:$0xff]
        %v4355 = vld [vmem:[#allocation6 + $0xe0] sm:$0xff]
        %v4356 = vld [vmem:[#allocation6 + $0xe8] sm:$0xff]
        %v4357 = vld [vmem:[#allocation6 + $0xf0] sm:$0xff]
        %v4358 = vld [vmem:[#allocation6 + $0xf8] sm:$0xff]
        %v4359 = vld [vmem:[#allocation6 + $0x100] sm:$0xff]
        %v4360 = vld [vmem:[#allocation6 + $0x108] sm:$0xff]
        %v4361 = vld [vmem:[#allocation6 + $0x110] sm:$0xff]
        %v4362 = vld [vmem:[#allocation6 + $0x118] sm:$0xff]
        %v4363 = vld [vmem:[#allocation6 + $0x120] sm:$0xff]
        %v4364 = vld [vmem:[#allocation6 + $0x128] sm:$0xff]
        %v4365 = vld [vmem:[#allocation6 + $0x130] sm:$0xff]
        %v4366 = vld [vmem:[#allocation6 + $0x138] sm:$0xff]
        %v4367 = vld [vmem:[#allocation6 + $0x140] sm:$0xff]
        %v4368 = vld [vmem:[#allocation6 + $0x148] sm:$0xff]
        %v4369 = vld [vmem:[#allocation6 + $0x150] sm:$0xff]
        %v4370 = vld [vmem:[#allocation6 + $0x158] sm:$0xff]
        %v4371 = vld [vmem:[#allocation6 + $0x160] sm:$0xff]
        %v4372 = vld [vmem:[#allocation6 + $0x168] sm:$0xff]
        %v4373 = vld [vmem:[#allocation6 + $0x170] sm:$0xff]
        %v4374 = vld [vmem:[#allocation6 + $0x178] sm:$0xff]
        %v4375 = vld [vmem:[#allocation6 + $0x180] sm:$0xff]
        %v4376 = vld [vmem:[#allocation6 + $0x188] sm:$0xff]
        %v4377 = vld [vmem:[#allocation6 + $0x190] sm:$0xff]
        %v4378 = vld [vmem:[#allocation6 + $0x198] sm:$0xff]
        %v4379 = vld [vmem:[#allocation6 + $0x1a0] sm:$0xff]
        %v4380 = vld [vmem:[#allocation6 + $0x1a8] sm:$0xff]
        %v4381 = vld [vmem:[#allocation6 + $0x1b0] sm:$0xff]
        %v4382 = vld [vmem:[#allocation6 + $0x1b8] sm:$0xff]
        %v4383 = vld [vmem:[#allocation6 + $0x1c0] sm:$0xff]
        %v4384 = vld [vmem:[#allocation6 + $0x1c8] sm:$0xff]
        %v4385 = vld [vmem:[#allocation6 + $0x1d0] sm:$0xff]
        %v4386 = vld [vmem:[#allocation6 + $0x1d8] sm:$0xff]
        %v4387 = vld [vmem:[#allocation6 + $0x1e0] sm:$0xff]
        %v4388 = vld [vmem:[#allocation6 + $0x1e8] sm:$0xff]
        %v4389 = vld [vmem:[#allocation6 + $0x1f0] sm:$0xff]
        %v4390 = vld [vmem:[#allocation6 + $0x1f8] sm:$0xff]
        %v4391 = vld [vmem:[#allocation6 + $0x200] sm:$0xff]
        %v4392 = vld [vmem:[#allocation6 + $0x208] sm:$0xff]
        %v4393 = vld [vmem:[#allocation6 + $0x210] sm:$0xff]
        %v4394 = vld [vmem:[#allocation6 + $0x218] sm:$0xff]
        %v4395 = vld [vmem:[#allocation6 + $0x220] sm:$0xff]
        %v4396 = vld [vmem:[#allocation6 + $0x228] sm:$0xff]
        %v4397 = vld [vmem:[#allocation6 + $0x230] sm:$0xff]
        %v4398 = vld [vmem:[#allocation6 + $0x238] sm:$0xff]
        %v4399 = vld [vmem:[#allocation6 + $0x240] sm:$0xff]
        %v4400 = vld [vmem:[#allocation6 + $0x248] sm:$0xff]
        %v4401 = vld [vmem:[#allocation6 + $0x250] sm:$0xff]
        %v4402 = vld [vmem:[#allocation6 + $0x258] sm:$0xff]
        %v4403 = vld [vmem:[#allocation6 + $0x260] sm:$0xff]
        %v4404 = vld [vmem:[#allocation6 + $0x268] sm:$0xff]
        %v4405 = vld [vmem:[#allocation6 + $0x270] sm:$0xff]
        %v4406 = vld [vmem:[#allocation6 + $0x278] sm:$0xff]
        %v4407 = vld [vmem:[#allocation6 + $0x280] sm:$0xff]
        %v4408 = vld [vmem:[#allocation6 + $0x288] sm:$0xff]
        %v4409 = vld [vmem:[#allocation6 + $0x290] sm:$0xff]
        %v4410 = vld [vmem:[#allocation6 + $0x298] sm:$0xff]
        %v4411 = vld [vmem:[#allocation6 + $0x2a0] sm:$0xff]
        %v4412 = vld [vmem:[#allocation6 + $0x2a8] sm:$0xff]
        %v4413 = vld [vmem:[#allocation6 + $0x2b0] sm:$0xff]
        %v4414 = vld [vmem:[#allocation6 + $0x2b8] sm:$0xff]
        %v4415 = vld [vmem:[#allocation6 + $0x2c0] sm:$0xff]
        %v4416 = vld [vmem:[#allocation6 + $0x2c8] sm:$0xff]
        %v4417 = vld [vmem:[#allocation6 + $0x2d0] sm:$0xff]
        %v4418 = vld [vmem:[#allocation6 + $0x2d8] sm:$0xff]
        %v4419 = vld [vmem:[#allocation6 + $0x2e0] sm:$0xff]
        %v4420 = vld [vmem:[#allocation6 + $0x2e8] sm:$0xff]
        %v4421 = vld [vmem:[#allocation6 + $0x2f0] sm:$0xff]
        %v4422 = vld [vmem:[#allocation6 + $0x2f8] sm:$0xff]
        %v4423 = vld [vmem:[#allocation6 + $0x300] sm:$0xff]
        %v4424 = vld [vmem:[#allocation6 + $0x308] sm:$0xff]
        %v4425 = vld [vmem:[#allocation6 + $0x310] sm:$0xff]
        %v4426 = vld [vmem:[#allocation6 + $0x318] sm:$0xff]
        %v4427 = vld [vmem:[#allocation6 + $0x320] sm:$0xff]
        %v4428 = vld [vmem:[#allocation6 + $0x328] sm:$0xff]
        %v4429 = vld [vmem:[#allocation6 + $0x330] sm:$0xff]
        %v4430 = vld [vmem:[#allocation6 + $0x338] sm:$0xff]
        %v4431 = vld [vmem:[#allocation6 + $0x340] sm:$0xff]
        %v4432 = vld [vmem:[#allocation6 + $0x348] sm:$0xff]
        %v4433 = vld [vmem:[#allocation6 + $0x350] sm:$0xff]
        %v4434 = vld [vmem:[#allocation6 + $0x358] sm:$0xff]
        %v4435 = vld [vmem:[#allocation6 + $0x360] sm:$0xff]
        %v4436 = vld [vmem:[#allocation6 + $0x368] sm:$0xff]
        %v4437 = vld [vmem:[#allocation6 + $0x370] sm:$0xff]
        %v4438 = vld [vmem:[#allocation6 + $0x378] sm:$0xff]
        %v4439 = vld [vmem:[#allocation6 + $0x380] sm:$0xff]
        %v4440 = vld [vmem:[#allocation6 + $0x388] sm:$0xff]
        %v4441 = vld [vmem:[#allocation6 + $0x390] sm:$0xff]
        %v4442 = vld [vmem:[#allocation6 + $0x398] sm:$0xff]
        %v4443 = vld [vmem:[#allocation6 + $0x3a0] sm:$0xff]
        %v4444 = vld [vmem:[#allocation6 + $0x3a8] sm:$0xff]
        %v4445 = vld [vmem:[#allocation6 + $0x3b0] sm:$0xff]
        %v4446 = vld [vmem:[#allocation6 + $0x3b8] sm:$0xff]
        %v4447 = vld [vmem:[#allocation6 + $0x3c0] sm:$0xff]
        %v4448 = vld [vmem:[#allocation6 + $0x3c8] sm:$0xff]
        %v4449 = vld [vmem:[#allocation6 + $0x3d0] sm:$0xff]
        %v4450 = vld [vmem:[#allocation6 + $0x3d8] sm:$0xff]
        %v4451 = vld [vmem:[#allocation6 + $0x3e0] sm:$0xff]
        %v4452 = vld [vmem:[#allocation6 + $0x3e8] sm:$0xff]
        %v4453 = vld [vmem:[#allocation6 + $0x3f0] sm:$0xff]
        %v4454 = vld [vmem:[#allocation6 + $0x3f8] sm:$0xff]
        %v4455 = vld [vmem:[#allocation6 + $0x400] sm:$0xff]
        %v4456 = vld [vmem:[#allocation6 + $0x408] sm:$0xff]
        %v4457 = vld [vmem:[#allocation6 + $0x410] sm:$0xff]
        %v4458 = vld [vmem:[#allocation6 + $0x418] sm:$0xff]
        %v4459 = vld [vmem:[#allocation6 + $0x420] sm:$0xff]
        %v4460 = vld [vmem:[#allocation6 + $0x428] sm:$0xff]
        %v4461 = vld [vmem:[#allocation6 + $0x430] sm:$0xff]
        %v4462 = vld [vmem:[#allocation6 + $0x438] sm:$0xff]
        %v4463 = vld [vmem:[#allocation6 + $0x440] sm:$0xff]
        %v4464 = vld [vmem:[#allocation6 + $0x448] sm:$0xff]
        %v4465 = vld [vmem:[#allocation6 + $0x450] sm:$0xff]
        %v4466 = vld [vmem:[#allocation6 + $0x458] sm:$0xff]
        %v4467 = vld [vmem:[#allocation6 + $0x460] sm:$0xff]
        %v4468 = vld [vmem:[#allocation6 + $0x468] sm:$0xff]
        %v4469 = vld [vmem:[#allocation6 + $0x470] sm:$0xff]
        %v4470 = vld [vmem:[#allocation6 + $0x478] sm:$0xff]
        %v4471 = vld [vmem:[#allocation6 + $0x480] sm:$0xff]
        %v4472 = vld [vmem:[#allocation6 + $0x488] sm:$0xff]
        %v4473 = vld [vmem:[#allocation6 + $0x490] sm:$0xff]
        %v4474 = vld [vmem:[#allocation6 + $0x498] sm:$0xff]
        %v4475 = vld [vmem:[#allocation6 + $0x4a0] sm:$0xff]
        %v4476 = vld [vmem:[#allocation6 + $0x4a8] sm:$0xff]
        %v4477 = vld [vmem:[#allocation6 + $0x4b0] sm:$0xff]
        %v4478 = vld [vmem:[#allocation6 + $0x4b8] sm:$0xff]
        %v4479 = vld [vmem:[#allocation6 + $0x4c0] sm:$0xff]
        %v4480 = vld [vmem:[#allocation6 + $0x4c8] sm:$0xff]
        %v4481 = vld [vmem:[#allocation6 + $0x4d0] sm:$0xff]
        %v4482 = vld [vmem:[#allocation6 + $0x4d8] sm:$0xff]
        %v4483 = vld [vmem:[#allocation6 + $0x4e0] sm:$0xff]
        %v4484 = vld [vmem:[#allocation6 + $0x4e8] sm:$0xff]
        %v4485 = vld [vmem:[#allocation6 + $0x4f0] sm:$0xff]
        %v4486 = vld [vmem:[#allocation6 + $0x4f8] sm:$0xff]
        %v4487 = vld [vmem:[#allocation6 + $0x500] sm:$0xff]
        %v4488 = vld [vmem:[#allocation6 + $0x508] sm:$0xff]
        %v4489 = vld [vmem:[#allocation6 + $0x510] sm:$0xff]
        %v4490 = vld [vmem:[#allocation6 + $0x518] sm:$0xff]
        %v4491 = vld [vmem:[#allocation6 + $0x520] sm:$0xff]
        %v4492 = vld [vmem:[#allocation6 + $0x528] sm:$0xff]
        %v4493 = vld [vmem:[#allocation6 + $0x530] sm:$0xff]
        %v4494 = vld [vmem:[#allocation6 + $0x538] sm:$0xff]
        %v4495 = vld [vmem:[#allocation6 + $0x540] sm:$0xff]
        %v4496 = vld [vmem:[#allocation6 + $0x548] sm:$0xff]
        %v4497 = vld [vmem:[#allocation6 + $0x550] sm:$0xff]
        %v4498 = vld [vmem:[#allocation6 + $0x558] sm:$0xff]
        %v4499 = vld [vmem:[#allocation6 + $0x560] sm:$0xff]
        %v4500 = vld [vmem:[#allocation6 + $0x568] sm:$0xff]
        %v4501 = vld [vmem:[#allocation6 + $0x570] sm:$0xff]
        %v4502 = vld [vmem:[#allocation6 + $0x578] sm:$0xff]
        %v4503 = vld [vmem:[#allocation6 + $0x580] sm:$0xff]
        %v4504 = vld [vmem:[#allocation6 + $0x588] sm:$0xff]
        %v4505 = vld [vmem:[#allocation6 + $0x590] sm:$0xff]
        %v4506 = vld [vmem:[#allocation6 + $0x598] sm:$0xff]
        %v4507 = vld [vmem:[#allocation6 + $0x5a0] sm:$0xff]
        %v4508 = vld [vmem:[#allocation6 + $0x5a8] sm:$0xff]
        %v4509 = vld [vmem:[#allocation6 + $0x5b0] sm:$0xff]
        %v4510 = vld [vmem:[#allocation6 + $0x5b8] sm:$0xff]
        %v4511 = vld [vmem:[#allocation6 + $0x5c0] sm:$0xff]
        %v4512 = vld [vmem:[#allocation6 + $0x5c8] sm:$0xff]
        %v4513 = vld [vmem:[#allocation6 + $0x5d0] sm:$0xff]
        %v4514 = vld [vmem:[#allocation6 + $0x5d8] sm:$0xff]
        %v4515 = vld [vmem:[#allocation6 + $0x5e0] sm:$0xff]
        %v4516 = vld [vmem:[#allocation6 + $0x5e8] sm:$0xff]
        %v4517 = vld [vmem:[#allocation6 + $0x5f0] sm:$0xff]
        %v4518 = vld [vmem:[#allocation6 + $0x5f8] sm:$0xff]
        %4519 = vmatprep.subr.mxu0 %v4388
        %4520 = vmatpush1.msra.mxu0 %v4387
        %4521 = vmatprep.subr.mxu0 %v4384
        %4522 = vmatpush1.msra.mxu0 %v4383
        %4523 = vmatprep.subr.mxu0 %v4380
        %4524 = vmatpush1.msra.mxu0 %v4379
        %4525 = vmatprep.subr.mxu0 %v4376
        %4526 = vmatpush1.msra.mxu0 %v4375
        %4527 = vmatprep.subr.mxu0 %v4372
        %4528 = vmatpush1.msra.mxu0 %v4371
        %4529 = vmatprep.subr.mxu0 %v4368
        %4530 = vmatpush1.msra.mxu0 %v4367
        %4531 = vmatprep.subr.mxu0 %v4364
        %4532 = vmatpush1.msra.mxu0 %v4363
        %4533 = vmatprep.subr.mxu0 %v4360
        %4534 = vmatpush1.msra.mxu0 %v4359
        %4535 = vmatprep.subr.mxu0 %v4356
        %4536 = vmatpush1.msra.mxu0 %v4355
        %4537 = vmatprep.subr.mxu0 %v4352
        %4538 = vmatpush1.msra.mxu0 %v4351
        %4539 = vmatprep.subr.mxu0 %v4348
        %4540 = vmatpush1.msra.mxu0 %v4347
        %4541 = vmatprep.subr.mxu0 %v4344
        %4542 = vmatpush1.msra.mxu0 %v4343
        %4543 = vmatprep.subr.mxu0 %v4340
        %4544 = vmatpush1.msra.mxu0 %v4339
        %4545 = vmatprep.subr.mxu0 %v4336
        %4546 = vmatpush1.msra.mxu0 %v4335
        %4547 = vmatprep.subr.mxu0 %v4332
        %4548 = vmatpush1.msra.mxu0 %v4331
        %4549 = vmatprep.subr.mxu0 %v4328
        %4550 = vmatpush1.msra.mxu0 %v4327
        %4551 = vmatprep.subr.mxu0 %v4452
        %4552 = vmatpush2.msra.mxu0 %v4451
        %4553 = vmatprep.subr.mxu0 %v4448
        %4554 = vmatpush2.msra.mxu0 %v4447
        %4555 = vmatprep.subr.mxu0 %v4444
        %4556 = vmatpush2.msra.mxu0 %v4443
        %4557 = vmatprep.subr.mxu0 %v4440
        %4558 = vmatpush2.msra.mxu0 %v4439
        %4559 = vmatprep.subr.mxu0 %v4436
        %4560 = vmatpush2.msra.mxu0 %v4435
        %4561 = vmatprep.subr.mxu0 %v4432
        %4562 = vmatpush2.msra.mxu0 %v4431
        %4563 = vmatprep.subr.mxu0 %v4428
        %4564 = vmatpush2.msra.mxu0 %v4427
        %4565 = vmatprep.subr.mxu0 %v4424
        %4566 = vmatpush2.msra.mxu0 %v4423
        %4567 = vmatprep.subr.mxu0 %v4420
        %4568 = vmatpush2.msra.mxu0 %v4419
        %4569 = vmatprep.subr.mxu0 %v4416
        %4570 = vmatpush2.msra.mxu0 %v4415
        %4571 = vmatprep.subr.mxu0 %v4412
        %4572 = vmatpush2.msra.mxu0 %v4411
        %4573 = vmatprep.subr.mxu0 %v4408
        %4574 = vmatpush2.msra.mxu0 %v4407
        %4575 = vmatprep.subr.mxu0 %v4404
        %4576 = vmatpush2.msra.mxu0 %v4403
        %4577 = vmatprep.subr.mxu0 %v4400
        %4578 = vmatpush2.msra.mxu0 %v4399
        %4579 = vmatprep.subr.mxu0 %v4396
        %4580 = vmatpush2.msra.mxu0 %v4395
        %4581 = vmatprep.subr.mxu0 %v4392
        %4582 = vmatpush2.msra.mxu0 %v4391
        %4583 = vmatprep.mubr.f32.mxu0 %v4297
        %4584 = vmatmul.mubr.f32.gmra.mxu0 %v4309
        %v4585 = vpop.f32.mrf.mxu0
        %v4586 = vadd.f32 0.0, %v4585
        %v4587 = vpop.f32.mrf.mxu0
        %v4588 = vadd.f32 0.0, %v4587
        %4589 = vmatprep.mubr.f32.mxu0 %v4298
        %4590 = vmatmul.mubr.f32.gmra.mxu0 %v4306
        %v4591 = vpop.f32.mrf.mxu0
        %v4592 = vadd.f32 0.0, %v4591
        %v4593 = vpop.f32.mrf.mxu0
        %v4594 = vadd.f32 0.0, %v4593
        %4595 = vdwg.mxu0
        %4596 = vmatprep.subr.mxu0 %v4516
        %4597 = vmatpush1.msra.mxu0 %v4515
        %4598 = vmatprep.subr.mxu0 %v4512
        %4599 = vmatpush1.msra.mxu0 %v4511
        %4600 = vmatprep.subr.mxu0 %v4508
        %4601 = vmatpush1.msra.mxu0 %v4507
        %4602 = vmatprep.subr.mxu0 %v4504
        %4603 = vmatpush1.msra.mxu0 %v4503
        %4604 = vmatprep.subr.mxu0 %v4500
        %4605 = vmatpush1.msra.mxu0 %v4499
        %4606 = vmatprep.subr.mxu0 %v4496
        %4607 = vmatpush1.msra.mxu0 %v4495
        %4608 = vmatprep.subr.mxu0 %v4492
        %4609 = vmatpush1.msra.mxu0 %v4491
        %4610 = vmatprep.subr.mxu0 %v4488
        %4611 = vmatpush1.msra.mxu0 %v4487
        %4612 = vmatprep.subr.mxu0 %v4484
        %4613 = vmatpush1.msra.mxu0 %v4483
        %4614 = vmatprep.subr.mxu0 %v4480
        %4615 = vmatpush1.msra.mxu0 %v4479
        %4616 = vmatprep.subr.mxu0 %v4476
        %4617 = vmatpush1.msra.mxu0 %v4475
        %4618 = vmatprep.subr.mxu0 %v4472
        %4619 = vmatpush1.msra.mxu0 %v4471
        %4620 = vmatprep.subr.mxu0 %v4468
        %4621 = vmatpush1.msra.mxu0 %v4467
        %4622 = vmatprep.subr.mxu0 %v4464
        %4623 = vmatpush1.msra.mxu0 %v4463
        %4624 = vmatprep.subr.mxu0 %v4460
        %4625 = vmatpush1.msra.mxu0 %v4459
        %4626 = vmatprep.subr.mxu0 %v4456
        %4627 = vmatpush1.msra.mxu0 %v4455
        %4628 = vmatprep.subr.mxu0 0.0
        %4629 = vmatpush2.msra.mxu0 0.0
        %4630 = vmatprep.subr.mxu0 0.0
        %4631 = vmatpush2.msra.mxu0 0.0
        %4632 = vmatprep.subr.mxu0 0.0
        %4633 = vmatpush2.msra.mxu0 0.0
        %4634 = vmatprep.subr.mxu0 0.0
        %4635 = vmatpush2.msra.mxu0 0.0
        %4636 = vmatprep.subr.mxu0 0.0
        %4637 = vmatpush2.msra.mxu0 0.0
        %4638 = vmatprep.subr.mxu0 0.0
        %4639 = vmatpush2.msra.mxu0 0.0
        %4640 = vmatprep.subr.mxu0 0.0
        %4641 = vmatpush2.msra.mxu0 0.0
        %4642 = vmatprep.subr.mxu0 0.0
        %4643 = vmatpush2.msra.mxu0 0.0
        %4644 = vmatprep.subr.mxu0 0.0
        %4645 = vmatpush2.msra.mxu0 0.0
        %4646 = vmatprep.subr.mxu0 0.0
        %4647 = vmatpush2.msra.mxu0 0.0
        %4648 = vmatprep.subr.mxu0 0.0
        %4649 = vmatpush2.msra.mxu0 0.0
        %4650 = vmatprep.subr.mxu0 0.0
        %4651 = vmatpush2.msra.mxu0 0.0
        %4652 = vmatprep.subr.mxu0 0.0
        %4653 = vmatpush2.msra.mxu0 0.0
        %4654 = vmatprep.subr.mxu0 0.0
        %4655 = vmatpush2.msra.mxu0 0.0
        %4656 = vmatprep.subr.mxu0 0.0
        %4657 = vmatpush2.msra.mxu0 0.0
        %4658 = vmatprep.subr.mxu0 0.0
        %4659 = vmatpush2.msra.mxu0 0.0
        %4660 = vmatprep.mubr.f32.mxu0 0.0
        %4661 = vmatmul.mubr.f32.gmra.mxu0 %v4312
        %v4662 = vpop.f32.mrf.mxu0
        %v4663 = vadd.f32 %v4586, %v4662
        %v4664 = vpop.f32.mrf.mxu0
        %v4665 = vadd.f32 %v4588, %v4664
        %4666 = vmatprep.mubr.f32.mxu0 0.0
        %4667 = vmatmul.mubr.f32.gmra.mxu0 %v4315
        %v4668 = vpop.f32.mrf.mxu0
        %v4669 = vadd.f32 %v4592, %v4668
        %v4670 = vpop.f32.mrf.mxu0
        %v4671 = vadd.f32 %v4594, %v4670
        %4672 = vdwg.mxu0
        %4673 = vmatprep.subr.mxu0 %v4390
        %4674 = vmatpush1.msra.mxu0 %v4389
        %4675 = vmatprep.subr.mxu0 %v4386
        %4676 = vmatpush1.msra.mxu0 %v4385
        %4677 = vmatprep.subr.mxu0 %v4382
        %4678 = vmatpush1.msra.mxu0 %v4381
        %4679 = vmatprep.subr.mxu0 %v4378
        %4680 = vmatpush1.msra.mxu0 %v4377
        %4681 = vmatprep.subr.mxu0 %v4374
        %4682 = vmatpush1.msra.mxu0 %v4373
        %4683 = vmatprep.subr.mxu0 %v4370
        %4684 = vmatpush1.msra.mxu0 %v4369
        %4685 = vmatprep.subr.mxu0 %v4366
        %4686 = vmatpush1.msra.mxu0 %v4365
        %4687 = vmatprep.subr.mxu0 %v4362
        %4688 = vmatpush1.msra.mxu0 %v4361
        %4689 = vmatprep.subr.mxu0 %v4358
        %4690 = vmatpush1.msra.mxu0 %v4357
        %4691 = vmatprep.subr.mxu0 %v4354
        %4692 = vmatpush1.msra.mxu0 %v4353
        %4693 = vmatprep.subr.mxu0 %v4350
        %4694 = vmatpush1.msra.mxu0 %v4349
        %4695 = vmatprep.subr.mxu0 %v4346
        %4696 = vmatpush1.msra.mxu0 %v4345
        %4697 = vmatprep.subr.mxu0 %v4342
        %4698 = vmatpush1.msra.mxu0 %v4341
        %4699 = vmatprep.subr.mxu0 %v4338
        %4700 = vmatpush1.msra.mxu0 %v4337
        %4701 = vmatprep.subr.mxu0 %v4334
        %4702 = vmatpush1.msra.mxu0 %v4333
        %4703 = vmatprep.subr.mxu0 %v4330
        %4704 = vmatpush1.msra.mxu0 %v4329
        %4705 = vmatprep.subr.mxu0 %v4454
        %4706 = vmatpush2.msra.mxu0 %v4453
        %4707 = vmatprep.subr.mxu0 %v4450
        %4708 = vmatpush2.msra.mxu0 %v4449
        %4709 = vmatprep.subr.mxu0 %v4446
        %4710 = vmatpush2.msra.mxu0 %v4445
        %4711 = vmatprep.subr.mxu0 %v4442
        %4712 = vmatpush2.msra.mxu0 %v4441
        %4713 = vmatprep.subr.mxu0 %v4438
        %4714 = vmatpush2.msra.mxu0 %v4437
        %4715 = vmatprep.subr.mxu0 %v4434
        %4716 = vmatpush2.msra.mxu0 %v4433
        %4717 = vmatprep.subr.mxu0 %v4430
        %4718 = vmatpush2.msra.mxu0 %v4429
        %4719 = vmatprep.subr.mxu0 %v4426
        %4720 = vmatpush2.msra.mxu0 %v4425
        %4721 = vmatprep.subr.mxu0 %v4422
        %4722 = vmatpush2.msra.mxu0 %v4421
        %4723 = vmatprep.subr.mxu0 %v4418
        %4724 = vmatpush2.msra.mxu0 %v4417
        %4725 = vmatprep.subr.mxu0 %v4414
        %4726 = vmatpush2.msra.mxu0 %v4413
        %4727 = vmatprep.subr.mxu0 %v4410
        %4728 = vmatpush2.msra.mxu0 %v4409
        %4729 = vmatprep.subr.mxu0 %v4406
        %4730 = vmatpush2.msra.mxu0 %v4405
        %4731 = vmatprep.subr.mxu0 %v4402
        %4732 = vmatpush2.msra.mxu0 %v4401
        %4733 = vmatprep.subr.mxu0 %v4398
        %4734 = vmatpush2.msra.mxu0 %v4397
        %4735 = vmatprep.subr.mxu0 %v4394
        %4736 = vmatpush2.msra.mxu0 %v4393
        %4737 = vmatprep.mubr.f32.mxu0 %v4297
        %4738 = vmatmul.mubr.f32.gmra.mxu0 %v4309
        %v4739 = vpop.f32.mrf.mxu0
        %v4740 = vadd.f32 0.0, %v4739
        %v4741 = vpop.f32.mrf.mxu0
        %v4742 = vadd.f32 0.0, %v4741
        %4743 = vmatprep.mubr.f32.mxu0 %v4298
        %4744 = vmatmul.mubr.f32.gmra.mxu0 %v4306
        %v4745 = vpop.f32.mrf.mxu0
        %v4746 = vadd.f32 0.0, %v4745
        %v4747 = vpop.f32.mrf.mxu0
        %v4748 = vadd.f32 0.0, %v4747
        %4749 = vdwg.mxu0
        %4750 = vmatprep.subr.mxu0 %v4518
        %4751 = vmatpush1.msra.mxu0 %v4517
        %4752 = vmatprep.subr.mxu0 %v4514
        %4753 = vmatpush1.msra.mxu0 %v4513
        %4754 = vmatprep.subr.mxu0 %v4510
        %4755 = vmatpush1.msra.mxu0 %v4509
        %4756 = vmatprep.subr.mxu0 %v4506
        %4757 = vmatpush1.msra.mxu0 %v4505
        %4758 = vmatprep.subr.mxu0 %v4502
        %4759 = vmatpush1.msra.mxu0 %v4501
        %4760 = vmatprep.subr.mxu0 %v4498
        %4761 = vmatpush1.msra.mxu0 %v4497
        %4762 = vmatprep.subr.mxu0 %v4494
        %4763 = vmatpush1.msra.mxu0 %v4493
        %4764 = vmatprep.subr.mxu0 %v4490
        %4765 = vmatpush1.msra.mxu0 %v4489
        %4766 = vmatprep.subr.mxu0 %v4486
        %4767 = vmatpush1.msra.mxu0 %v4485
        %4768 = vmatprep.subr.mxu0 %v4482
        %4769 = vmatpush1.msra.mxu0 %v4481
        %4770 = vmatprep.subr.mxu0 %v4478
        %4771 = vmatpush1.msra.mxu0 %v4477
        %4772 = vmatprep.subr.mxu0 %v4474
        %4773 = vmatpush1.msra.mxu0 %v4473
        %4774 = vmatprep.subr.mxu0 %v4470
        %4775 = vmatpush1.msra.mxu0 %v4469
        %4776 = vmatprep.subr.mxu0 %v4466
        %4777 = vmatpush1.msra.mxu0 %v4465
        %4778 = vmatprep.subr.mxu0 %v4462
        %4779 = vmatpush1.msra.mxu0 %v4461
        %4780 = vmatprep.subr.mxu0 %v4458
        %4781 = vmatpush1.msra.mxu0 %v4457
        %4782 = vmatprep.subr.mxu0 0.0
        %4783 = vmatpush2.msra.mxu0 0.0
        %4784 = vmatprep.subr.mxu0 0.0
        %4785 = vmatpush2.msra.mxu0 0.0
        %4786 = vmatprep.subr.mxu0 0.0
        %4787 = vmatpush2.msra.mxu0 0.0
        %4788 = vmatprep.subr.mxu0 0.0
        %4789 = vmatpush2.msra.mxu0 0.0
        %4790 = vmatprep.subr.mxu0 0.0
        %4791 = vmatpush2.msra.mxu0 0.0
        %4792 = vmatprep.subr.mxu0 0.0
        %4793 = vmatpush2.msra.mxu0 0.0
        %4794 = vmatprep.subr.mxu0 0.0
        %4795 = vmatpush2.msra.mxu0 0.0
        %4796 = vmatprep.subr.mxu0 0.0
        %4797 = vmatpush2.msra.mxu0 0.0
        %4798 = vmatprep.subr.mxu0 0.0
        %4799 = vmatpush2.msra.mxu0 0.0
        %4800 = vmatprep.subr.mxu0 0.0
        %4801 = vmatpush2.msra.mxu0 0.0
        %4802 = vmatprep.subr.mxu0 0.0
        %4803 = vmatpush2.msra.mxu0 0.0
        %4804 = vmatprep.subr.mxu0 0.0
        %4805 = vmatpush2.msra.mxu0 0.0
        %4806 = vmatprep.subr.mxu0 0.0
        %4807 = vmatpush2.msra.mxu0 0.0
        %4808 = vmatprep.subr.mxu0 0.0
        %4809 = vmatpush2.msra.mxu0 0.0
        %4810 = vmatprep.subr.mxu0 0.0
        %4811 = vmatpush2.msra.mxu0 0.0
        %4812 = vmatprep.subr.mxu0 0.0
        %4813 = vmatpush2.msra.mxu0 0.0
        %4814 = vmatprep.mubr.f32.mxu0 0.0
        %4815 = vmatmul.mubr.f32.gmra.mxu0 %v4312
        %v4816 = vpop.f32.mrf.mxu0
        %v4817 = vadd.f32 %v4740, %v4816
        %v4818 = vpop.f32.mrf.mxu0
        %v4819 = vadd.f32 %v4742, %v4818
        %4820 = vmatprep.mubr.f32.mxu0 0.0
        %4821 = vmatmul.mubr.f32.gmra.mxu0 %v4315
        %v4822 = vpop.f32.mrf.mxu0
        %v4823 = vadd.f32 %v4746, %v4822
        %v4824 = vpop.f32.mrf.mxu0
        %v4825 = vadd.f32 %v4748, %v4824
        %4826 = vdwg.mxu0
        %v4827 = vadd.f32 %v4319, %v4663
        %v4828 = vadd.f32 %v4320, %v4665
        %v4829 = vadd.f32 %v4321, %v4817
        %v4830 = vadd.f32 %v4322, %v4819
        %v4831 = vadd.f32 %v4323, %v4669
        %v4832 = vadd.f32 %v4324, %v4671
        %v4833 = vadd.f32 %v4325, %v4823
        %v4834 = vadd.f32 %v4326, %v4825
        %v4835 = vmul.f32 %v1391, %v4281
        %v4836 = vmul.f32 %v1392, %v4282
        %v4837 = vadd.f32 %v4827, %v4835
        %v4838 = vadd.f32 %v4831, %v4836
        %v4839 = vmul.f32 %v4837, 0.5
        %v4840 = vmul.f32 %v4838, 0.5
        %v4841 = vtanh.pop %v4839
        %v4842 = vtanh.pop %v4840
        %v4843 = vmul.f32 %v4841, 0.5
        %v4844 = vmul.f32 %v4842, 0.5
        %v4845 = vadd.f32 %v4843, 0.5
        %v4846 = vadd.f32 %v4844, 0.5
        %v4847 = vmul.f32 %v1393, %v4281
        %v4848 = vmul.f32 %v1394, %v4282
        %v4849 = vadd.f32 %v4828, %v4847
        %v4850 = vadd.f32 %v4832, %v4848
        %v4851 = vmul.f32 %v4849, 0.5
        %v4852 = vmul.f32 %v4850, 0.5
        %v4853 = vtanh.pop %v4851
        %v4854 = vtanh.pop %v4852
        %v4855 = vmul.f32 %v4853, 0.5
        %v4856 = vmul.f32 %v4854, 0.5
        %v4857 = vadd.f32 %v4855, 0.5
        %v4858 = vadd.f32 %v4856, 0.5
        %v4859 = vmul.f32 %v4857, %v4281
        %v4860 = vmul.f32 %v4858, %v4282
        %v4861 = vtanh.pop %v4829
        %v4862 = vtanh.pop %v4833
        %v4863 = vmul.f32 %v4845, %v4861
        %v4864 = vmul.f32 %v4846, %v4862
        %v4865 = vadd.f32 %v4859, %v4863
        %v4866 = vadd.f32 %v4860, %v4864
        %v4867 = vmul.f32 %v1395, %v4865
        %v4868 = vmul.f32 %v1396, %v4866
        %v4869 = vadd.f32 %v4830, %v4867
        %v4870 = vadd.f32 %v4834, %v4868
        %v4871 = vmul.f32 %v4869, 0.5
        %v4872 = vmul.f32 %v4870, 0.5
        %v4873 = vtanh.pop %v4871
        %v4874 = vtanh.pop %v4872
        %v4875 = vmul.f32 %v4873, 0.5
        %v4876 = vmul.f32 %v4874, 0.5
        %v4877 = vadd.f32 %v4875, 0.5
        %v4878 = vadd.f32 %v4876, 0.5
        %v4879 = vtanh.pop %v4865
        %v4880 = vtanh.pop %v4866
        %v4881 = vmul.f32 %v4877, %v4879
        %v4882 = vmul.f32 %v4878, %v4880
        %s4883 = scalar_lea.vmem %s301, 80 [#allocation8]
        %4884 = vst [vmem:[%s4883] sm:$0xff] %v4881
        %4885 = vst [vmem:[%s4883 + $0x8] sm:$0xff] %v4882
        %v4888 = vrot.slane %v4881, 7
        %v4889 = vrot.slane %v4882, 7
        %v4890 = vsel %vm339, %v4888, %v4889
        %v4893 = vsel %vm339, 0.0, %v4888
        %v4894 = vrot.slane %v4881, 1
        %v4895 = vrot.slane %v4882, 1
        %v4896 = vsel %vm629, %v4894, %v4895
        %v4899 = vsel %vm629, %v4895, 0.0
        %s4900 = smul.u32 12, 4
        %s4901 = smul.addr %s4900, 8
        %s4902 = scalar_lea.vmem [#allocation2], %s4901
        %v4903 = vld [vmem:[%s4902] sm:$0xff]
        %v4904 = vld [vmem:[%s4902 + $0x8] sm:$0xff]
        %v4905 = vld [vmem:[%s4902 + $0x10] sm:$0xff]
        %v4906 = vld [vmem:[%s4902 + $0x18] sm:$0xff]
        %v4907 = vld [vmem:[%s4902 + $0x20] sm:$0xff]
        %v4908 = vld [vmem:[%s4902 + $0x28] sm:$0xff]
        %v4909 = vld [vmem:[%s4902 + $0x30] sm:$0xff]
        %v4910 = vld [vmem:[%s4902 + $0x38] sm:$0xff]
        %v4911 = vld [vmem:[#allocation6] sm:$0xff]
        %v4912 = vld [vmem:[#allocation6 + $0x8] sm:$0xff]
        %v4913 = vld [vmem:[#allocation6 + $0x10] sm:$0xff]
        %v4914 = vld [vmem:[#allocation6 + $0x18] sm:$0xff]
        %v4915 = vld [vmem:[#allocation6 + $0x20] sm:$0xff]
        %v4916 = vld [vmem:[#allocation6 + $0x28] sm:$0xff]
        %v4917 = vld [vmem:[#allocation6 + $0x30] sm:$0xff]
        %v4918 = vld [vmem:[#allocation6 + $0x38] sm:$0xff]
        %v4919 = vld [vmem:[#allocation6 + $0x40] sm:$0xff]
        %v4920 = vld [vmem:[#allocation6 + $0x48] sm:$0xff]
        %v4921 = vld [vmem:[#allocation6 + $0x50] sm:$0xff]
        %v4922 = vld [vmem:[#allocation6 + $0x58] sm:$0xff]
        %v4923 = vld [vmem:[#allocation6 + $0x60] sm:$0xff]
        %v4924 = vld [vmem:[#allocation6 + $0x68] sm:$0xff]
        %v4925 = vld [vmem:[#allocation6 + $0x70] sm:$0xff]
        %v4926 = vld [vmem:[#allocation6 + $0x78] sm:$0xff]
        %v4927 = vld [vmem:[#allocation6 + $0x80] sm:$0xff]
        %v4928 = vld [vmem:[#allocation6 + $0x88] sm:$0xff]
        %v4929 = vld [vmem:[#allocation6 + $0x90] sm:$0xff]
        %v4930 = vld [vmem:[#allocation6 + $0x98] sm:$0xff]
        %v4931 = vld [vmem:[#allocation6 + $0xa0] sm:$0xff]
        %v4932 = vld [vmem:[#allocation6 + $0xa8] sm:$0xff]
        %v4933 = vld [vmem:[#allocation6 + $0xb0] sm:$0xff]
        %v4934 = vld [vmem:[#allocation6 + $0xb8] sm:$0xff]
        %v4935 = vld [vmem:[#allocation6 + $0xc0] sm:$0xff]
        %v4936 = vld [vmem:[#allocation6 + $0xc8] sm:$0xff]
        %v4937 = vld [vmem:[#allocation6 + $0xd0] sm:$0xff]
        %v4938 = vld [vmem:[#allocation6 + $0xd8] sm:$0xff]
        %v4939 = vld [vmem:[#allocation6 + $0xe0] sm:$0xff]
        %v4940 = vld [vmem:[#allocation6 + $0xe8] sm:$0xff]
        %v4941 = vld [vmem:[#allocation6 + $0xf0] sm:$0xff]
        %v4942 = vld [vmem:[#allocation6 + $0xf8] sm:$0xff]
        %v4943 = vld [vmem:[#allocation6 + $0x100] sm:$0xff]
        %v4944 = vld [vmem:[#allocation6 + $0x108] sm:$0xff]
        %v4945 = vld [vmem:[#allocation6 + $0x110] sm:$0xff]
        %v4946 = vld [vmem:[#allocation6 + $0x118] sm:$0xff]
        %v4947 = vld [vmem:[#allocation6 + $0x120] sm:$0xff]
        %v4948 = vld [vmem:[#allocation6 + $0x128] sm:$0xff]
        %v4949 = vld [vmem:[#allocation6 + $0x130] sm:$0xff]
        %v4950 = vld [vmem:[#allocation6 + $0x138] sm:$0xff]
        %v4951 = vld [vmem:[#allocation6 + $0x140] sm:$0xff]
        %v4952 = vld [vmem:[#allocation6 + $0x148] sm:$0xff]
        %v4953 = vld [vmem:[#allocation6 + $0x150] sm:$0xff]
        %v4954 = vld [vmem:[#allocation6 + $0x158] sm:$0xff]
        %v4955 = vld [vmem:[#allocation6 + $0x160] sm:$0xff]
        %v4956 = vld [vmem:[#allocation6 + $0x168] sm:$0xff]
        %v4957 = vld [vmem:[#allocation6 + $0x170] sm:$0xff]
        %v4958 = vld [vmem:[#allocation6 + $0x178] sm:$0xff]
        %v4959 = vld [vmem:[#allocation6 + $0x180] sm:$0xff]
        %v4960 = vld [vmem:[#allocation6 + $0x188] sm:$0xff]
        %v4961 = vld [vmem:[#allocation6 + $0x190] sm:$0xff]
        %v4962 = vld [vmem:[#allocation6 + $0x198] sm:$0xff]
        %v4963 = vld [vmem:[#allocation6 + $0x1a0] sm:$0xff]
        %v4964 = vld [vmem:[#allocation6 + $0x1a8] sm:$0xff]
        %v4965 = vld [vmem:[#allocation6 + $0x1b0] sm:$0xff]
        %v4966 = vld [vmem:[#allocation6 + $0x1b8] sm:$0xff]
        %v4967 = vld [vmem:[#allocation6 + $0x1c0] sm:$0xff]
        %v4968 = vld [vmem:[#allocation6 + $0x1c8] sm:$0xff]
        %v4969 = vld [vmem:[#allocation6 + $0x1d0] sm:$0xff]
        %v4970 = vld [vmem:[#allocation6 + $0x1d8] sm:$0xff]
        %v4971 = vld [vmem:[#allocation6 + $0x1e0] sm:$0xff]
        %v4972 = vld [vmem:[#allocation6 + $0x1e8] sm:$0xff]
        %v4973 = vld [vmem:[#allocation6 + $0x1f0] sm:$0xff]
        %v4974 = vld [vmem:[#allocation6 + $0x1f8] sm:$0xff]
        %v4975 = vld [vmem:[#allocation6 + $0x200] sm:$0xff]
        %v4976 = vld [vmem:[#allocation6 + $0x208] sm:$0xff]
        %v4977 = vld [vmem:[#allocation6 + $0x210] sm:$0xff]
        %v4978 = vld [vmem:[#allocation6 + $0x218] sm:$0xff]
        %v4979 = vld [vmem:[#allocation6 + $0x220] sm:$0xff]
        %v4980 = vld [vmem:[#allocation6 + $0x228] sm:$0xff]
        %v4981 = vld [vmem:[#allocation6 + $0x230] sm:$0xff]
        %v4982 = vld [vmem:[#allocation6 + $0x238] sm:$0xff]
        %v4983 = vld [vmem:[#allocation6 + $0x240] sm:$0xff]
        %v4984 = vld [vmem:[#allocation6 + $0x248] sm:$0xff]
        %v4985 = vld [vmem:[#allocation6 + $0x250] sm:$0xff]
        %v4986 = vld [vmem:[#allocation6 + $0x258] sm:$0xff]
        %v4987 = vld [vmem:[#allocation6 + $0x260] sm:$0xff]
        %v4988 = vld [vmem:[#allocation6 + $0x268] sm:$0xff]
        %v4989 = vld [vmem:[#allocation6 + $0x270] sm:$0xff]
        %v4990 = vld [vmem:[#allocation6 + $0x278] sm:$0xff]
        %v4991 = vld [vmem:[#allocation6 + $0x280] sm:$0xff]
        %v4992 = vld [vmem:[#allocation6 + $0x288] sm:$0xff]
        %v4993 = vld [vmem:[#allocation6 + $0x290] sm:$0xff]
        %v4994 = vld [vmem:[#allocation6 + $0x298] sm:$0xff]
        %v4995 = vld [vmem:[#allocation6 + $0x2a0] sm:$0xff]
        %v4996 = vld [vmem:[#allocation6 + $0x2a8] sm:$0xff]
        %v4997 = vld [vmem:[#allocation6 + $0x2b0] sm:$0xff]
        %v4998 = vld [vmem:[#allocation6 + $0x2b8] sm:$0xff]
        %v4999 = vld [vmem:[#allocation6 + $0x2c0] sm:$0xff]
        %v5000 = vld [vmem:[#allocation6 + $0x2c8] sm:$0xff]
        %v5001 = vld [vmem:[#allocation6 + $0x2d0] sm:$0xff]
        %v5002 = vld [vmem:[#allocation6 + $0x2d8] sm:$0xff]
        %v5003 = vld [vmem:[#allocation6 + $0x2e0] sm:$0xff]
        %v5004 = vld [vmem:[#allocation6 + $0x2e8] sm:$0xff]
        %v5005 = vld [vmem:[#allocation6 + $0x2f0] sm:$0xff]
        %v5006 = vld [vmem:[#allocation6 + $0x2f8] sm:$0xff]
        %v5007 = vld [vmem:[#allocation6 + $0x300] sm:$0xff]
        %v5008 = vld [vmem:[#allocation6 + $0x308] sm:$0xff]
        %v5009 = vld [vmem:[#allocation6 + $0x310] sm:$0xff]
        %v5010 = vld [vmem:[#allocation6 + $0x318] sm:$0xff]
        %v5011 = vld [vmem:[#allocation6 + $0x320] sm:$0xff]
        %v5012 = vld [vmem:[#allocation6 + $0x328] sm:$0xff]
        %v5013 = vld [vmem:[#allocation6 + $0x330] sm:$0xff]
        %v5014 = vld [vmem:[#allocation6 + $0x338] sm:$0xff]
        %v5015 = vld [vmem:[#allocation6 + $0x340] sm:$0xff]
        %v5016 = vld [vmem:[#allocation6 + $0x348] sm:$0xff]
        %v5017 = vld [vmem:[#allocation6 + $0x350] sm:$0xff]
        %v5018 = vld [vmem:[#allocation6 + $0x358] sm:$0xff]
        %v5019 = vld [vmem:[#allocation6 + $0x360] sm:$0xff]
        %v5020 = vld [vmem:[#allocation6 + $0x368] sm:$0xff]
        %v5021 = vld [vmem:[#allocation6 + $0x370] sm:$0xff]
        %v5022 = vld [vmem:[#allocation6 + $0x378] sm:$0xff]
        %v5023 = vld [vmem:[#allocation6 + $0x380] sm:$0xff]
        %v5024 = vld [vmem:[#allocation6 + $0x388] sm:$0xff]
        %v5025 = vld [vmem:[#allocation6 + $0x390] sm:$0xff]
        %v5026 = vld [vmem:[#allocation6 + $0x398] sm:$0xff]
        %v5027 = vld [vmem:[#allocation6 + $0x3a0] sm:$0xff]
        %v5028 = vld [vmem:[#allocation6 + $0x3a8] sm:$0xff]
        %v5029 = vld [vmem:[#allocation6 + $0x3b0] sm:$0xff]
        %v5030 = vld [vmem:[#allocation6 + $0x3b8] sm:$0xff]
        %v5031 = vld [vmem:[#allocation6 + $0x3c0] sm:$0xff]
        %v5032 = vld [vmem:[#allocation6 + $0x3c8] sm:$0xff]
        %v5033 = vld [vmem:[#allocation6 + $0x3d0] sm:$0xff]
        %v5034 = vld [vmem:[#allocation6 + $0x3d8] sm:$0xff]
        %v5035 = vld [vmem:[#allocation6 + $0x3e0] sm:$0xff]
        %v5036 = vld [vmem:[#allocation6 + $0x3e8] sm:$0xff]
        %v5037 = vld [vmem:[#allocation6 + $0x3f0] sm:$0xff]
        %v5038 = vld [vmem:[#allocation6 + $0x3f8] sm:$0xff]
        %v5039 = vld [vmem:[#allocation6 + $0x400] sm:$0xff]
        %v5040 = vld [vmem:[#allocation6 + $0x408] sm:$0xff]
        %v5041 = vld [vmem:[#allocation6 + $0x410] sm:$0xff]
        %v5042 = vld [vmem:[#allocation6 + $0x418] sm:$0xff]
        %v5043 = vld [vmem:[#allocation6 + $0x420] sm:$0xff]
        %v5044 = vld [vmem:[#allocation6 + $0x428] sm:$0xff]
        %v5045 = vld [vmem:[#allocation6 + $0x430] sm:$0xff]
        %v5046 = vld [vmem:[#allocation6 + $0x438] sm:$0xff]
        %v5047 = vld [vmem:[#allocation6 + $0x440] sm:$0xff]
        %v5048 = vld [vmem:[#allocation6 + $0x448] sm:$0xff]
        %v5049 = vld [vmem:[#allocation6 + $0x450] sm:$0xff]
        %v5050 = vld [vmem:[#allocation6 + $0x458] sm:$0xff]
        %v5051 = vld [vmem:[#allocation6 + $0x460] sm:$0xff]
        %v5052 = vld [vmem:[#allocation6 + $0x468] sm:$0xff]
        %v5053 = vld [vmem:[#allocation6 + $0x470] sm:$0xff]
        %v5054 = vld [vmem:[#allocation6 + $0x478] sm:$0xff]
        %v5055 = vld [vmem:[#allocation6 + $0x480] sm:$0xff]
        %v5056 = vld [vmem:[#allocation6 + $0x488] sm:$0xff]
        %v5057 = vld [vmem:[#allocation6 + $0x490] sm:$0xff]
        %v5058 = vld [vmem:[#allocation6 + $0x498] sm:$0xff]
        %v5059 = vld [vmem:[#allocation6 + $0x4a0] sm:$0xff]
        %v5060 = vld [vmem:[#allocation6 + $0x4a8] sm:$0xff]
        %v5061 = vld [vmem:[#allocation6 + $0x4b0] sm:$0xff]
        %v5062 = vld [vmem:[#allocation6 + $0x4b8] sm:$0xff]
        %v5063 = vld [vmem:[#allocation6 + $0x4c0] sm:$0xff]
        %v5064 = vld [vmem:[#allocation6 + $0x4c8] sm:$0xff]
        %v5065 = vld [vmem:[#allocation6 + $0x4d0] sm:$0xff]
        %v5066 = vld [vmem:[#allocation6 + $0x4d8] sm:$0xff]
        %v5067 = vld [vmem:[#allocation6 + $0x4e0] sm:$0xff]
        %v5068 = vld [vmem:[#allocation6 + $0x4e8] sm:$0xff]
        %v5069 = vld [vmem:[#allocation6 + $0x4f0] sm:$0xff]
        %v5070 = vld [vmem:[#allocation6 + $0x4f8] sm:$0xff]
        %v5071 = vld [vmem:[#allocation6 + $0x500] sm:$0xff]
        %v5072 = vld [vmem:[#allocation6 + $0x508] sm:$0xff]
        %v5073 = vld [vmem:[#allocation6 + $0x510] sm:$0xff]
        %v5074 = vld [vmem:[#allocation6 + $0x518] sm:$0xff]
        %v5075 = vld [vmem:[#allocation6 + $0x520] sm:$0xff]
        %v5076 = vld [vmem:[#allocation6 + $0x528] sm:$0xff]
        %v5077 = vld [vmem:[#allocation6 + $0x530] sm:$0xff]
        %v5078 = vld [vmem:[#allocation6 + $0x538] sm:$0xff]
        %v5079 = vld [vmem:[#allocation6 + $0x540] sm:$0xff]
        %v5080 = vld [vmem:[#allocation6 + $0x548] sm:$0xff]
        %v5081 = vld [vmem:[#allocation6 + $0x550] sm:$0xff]
        %v5082 = vld [vmem:[#allocation6 + $0x558] sm:$0xff]
        %v5083 = vld [vmem:[#allocation6 + $0x560] sm:$0xff]
        %v5084 = vld [vmem:[#allocation6 + $0x568] sm:$0xff]
        %v5085 = vld [vmem:[#allocation6 + $0x570] sm:$0xff]
        %v5086 = vld [vmem:[#allocation6 + $0x578] sm:$0xff]
        %v5087 = vld [vmem:[#allocation6 + $0x580] sm:$0xff]
        %v5088 = vld [vmem:[#allocation6 + $0x588] sm:$0xff]
        %v5089 = vld [vmem:[#allocation6 + $0x590] sm:$0xff]
        %v5090 = vld [vmem:[#allocation6 + $0x598] sm:$0xff]
        %v5091 = vld [vmem:[#allocation6 + $0x5a0] sm:$0xff]
        %v5092 = vld [vmem:[#allocation6 + $0x5a8] sm:$0xff]
        %v5093 = vld [vmem:[#allocation6 + $0x5b0] sm:$0xff]
        %v5094 = vld [vmem:[#allocation6 + $0x5b8] sm:$0xff]
        %v5095 = vld [vmem:[#allocation6 + $0x5c0] sm:$0xff]
        %v5096 = vld [vmem:[#allocation6 + $0x5c8] sm:$0xff]
        %v5097 = vld [vmem:[#allocation6 + $0x5d0] sm:$0xff]
        %v5098 = vld [vmem:[#allocation6 + $0x5d8] sm:$0xff]
        %v5099 = vld [vmem:[#allocation6 + $0x5e0] sm:$0xff]
        %v5100 = vld [vmem:[#allocation6 + $0x5e8] sm:$0xff]
        %v5101 = vld [vmem:[#allocation6 + $0x5f0] sm:$0xff]
        %v5102 = vld [vmem:[#allocation6 + $0x5f8] sm:$0xff]
        %5103 = vmatprep.subr.mxu0 %v4972
        %5104 = vmatpush1.msra.mxu0 %v4971
        %5105 = vmatprep.subr.mxu0 %v4968
        %5106 = vmatpush1.msra.mxu0 %v4967
        %5107 = vmatprep.subr.mxu0 %v4964
        %5108 = vmatpush1.msra.mxu0 %v4963
        %5109 = vmatprep.subr.mxu0 %v4960
        %5110 = vmatpush1.msra.mxu0 %v4959
        %5111 = vmatprep.subr.mxu0 %v4956
        %5112 = vmatpush1.msra.mxu0 %v4955
        %5113 = vmatprep.subr.mxu0 %v4952
        %5114 = vmatpush1.msra.mxu0 %v4951
        %5115 = vmatprep.subr.mxu0 %v4948
        %5116 = vmatpush1.msra.mxu0 %v4947
        %5117 = vmatprep.subr.mxu0 %v4944
        %5118 = vmatpush1.msra.mxu0 %v4943
        %5119 = vmatprep.subr.mxu0 %v4940
        %5120 = vmatpush1.msra.mxu0 %v4939
        %5121 = vmatprep.subr.mxu0 %v4936
        %5122 = vmatpush1.msra.mxu0 %v4935
        %5123 = vmatprep.subr.mxu0 %v4932
        %5124 = vmatpush1.msra.mxu0 %v4931
        %5125 = vmatprep.subr.mxu0 %v4928
        %5126 = vmatpush1.msra.mxu0 %v4927
        %5127 = vmatprep.subr.mxu0 %v4924
        %5128 = vmatpush1.msra.mxu0 %v4923
        %5129 = vmatprep.subr.mxu0 %v4920
        %5130 = vmatpush1.msra.mxu0 %v4919
        %5131 = vmatprep.subr.mxu0 %v4916
        %5132 = vmatpush1.msra.mxu0 %v4915
        %5133 = vmatprep.subr.mxu0 %v4912
        %5134 = vmatpush1.msra.mxu0 %v4911
        %5135 = vmatprep.subr.mxu0 %v5036
        %5136 = vmatpush2.msra.mxu0 %v5035
        %5137 = vmatprep.subr.mxu0 %v5032
        %5138 = vmatpush2.msra.mxu0 %v5031
        %5139 = vmatprep.subr.mxu0 %v5028
        %5140 = vmatpush2.msra.mxu0 %v5027
        %5141 = vmatprep.subr.mxu0 %v5024
        %5142 = vmatpush2.msra.mxu0 %v5023
        %5143 = vmatprep.subr.mxu0 %v5020
        %5144 = vmatpush2.msra.mxu0 %v5019
        %5145 = vmatprep.subr.mxu0 %v5016
        %5146 = vmatpush2.msra.mxu0 %v5015
        %5147 = vmatprep.subr.mxu0 %v5012
        %5148 = vmatpush2.msra.mxu0 %v5011
        %5149 = vmatprep.subr.mxu0 %v5008
        %5150 = vmatpush2.msra.mxu0 %v5007
        %5151 = vmatprep.subr.mxu0 %v5004
        %5152 = vmatpush2.msra.mxu0 %v5003
        %5153 = vmatprep.subr.mxu0 %v5000
        %5154 = vmatpush2.msra.mxu0 %v4999
        %5155 = vmatprep.subr.mxu0 %v4996
        %5156 = vmatpush2.msra.mxu0 %v4995
        %5157 = vmatprep.subr.mxu0 %v4992
        %5158 = vmatpush2.msra.mxu0 %v4991
        %5159 = vmatprep.subr.mxu0 %v4988
        %5160 = vmatpush2.msra.mxu0 %v4987
        %5161 = vmatprep.subr.mxu0 %v4984
        %5162 = vmatpush2.msra.mxu0 %v4983
        %5163 = vmatprep.subr.mxu0 %v4980
        %5164 = vmatpush2.msra.mxu0 %v4979
        %5165 = vmatprep.subr.mxu0 %v4976
        %5166 = vmatpush2.msra.mxu0 %v4975
        %5167 = vmatprep.mubr.f32.mxu0 %v4881
        %5168 = vmatmul.mubr.f32.gmra.mxu0 %v4893
        %v5169 = vpop.f32.mrf.mxu0
        %v5170 = vadd.f32 0.0, %v5169
        %v5171 = vpop.f32.mrf.mxu0
        %v5172 = vadd.f32 0.0, %v5171
        %5173 = vmatprep.mubr.f32.mxu0 %v4882
        %5174 = vmatmul.mubr.f32.gmra.mxu0 %v4890
        %v5175 = vpop.f32.mrf.mxu0
        %v5176 = vadd.f32 0.0, %v5175
        %v5177 = vpop.f32.mrf.mxu0
        %v5178 = vadd.f32 0.0, %v5177
        %5179 = vdwg.mxu0
        %5180 = vmatprep.subr.mxu0 %v5100
        %5181 = vmatpush1.msra.mxu0 %v5099
        %5182 = vmatprep.subr.mxu0 %v5096
        %5183 = vmatpush1.msra.mxu0 %v5095
        %5184 = vmatprep.subr.mxu0 %v5092
        %5185 = vmatpush1.msra.mxu0 %v5091
        %5186 = vmatprep.subr.mxu0 %v5088
        %5187 = vmatpush1.msra.mxu0 %v5087
        %5188 = vmatprep.subr.mxu0 %v5084
        %5189 = vmatpush1.msra.mxu0 %v5083
        %5190 = vmatprep.subr.mxu0 %v5080
        %5191 = vmatpush1.msra.mxu0 %v5079
        %5192 = vmatprep.subr.mxu0 %v5076
        %5193 = vmatpush1.msra.mxu0 %v5075
        %5194 = vmatprep.subr.mxu0 %v5072
        %5195 = vmatpush1.msra.mxu0 %v5071
        %5196 = vmatprep.subr.mxu0 %v5068
        %5197 = vmatpush1.msra.mxu0 %v5067
        %5198 = vmatprep.subr.mxu0 %v5064
        %5199 = vmatpush1.msra.mxu0 %v5063
        %5200 = vmatprep.subr.mxu0 %v5060
        %5201 = vmatpush1.msra.mxu0 %v5059
        %5202 = vmatprep.subr.mxu0 %v5056
        %5203 = vmatpush1.msra.mxu0 %v5055
        %5204 = vmatprep.subr.mxu0 %v5052
        %5205 = vmatpush1.msra.mxu0 %v5051
        %5206 = vmatprep.subr.mxu0 %v5048
        %5207 = vmatpush1.msra.mxu0 %v5047
        %5208 = vmatprep.subr.mxu0 %v5044
        %5209 = vmatpush1.msra.mxu0 %v5043
        %5210 = vmatprep.subr.mxu0 %v5040
        %5211 = vmatpush1.msra.mxu0 %v5039
        %5212 = vmatprep.subr.mxu0 0.0
        %5213 = vmatpush2.msra.mxu0 0.0
        %5214 = vmatprep.subr.mxu0 0.0
        %5215 = vmatpush2.msra.mxu0 0.0
        %5216 = vmatprep.subr.mxu0 0.0
        %5217 = vmatpush2.msra.mxu0 0.0
        %5218 = vmatprep.subr.mxu0 0.0
        %5219 = vmatpush2.msra.mxu0 0.0
        %5220 = vmatprep.subr.mxu0 0.0
        %5221 = vmatpush2.msra.mxu0 0.0
        %5222 = vmatprep.subr.mxu0 0.0
        %5223 = vmatpush2.msra.mxu0 0.0
        %5224 = vmatprep.subr.mxu0 0.0
        %5225 = vmatpush2.msra.mxu0 0.0
        %5226 = vmatprep.subr.mxu0 0.0
        %5227 = vmatpush2.msra.mxu0 0.0
        %5228 = vmatprep.subr.mxu0 0.0
        %5229 = vmatpush2.msra.mxu0 0.0
        %5230 = vmatprep.subr.mxu0 0.0
        %5231 = vmatpush2.msra.mxu0 0.0
        %5232 = vmatprep.subr.mxu0 0.0
        %5233 = vmatpush2.msra.mxu0 0.0
        %5234 = vmatprep.subr.mxu0 0.0
        %5235 = vmatpush2.msra.mxu0 0.0
        %5236 = vmatprep.subr.mxu0 0.0
        %5237 = vmatpush2.msra.mxu0 0.0
        %5238 = vmatprep.subr.mxu0 0.0
        %5239 = vmatpush2.msra.mxu0 0.0
        %5240 = vmatprep.subr.mxu0 0.0
        %5241 = vmatpush2.msra.mxu0 0.0
        %5242 = vmatprep.subr.mxu0 0.0
        %5243 = vmatpush2.msra.mxu0 0.0
        %5244 = vmatprep.mubr.f32.mxu0 0.0
        %5245 = vmatmul.mubr.f32.gmra.mxu0 %v4896
        %v5246 = vpop.f32.mrf.mxu0
        %v5247 = vadd.f32 %v5170, %v5246
        %v5248 = vpop.f32.mrf.mxu0
        %v5249 = vadd.f32 %v5172, %v5248
        %5250 = vmatprep.mubr.f32.mxu0 0.0
        %5251 = vmatmul.mubr.f32.gmra.mxu0 %v4899
        %v5252 = vpop.f32.mrf.mxu0
        %v5253 = vadd.f32 %v5176, %v5252
        %v5254 = vpop.f32.mrf.mxu0
        %v5255 = vadd.f32 %v5178, %v5254
        %5256 = vdwg.mxu0
        %5257 = vmatprep.subr.mxu0 %v4974
        %5258 = vmatpush1.msra.mxu0 %v4973
        %5259 = vmatprep.subr.mxu0 %v4970
        %5260 = vmatpush1.msra.mxu0 %v4969
        %5261 = vmatprep.subr.mxu0 %v4966
        %5262 = vmatpush1.msra.mxu0 %v4965
        %5263 = vmatprep.subr.mxu0 %v4962
        %5264 = vmatpush1.msra.mxu0 %v4961
        %5265 = vmatprep.subr.mxu0 %v4958
        %5266 = vmatpush1.msra.mxu0 %v4957
        %5267 = vmatprep.subr.mxu0 %v4954
        %5268 = vmatpush1.msra.mxu0 %v4953
        %5269 = vmatprep.subr.mxu0 %v4950
        %5270 = vmatpush1.msra.mxu0 %v4949
        %5271 = vmatprep.subr.mxu0 %v4946
        %5272 = vmatpush1.msra.mxu0 %v4945
        %5273 = vmatprep.subr.mxu0 %v4942
        %5274 = vmatpush1.msra.mxu0 %v4941
        %5275 = vmatprep.subr.mxu0 %v4938
        %5276 = vmatpush1.msra.mxu0 %v4937
        %5277 = vmatprep.subr.mxu0 %v4934
        %5278 = vmatpush1.msra.mxu0 %v4933
        %5279 = vmatprep.subr.mxu0 %v4930
        %5280 = vmatpush1.msra.mxu0 %v4929
        %5281 = vmatprep.subr.mxu0 %v4926
        %5282 = vmatpush1.msra.mxu0 %v4925
        %5283 = vmatprep.subr.mxu0 %v4922
        %5284 = vmatpush1.msra.mxu0 %v4921
        %5285 = vmatprep.subr.mxu0 %v4918
        %5286 = vmatpush1.msra.mxu0 %v4917
        %5287 = vmatprep.subr.mxu0 %v4914
        %5288 = vmatpush1.msra.mxu0 %v4913
        %5289 = vmatprep.subr.mxu0 %v5038
        %5290 = vmatpush2.msra.mxu0 %v5037
        %5291 = vmatprep.subr.mxu0 %v5034
        %5292 = vmatpush2.msra.mxu0 %v5033
        %5293 = vmatprep.subr.mxu0 %v5030
        %5294 = vmatpush2.msra.mxu0 %v5029
        %5295 = vmatprep.subr.mxu0 %v5026
        %5296 = vmatpush2.msra.mxu0 %v5025
        %5297 = vmatprep.subr.mxu0 %v5022
        %5298 = vmatpush2.msra.mxu0 %v5021
        %5299 = vmatprep.subr.mxu0 %v5018
        %5300 = vmatpush2.msra.mxu0 %v5017
        %5301 = vmatprep.subr.mxu0 %v5014
        %5302 = vmatpush2.msra.mxu0 %v5013
        %5303 = vmatprep.subr.mxu0 %v5010
        %5304 = vmatpush2.msra.mxu0 %v5009
        %5305 = vmatprep.subr.mxu0 %v5006
        %5306 = vmatpush2.msra.mxu0 %v5005
        %5307 = vmatprep.subr.mxu0 %v5002
        %5308 = vmatpush2.msra.mxu0 %v5001
        %5309 = vmatprep.subr.mxu0 %v4998
        %5310 = vmatpush2.msra.mxu0 %v4997
        %5311 = vmatprep.subr.mxu0 %v4994
        %5312 = vmatpush2.msra.mxu0 %v4993
        %5313 = vmatprep.subr.mxu0 %v4990
        %5314 = vmatpush2.msra.mxu0 %v4989
        %5315 = vmatprep.subr.mxu0 %v4986
        %5316 = vmatpush2.msra.mxu0 %v4985
        %5317 = vmatprep.subr.mxu0 %v4982
        %5318 = vmatpush2.msra.mxu0 %v4981
        %5319 = vmatprep.subr.mxu0 %v4978
        %5320 = vmatpush2.msra.mxu0 %v4977
        %5321 = vmatprep.mubr.f32.mxu0 %v4881
        %5322 = vmatmul.mubr.f32.gmra.mxu0 %v4893
        %v5323 = vpop.f32.mrf.mxu0
        %v5324 = vadd.f32 0.0, %v5323
        %v5325 = vpop.f32.mrf.mxu0
        %v5326 = vadd.f32 0.0, %v5325
        %5327 = vmatprep.mubr.f32.mxu0 %v4882
        %5328 = vmatmul.mubr.f32.gmra.mxu0 %v4890
        %v5329 = vpop.f32.mrf.mxu0
        %v5330 = vadd.f32 0.0, %v5329
        %v5331 = vpop.f32.mrf.mxu0
        %v5332 = vadd.f32 0.0, %v5331
        %5333 = vdwg.mxu0
        %5334 = vmatprep.subr.mxu0 %v5102
        %5335 = vmatpush1.msra.mxu0 %v5101
        %5336 = vmatprep.subr.mxu0 %v5098
        %5337 = vmatpush1.msra.mxu0 %v5097
        %5338 = vmatprep.subr.mxu0 %v5094
        %5339 = vmatpush1.msra.mxu0 %v5093
        %5340 = vmatprep.subr.mxu0 %v5090
        %5341 = vmatpush1.msra.mxu0 %v5089
        %5342 = vmatprep.subr.mxu0 %v5086
        %5343 = vmatpush1.msra.mxu0 %v5085
        %5344 = vmatprep.subr.mxu0 %v5082
        %5345 = vmatpush1.msra.mxu0 %v5081
        %5346 = vmatprep.subr.mxu0 %v5078
        %5347 = vmatpush1.msra.mxu0 %v5077
        %5348 = vmatprep.subr.mxu0 %v5074
        %5349 = vmatpush1.msra.mxu0 %v5073
        %5350 = vmatprep.subr.mxu0 %v5070
        %5351 = vmatpush1.msra.mxu0 %v5069
        %5352 = vmatprep.subr.mxu0 %v5066
        %5353 = vmatpush1.msra.mxu0 %v5065
        %5354 = vmatprep.subr.mxu0 %v5062
        %5355 = vmatpush1.msra.mxu0 %v5061
        %5356 = vmatprep.subr.mxu0 %v5058
        %5357 = vmatpush1.msra.mxu0 %v5057
        %5358 = vmatprep.subr.mxu0 %v5054
        %5359 = vmatpush1.msra.mxu0 %v5053
        %5360 = vmatprep.subr.mxu0 %v5050
        %5361 = vmatpush1.msra.mxu0 %v5049
        %5362 = vmatprep.subr.mxu0 %v5046
        %5363 = vmatpush1.msra.mxu0 %v5045
        %5364 = vmatprep.subr.mxu0 %v5042
        %5365 = vmatpush1.msra.mxu0 %v5041
        %5366 = vmatprep.subr.mxu0 0.0
        %5367 = vmatpush2.msra.mxu0 0.0
        %5368 = vmatprep.subr.mxu0 0.0
        %5369 = vmatpush2.msra.mxu0 0.0
        %5370 = vmatprep.subr.mxu0 0.0
        %5371 = vmatpush2.msra.mxu0 0.0
        %5372 = vmatprep.subr.mxu0 0.0
        %5373 = vmatpush2.msra.mxu0 0.0
        %5374 = vmatprep.subr.mxu0 0.0
        %5375 = vmatpush2.msra.mxu0 0.0
        %5376 = vmatprep.subr.mxu0 0.0
        %5377 = vmatpush2.msra.mxu0 0.0
        %5378 = vmatprep.subr.mxu0 0.0
        %5379 = vmatpush2.msra.mxu0 0.0
        %5380 = vmatprep.subr.mxu0 0.0
        %5381 = vmatpush2.msra.mxu0 0.0
        %5382 = vmatprep.subr.mxu0 0.0
        %5383 = vmatpush2.msra.mxu0 0.0
        %5384 = vmatprep.subr.mxu0 0.0
        %5385 = vmatpush2.msra.mxu0 0.0
        %5386 = vmatprep.subr.mxu0 0.0
        %5387 = vmatpush2.msra.mxu0 0.0
        %5388 = vmatprep.subr.mxu0 0.0
        %5389 = vmatpush2.msra.mxu0 0.0
        %5390 = vmatprep.subr.mxu0 0.0
        %5391 = vmatpush2.msra.mxu0 0.0
        %5392 = vmatprep.subr.mxu0 0.0
        %5393 = vmatpush2.msra.mxu0 0.0
        %5394 = vmatprep.subr.mxu0 0.0
        %5395 = vmatpush2.msra.mxu0 0.0
        %5396 = vmatprep.subr.mxu0 0.0
        %5397 = vmatpush2.msra.mxu0 0.0
        %5398 = vmatprep.mubr.f32.mxu0 0.0
        %5399 = vmatmul.mubr.f32.gmra.mxu0 %v4896
        %v5400 = vpop.f32.mrf.mxu0
        %v5401 = vadd.f32 %v5324, %v5400
        %v5402 = vpop.f32.mrf.mxu0
        %v5403 = vadd.f32 %v5326, %v5402
        %5404 = vmatprep.mubr.f32.mxu0 0.0
        %5405 = vmatmul.mubr.f32.gmra.mxu0 %v4899
        %v5406 = vpop.f32.mrf.mxu0
        %v5407 = vadd.f32 %v5330, %v5406
        %v5408 = vpop.f32.mrf.mxu0
        %v5409 = vadd.f32 %v5332, %v5408
        %5410 = vdwg.mxu0
        %v5411 = vadd.f32 %v4903, %v5247
        %v5412 = vadd.f32 %v4904, %v5249
        %v5413 = vadd.f32 %v4905, %v5401
        %v5414 = vadd.f32 %v4906, %v5403
        %v5415 = vadd.f32 %v4907, %v5253
        %v5416 = vadd.f32 %v4908, %v5255
        %v5417 = vadd.f32 %v4909, %v5407
        %v5418 = vadd.f32 %v4910, %v5409
        %v5419 = vmul.f32 %v1391, %v4865
        %v5420 = vmul.f32 %v1392, %v4866
        %v5421 = vadd.f32 %v5411, %v5419
        %v5422 = vadd.f32 %v5415, %v5420
        %v5423 = vmul.f32 %v5421, 0.5
        %v5424 = vmul.f32 %v5422, 0.5
        %v5425 = vtanh.pop %v5423
        %v5426 = vtanh.pop %v5424
        %v5427 = vmul.f32 %v5425, 0.5
        %v5428 = vmul.f32 %v5426, 0.5
        %v5429 = vadd.f32 %v5427, 0.5
        %v5430 = vadd.f32 %v5428, 0.5
        %v5431 = vmul.f32 %v1393, %v4865
        %v5432 = vmul.f32 %v1394, %v4866
        %v5433 = vadd.f32 %v5412, %v5431
        %v5434 = vadd.f32 %v5416, %v5432
        %v5435 = vmul.f32 %v5433, 0.5
        %v5436 = vmul.f32 %v5434, 0.5
        %v5437 = vtanh.pop %v5435
        %v5438 = vtanh.pop %v5436
        %v5439 = vmul.f32 %v5437, 0.5
        %v5440 = vmul.f32 %v5438, 0.5
        %v5441 = vadd.f32 %v5439, 0.5
        %v5442 = vadd.f32 %v5440, 0.5
        %v5443 = vmul.f32 %v5441, %v4865
        %v5444 = vmul.f32 %v5442, %v4866
        %v5445 = vtanh.pop %v5413
        %v5446 = vtanh.pop %v5417
        %v5447 = vmul.f32 %v5429, %v5445
        %v5448 = vmul.f32 %v5430, %v5446
        %v5449 = vadd.f32 %v5443, %v5447
        %v5450 = vadd.f32 %v5444, %v5448
        %v5451 = vmul.f32 %v1395, %v5449
        %v5452 = vmul.f32 %v1396, %v5450
        %v5453 = vadd.f32 %v5414, %v5451
        %v5454 = vadd.f32 %v5418, %v5452
        %v5455 = vmul.f32 %v5453, 0.5
        %v5456 = vmul.f32 %v5454, 0.5
        %v5457 = vtanh.pop %v5455
        %v5458 = vtanh.pop %v5456
        %v5459 = vmul.f32 %v5457, 0.5
        %v5460 = vmul.f32 %v5458, 0.5
        %v5461 = vadd.f32 %v5459, 0.5
        %v5462 = vadd.f32 %v5460, 0.5
        %v5463 = vtanh.pop %v5449
        %v5464 = vtanh.pop %v5450
        %v5465 = vmul.f32 %v5461, %v5463
        %v5466 = vmul.f32 %v5462, %v5464
        %s5467 = scalar_lea.vmem %s301, 96 [#allocation8]
        %5468 = vst [vmem:[%s5467] sm:$0xff] %v5465
        %5469 = vst [vmem:[%s5467 + $0x8] sm:$0xff] %v5466
        %v5472 = vrot.slane %v5465, 7
        %v5473 = vrot.slane %v5466, 7
        %v5474 = vsel %vm339, %v5472, %v5473
        %v5477 = vsel %vm339, 0.0, %v5472
        %v5478 = vrot.slane %v5465, 1
        %v5479 = vrot.slane %v5466, 1
        %v5480 = vsel %vm629, %v5478, %v5479
        %v5483 = vsel %vm629, %v5479, 0.0
        %s5484 = smul.u32 14, 4
        %s5485 = smul.addr %s5484, 8
        %s5486 = scalar_lea.vmem [#allocation2], %s5485
        %v5487 = vld [vmem:[%s5486] sm:$0xff]
        %v5488 = vld [vmem:[%s5486 + $0x8] sm:$0xff]
        %v5489 = vld [vmem:[%s5486 + $0x10] sm:$0xff]
        %v5490 = vld [vmem:[%s5486 + $0x18] sm:$0xff]
        %v5491 = vld [vmem:[%s5486 + $0x20] sm:$0xff]
        %v5492 = vld [vmem:[%s5486 + $0x28] sm:$0xff]
        %v5493 = vld [vmem:[%s5486 + $0x30] sm:$0xff]
        %v5494 = vld [vmem:[%s5486 + $0x38] sm:$0xff]
        %v5495 = vld [vmem:[#allocation6] sm:$0xff]
        %v5496 = vld [vmem:[#allocation6 + $0x8] sm:$0xff]
        %v5497 = vld [vmem:[#allocation6 + $0x10] sm:$0xff]
        %v5498 = vld [vmem:[#allocation6 + $0x18] sm:$0xff]
        %v5499 = vld [vmem:[#allocation6 + $0x20] sm:$0xff]
        %v5500 = vld [vmem:[#allocation6 + $0x28] sm:$0xff]
        %v5501 = vld [vmem:[#allocation6 + $0x30] sm:$0xff]
        %v5502 = vld [vmem:[#allocation6 + $0x38] sm:$0xff]
        %v5503 = vld [vmem:[#allocation6 + $0x40] sm:$0xff]
        %v5504 = vld [vmem:[#allocation6 + $0x48] sm:$0xff]
        %v5505 = vld [vmem:[#allocation6 + $0x50] sm:$0xff]
        %v5506 = vld [vmem:[#allocation6 + $0x58] sm:$0xff]
        %v5507 = vld [vmem:[#allocation6 + $0x60] sm:$0xff]
        %v5508 = vld [vmem:[#allocation6 + $0x68] sm:$0xff]
        %v5509 = vld [vmem:[#allocation6 + $0x70] sm:$0xff]
        %v5510 = vld [vmem:[#allocation6 + $0x78] sm:$0xff]
        %v5511 = vld [vmem:[#allocation6 + $0x80] sm:$0xff]
        %v5512 = vld [vmem:[#allocation6 + $0x88] sm:$0xff]
        %v5513 = vld [vmem:[#allocation6 + $0x90] sm:$0xff]
        %v5514 = vld [vmem:[#allocation6 + $0x98] sm:$0xff]
        %v5515 = vld [vmem:[#allocation6 + $0xa0] sm:$0xff]
        %v5516 = vld [vmem:[#allocation6 + $0xa8] sm:$0xff]
        %v5517 = vld [vmem:[#allocation6 + $0xb0] sm:$0xff]
        %v5518 = vld [vmem:[#allocation6 + $0xb8] sm:$0xff]
        %v5519 = vld [vmem:[#allocation6 + $0xc0] sm:$0xff]
        %v5520 = vld [vmem:[#allocation6 + $0xc8] sm:$0xff]
        %v5521 = vld [vmem:[#allocation6 + $0xd0] sm:$0xff]
        %v5522 = vld [vmem:[#allocation6 + $0xd8] sm:$0xff]
        %v5523 = vld [vmem:[#allocation6 + $0xe0] sm:$0xff]
        %v5524 = vld [vmem:[#allocation6 + $0xe8] sm:$0xff]
        %v5525 = vld [vmem:[#allocation6 + $0xf0] sm:$0xff]
        %v5526 = vld [vmem:[#allocation6 + $0xf8] sm:$0xff]
        %v5527 = vld [vmem:[#allocation6 + $0x100] sm:$0xff]
        %v5528 = vld [vmem:[#allocation6 + $0x108] sm:$0xff]
        %v5529 = vld [vmem:[#allocation6 + $0x110] sm:$0xff]
        %v5530 = vld [vmem:[#allocation6 + $0x118] sm:$0xff]
        %v5531 = vld [vmem:[#allocation6 + $0x120] sm:$0xff]
        %v5532 = vld [vmem:[#allocation6 + $0x128] sm:$0xff]
        %v5533 = vld [vmem:[#allocation6 + $0x130] sm:$0xff]
        %v5534 = vld [vmem:[#allocation6 + $0x138] sm:$0xff]
        %v5535 = vld [vmem:[#allocation6 + $0x140] sm:$0xff]
        %v5536 = vld [vmem:[#allocation6 + $0x148] sm:$0xff]
        %v5537 = vld [vmem:[#allocation6 + $0x150] sm:$0xff]
        %v5538 = vld [vmem:[#allocation6 + $0x158] sm:$0xff]
        %v5539 = vld [vmem:[#allocation6 + $0x160] sm:$0xff]
        %v5540 = vld [vmem:[#allocation6 + $0x168] sm:$0xff]
        %v5541 = vld [vmem:[#allocation6 + $0x170] sm:$0xff]
        %v5542 = vld [vmem:[#allocation6 + $0x178] sm:$0xff]
        %v5543 = vld [vmem:[#allocation6 + $0x180] sm:$0xff]
        %v5544 = vld [vmem:[#allocation6 + $0x188] sm:$0xff]
        %v5545 = vld [vmem:[#allocation6 + $0x190] sm:$0xff]
        %v5546 = vld [vmem:[#allocation6 + $0x198] sm:$0xff]
        %v5547 = vld [vmem:[#allocation6 + $0x1a0] sm:$0xff]
        %v5548 = vld [vmem:[#allocation6 + $0x1a8] sm:$0xff]
        %v5549 = vld [vmem:[#allocation6 + $0x1b0] sm:$0xff]
        %v5550 = vld [vmem:[#allocation6 + $0x1b8] sm:$0xff]
        %v5551 = vld [vmem:[#allocation6 + $0x1c0] sm:$0xff]
        %v5552 = vld [vmem:[#allocation6 + $0x1c8] sm:$0xff]
        %v5553 = vld [vmem:[#allocation6 + $0x1d0] sm:$0xff]
        %v5554 = vld [vmem:[#allocation6 + $0x1d8] sm:$0xff]
        %v5555 = vld [vmem:[#allocation6 + $0x1e0] sm:$0xff]
        %v5556 = vld [vmem:[#allocation6 + $0x1e8] sm:$0xff]
        %v5557 = vld [vmem:[#allocation6 + $0x1f0] sm:$0xff]
        %v5558 = vld [vmem:[#allocation6 + $0x1f8] sm:$0xff]
        %v5559 = vld [vmem:[#allocation6 + $0x200] sm:$0xff]
        %v5560 = vld [vmem:[#allocation6 + $0x208] sm:$0xff]
        %v5561 = vld [vmem:[#allocation6 + $0x210] sm:$0xff]
        %v5562 = vld [vmem:[#allocation6 + $0x218] sm:$0xff]
        %v5563 = vld [vmem:[#allocation6 + $0x220] sm:$0xff]
        %v5564 = vld [vmem:[#allocation6 + $0x228] sm:$0xff]
        %v5565 = vld [vmem:[#allocation6 + $0x230] sm:$0xff]
        %v5566 = vld [vmem:[#allocation6 + $0x238] sm:$0xff]
        %v5567 = vld [vmem:[#allocation6 + $0x240] sm:$0xff]
        %v5568 = vld [vmem:[#allocation6 + $0x248] sm:$0xff]
        %v5569 = vld [vmem:[#allocation6 + $0x250] sm:$0xff]
        %v5570 = vld [vmem:[#allocation6 + $0x258] sm:$0xff]
        %v5571 = vld [vmem:[#allocation6 + $0x260] sm:$0xff]
        %v5572 = vld [vmem:[#allocation6 + $0x268] sm:$0xff]
        %v5573 = vld [vmem:[#allocation6 + $0x270] sm:$0xff]
        %v5574 = vld [vmem:[#allocation6 + $0x278] sm:$0xff]
        %v5575 = vld [vmem:[#allocation6 + $0x280] sm:$0xff]
        %v5576 = vld [vmem:[#allocation6 + $0x288] sm:$0xff]
        %v5577 = vld [vmem:[#allocation6 + $0x290] sm:$0xff]
        %v5578 = vld [vmem:[#allocation6 + $0x298] sm:$0xff]
        %v5579 = vld [vmem:[#allocation6 + $0x2a0] sm:$0xff]
        %v5580 = vld [vmem:[#allocation6 + $0x2a8] sm:$0xff]
        %v5581 = vld [vmem:[#allocation6 + $0x2b0] sm:$0xff]
        %v5582 = vld [vmem:[#allocation6 + $0x2b8] sm:$0xff]
        %v5583 = vld [vmem:[#allocation6 + $0x2c0] sm:$0xff]
        %v5584 = vld [vmem:[#allocation6 + $0x2c8] sm:$0xff]
        %v5585 = vld [vmem:[#allocation6 + $0x2d0] sm:$0xff]
        %v5586 = vld [vmem:[#allocation6 + $0x2d8] sm:$0xff]
        %v5587 = vld [vmem:[#allocation6 + $0x2e0] sm:$0xff]
        %v5588 = vld [vmem:[#allocation6 + $0x2e8] sm:$0xff]
        %v5589 = vld [vmem:[#allocation6 + $0x2f0] sm:$0xff]
        %v5590 = vld [vmem:[#allocation6 + $0x2f8] sm:$0xff]
        %v5591 = vld [vmem:[#allocation6 + $0x300] sm:$0xff]
        %v5592 = vld [vmem:[#allocation6 + $0x308] sm:$0xff]
        %v5593 = vld [vmem:[#allocation6 + $0x310] sm:$0xff]
        %v5594 = vld [vmem:[#allocation6 + $0x318] sm:$0xff]
        %v5595 = vld [vmem:[#allocation6 + $0x320] sm:$0xff]
        %v5596 = vld [vmem:[#allocation6 + $0x328] sm:$0xff]
        %v5597 = vld [vmem:[#allocation6 + $0x330] sm:$0xff]
        %v5598 = vld [vmem:[#allocation6 + $0x338] sm:$0xff]
        %v5599 = vld [vmem:[#allocation6 + $0x340] sm:$0xff]
        %v5600 = vld [vmem:[#allocation6 + $0x348] sm:$0xff]
        %v5601 = vld [vmem:[#allocation6 + $0x350] sm:$0xff]
        %v5602 = vld [vmem:[#allocation6 + $0x358] sm:$0xff]
        %v5603 = vld [vmem:[#allocation6 + $0x360] sm:$0xff]
        %v5604 = vld [vmem:[#allocation6 + $0x368] sm:$0xff]
        %v5605 = vld [vmem:[#allocation6 + $0x370] sm:$0xff]
        %v5606 = vld [vmem:[#allocation6 + $0x378] sm:$0xff]
        %v5607 = vld [vmem:[#allocation6 + $0x380] sm:$0xff]
        %v5608 = vld [vmem:[#allocation6 + $0x388] sm:$0xff]
        %v5609 = vld [vmem:[#allocation6 + $0x390] sm:$0xff]
        %v5610 = vld [vmem:[#allocation6 + $0x398] sm:$0xff]
        %v5611 = vld [vmem:[#allocation6 + $0x3a0] sm:$0xff]
        %v5612 = vld [vmem:[#allocation6 + $0x3a8] sm:$0xff]
        %v5613 = vld [vmem:[#allocation6 + $0x3b0] sm:$0xff]
        %v5614 = vld [vmem:[#allocation6 + $0x3b8] sm:$0xff]
        %v5615 = vld [vmem:[#allocation6 + $0x3c0] sm:$0xff]
        %v5616 = vld [vmem:[#allocation6 + $0x3c8] sm:$0xff]
        %v5617 = vld [vmem:[#allocation6 + $0x3d0] sm:$0xff]
        %v5618 = vld [vmem:[#allocation6 + $0x3d8] sm:$0xff]
        %v5619 = vld [vmem:[#allocation6 + $0x3e0] sm:$0xff]
        %v5620 = vld [vmem:[#allocation6 + $0x3e8] sm:$0xff]
        %v5621 = vld [vmem:[#allocation6 + $0x3f0] sm:$0xff]
        %v5622 = vld [vmem:[#allocation6 + $0x3f8] sm:$0xff]
        %v5623 = vld [vmem:[#allocation6 + $0x400] sm:$0xff]
        %v5624 = vld [vmem:[#allocation6 + $0x408] sm:$0xff]
        %v5625 = vld [vmem:[#allocation6 + $0x410] sm:$0xff]
        %v5626 = vld [vmem:[#allocation6 + $0x418] sm:$0xff]
        %v5627 = vld [vmem:[#allocation6 + $0x420] sm:$0xff]
        %v5628 = vld [vmem:[#allocation6 + $0x428] sm:$0xff]
        %v5629 = vld [vmem:[#allocation6 + $0x430] sm:$0xff]
        %v5630 = vld [vmem:[#allocation6 + $0x438] sm:$0xff]
        %v5631 = vld [vmem:[#allocation6 + $0x440] sm:$0xff]
        %v5632 = vld [vmem:[#allocation6 + $0x448] sm:$0xff]
        %v5633 = vld [vmem:[#allocation6 + $0x450] sm:$0xff]
        %v5634 = vld [vmem:[#allocation6 + $0x458] sm:$0xff]
        %v5635 = vld [vmem:[#allocation6 + $0x460] sm:$0xff]
        %v5636 = vld [vmem:[#allocation6 + $0x468] sm:$0xff]
        %v5637 = vld [vmem:[#allocation6 + $0x470] sm:$0xff]
        %v5638 = vld [vmem:[#allocation6 + $0x478] sm:$0xff]
        %v5639 = vld [vmem:[#allocation6 + $0x480] sm:$0xff]
        %v5640 = vld [vmem:[#allocation6 + $0x488] sm:$0xff]
        %v5641 = vld [vmem:[#allocation6 + $0x490] sm:$0xff]
        %v5642 = vld [vmem:[#allocation6 + $0x498] sm:$0xff]
        %v5643 = vld [vmem:[#allocation6 + $0x4a0] sm:$0xff]
        %v5644 = vld [vmem:[#allocation6 + $0x4a8] sm:$0xff]
        %v5645 = vld [vmem:[#allocation6 + $0x4b0] sm:$0xff]
        %v5646 = vld [vmem:[#allocation6 + $0x4b8] sm:$0xff]
        %v5647 = vld [vmem:[#allocation6 + $0x4c0] sm:$0xff]
        %v5648 = vld [vmem:[#allocation6 + $0x4c8] sm:$0xff]
        %v5649 = vld [vmem:[#allocation6 + $0x4d0] sm:$0xff]
        %v5650 = vld [vmem:[#allocation6 + $0x4d8] sm:$0xff]
        %v5651 = vld [vmem:[#allocation6 + $0x4e0] sm:$0xff]
        %v5652 = vld [vmem:[#allocation6 + $0x4e8] sm:$0xff]
        %v5653 = vld [vmem:[#allocation6 + $0x4f0] sm:$0xff]
        %v5654 = vld [vmem:[#allocation6 + $0x4f8] sm:$0xff]
        %v5655 = vld [vmem:[#allocation6 + $0x500] sm:$0xff]
        %v5656 = vld [vmem:[#allocation6 + $0x508] sm:$0xff]
        %v5657 = vld [vmem:[#allocation6 + $0x510] sm:$0xff]
        %v5658 = vld [vmem:[#allocation6 + $0x518] sm:$0xff]
        %v5659 = vld [vmem:[#allocation6 + $0x520] sm:$0xff]
        %v5660 = vld [vmem:[#allocation6 + $0x528] sm:$0xff]
        %v5661 = vld [vmem:[#allocation6 + $0x530] sm:$0xff]
        %v5662 = vld [vmem:[#allocation6 + $0x538] sm:$0xff]
        %v5663 = vld [vmem:[#allocation6 + $0x540] sm:$0xff]
        %v5664 = vld [vmem:[#allocation6 + $0x548] sm:$0xff]
        %v5665 = vld [vmem:[#allocation6 + $0x550] sm:$0xff]
        %v5666 = vld [vmem:[#allocation6 + $0x558] sm:$0xff]
        %v5667 = vld [vmem:[#allocation6 + $0x560] sm:$0xff]
        %v5668 = vld [vmem:[#allocation6 + $0x568] sm:$0xff]
        %v5669 = vld [vmem:[#allocation6 + $0x570] sm:$0xff]
        %v5670 = vld [vmem:[#allocation6 + $0x578] sm:$0xff]
        %v5671 = vld [vmem:[#allocation6 + $0x580] sm:$0xff]
        %v5672 = vld [vmem:[#allocation6 + $0x588] sm:$0xff]
        %v5673 = vld [vmem:[#allocation6 + $0x590] sm:$0xff]
        %v5674 = vld [vmem:[#allocation6 + $0x598] sm:$0xff]
        %v5675 = vld [vmem:[#allocation6 + $0x5a0] sm:$0xff]
        %v5676 = vld [vmem:[#allocation6 + $0x5a8] sm:$0xff]
        %v5677 = vld [vmem:[#allocation6 + $0x5b0] sm:$0xff]
        %v5678 = vld [vmem:[#allocation6 + $0x5b8] sm:$0xff]
        %v5679 = vld [vmem:[#allocation6 + $0x5c0] sm:$0xff]
        %v5680 = vld [vmem:[#allocation6 + $0x5c8] sm:$0xff]
        %v5681 = vld [vmem:[#allocation6 + $0x5d0] sm:$0xff]
        %v5682 = vld [vmem:[#allocation6 + $0x5d8] sm:$0xff]
        %v5683 = vld [vmem:[#allocation6 + $0x5e0] sm:$0xff]
        %v5684 = vld [vmem:[#allocation6 + $0x5e8] sm:$0xff]
        %v5685 = vld [vmem:[#allocation6 + $0x5f0] sm:$0xff]
        %v5686 = vld [vmem:[#allocation6 + $0x5f8] sm:$0xff]
        %5687 = vmatprep.subr.mxu0 %v5556
        %5688 = vmatpush1.msra.mxu0 %v5555
        %5689 = vmatprep.subr.mxu0 %v5552
        %5690 = vmatpush1.msra.mxu0 %v5551
        %5691 = vmatprep.subr.mxu0 %v5548
        %5692 = vmatpush1.msra.mxu0 %v5547
        %5693 = vmatprep.subr.mxu0 %v5544
        %5694 = vmatpush1.msra.mxu0 %v5543
        %5695 = vmatprep.subr.mxu0 %v5540
        %5696 = vmatpush1.msra.mxu0 %v5539
        %5697 = vmatprep.subr.mxu0 %v5536
        %5698 = vmatpush1.msra.mxu0 %v5535
        %5699 = vmatprep.subr.mxu0 %v5532
        %5700 = vmatpush1.msra.mxu0 %v5531
        %5701 = vmatprep.subr.mxu0 %v5528
        %5702 = vmatpush1.msra.mxu0 %v5527
        %5703 = vmatprep.subr.mxu0 %v5524
        %5704 = vmatpush1.msra.mxu0 %v5523
        %5705 = vmatprep.subr.mxu0 %v5520
        %5706 = vmatpush1.msra.mxu0 %v5519
        %5707 = vmatprep.subr.mxu0 %v5516
        %5708 = vmatpush1.msra.mxu0 %v5515
        %5709 = vmatprep.subr.mxu0 %v5512
        %5710 = vmatpush1.msra.mxu0 %v5511
        %5711 = vmatprep.subr.mxu0 %v5508
        %5712 = vmatpush1.msra.mxu0 %v5507
        %5713 = vmatprep.subr.mxu0 %v5504
        %5714 = vmatpush1.msra.mxu0 %v5503
        %5715 = vmatprep.subr.mxu0 %v5500
        %5716 = vmatpush1.msra.mxu0 %v5499
        %5717 = vmatprep.subr.mxu0 %v5496
        %5718 = vmatpush1.msra.mxu0 %v5495
        %5719 = vmatprep.subr.mxu0 %v5620
        %5720 = vmatpush2.msra.mxu0 %v5619
        %5721 = vmatprep.subr.mxu0 %v5616
        %5722 = vmatpush2.msra.mxu0 %v5615
        %5723 = vmatprep.subr.mxu0 %v5612
        %5724 = vmatpush2.msra.mxu0 %v5611
        %5725 = vmatprep.subr.mxu0 %v5608
        %5726 = vmatpush2.msra.mxu0 %v5607
        %5727 = vmatprep.subr.mxu0 %v5604
        %5728 = vmatpush2.msra.mxu0 %v5603
        %5729 = vmatprep.subr.mxu0 %v5600
        %5730 = vmatpush2.msra.mxu0 %v5599
        %5731 = vmatprep.subr.mxu0 %v5596
        %5732 = vmatpush2.msra.mxu0 %v5595
        %5733 = vmatprep.subr.mxu0 %v5592
        %5734 = vmatpush2.msra.mxu0 %v5591
        %5735 = vmatprep.subr.mxu0 %v5588
        %5736 = vmatpush2.msra.mxu0 %v5587
        %5737 = vmatprep.subr.mxu0 %v5584
        %5738 = vmatpush2.msra.mxu0 %v5583
        %5739 = vmatprep.subr.mxu0 %v5580
        %5740 = vmatpush2.msra.mxu0 %v5579
        %5741 = vmatprep.subr.mxu0 %v5576
        %5742 = vmatpush2.msra.mxu0 %v5575
        %5743 = vmatprep.subr.mxu0 %v5572
        %5744 = vmatpush2.msra.mxu0 %v5571
        %5745 = vmatprep.subr.mxu0 %v5568
        %5746 = vmatpush2.msra.mxu0 %v5567
        %5747 = vmatprep.subr.mxu0 %v5564
        %5748 = vmatpush2.msra.mxu0 %v5563
        %5749 = vmatprep.subr.mxu0 %v5560
        %5750 = vmatpush2.msra.mxu0 %v5559
        %5751 = vmatprep.mubr.f32.mxu0 %v5465
        %5752 = vmatmul.mubr.f32.gmra.mxu0 %v5477
        %v5753 = vpop.f32.mrf.mxu0
        %v5754 = vadd.f32 0.0, %v5753
        %v5755 = vpop.f32.mrf.mxu0
        %v5756 = vadd.f32 0.0, %v5755
        %5757 = vmatprep.mubr.f32.mxu0 %v5466
        %5758 = vmatmul.mubr.f32.gmra.mxu0 %v5474
        %v5759 = vpop.f32.mrf.mxu0
        %v5760 = vadd.f32 0.0, %v5759
        %v5761 = vpop.f32.mrf.mxu0
        %v5762 = vadd.f32 0.0, %v5761
        %5763 = vdwg.mxu0
        %5764 = vmatprep.subr.mxu0 %v5684
        %5765 = vmatpush1.msra.mxu0 %v5683
        %5766 = vmatprep.subr.mxu0 %v5680
        %5767 = vmatpush1.msra.mxu0 %v5679
        %5768 = vmatprep.subr.mxu0 %v5676
        %5769 = vmatpush1.msra.mxu0 %v5675
        %5770 = vmatprep.subr.mxu0 %v5672
        %5771 = vmatpush1.msra.mxu0 %v5671
        %5772 = vmatprep.subr.mxu0 %v5668
        %5773 = vmatpush1.msra.mxu0 %v5667
        %5774 = vmatprep.subr.mxu0 %v5664
        %5775 = vmatpush1.msra.mxu0 %v5663
        %5776 = vmatprep.subr.mxu0 %v5660
        %5777 = vmatpush1.msra.mxu0 %v5659
        %5778 = vmatprep.subr.mxu0 %v5656
        %5779 = vmatpush1.msra.mxu0 %v5655
        %5780 = vmatprep.subr.mxu0 %v5652
        %5781 = vmatpush1.msra.mxu0 %v5651
        %5782 = vmatprep.subr.mxu0 %v5648
        %5783 = vmatpush1.msra.mxu0 %v5647
        %5784 = vmatprep.subr.mxu0 %v5644
        %5785 = vmatpush1.msra.mxu0 %v5643
        %5786 = vmatprep.subr.mxu0 %v5640
        %5787 = vmatpush1.msra.mxu0 %v5639
        %5788 = vmatprep.subr.mxu0 %v5636
        %5789 = vmatpush1.msra.mxu0 %v5635
        %5790 = vmatprep.subr.mxu0 %v5632
        %5791 = vmatpush1.msra.mxu0 %v5631
        %5792 = vmatprep.subr.mxu0 %v5628
        %5793 = vmatpush1.msra.mxu0 %v5627
        %5794 = vmatprep.subr.mxu0 %v5624
        %5795 = vmatpush1.msra.mxu0 %v5623
        %5796 = vmatprep.subr.mxu0 0.0
        %5797 = vmatpush2.msra.mxu0 0.0
        %5798 = vmatprep.subr.mxu0 0.0
        %5799 = vmatpush2.msra.mxu0 0.0
        %5800 = vmatprep.subr.mxu0 0.0
        %5801 = vmatpush2.msra.mxu0 0.0
        %5802 = vmatprep.subr.mxu0 0.0
        %5803 = vmatpush2.msra.mxu0 0.0
        %5804 = vmatprep.subr.mxu0 0.0
        %5805 = vmatpush2.msra.mxu0 0.0
        %5806 = vmatprep.subr.mxu0 0.0
        %5807 = vmatpush2.msra.mxu0 0.0
        %5808 = vmatprep.subr.mxu0 0.0
        %5809 = vmatpush2.msra.mxu0 0.0
        %5810 = vmatprep.subr.mxu0 0.0
        %5811 = vmatpush2.msra.mxu0 0.0
        %5812 = vmatprep.subr.mxu0 0.0
        %5813 = vmatpush2.msra.mxu0 0.0
        %5814 = vmatprep.subr.mxu0 0.0
        %5815 = vmatpush2.msra.mxu0 0.0
        %5816 = vmatprep.subr.mxu0 0.0
        %5817 = vmatpush2.msra.mxu0 0.0
        %5818 = vmatprep.subr.mxu0 0.0
        %5819 = vmatpush2.msra.mxu0 0.0
        %5820 = vmatprep.subr.mxu0 0.0
        %5821 = vmatpush2.msra.mxu0 0.0
        %5822 = vmatprep.subr.mxu0 0.0
        %5823 = vmatpush2.msra.mxu0 0.0
        %5824 = vmatprep.subr.mxu0 0.0
        %5825 = vmatpush2.msra.mxu0 0.0
        %5826 = vmatprep.subr.mxu0 0.0
        %5827 = vmatpush2.msra.mxu0 0.0
        %5828 = vmatprep.mubr.f32.mxu0 0.0
        %5829 = vmatmul.mubr.f32.gmra.mxu0 %v5480
        %v5830 = vpop.f32.mrf.mxu0
        %v5831 = vadd.f32 %v5754, %v5830
        %v5832 = vpop.f32.mrf.mxu0
        %v5833 = vadd.f32 %v5756, %v5832
        %5834 = vmatprep.mubr.f32.mxu0 0.0
        %5835 = vmatmul.mubr.f32.gmra.mxu0 %v5483
        %v5836 = vpop.f32.mrf.mxu0
        %v5837 = vadd.f32 %v5760, %v5836
        %v5838 = vpop.f32.mrf.mxu0
        %v5839 = vadd.f32 %v5762, %v5838
        %5840 = vdwg.mxu0
        %5841 = vmatprep.subr.mxu0 %v5558
        %5842 = vmatpush1.msra.mxu0 %v5557
        %5843 = vmatprep.subr.mxu0 %v5554
        %5844 = vmatpush1.msra.mxu0 %v5553
        %5845 = vmatprep.subr.mxu0 %v5550
        %5846 = vmatpush1.msra.mxu0 %v5549
        %5847 = vmatprep.subr.mxu0 %v5546
        %5848 = vmatpush1.msra.mxu0 %v5545
        %5849 = vmatprep.subr.mxu0 %v5542
        %5850 = vmatpush1.msra.mxu0 %v5541
        %5851 = vmatprep.subr.mxu0 %v5538
        %5852 = vmatpush1.msra.mxu0 %v5537
        %5853 = vmatprep.subr.mxu0 %v5534
        %5854 = vmatpush1.msra.mxu0 %v5533
        %5855 = vmatprep.subr.mxu0 %v5530
        %5856 = vmatpush1.msra.mxu0 %v5529
        %5857 = vmatprep.subr.mxu0 %v5526
        %5858 = vmatpush1.msra.mxu0 %v5525
        %5859 = vmatprep.subr.mxu0 %v5522
        %5860 = vmatpush1.msra.mxu0 %v5521
        %5861 = vmatprep.subr.mxu0 %v5518
        %5862 = vmatpush1.msra.mxu0 %v5517
        %5863 = vmatprep.subr.mxu0 %v5514
        %5864 = vmatpush1.msra.mxu0 %v5513
        %5865 = vmatprep.subr.mxu0 %v5510
        %5866 = vmatpush1.msra.mxu0 %v5509
        %5867 = vmatprep.subr.mxu0 %v5506
        %5868 = vmatpush1.msra.mxu0 %v5505
        %5869 = vmatprep.subr.mxu0 %v5502
        %5870 = vmatpush1.msra.mxu0 %v5501
        %5871 = vmatprep.subr.mxu0 %v5498
        %5872 = vmatpush1.msra.mxu0 %v5497
        %5873 = vmatprep.subr.mxu0 %v5622
        %5874 = vmatpush2.msra.mxu0 %v5621
        %5875 = vmatprep.subr.mxu0 %v5618
        %5876 = vmatpush2.msra.mxu0 %v5617
        %5877 = vmatprep.subr.mxu0 %v5614
        %5878 = vmatpush2.msra.mxu0 %v5613
        %5879 = vmatprep.subr.mxu0 %v5610
        %5880 = vmatpush2.msra.mxu0 %v5609
        %5881 = vmatprep.subr.mxu0 %v5606
        %5882 = vmatpush2.msra.mxu0 %v5605
        %5883 = vmatprep.subr.mxu0 %v5602
        %5884 = vmatpush2.msra.mxu0 %v5601
        %5885 = vmatprep.subr.mxu0 %v5598
        %5886 = vmatpush2.msra.mxu0 %v5597
        %5887 = vmatprep.subr.mxu0 %v5594
        %5888 = vmatpush2.msra.mxu0 %v5593
        %5889 = vmatprep.subr.mxu0 %v5590
        %5890 = vmatpush2.msra.mxu0 %v5589
        %5891 = vmatprep.subr.mxu0 %v5586
        %5892 = vmatpush2.msra.mxu0 %v5585
        %5893 = vmatprep.subr.mxu0 %v5582
        %5894 = vmatpush2.msra.mxu0 %v5581
        %5895 = vmatprep.subr.mxu0 %v5578
        %5896 = vmatpush2.msra.mxu0 %v5577
        %5897 = vmatprep.subr.mxu0 %v5574
        %5898 = vmatpush2.msra.mxu0 %v5573
        %5899 = vmatprep.subr.mxu0 %v5570
        %5900 = vmatpush2.msra.mxu0 %v5569
        %5901 = vmatprep.subr.mxu0 %v5566
        %5902 = vmatpush2.msra.mxu0 %v5565
        %5903 = vmatprep.subr.mxu0 %v5562
        %5904 = vmatpush2.msra.mxu0 %v5561
        %5905 = vmatprep.mubr.f32.mxu0 %v5465
        %5906 = vmatmul.mubr.f32.gmra.mxu0 %v5477
        %v5907 = vpop.f32.mrf.mxu0
        %v5908 = vadd.f32 0.0, %v5907
        %v5909 = vpop.f32.mrf.mxu0
        %v5910 = vadd.f32 0.0, %v5909
        %5911 = vmatprep.mubr.f32.mxu0 %v5466
        %5912 = vmatmul.mubr.f32.gmra.mxu0 %v5474
        %v5913 = vpop.f32.mrf.mxu0
        %v5914 = vadd.f32 0.0, %v5913
        %v5915 = vpop.f32.mrf.mxu0
        %v5916 = vadd.f32 0.0, %v5915
        %5917 = vdwg.mxu0
        %5918 = vmatprep.subr.mxu0 %v5686
        %5919 = vmatpush1.msra.mxu0 %v5685
        %5920 = vmatprep.subr.mxu0 %v5682
        %5921 = vmatpush1.msra.mxu0 %v5681
        %5922 = vmatprep.subr.mxu0 %v5678
        %5923 = vmatpush1.msra.mxu0 %v5677
        %5924 = vmatprep.subr.mxu0 %v5674
        %5925 = vmatpush1.msra.mxu0 %v5673
        %5926 = vmatprep.subr.mxu0 %v5670
        %5927 = vmatpush1.msra.mxu0 %v5669
        %5928 = vmatprep.subr.mxu0 %v5666
        %5929 = vmatpush1.msra.mxu0 %v5665
        %5930 = vmatprep.subr.mxu0 %v5662
        %5931 = vmatpush1.msra.mxu0 %v5661
        %5932 = vmatprep.subr.mxu0 %v5658
        %5933 = vmatpush1.msra.mxu0 %v5657
        %5934 = vmatprep.subr.mxu0 %v5654
        %5935 = vmatpush1.msra.mxu0 %v5653
        %5936 = vmatprep.subr.mxu0 %v5650
        %5937 = vmatpush1.msra.mxu0 %v5649
        %5938 = vmatprep.subr.mxu0 %v5646
        %5939 = vmatpush1.msra.mxu0 %v5645
        %5940 = vmatprep.subr.mxu0 %v5642
        %5941 = vmatpush1.msra.mxu0 %v5641
        %5942 = vmatprep.subr.mxu0 %v5638
        %5943 = vmatpush1.msra.mxu0 %v5637
        %5944 = vmatprep.subr.mxu0 %v5634
        %5945 = vmatpush1.msra.mxu0 %v5633
        %5946 = vmatprep.subr.mxu0 %v5630
        %5947 = vmatpush1.msra.mxu0 %v5629
        %5948 = vmatprep.subr.mxu0 %v5626
        %5949 = vmatpush1.msra.mxu0 %v5625
        %5950 = vmatprep.subr.mxu0 0.0
        %5951 = vmatpush2.msra.mxu0 0.0
        %5952 = vmatprep.subr.mxu0 0.0
        %5953 = vmatpush2.msra.mxu0 0.0
        %5954 = vmatprep.subr.mxu0 0.0
        %5955 = vmatpush2.msra.mxu0 0.0
        %5956 = vmatprep.subr.mxu0 0.0
        %5957 = vmatpush2.msra.mxu0 0.0
        %5958 = vmatprep.subr.mxu0 0.0
        %5959 = vmatpush2.msra.mxu0 0.0
        %5960 = vmatprep.subr.mxu0 0.0
        %5961 = vmatpush2.msra.mxu0 0.0
        %5962 = vmatprep.subr.mxu0 0.0
        %5963 = vmatpush2.msra.mxu0 0.0
        %5964 = vmatprep.subr.mxu0 0.0
        %5965 = vmatpush2.msra.mxu0 0.0
        %5966 = vmatprep.subr.mxu0 0.0
        %5967 = vmatpush2.msra.mxu0 0.0
        %5968 = vmatprep.subr.mxu0 0.0
        %5969 = vmatpush2.msra.mxu0 0.0
        %5970 = vmatprep.subr.mxu0 0.0
        %5971 = vmatpush2.msra.mxu0 0.0
        %5972 = vmatprep.subr.mxu0 0.0
        %5973 = vmatpush2.msra.mxu0 0.0
        %5974 = vmatprep.subr.mxu0 0.0
        %5975 = vmatpush2.msra.mxu0 0.0
        %5976 = vmatprep.subr.mxu0 0.0
        %5977 = vmatpush2.msra.mxu0 0.0
        %5978 = vmatprep.subr.mxu0 0.0
        %5979 = vmatpush2.msra.mxu0 0.0
        %5980 = vmatprep.subr.mxu0 0.0
        %5981 = vmatpush2.msra.mxu0 0.0
        %5982 = vmatprep.mubr.f32.mxu0 0.0
        %5983 = vmatmul.mubr.f32.gmra.mxu0 %v5480
        %v5984 = vpop.f32.mrf.mxu0
        %v5985 = vadd.f32 %v5908, %v5984
        %v5986 = vpop.f32.mrf.mxu0
        %v5987 = vadd.f32 %v5910, %v5986
        %5988 = vmatprep.mubr.f32.mxu0 0.0
        %5989 = vmatmul.mubr.f32.gmra.mxu0 %v5483
        %v5990 = vpop.f32.mrf.mxu0
        %v5991 = vadd.f32 %v5914, %v5990
        %v5992 = vpop.f32.mrf.mxu0
        %v5993 = vadd.f32 %v5916, %v5992
        %5994 = vdwg.mxu0
        %v5995 = vadd.f32 %v5487, %v5831
        %v5996 = vadd.f32 %v5488, %v5833
        %v5997 = vadd.f32 %v5489, %v5985
        %v5998 = vadd.f32 %v5490, %v5987
        %v5999 = vadd.f32 %v5491, %v5837
        %v6000 = vadd.f32 %v5492, %v5839
        %v6001 = vadd.f32 %v5493, %v5991
        %v6002 = vadd.f32 %v5494, %v5993
        %v6003 = vmul.f32 %v1391, %v5449
        %v6004 = vmul.f32 %v1392, %v5450
        %v6005 = vadd.f32 %v5995, %v6003
        %v6006 = vadd.f32 %v5999, %v6004
        %v6007 = vmul.f32 %v6005, 0.5
        %v6008 = vmul.f32 %v6006, 0.5
        %v6009 = vtanh.pop %v6007
        %v6010 = vtanh.pop %v6008
        %v6011 = vmul.f32 %v6009, 0.5
        %v6012 = vmul.f32 %v6010, 0.5
        %v6013 = vadd.f32 %v6011, 0.5
        %v6014 = vadd.f32 %v6012, 0.5
        %v6015 = vmul.f32 %v1393, %v5449
        %v6016 = vmul.f32 %v1394, %v5450
        %v6017 = vadd.f32 %v5996, %v6015
        %v6018 = vadd.f32 %v6000, %v6016
        %v6019 = vmul.f32 %v6017, 0.5
        %v6020 = vmul.f32 %v6018, 0.5
        %v6021 = vtanh.pop %v6019
        %v6022 = vtanh.pop %v6020
        %v6023 = vmul.f32 %v6021, 0.5
        %v6024 = vmul.f32 %v6022, 0.5
        %v6025 = vadd.f32 %v6023, 0.5
        %v6026 = vadd.f32 %v6024, 0.5
        %v6027 = vmul.f32 %v6025, %v5449
        %v6028 = vmul.f32 %v6026, %v5450
        %v6029 = vtanh.pop %v5997
        %v6030 = vtanh.pop %v6001
        %v6031 = vmul.f32 %v6013, %v6029
        %v6032 = vmul.f32 %v6014, %v6030
        %v6033 = vadd.f32 %v6027, %v6031
        %v6034 = vadd.f32 %v6028, %v6032
        %v6035 = vmul.f32 %v1395, %v6033
        %v6036 = vmul.f32 %v1396, %v6034
        %v6037 = vadd.f32 %v5998, %v6035
        %v6038 = vadd.f32 %v6002, %v6036
        %v6039 = vmul.f32 %v6037, 0.5
        %v6040 = vmul.f32 %v6038, 0.5
        %v6041 = vtanh.pop %v6039
        %v6042 = vtanh.pop %v6040
        %v6043 = vmul.f32 %v6041, 0.5
        %v6044 = vmul.f32 %v6042, 0.5
        %v6045 = vadd.f32 %v6043, 0.5
        %v6046 = vadd.f32 %v6044, 0.5
        %v6047 = vtanh.pop %v6033
        %v6048 = vtanh.pop %v6034
        %v6049 = vmul.f32 %v6045, %v6047
        %v6050 = vmul.f32 %v6046, %v6048
        %s6051 = scalar_lea.vmem %s301, 112 [#allocation8]
        %6052 = vst [vmem:[%s6051] sm:$0xff] %v6049
        %6053 = vst [vmem:[%s6051 + $0x8] sm:$0xff] %v6050
        %s6054 = sand.u32 %s183, 1
        %s6055 = scalar_lea.sflag [#allocation5], %s6054
        %s6056 = sand.u32 %s183, 1
        %s6057 = smul.addr %s6056, 128
        %s6058 = scalar_lea.vmem [#allocation8], %s6057
        // Predicated region
        $region57: #{tpu_custom_call.1} parent=47 // pred_check
          %p6059 = pneg %p193
        $region58: #{tpu_custom_call.1} parent=47 // pred_check_branch
          %6061 = sbr.rel (%p6059) target = $region60
        $region59: #{tpu_custom_call.1} parent=47 // pred_region
          %s6063 = ssub.s32 2048, 2048
          %6064 = vsyncadd %s6055, %s6063
          %s6065 = smul.addr %s23, 16
          %s6066 = smul.addr %s6065, 128
          %s6067 = scalar_lea.hbm %s7, %s6066
          %s6068 = sshll.u32 %s6058, 4
          %s6069 = int_to_ptr.vmem [resolvable:$true] %s6068
          %6074 = dma.vmem_to_hbm [thread:$0]  %s6069, 2048, %s6067, %s6055, 128, 128, 8
        $region60: #{tpu_custom_call.1} parent=47 // pred_fallthru
          _
      $region48: #{tpu_custom_call.1} parent=5 // pred_fallthru
        _
      %p6075 = scmp.le.s32.totalorder 2, %s18
      // Predicated region
      $region61: #{tpu_custom_call.1} parent=5 // pred_check
        %p6076 = pneg %p6075
      $region62: #{tpu_custom_call.1} parent=5 // pred_check_branch
        %6078 = sbr.rel (%p6076) target = $region64
      $region63: #{tpu_custom_call.1} parent=5 // pred_region
        %s6079 = ssub.s32 %s18, 2
        // Predicated region
        $region65: #{tpu_custom_call.1} parent=63 // pred_check
          %p6080 = pneg %p199
        $region66: #{tpu_custom_call.1} parent=63 // pred_check_branch
          %6082 = sbr.rel (%p6080) target = $region68
        $region67: #{tpu_custom_call.1} parent=63 // pred_region
          %s6083 = sand.u32 %s184, 1
          %s6084 = scalar_lea.sflag [#allocation5], %s6083
          %s6085 = sand.u32 %s184, 1
          %s6086 = smul.addr %s6085, 128
          %s6087 = scalar_lea.vmem [#allocation8], %s6086
          %6088 = dma.done %s6084, 2048
        $region68: #{tpu_custom_call.1} parent=63 // pred_fallthru
          _
      $region64: #{tpu_custom_call.1} parent=5 // pred_fallthru
        _
    $region6: #{tpu_custom_call.1} parent=1 // loop_footer
      %s22 = sadd.s32 1, %s18
    $region7: #{tpu_custom_call.1} parent=1 // loop_footer_branch
      %17 = sbr.rel target = $region3
    $region8: #{tpu_custom_call.1} parent=1 // loop_exit
      _
    %6089 = vsyncpa [#allocation4], 1
    %s6090 = scalar_lea.sflag [#allocation4], 1
    %6091 = vsyncpa %s6090, 1
    %6092 = vsyncpa [#allocation7], 1
    %6093 = vsyncpa [#allocation5], 1
    %s6094 = scalar_lea.sflag [#allocation5], 1
    %6095 = vsyncpa %s6094, 1

</llo_original>
